<compile_context>
chip_gen: v6e
topology: v6e:2x2x1
jax: 0.10.0
libtpu: 0.0.40
codegen_flags: <defaults>
</compile_context>

<pallas_src>
import functools

import jax
import jax.numpy as jnp
import numpy as np
from jax.experimental import pallas as pl
from jax.experimental.pallas import tpu as pltpu

# Model hyper-parameters (HipotReferenceModel defaults)
INPUT_DIM = 4
HIDDEN_DIM = 128
NUM_LAYERS = 3
LATENT_DIM = 16
NUM_CLASSES = 5
BN_EPS = 1e-5


# ----------------------------------------------------------------------------
# Fused kernel: 3 LSTM layers (time loop in-kernel) + encoder + fused decoder/classifier.
# ----------------------------------------------------------------------------
def _fused_kernel(x_ref, wih0_ref, whh0_ref, lstm_b_ref, enc_b_ref, dc_b_ref,
                  wih12_hbm, whh12_hbm, enc_w_hbm, dc_w1_hbm, dc_w23_hbm,
                  out_ref,
                  xg_scr, hseq_scr,
                  wih12_scr, whh12_scr, enc_w_scr, dc_w1_scr, dc_w23_scr,
                  dma_sem, *, T, B):
    H = HIDDEN_DIM
    f32 = jnp.float32
    bf16 = jnp.bfloat16

    # ---- Overlap weight DMA with layer-0 compute: only wih0 / whh0 / lstm_b are needed
    # up front; layer-1/2 LSTM weights and all head weights land while layer 0 runs.
    copies = [
        pltpu.make_async_copy(wih12_hbm, wih12_scr, dma_sem.at[0]),
        pltpu.make_async_copy(whh12_hbm, whh12_scr, dma_sem.at[1]),
        pltpu.make_async_copy(enc_w_hbm, enc_w_scr, dma_sem.at[2]),
        pltpu.make_async_copy(dc_w1_hbm, dc_w1_scr, dma_sem.at[3]),
        pltpu.make_async_copy(dc_w23_hbm, dc_w23_scr, dma_sem.at[4]),
    ]
    for cp in copies:
        cp.start()

    # Full unroll for small T (static offsets + LLO visibility); cap it for long T to
    # avoid instruction-memory / vreg-pressure blowup.
    unroll = True if T <= 32 else 4

    def run_layer(in_seq_bf16, wih_bf16, whh_view, bias_row, store_hseq):
        # ---- prologue: input projection for ALL timesteps in one matmul --------------
        xg_scr[...] = (jnp.dot(in_seq_bf16, wih_bf16, preferred_element_type=f32)
                       + bias_row)                                  # (T*B, 4H) f32

        # ---- recurrence: only h_prev @ W_hh is on the serial critical path -----------
        def step(t, carry):
            h_prev, c_prev = carry                                  # bf16, f32
            off = pl.multiple_of(t * B, B)
            gates = xg_scr[pl.ds(off, B), :] + jnp.dot(
                h_prev, whh_view[...], preferred_element_type=f32)
            i_g = jax.nn.sigmoid(gates[:, 0 * H:1 * H])
            f_g = jax.nn.sigmoid(gates[:, 1 * H:2 * H])
            g_g = jnp.tanh(gates[:, 2 * H:3 * H])
            o_g = jax.nn.sigmoid(gates[:, 3 * H:4 * H])
            c_new = f_g * c_prev + i_g * g_g                        # f32 cell state
            h_new = (o_g * jnp.tanh(c_new)).astype(bf16)            # bf16 hidden carry
            if store_hseq:                                          # skipped for layer 2
                hseq_scr[pl.ds(off, B), :] = h_new
            return h_new, c_new

        carry0 = (jnp.zeros((B, H), bf16), jnp.zeros((B, H), f32))
        h_last, _ = jax.lax.fori_loop(0, T, step, carry0, unroll=unroll)
        return h_last

    # layer 0: weights already VMEM-resident via the BlockSpec DMA.
    run_layer(x_ref[...], wih0_ref[...], whh0_ref, lstm_b_ref[0:1, :],
              store_hseq=True)

    copies[0].wait()                                                # wih (layers 1,2)
    copies[1].wait()                                                # whh (layers 1,2)

    # inter-layer dropout(p=0.2) = identity (eval)
    run_layer(hseq_scr[...], wih12_scr[0], whh12_scr.at[0], lstm_b_ref[1:2, :],
              store_hseq=True)
    h_last = run_layer(hseq_scr[...], wih12_scr[1], whh12_scr.at[1], lstm_b_ref[2:3, :],
                       store_hseq=False)                            # only h_last is used

    # ---- MLP heads ---------------------------------------------------------------
    copies[2].wait()                                                # encoder weights
    copies[3].wait()                                                # dec|cls layer 1
    copies[4].wait()                                                # dec|cls layers 2,3

    def head(inp_bf16, w_bf16, bias_row, relu):
        y = jnp.dot(inp_bf16, w_bf16, preferred_element_type=f32) + bias_row
        return jnp.maximum(y, 0.0) if relu else y

    # Encoder: 3 lane-dense (B,128)@(128,128) matmuls.  Eval-mode BN already folded
    # into the following Linear at pack time.
    e1 = head(h_last, enc_w_scr[0], enc_b_ref[0:1, :], True)
    e2 = head(e1.astype(jnp.bfloat16), enc_w_scr[1], enc_b_ref[1:2, :], True)
    enc = head(e2.astype(jnp.bfloat16), enc_w_scr[2], enc_b_ref[2:3, :], False)

    # Decoder | classifier fused into 3 block-diagonal 256-wide matmuls
    # (independent given enc; classifier Dropout(0.3) = identity in eval).
    dc1 = head(enc.astype(jnp.bfloat16), dc_w1_scr[...], dc_b_ref[0:1, :], True)
    dc2 = head(dc1.astype(jnp.bfloat16), dc_w23_scr[0], dc_b_ref[1:2, :], True)
    dc3 = head(dc2.astype(jnp.bfloat16), dc_w23_scr[1], dc_b_ref[2:3, :], False)

    # Single lane-dense (B, 4H) output slab: [ lstm_last | encoded | decoded | classified ]
    out_ref[:, 0:H] = h_last.astype(f32)
    out_ref[:, H:2 * H] = enc
    out_ref[:, 2 * H:4 * H] = dc3


def _vmem():
    return pl.BlockSpec(memory_space=pltpu.MemorySpace.VMEM)


def _any():
    return pl.BlockSpec(memory_space=pl.ANY)


def hipot_forward(x, packed):
    """x: (B, T, INPUT_DIM) batch-first, like the PyTorch module."""
    B, T, D = x.shape
    H = HIDDEN_DIM
    # batch-first -> flattened time-major rows (row = t*B + b); pad lanes to a full
    # 128-deep contraction so the layer-0 input projection is a clean MXU matmul.
    x_tm = jnp.transpose(x, (1, 0, 2)).reshape(T * B, D)
    x_tm = jnp.pad(x_tm, ((0, 0), (0, H - D))).astype(jnp.bfloat16)

    kernel = functools.partial(_fused_kernel, T=T, B=B)
    out = pl.pallas_call(
        kernel,
        out_shape=jax.ShapeDtypeStruct((B, 4 * H), jnp.float32),
        in_specs=[_vmem()] * 6 + [_any()] * 5,
        out_specs=_vmem(),
        scratch_shapes=[
            pltpu.VMEM((T * B, 4 * H), jnp.float32),      # xg: hoisted input projections
            pltpu.VMEM((T * B, H), jnp.bfloat16),         # hseq: per-layer hidden sequence
            pltpu.VMEM((2, H, 4 * H), jnp.bfloat16),      # wih (layers 1..2), prefetched
            pltpu.VMEM((2, H, 4 * H), jnp.bfloat16),      # whh (layers 1..2), prefetched
            pltpu.VMEM((3, H, H), jnp.bfloat16),          # encoder weights, prefetched
            pltpu.VMEM((H, 2 * H), jnp.bfloat16),         # fused dec|cls layer 1
            pltpu.VMEM((2, 2 * H, 2 * H), jnp.bfloat16),  # fused dec|cls layers 2,3
            pltpu.SemaphoreType.DMA((5,)),
        ],
        # TODO(synk): for very large T, store xg in bf16 / tile the input projection to
        # respect v7x's 64 MiB VMEM; at T*B=64 the scratch is ~160 KiB and irrelevant.
        # TODO(synk): for large B on v7x, add a leading "parallel" batch grid axis to use
        # both TensorCores; at B=8 one invocation is optimal (serial chain unchanged).
    )(x_tm, packed['wih0'], packed['whh0'], packed['lstm_b'],
      packed['enc_b'], packed['dc_b'],
      packed['wih12'], packed['whh12'], packed['enc_w'],
      packed['dc_w1'], packed['dc_w23'])

    return {'encoded': out[:, H:H + LATENT_DIM],
            'decoded': out[:, 2 * H:3 * H],
            'classified': out[:, 3 * H:3 * H + NUM_CLASSES],
            'lstm_output': out[:, 0:H]}


# ----------------------------------------------------------------------------
# Parameter init (deterministic, synthetic) and kernel-side packing.
# ----------------------------------------------------------------------------
def init_params(key):
    keys = iter(jax.random.split(key, 128))

    def u(shape, scale):
        return jax.random.uniform(next(keys), shape, jnp.float32, -scale, scale)

    params = {}

    k = 1.0 / float(np.sqrt(HIDDEN_DIM))
    lstm = []
    for layer in range(NUM_LAYERS):
        d_in = INPUT_DIM if layer == 0 else HIDDEN_DIM
        w_ih = u((d_in, 4 * HIDDEN_DIM), k)               # stored (in, 4H): y = x @ W
        w_hh = u((HIDDEN_DIM, 4 * HIDDEN_DIM), k)
        bias = u((1, 4 * HIDDEN_DIM), k) + u((1, 4 * HIDDEN_DIM), k)  # b_ih + b_hh
        lstm.append((w_ih, w_hh, bias))
    params['lstm'] = lstm

    def linear(d_in, d_out):
        s = 1.0 / float(np.sqrt(d_in))
        return u((d_in, d_out), s), u((1, d_out), s)

    def bn(d):
        # eval-mode BatchNorm1d as scale/shift (gamma=1, beta=0, mean=0, var=1)
        gamma = jnp.ones((1, d), jnp.float32)
        beta = jnp.zeros((1, d), jnp.float32)
        run_mean = jnp.zeros((1, d), jnp.float32)
        run_var = jnp.ones((1, d), jnp.float32)
        scale = gamma / jnp.sqrt(run_var + BN_EPS)
        shift = beta - run_mean * scale
        return scale, shift

    e_w1, e_b1 = linear(HIDDEN_DIM, 64); e_s1, e_o1 = bn(64)
    e_w2, e_b2 = linear(64, 32);         e_s2, e_o2 = bn(32)
    e_w3, e_b3 = linear(32, LATENT_DIM)
    d_w1, d_b1 = linear(LATENT_DIM, 32); d_s1, d_o1 = bn(32)
    d_w2, d_b2 = linear(32, 64);         d_s2, d_o2 = bn(64)
    d_w3, d_b3 = linear(64, HIDDEN_DIM)
    c_w1, c_b1 = linear(LATENT_DIM, 32)
    c_w2, c_b2 = linear(32, 16)
    c_w3, c_b3 = linear(16, NUM_CLASSES)

    params['heads'] = [e_w1, e_b1, e_s1, e_o1, e_w2, e_b2, e_s2, e_o2, e_w3, e_b3,
                       d_w1, d_b1, d_s1, d_o1, d_w2, d_b2, d_s2, d_o2, d_w3, d_b3,
                       c_w1, c_b1, c_w2, c_b2, c_w3, c_b3]
    return params


def pack_params(params):
    """One-time packing: bf16 LSTM weights (layer-0 input weight padded to a 128-deep
    contraction), eval-mode BN folded into the following Linear, encoder packed as a
    (3,128,128) slab, and decoder/classifier fused into block-diagonal 256-wide slabs."""
    bf16 = jnp.bfloat16
    H = HIDDEN_DIM
    l0, l1, l2 = params['lstm']

    wih0 = jnp.zeros((H, 4 * H), jnp.float32).at[:INPUT_DIM].set(l0[0]).astype(bf16)
    wih12 = jnp.stack([l1[0], l2[0]]).astype(bf16)            # (2, H, 4H)
    whh0 = l0[1].astype(bf16)                                 # (H, 4H)
    whh12 = jnp.stack([l1[1], l2[1]]).astype(bf16)            # (2, H, 4H)
    lstm_b = jnp.concatenate([l0[2], l1[2], l2[2]], axis=0)   # (3, 4H) f32

    (e_w1, e_b1, e_s1, e_o1, e_w2, e_b2, e_s2, e_o2, e_w3, e_b3,
     d_w1, d_b1, d_s1, d_o1, d_w2, d_b2, d_s2, d_o2, d_w3, d_b3,
     c_w1, c_b1, c_w2, c_b2, c_w3, c_b3) = params['heads']

    def fold_bn(w, b, scale, shift):
        # Linear(BN(y)) with eval-mode BN: (y*scale + shift) @ w + b
        #   == y @ (scale^T * w) + (shift @ w + b)
        return scale.reshape(-1, 1) * w, shift @ w + b

    e_w2, e_b2 = fold_bn(e_w2, e_b2, e_s1, e_o1)
    e_w3, e_b3 = fold_bn(e_w3, e_b3, e_s2, e_o2)
    d_w2, d_b2 = fold_bn(d_w2, d_b2, d_s1, d_o1)
    d_w3, d_b3 = fold_bn(d_w3, d_b3, d_s2, d_o2)

    # Encoder: three zero-padded lane-dense (128,128) layers.
    enc_w = jnp.zeros((3, H, H), jnp.float32)
    enc_b = jnp.zeros((3, H), jnp.float32)
    for i, (w, b) in enumerate([(e_w1, e_b1), (e_w2, e_b2), (e_w3, e_b3)]):
        enc_w = enc_w.at[i, :w.shape[0], :w.shape[1]].set(w)
        enc_b = enc_b.at[i, :b.shape[-1]].set(b.reshape(-1))

    # Decoder | classifier fused into block-diagonal 256-wide layers
    # (lanes [0,128): decoder path, lanes [128,256): classifier path).
    Q = 2 * H
    dc_w1 = jnp.zeros((H, Q), jnp.float32)
    dc_w1 = dc_w1.at[:d_w1.shape[0], :d_w1.shape[1]].set(d_w1)
    dc_w1 = dc_w1.at[:c_w1.shape[0], H:H + c_w1.shape[1]].set(c_w1)
    dc_w23 = jnp.zeros((2, Q, Q), jnp.float32)
    for i, (dw, cw) in enumerate([(d_w2, c_w2), (d_w3, c_w3)]):
        dc_w23 = dc_w23.at[i, :dw.shape[0], :dw.shape[1]].set(dw)
        dc_w23 = dc_w23.at[i, H:H + cw.shape[0], H:H + cw.shape[1]].set(cw)
    dc_b = jnp.zeros((3, Q), jnp.float32)
    for i, (db, cb) in enumerate([(d_b1, c_b1), (d_b2, c_b2), (d_b3, c_b3)]):
        dc_b = dc_b.at[i, :db.shape[-1]].set(db.reshape(-1))
        dc_b = dc_b.at[i, H:H + cb.shape[-1]].set(cb.reshape(-1))

    return {'wih0': wih0, 'wih12': wih12, 'whh0': whh0, 'whh12': whh12,
            'lstm_b': lstm_b,
            'enc_w': enc_w.astype(bf16), 'enc_b': enc_b,
            'dc_w1': dc_w1.astype(bf16), 'dc_w23': dc_w23.astype(bf16), 'dc_b': dc_b}


# ----------------------------------------------------------------------------
# Pure-JAX f32 reference (unfolded, eval-mode semantics) for correctness checking.
# ----------------------------------------------------------------------------
def ref_forward(x, params):
    dot = functools.partial(jnp.dot, precision='highest')
    B = x.shape[0]
    h = jnp.transpose(x, (1, 0, 2)).astype(jnp.float32)
    for (w_ih, w_hh, b) in params['lstm']:
        def step(carry, x_t):
            hp, cp = carry
            g = dot(x_t, w_ih) + dot(hp, w_hh) + b
            H = HIDDEN_DIM
            i = jax.nn.sigmoid(g[:, :H])
            f = jax.nn.sigmoid(g[:, H:2 * H])
            gg = jnp.tanh(g[:, 2 * H:3 * H])
            o = jax.nn.sigmoid(g[:, 3 * H:])
            c = f * cp + i * gg
            hn = o * jnp.tanh(c)
            return (hn, c), hn
        init = (jnp.zeros((B, HIDDEN_DIM), jnp.float32),
                jnp.zeros((B, HIDDEN_DIM), jnp.float32))
        _, h = jax.lax.scan(step, init, h)
    last = h[-1]

    (e_w1, e_b1, e_s1, e_o1, e_w2, e_b2, e_s2, e_o2, e_w3, e_b3,
     d_w1, d_b1, d_s1, d_o1, d_w2, d_b2, d_s2, d_o2, d_w3, d_b3,
     c_w1, c_b1, c_w2, c_b2, c_w3, c_b3) = params['heads']

    def lin(a, w, bb):
        return dot(a, w) + bb

    hh = jnp.maximum(lin(last, e_w1, e_b1), 0.0) * e_s1 + e_o1
    hh = jnp.maximum(lin(hh, e_w2, e_b2), 0.0) * e_s2 + e_o2
    enc = lin(hh, e_w3, e_b3)
    dd = jnp.maximum(lin(enc, d_w1, d_b1), 0.0) * d_s1 + d_o1
    dd = jnp.maximum(lin(dd, d_w2, d_b2), 0.0) * d_s2 + d_o2
    dec = lin(dd, d_w3, d_b3)
    cc = jnp.maximum(lin(enc, c_w1, c_b1), 0.0)
    cc = jnp.maximum(lin(cc, c_w2, c_b2), 0.0)
    cls = lin(cc, c_w3, c_b3)
    return {'encoded': enc, 'decoded': dec, 'classified': cls, 'lstm_output': last}


if __name__ == "__main__":
    key = jax.random.PRNGKey(0)
    pkey, xkey = jax.random.split(key)
    params = init_params(pkey)
    packed = pack_params(params)

    B, T = 8, 8
    x = jax.random.normal(xkey, (B, T, INPUT_DIM), jnp.float32)

    fwd = jax.jit(hipot_forward)
    out = jax.block_until_ready(fwd(x, packed))

    ref = ref_forward(x, params)
    # Kernel uses bf16 MXU operands / bf16 hidden-state carry with f32 accumulation and
    # f32 gate math; the reference is pure f32 — allow ~2e-2 drift through the 3-layer x
    # 8-step recurrent chain (typical observed deviation is a few 1e-3).
    for name in ('encoded', 'decoded', 'classified', 'lstm_output'):
        np.testing.assert_allclose(np.asarray(out[name]), np.asarray(ref[name]),
                                   rtol=2e-2, atol=2e-2)

    print("KERNEL_OK")
</pallas_src>

<mosaic_0001>
module attributes {stable_mosaic.version = 11 : i64} {
  func.func @_fused_kernel(%arg0: memref<64x128xbf16, #tpu.memory_space<vmem>>, %arg1: memref<128x512xbf16, #tpu.memory_space<vmem>>, %arg2: memref<128x512xbf16, #tpu.memory_space<vmem>>, %arg3: memref<3x512xf32, #tpu.memory_space<vmem>>, %arg4: memref<3x128xf32, #tpu.memory_space<vmem>>, %arg5: memref<3x256xf32, #tpu.memory_space<vmem>>, %arg6: memref<2x128x512xbf16, #tpu.memory_space<any>>, %arg7: memref<2x128x512xbf16, #tpu.memory_space<any>>, %arg8: memref<3x128x128xbf16, #tpu.memory_space<any>>, %arg9: memref<128x256xbf16, #tpu.memory_space<any>>, %arg10: memref<2x256x256xbf16, #tpu.memory_space<any>>, %arg11: memref<8x512xf32, #tpu.memory_space<vmem>>, %arg12: memref<64x512xf32, #tpu.memory_space<vmem>>, %arg13: memref<64x128xbf16, #tpu.memory_space<vmem>>, %arg14: memref<2x128x512xbf16, #tpu.memory_space<vmem>>, %arg15: memref<2x128x512xbf16, #tpu.memory_space<vmem>>, %arg16: memref<3x128x128xbf16, #tpu.memory_space<vmem>>, %arg17: memref<128x256xbf16, #tpu.memory_space<vmem>>, %arg18: memref<2x256x256xbf16, #tpu.memory_space<vmem>>, %arg19: memref<5x!tpu.dma_semaphore, #tpu.memory_space<semaphore_mem>>) attributes {dimension_semantics = [], scalar_prefetch = 0 : i64, scratch_operands = 8 : i64, tpu.core_type = #tpu.core_type<tc>} {
    %c0_i32 = arith.constant 0 : i32
    %0 = tpu.memref_slice %arg19[%c0_i32] : memref<5x!tpu.dma_semaphore, #tpu.memory_space<semaphore_mem>> -> memref<1x!tpu.dma_semaphore, #tpu.memory_space<semaphore_mem>>
    %1 = tpu.memref_squeeze %0 : memref<1x!tpu.dma_semaphore, #tpu.memory_space<semaphore_mem>> -> memref<!tpu.dma_semaphore, #tpu.memory_space<semaphore_mem>>
    tpu.enqueue_dma source(%arg6 : memref<2x128x512xbf16, #tpu.memory_space<any>>) target(%arg14 : memref<2x128x512xbf16, #tpu.memory_space<vmem>>) target_semaphore(%1 : memref<!tpu.dma_semaphore, #tpu.memory_space<semaphore_mem>>)
    %c1_i32 = arith.constant 1 : i32
    %2 = tpu.memref_slice %arg19[%c1_i32] : memref<5x!tpu.dma_semaphore, #tpu.memory_space<semaphore_mem>> -> memref<1x!tpu.dma_semaphore, #tpu.memory_space<semaphore_mem>>
    %3 = tpu.memref_squeeze %2 : memref<1x!tpu.dma_semaphore, #tpu.memory_space<semaphore_mem>> -> memref<!tpu.dma_semaphore, #tpu.memory_space<semaphore_mem>>
    tpu.enqueue_dma source(%arg7 : memref<2x128x512xbf16, #tpu.memory_space<any>>) target(%arg15 : memref<2x128x512xbf16, #tpu.memory_space<vmem>>) target_semaphore(%3 : memref<!tpu.dma_semaphore, #tpu.memory_space<semaphore_mem>>)
    %c2_i32 = arith.constant 2 : i32
    %4 = tpu.memref_slice %arg19[%c2_i32] : memref<5x!tpu.dma_semaphore, #tpu.memory_space<semaphore_mem>> -> memref<1x!tpu.dma_semaphore, #tpu.memory_space<semaphore_mem>>
    %5 = tpu.memref_squeeze %4 : memref<1x!tpu.dma_semaphore, #tpu.memory_space<semaphore_mem>> -> memref<!tpu.dma_semaphore, #tpu.memory_space<semaphore_mem>>
    tpu.enqueue_dma source(%arg8 : memref<3x128x128xbf16, #tpu.memory_space<any>>) target(%arg16 : memref<3x128x128xbf16, #tpu.memory_space<vmem>>) target_semaphore(%5 : memref<!tpu.dma_semaphore, #tpu.memory_space<semaphore_mem>>)
    %c3_i32 = arith.constant 3 : i32
    %6 = tpu.memref_slice %arg19[%c3_i32] : memref<5x!tpu.dma_semaphore, #tpu.memory_space<semaphore_mem>> -> memref<1x!tpu.dma_semaphore, #tpu.memory_space<semaphore_mem>>
    %7 = tpu.memref_squeeze %6 : memref<1x!tpu.dma_semaphore, #tpu.memory_space<semaphore_mem>> -> memref<!tpu.dma_semaphore, #tpu.memory_space<semaphore_mem>>
    tpu.enqueue_dma source(%arg9 : memref<128x256xbf16, #tpu.memory_space<any>>) target(%arg17 : memref<128x256xbf16, #tpu.memory_space<vmem>>) target_semaphore(%7 : memref<!tpu.dma_semaphore, #tpu.memory_space<semaphore_mem>>)
    %c4_i32 = arith.constant 4 : i32
    %8 = tpu.memref_slice %arg19[%c4_i32] : memref<5x!tpu.dma_semaphore, #tpu.memory_space<semaphore_mem>> -> memref<1x!tpu.dma_semaphore, #tpu.memory_space<semaphore_mem>>
    %9 = tpu.memref_squeeze %8 : memref<1x!tpu.dma_semaphore, #tpu.memory_space<semaphore_mem>> -> memref<!tpu.dma_semaphore, #tpu.memory_space<semaphore_mem>>
    tpu.enqueue_dma source(%arg10 : memref<2x256x256xbf16, #tpu.memory_space<any>>) target(%arg18 : memref<2x256x256xbf16, #tpu.memory_space<vmem>>) target_semaphore(%9 : memref<!tpu.dma_semaphore, #tpu.memory_space<semaphore_mem>>)
    %c0 = arith.constant 0 : index
    %c0_0 = arith.constant 0 : index
    %10 = vector.load %arg0[%c0, %c0_0] : memref<64x128xbf16, #tpu.memory_space<vmem>>, vector<64x128xbf16>
    %c0_1 = arith.constant 0 : index
    %c0_2 = arith.constant 0 : index
    %11 = vector.load %arg1[%c0_1, %c0_2] : memref<128x512xbf16, #tpu.memory_space<vmem>>, vector<128x512xbf16>
    %c0_3 = arith.constant 0 : index
    %c0_4 = arith.constant 0 : index
    %12 = vector.load %arg3[%c0_3, %c0_4] : memref<3x512xf32, #tpu.memory_space<vmem>>, vector<1x512xf32>
    %cst = arith.constant dense<0.000000e+00> : vector<64x512xf32>
    %13 = tpu.matmul %10, %11, %cst {dimension_numbers = #tpu.dot_dimension_numbers<[1], [0], [0], [1], [0, 0, 1, 1], [], []>} : vector<64x128xbf16>, vector<128x512xbf16>, vector<64x512xf32> -> vector<64x512xf32>
    %14 = vector.broadcast %12 : vector<1x512xf32> to vector<64x512xf32>
    %15 = arith.addf %13, %14 : vector<64x512xf32>
    %c0_5 = arith.constant 0 : index
    %c0_6 = arith.constant 0 : index
    %16 = vector.load %arg12[%c0_5, %c0_6] : memref<64x512xf32, #tpu.memory_space<vmem>>, vector<64x512xf32>
    tpu.vector_store %arg12[%c0_5, %c0_6], %15 {strides = array<i32>} : memref<64x512xf32, #tpu.memory_space<vmem>>, vector<64x512xf32>,
    %cst_7 = arith.constant 0.000000e+00 : bf16
    %17 = vector.broadcast %cst_7 : bf16 to vector<8x128xbf16>
    %cst_8 = arith.constant 0.000000e+00 : f32
    %18 = vector.broadcast %cst_8 : f32 to vector<8x128xf32>
    %c0_i32_9 = arith.constant 0 : i32
    %c8_i32 = arith.constant 8 : i32
    %19 = arith.muli %c0_i32_9, %c8_i32 : i32
    %20 = tpu.assume_multiple %19, 8 : i32
    %21 = arith.index_cast %20 : i32 to index
    %c0_10 = arith.constant 0 : index
    %22 = vector.load %arg12[%21, %c0_10] : memref<64x512xf32, #tpu.memory_space<vmem>>, vector<8x512xf32>
    %c0_11 = arith.constant 0 : index
    %c0_12 = arith.constant 0 : index
    %23 = vector.load %arg2[%c0_11, %c0_12] : memref<128x512xbf16, #tpu.memory_space<vmem>>, vector<128x512xbf16>
    %cst_13 = arith.constant dense<0.000000e+00> : vector<8x512xf32>
    %24 = tpu.matmul %17, %23, %cst_13 {dimension_numbers = #tpu.dot_dimension_numbers<[1], [0], [0], [1], [0, 0, 1, 1], [], []>} : vector<8x128xbf16>, vector<128x512xbf16>, vector<8x512xf32> -> vector<8x512xf32>
    %25 = arith.addf %22, %24 : vector<8x512xf32>
    %26 = vector.extract_strided_slice %25 {offsets = [0, 0], sizes = [8, 128], strides = [1, 1]} : vector<8x512xf32> to vector<8x128xf32>
    %27 = arith.negf %26 : vector<8x128xf32>
    %28 = math.exp %27 : vector<8x128xf32>
    %cst_14 = arith.constant 1.000000e+00 : f32
    %29 = vector.broadcast %cst_14 : f32 to vector<8x128xf32>
    %30 = arith.addf %29, %28 : vector<8x128xf32>
    %31 = arith.divf %29, %30 : vector<8x128xf32>
    %32 = vector.extract_strided_slice %25 {offsets = [0, 128], sizes = [8, 128], strides = [1, 1]} : vector<8x512xf32> to vector<8x128xf32>
    %33 = arith.negf %32 : vector<8x128xf32>
    %34 = math.exp %33 : vector<8x128xf32>
    %cst_15 = arith.constant 1.000000e+00 : f32
    %35 = vector.broadcast %cst_15 : f32 to vector<8x128xf32>
    %36 = arith.addf %35, %34 : vector<8x128xf32>
    %37 = arith.divf %35, %36 : vector<8x128xf32>
    %38 = vector.extract_strided_slice %25 {offsets = [0, 256], sizes = [8, 128], strides = [1, 1]} : vector<8x512xf32> to vector<8x128xf32>
    %39 = math.tanh %38 : vector<8x128xf32>
    %40 = vector.extract_strided_slice %25 {offsets = [0, 384], sizes = [8, 128], strides = [1, 1]} : vector<8x512xf32> to vector<8x128xf32>
    %41 = arith.negf %40 : vector<8x128xf32>
    %42 = math.exp %41 : vector<8x128xf32>
    %cst_16 = arith.constant 1.000000e+00 : f32
    %43 = vector.broadcast %cst_16 : f32 to vector<8x128xf32>
    %44 = arith.addf %43, %42 : vector<8x128xf32>
    %45 = arith.divf %43, %44 : vector<8x128xf32>
    %46 = arith.mulf %37, %18 : vector<8x128xf32>
    %47 = arith.mulf %31, %39 : vector<8x128xf32>
    %48 = arith.addf %46, %47 : vector<8x128xf32>
    %49 = math.tanh %48 : vector<8x128xf32>
    %50 = arith.mulf %45, %49 : vector<8x128xf32>
    %51 = arith.truncf %50 : vector<8x128xf32> to vector<8x128xbf16>
    %52 = arith.index_cast %20 : i32 to index
    %c0_17 = arith.constant 0 : index
    %53 = vector.load %arg13[%52, %c0_17] : memref<64x128xbf16, #tpu.memory_space<vmem>>, vector<8x128xbf16>
    tpu.vector_store %arg13[%52, %c0_17], %51 {strides = array<i32>} : memref<64x128xbf16, #tpu.memory_space<vmem>>, vector<8x128xbf16>,
    %c1_i32_18 = arith.constant 1 : i32
    %c8_i32_19 = arith.constant 8 : i32
    %54 = arith.muli %c1_i32_18, %c8_i32_19 : i32
    %55 = tpu.assume_multiple %54, 8 : i32
    %56 = arith.index_cast %55 : i32 to index
    %c0_20 = arith.constant 0 : index
    %57 = vector.load %arg12[%56, %c0_20] : memref<64x512xf32, #tpu.memory_space<vmem>>, vector<8x512xf32>
    %c0_21 = arith.constant 0 : index
    %c0_22 = arith.constant 0 : index
    %58 = vector.load %arg2[%c0_21, %c0_22] : memref<128x512xbf16, #tpu.memory_space<vmem>>, vector<128x512xbf16>
    %cst_23 = arith.constant dense<0.000000e+00> : vector<8x512xf32>
    %59 = tpu.matmul %51, %58, %cst_23 {dimension_numbers = #tpu.dot_dimension_numbers<[1], [0], [0], [1], [0, 0, 1, 1], [], []>} : vector<8x128xbf16>, vector<128x512xbf16>, vector<8x512xf32> -> vector<8x512xf32>
    %60 = arith.addf %57, %59 : vector<8x512xf32>
    %61 = vector.extract_strided_slice %60 {offsets = [0, 0], sizes = [8, 128], strides = [1, 1]} : vector<8x512xf32> to vector<8x128xf32>
    %62 = arith.negf %61 : vector<8x128xf32>
    %63 = math.exp %62 : vector<8x128xf32>
    %cst_24 = arith.constant 1.000000e+00 : f32
    %64 = vector.broadcast %cst_24 : f32 to vector<8x128xf32>
    %65 = arith.addf %64, %63 : vector<8x128xf32>
    %66 = arith.divf %64, %65 : vector<8x128xf32>
    %67 = vector.extract_strided_slice %60 {offsets = [0, 128], sizes = [8, 128], strides = [1, 1]} : vector<8x512xf32> to vector<8x128xf32>
    %68 = arith.negf %67 : vector<8x128xf32>
    %69 = math.exp %68 : vector<8x128xf32>
    %cst_25 = arith.constant 1.000000e+00 : f32
    %70 = vector.broadcast %cst_25 : f32 to vector<8x128xf32>
    %71 = arith.addf %70, %69 : vector<8x128xf32>
    %72 = arith.divf %70, %71 : vector<8x128xf32>
    %73 = vector.extract_strided_slice %60 {offsets = [0, 256], sizes = [8, 128], strides = [1, 1]} : vector<8x512xf32> to vector<8x128xf32>
    %74 = math.tanh %73 : vector<8x128xf32>
    %75 = vector.extract_strided_slice %60 {offsets = [0, 384], sizes = [8, 128], strides = [1, 1]} : vector<8x512xf32> to vector<8x128xf32>
    %76 = arith.negf %75 : vector<8x128xf32>
    %77 = math.exp %76 : vector<8x128xf32>
    %cst_26 = arith.constant 1.000000e+00 : f32
    %78 = vector.broadcast %cst_26 : f32 to vector<8x128xf32>
    %79 = arith.addf %78, %77 : vector<8x128xf32>
    %80 = arith.divf %78, %79 : vector<8x128xf32>
    %81 = arith.mulf %72, %48 : vector<8x128xf32>
    %82 = arith.mulf %66, %74 : vector<8x128xf32>
    %83 = arith.addf %81, %82 : vector<8x128xf32>
    %84 = math.tanh %83 : vector<8x128xf32>
    %85 = arith.mulf %80, %84 : vector<8x128xf32>
    %86 = arith.truncf %85 : vector<8x128xf32> to vector<8x128xbf16>
    %87 = arith.index_cast %55 : i32 to index
    %c0_27 = arith.constant 0 : index
    %88 = vector.load %arg13[%87, %c0_27] : memref<64x128xbf16, #tpu.memory_space<vmem>>, vector<8x128xbf16>
    tpu.vector_store %arg13[%87, %c0_27], %86 {strides = array<i32>} : memref<64x128xbf16, #tpu.memory_space<vmem>>, vector<8x128xbf16>,
    %c2_i32_28 = arith.constant 2 : i32
    %c8_i32_29 = arith.constant 8 : i32
    %89 = arith.muli %c2_i32_28, %c8_i32_29 : i32
    %90 = tpu.assume_multiple %89, 8 : i32
    %91 = arith.index_cast %90 : i32 to index
    %c0_30 = arith.constant 0 : index
    %92 = vector.load %arg12[%91, %c0_30] : memref<64x512xf32, #tpu.memory_space<vmem>>, vector<8x512xf32>
    %c0_31 = arith.constant 0 : index
    %c0_32 = arith.constant 0 : index
    %93 = vector.load %arg2[%c0_31, %c0_32] : memref<128x512xbf16, #tpu.memory_space<vmem>>, vector<128x512xbf16>
    %cst_33 = arith.constant dense<0.000000e+00> : vector<8x512xf32>
    %94 = tpu.matmul %86, %93, %cst_33 {dimension_numbers = #tpu.dot_dimension_numbers<[1], [0], [0], [1], [0, 0, 1, 1], [], []>} : vector<8x128xbf16>, vector<128x512xbf16>, vector<8x512xf32> -> vector<8x512xf32>
    %95 = arith.addf %92, %94 : vector<8x512xf32>
    %96 = vector.extract_strided_slice %95 {offsets = [0, 0], sizes = [8, 128], strides = [1, 1]} : vector<8x512xf32> to vector<8x128xf32>
    %97 = arith.negf %96 : vector<8x128xf32>
    %98 = math.exp %97 : vector<8x128xf32>
    %cst_34 = arith.constant 1.000000e+00 : f32
    %99 = vector.broadcast %cst_34 : f32 to vector<8x128xf32>
    %100 = arith.addf %99, %98 : vector<8x128xf32>
    %101 = arith.divf %99, %100 : vector<8x128xf32>
    %102 = vector.extract_strided_slice %95 {offsets = [0, 128], sizes = [8, 128], strides = [1, 1]} : vector<8x512xf32> to vector<8x128xf32>
    %103 = arith.negf %102 : vector<8x128xf32>
    %104 = math.exp %103 : vector<8x128xf32>
    %cst_35 = arith.constant 1.000000e+00 : f32
    %105 = vector.broadcast %cst_35 : f32 to vector<8x128xf32>
    %106 = arith.addf %105, %104 : vector<8x128xf32>
    %107 = arith.divf %105, %106 : vector<8x128xf32>
    %108 = vector.extract_strided_slice %95 {offsets = [0, 256], sizes = [8, 128], strides = [1, 1]} : vector<8x512xf32> to vector<8x128xf32>
    %109 = math.tanh %108 : vector<8x128xf32>
    %110 = vector.extract_strided_slice %95 {offsets = [0, 384], sizes = [8, 128], strides = [1, 1]} : vector<8x512xf32> to vector<8x128xf32>
    %111 = arith.negf %110 : vector<8x128xf32>
    %112 = math.exp %111 : vector<8x128xf32>
    %cst_36 = arith.constant 1.000000e+00 : f32
    %113 = vector.broadcast %cst_36 : f32 to vector<8x128xf32>
    %114 = arith.addf %113, %112 : vector<8x128xf32>
    %115 = arith.divf %113, %114 : vector<8x128xf32>
    %116 = arith.mulf %107, %83 : vector<8x128xf32>
    %117 = arith.mulf %101, %109 : vector<8x128xf32>
    %118 = arith.addf %116, %117 : vector<8x128xf32>
    %119 = math.tanh %118 : vector<8x128xf32>
    %120 = arith.mulf %115, %119 : vector<8x128xf32>
    %121 = arith.truncf %120 : vector<8x128xf32> to vector<8x128xbf16>
    %122 = arith.index_cast %90 : i32 to index
    %c0_37 = arith.constant 0 : index
    %123 = vector.load %arg13[%122, %c0_37] : memref<64x128xbf16, #tpu.memory_space<vmem>>, vector<8x128xbf16>
    tpu.vector_store %arg13[%122, %c0_37], %121 {strides = array<i32>} : memref<64x128xbf16, #tpu.memory_space<vmem>>, vector<8x128xbf16>,
    %c3_i32_38 = arith.constant 3 : i32
    %c8_i32_39 = arith.constant 8 : i32
    %124 = arith.muli %c3_i32_38, %c8_i32_39 : i32
    %125 = tpu.assume_multiple %124, 8 : i32
    %126 = arith.index_cast %125 : i32 to index
    %c0_40 = arith.constant 0 : index
    %127 = vector.load %arg12[%126, %c0_40] : memref<64x512xf32, #tpu.memory_space<vmem>>, vector<8x512xf32>
    %c0_41 = arith.constant 0 : index
    %c0_42 = arith.constant 0 : index
    %128 = vector.load %arg2[%c0_41, %c0_42] : memref<128x512xbf16, #tpu.memory_space<vmem>>, vector<128x512xbf16>
    %cst_43 = arith.constant dense<0.000000e+00> : vector<8x512xf32>
    %129 = tpu.matmul %121, %128, %cst_43 {dimension_numbers = #tpu.dot_dimension_numbers<[1], [0], [0], [1], [0, 0, 1, 1], [], []>} : vector<8x128xbf16>, vector<128x512xbf16>, vector<8x512xf32> -> vector<8x512xf32>
    %130 = arith.addf %127, %129 : vector<8x512xf32>
    %131 = vector.extract_strided_slice %130 {offsets = [0, 0], sizes = [8, 128], strides = [1, 1]} : vector<8x512xf32> to vector<8x128xf32>
    %132 = arith.negf %131 : vector<8x128xf32>
    %133 = math.exp %132 : vector<8x128xf32>
    %cst_44 = arith.constant 1.000000e+00 : f32
    %134 = vector.broadcast %cst_44 : f32 to vector<8x128xf32>
    %135 = arith.addf %134, %133 : vector<8x128xf32>
    %136 = arith.divf %134, %135 : vector<8x128xf32>
    %137 = vector.extract_strided_slice %130 {offsets = [0, 128], sizes = [8, 128], strides = [1, 1]} : vector<8x512xf32> to vector<8x128xf32>
    %138 = arith.negf %137 : vector<8x128xf32>
    %139 = math.exp %138 : vector<8x128xf32>
    %cst_45 = arith.constant 1.000000e+00 : f32
    %140 = vector.broadcast %cst_45 : f32 to vector<8x128xf32>
    %141 = arith.addf %140, %139 : vector<8x128xf32>
    %142 = arith.divf %140, %141 : vector<8x128xf32>
    %143 = vector.extract_strided_slice %130 {offsets = [0, 256], sizes = [8, 128], strides = [1, 1]} : vector<8x512xf32> to vector<8x128xf32>
    %144 = math.tanh %143 : vector<8x128xf32>
    %145 = vector.extract_strided_slice %130 {offsets = [0, 384], sizes = [8, 128], strides = [1, 1]} : vector<8x512xf32> to vector<8x128xf32>
    %146 = arith.negf %145 : vector<8x128xf32>
    %147 = math.exp %146 : vector<8x128xf32>
    %cst_46 = arith.constant 1.000000e+00 : f32
    %148 = vector.broadcast %cst_46 : f32 to vector<8x128xf32>
    %149 = arith.addf %148, %147 : vector<8x128xf32>
    %150 = arith.divf %148, %149 : vector<8x128xf32>
    %151 = arith.mulf %142, %118 : vector<8x128xf32>
    %152 = arith.mulf %136, %144 : vector<8x128xf32>
    %153 = arith.addf %151, %152 : vector<8x128xf32>
    %154 = math.tanh %153 : vector<8x128xf32>
    %155 = arith.mulf %150, %154 : vector<8x128xf32>
    %156 = arith.truncf %155 : vector<8x128xf32> to vector<8x128xbf16>
    %157 = arith.index_cast %125 : i32 to index
    %c0_47 = arith.constant 0 : index
    %158 = vector.load %arg13[%157, %c0_47] : memref<64x128xbf16, #tpu.memory_space<vmem>>, vector<8x128xbf16>
    tpu.vector_store %arg13[%157, %c0_47], %156 {strides = array<i32>} : memref<64x128xbf16, #tpu.memory_space<vmem>>, vector<8x128xbf16>,
    %c4_i32_48 = arith.constant 4 : i32
    %c8_i32_49 = arith.constant 8 : i32
    %159 = arith.muli %c4_i32_48, %c8_i32_49 : i32
    %160 = tpu.assume_multiple %159, 8 : i32
    %161 = arith.index_cast %160 : i32 to index
    %c0_50 = arith.constant 0 : index
    %162 = vector.load %arg12[%161, %c0_50] : memref<64x512xf32, #tpu.memory_space<vmem>>, vector<8x512xf32>
    %c0_51 = arith.constant 0 : index
    %c0_52 = arith.constant 0 : index
    %163 = vector.load %arg2[%c0_51, %c0_52] : memref<128x512xbf16, #tpu.memory_space<vmem>>, vector<128x512xbf16>
    %cst_53 = arith.constant dense<0.000000e+00> : vector<8x512xf32>
    %164 = tpu.matmul %156, %163, %cst_53 {dimension_numbers = #tpu.dot_dimension_numbers<[1], [0], [0], [1], [0, 0, 1, 1], [], []>} : vector<8x128xbf16>, vector<128x512xbf16>, vector<8x512xf32> -> vector<8x512xf32>
    %165 = arith.addf %162, %164 : vector<8x512xf32>
    %166 = vector.extract_strided_slice %165 {offsets = [0, 0], sizes = [8, 128], strides = [1, 1]} : vector<8x512xf32> to vector<8x128xf32>
    %167 = arith.negf %166 : vector<8x128xf32>
    %168 = math.exp %167 : vector<8x128xf32>
    %cst_54 = arith.constant 1.000000e+00 : f32
    %169 = vector.broadcast %cst_54 : f32 to vector<8x128xf32>
    %170 = arith.addf %169, %168 : vector<8x128xf32>
    %171 = arith.divf %169, %170 : vector<8x128xf32>
    %172 = vector.extract_strided_slice %165 {offsets = [0, 128], sizes = [8, 128], strides = [1, 1]} : vector<8x512xf32> to vector<8x128xf32>
    %173 = arith.negf %172 : vector<8x128xf32>
    %174 = math.exp %173 : vector<8x128xf32>
    %cst_55 = arith.constant 1.000000e+00 : f32
    %175 = vector.broadcast %cst_55 : f32 to vector<8x128xf32>
    %176 = arith.addf %175, %174 : vector<8x128xf32>
    %177 = arith.divf %175, %176 : vector<8x128xf32>
    %178 = vector.extract_strided_slice %165 {offsets = [0, 256], sizes = [8, 128], strides = [1, 1]} : vector<8x512xf32> to vector<8x128xf32>
    %179 = math.tanh %178 : vector<8x128xf32>
    %180 = vector.extract_strided_slice %165 {offsets = [0, 384], sizes = [8, 128], strides = [1, 1]} : vector<8x512xf32> to vector<8x128xf32>
    %181 = arith.negf %180 : vector<8x128xf32>
    %182 = math.exp %181 : vector<8x128xf32>
    %cst_56 = arith.constant 1.000000e+00 : f32
    %183 = vector.broadcast %cst_56 : f32 to vector<8x128xf32>
    %184 = arith.addf %183, %182 : vector<8x128xf32>
    %185 = arith.divf %183, %184 : vector<8x128xf32>
    %186 = arith.mulf %177, %153 : vector<8x128xf32>
    %187 = arith.mulf %171, %179 : vector<8x128xf32>
    %188 = arith.addf %186, %187 : vector<8x128xf32>
    %189 = math.tanh %188 : vector<8x128xf32>
    %190 = arith.mulf %185, %189 : vector<8x128xf32>
    %191 = arith.truncf %190 : vector<8x128xf32> to vector<8x128xbf16>
    %192 = arith.index_cast %160 : i32 to index
    %c0_57 = arith.constant 0 : index
    %193 = vector.load %arg13[%192, %c0_57] : memref<64x128xbf16, #tpu.memory_space<vmem>>, vector<8x128xbf16>
    tpu.vector_store %arg13[%192, %c0_57], %191 {strides = array<i32>} : memref<64x128xbf16, #tpu.memory_space<vmem>>, vector<8x128xbf16>,
    %c5_i32 = arith.constant 5 : i32
    %c8_i32_58 = arith.constant 8 : i32
    %194 = arith.muli %c5_i32, %c8_i32_58 : i32
    %195 = tpu.assume_multiple %194, 8 : i32
    %196 = arith.index_cast %195 : i32 to index
    %c0_59 = arith.constant 0 : index
    %197 = vector.load %arg12[%196, %c0_59] : memref<64x512xf32, #tpu.memory_space<vmem>>, vector<8x512xf32>
    %c0_60 = arith.constant 0 : index
    %c0_61 = arith.constant 0 : index
    %198 = vector.load %arg2[%c0_60, %c0_61] : memref<128x512xbf16, #tpu.memory_space<vmem>>, vector<128x512xbf16>
    %cst_62 = arith.constant dense<0.000000e+00> : vector<8x512xf32>
    %199 = tpu.matmul %191, %198, %cst_62 {dimension_numbers = #tpu.dot_dimension_numbers<[1], [0], [0], [1], [0, 0, 1, 1], [], []>} : vector<8x128xbf16>, vector<128x512xbf16>, vector<8x512xf32> -> vector<8x512xf32>
    %200 = arith.addf %197, %199 : vector<8x512xf32>
    %201 = vector.extract_strided_slice %200 {offsets = [0, 0], sizes = [8, 128], strides = [1, 1]} : vector<8x512xf32> to vector<8x128xf32>
    %202 = arith.negf %201 : vector<8x128xf32>
    %203 = math.exp %202 : vector<8x128xf32>
    %cst_63 = arith.constant 1.000000e+00 : f32
    %204 = vector.broadcast %cst_63 : f32 to vector<8x128xf32>
    %205 = arith.addf %204, %203 : vector<8x128xf32>
    %206 = arith.divf %204, %205 : vector<8x128xf32>
    %207 = vector.extract_strided_slice %200 {offsets = [0, 128], sizes = [8, 128], strides = [1, 1]} : vector<8x512xf32> to vector<8x128xf32>
    %208 = arith.negf %207 : vector<8x128xf32>
    %209 = math.exp %208 : vector<8x128xf32>
    %cst_64 = arith.constant 1.000000e+00 : f32
    %210 = vector.broadcast %cst_64 : f32 to vector<8x128xf32>
    %211 = arith.addf %210, %209 : vector<8x128xf32>
    %212 = arith.divf %210, %211 : vector<8x128xf32>
    %213 = vector.extract_strided_slice %200 {offsets = [0, 256], sizes = [8, 128], strides = [1, 1]} : vector<8x512xf32> to vector<8x128xf32>
    %214 = math.tanh %213 : vector<8x128xf32>
    %215 = vector.extract_strided_slice %200 {offsets = [0, 384], sizes = [8, 128], strides = [1, 1]} : vector<8x512xf32> to vector<8x128xf32>
    %216 = arith.negf %215 : vector<8x128xf32>
    %217 = math.exp %216 : vector<8x128xf32>
    %cst_65 = arith.constant 1.000000e+00 : f32
    %218 = vector.broadcast %cst_65 : f32 to vector<8x128xf32>
    %219 = arith.addf %218, %217 : vector<8x128xf32>
    %220 = arith.divf %218, %219 : vector<8x128xf32>
    %221 = arith.mulf %212, %188 : vector<8x128xf32>
    %222 = arith.mulf %206, %214 : vector<8x128xf32>
    %223 = arith.addf %221, %222 : vector<8x128xf32>
    %224 = math.tanh %223 : vector<8x128xf32>
    %225 = arith.mulf %220, %224 : vector<8x128xf32>
    %226 = arith.truncf %225 : vector<8x128xf32> to vector<8x128xbf16>
    %227 = arith.index_cast %195 : i32 to index
    %c0_66 = arith.constant 0 : index
    %228 = vector.load %arg13[%227, %c0_66] : memref<64x128xbf16, #tpu.memory_space<vmem>>, vector<8x128xbf16>
    tpu.vector_store %arg13[%227, %c0_66], %226 {strides = array<i32>} : memref<64x128xbf16, #tpu.memory_space<vmem>>, vector<8x128xbf16>,
    %c6_i32 = arith.constant 6 : i32
    %c8_i32_67 = arith.constant 8 : i32
    %229 = arith.muli %c6_i32, %c8_i32_67 : i32
    %230 = tpu.assume_multiple %229, 8 : i32
    %231 = arith.index_cast %230 : i32 to index
    %c0_68 = arith.constant 0 : index
    %232 = vector.load %arg12[%231, %c0_68] : memref<64x512xf32, #tpu.memory_space<vmem>>, vector<8x512xf32>
    %c0_69 = arith.constant 0 : index
    %c0_70 = arith.constant 0 : index
    %233 = vector.load %arg2[%c0_69, %c0_70] : memref<128x512xbf16, #tpu.memory_space<vmem>>, vector<128x512xbf16>
    %cst_71 = arith.constant dense<0.000000e+00> : vector<8x512xf32>
    %234 = tpu.matmul %226, %233, %cst_71 {dimension_numbers = #tpu.dot_dimension_numbers<[1], [0], [0], [1], [0, 0, 1, 1], [], []>} : vector<8x128xbf16>, vector<128x512xbf16>, vector<8x512xf32> -> vector<8x512xf32>
    %235 = arith.addf %232, %234 : vector<8x512xf32>
    %236 = vector.extract_strided_slice %235 {offsets = [0, 0], sizes = [8, 128], strides = [1, 1]} : vector<8x512xf32> to vector<8x128xf32>
    %237 = arith.negf %236 : vector<8x128xf32>
    %238 = math.exp %237 : vector<8x128xf32>
    %cst_72 = arith.constant 1.000000e+00 : f32
    %239 = vector.broadcast %cst_72 : f32 to vector<8x128xf32>
    %240 = arith.addf %239, %238 : vector<8x128xf32>
    %241 = arith.divf %239, %240 : vector<8x128xf32>
    %242 = vector.extract_strided_slice %235 {offsets = [0, 128], sizes = [8, 128], strides = [1, 1]} : vector<8x512xf32> to vector<8x128xf32>
    %243 = arith.negf %242 : vector<8x128xf32>
    %244 = math.exp %243 : vector<8x128xf32>
    %cst_73 = arith.constant 1.000000e+00 : f32
    %245 = vector.broadcast %cst_73 : f32 to vector<8x128xf32>
    %246 = arith.addf %245, %244 : vector<8x128xf32>
    %247 = arith.divf %245, %246 : vector<8x128xf32>
    %248 = vector.extract_strided_slice %235 {offsets = [0, 256], sizes = [8, 128], strides = [1, 1]} : vector<8x512xf32> to vector<8x128xf32>
    %249 = math.tanh %248 : vector<8x128xf32>
    %250 = vector.extract_strided_slice %235 {offsets = [0, 384], sizes = [8, 128], strides = [1, 1]} : vector<8x512xf32> to vector<8x128xf32>
    %251 = arith.negf %250 : vector<8x128xf32>
    %252 = math.exp %251 : vector<8x128xf32>
    %cst_74 = arith.constant 1.000000e+00 : f32
    %253 = vector.broadcast %cst_74 : f32 to vector<8x128xf32>
    %254 = arith.addf %253, %252 : vector<8x128xf32>
    %255 = arith.divf %253, %254 : vector<8x128xf32>
    %256 = arith.mulf %247, %223 : vector<8x128xf32>
    %257 = arith.mulf %241, %249 : vector<8x128xf32>
    %258 = arith.addf %256, %257 : vector<8x128xf32>
    %259 = math.tanh %258 : vector<8x128xf32>
    %260 = arith.mulf %255, %259 : vector<8x128xf32>
    %261 = arith.truncf %260 : vector<8x128xf32> to vector<8x128xbf16>
    %262 = arith.index_cast %230 : i32 to index
    %c0_75 = arith.constant 0 : index
    %263 = vector.load %arg13[%262, %c0_75] : memref<64x128xbf16, #tpu.memory_space<vmem>>, vector<8x128xbf16>
    tpu.vector_store %arg13[%262, %c0_75], %261 {strides = array<i32>} : memref<64x128xbf16, #tpu.memory_space<vmem>>, vector<8x128xbf16>,
    %c7_i32 = arith.constant 7 : i32
    %c8_i32_76 = arith.constant 8 : i32
    %264 = arith.muli %c7_i32, %c8_i32_76 : i32
    %265 = tpu.assume_multiple %264, 8 : i32
    %266 = arith.index_cast %265 : i32 to index
    %c0_77 = arith.constant 0 : index
    %267 = vector.load %arg12[%266, %c0_77] : memref<64x512xf32, #tpu.memory_space<vmem>>, vector<8x512xf32>
    %c0_78 = arith.constant 0 : index
    %c0_79 = arith.constant 0 : index
    %268 = vector.load %arg2[%c0_78, %c0_79] : memref<128x512xbf16, #tpu.memory_space<vmem>>, vector<128x512xbf16>
    %cst_80 = arith.constant dense<0.000000e+00> : vector<8x512xf32>
    %269 = tpu.matmul %261, %268, %cst_80 {dimension_numbers = #tpu.dot_dimension_numbers<[1], [0], [0], [1], [0, 0, 1, 1], [], []>} : vector<8x128xbf16>, vector<128x512xbf16>, vector<8x512xf32> -> vector<8x512xf32>
    %270 = arith.addf %267, %269 : vector<8x512xf32>
    %271 = vector.extract_strided_slice %270 {offsets = [0, 0], sizes = [8, 128], strides = [1, 1]} : vector<8x512xf32> to vector<8x128xf32>
    %272 = arith.negf %271 : vector<8x128xf32>
    %273 = math.exp %272 : vector<8x128xf32>
    %cst_81 = arith.constant 1.000000e+00 : f32
    %274 = vector.broadcast %cst_81 : f32 to vector<8x128xf32>
    %275 = arith.addf %274, %273 : vector<8x128xf32>
    %276 = arith.divf %274, %275 : vector<8x128xf32>
    %277 = vector.extract_strided_slice %270 {offsets = [0, 128], sizes = [8, 128], strides = [1, 1]} : vector<8x512xf32> to vector<8x128xf32>
    %278 = arith.negf %277 : vector<8x128xf32>
    %279 = math.exp %278 : vector<8x128xf32>
    %cst_82 = arith.constant 1.000000e+00 : f32
    %280 = vector.broadcast %cst_82 : f32 to vector<8x128xf32>
    %281 = arith.addf %280, %279 : vector<8x128xf32>
    %282 = arith.divf %280, %281 : vector<8x128xf32>
    %283 = vector.extract_strided_slice %270 {offsets = [0, 256], sizes = [8, 128], strides = [1, 1]} : vector<8x512xf32> to vector<8x128xf32>
    %284 = math.tanh %283 : vector<8x128xf32>
    %285 = vector.extract_strided_slice %270 {offsets = [0, 384], sizes = [8, 128], strides = [1, 1]} : vector<8x512xf32> to vector<8x128xf32>
    %286 = arith.negf %285 : vector<8x128xf32>
    %287 = math.exp %286 : vector<8x128xf32>
    %cst_83 = arith.constant 1.000000e+00 : f32
    %288 = vector.broadcast %cst_83 : f32 to vector<8x128xf32>
    %289 = arith.addf %288, %287 : vector<8x128xf32>
    %290 = arith.divf %288, %289 : vector<8x128xf32>
    %291 = arith.mulf %282, %258 : vector<8x128xf32>
    %292 = arith.mulf %276, %284 : vector<8x128xf32>
    %293 = arith.addf %291, %292 : vector<8x128xf32>
    %294 = math.tanh %293 : vector<8x128xf32>
    %295 = arith.mulf %290, %294 : vector<8x128xf32>
    %296 = arith.truncf %295 : vector<8x128xf32> to vector<8x128xbf16>
    %297 = arith.index_cast %265 : i32 to index
    %c0_84 = arith.constant 0 : index
    %298 = vector.load %arg13[%297, %c0_84] : memref<64x128xbf16, #tpu.memory_space<vmem>>, vector<8x128xbf16>
    tpu.vector_store %arg13[%297, %c0_84], %296 {strides = array<i32>} : memref<64x128xbf16, #tpu.memory_space<vmem>>, vector<8x128xbf16>,
    %c8_i32_85 = arith.constant 8 : i32
    %c0_i32_86 = arith.constant 0 : i32
    %299 = tpu.memref_slice %arg19[%c0_i32_86] : memref<5x!tpu.dma_semaphore, #tpu.memory_space<semaphore_mem>> -> memref<1x!tpu.dma_semaphore, #tpu.memory_space<semaphore_mem>>
    %300 = tpu.memref_squeeze %299 : memref<1x!tpu.dma_semaphore, #tpu.memory_space<semaphore_mem>> -> memref<!tpu.dma_semaphore, #tpu.memory_space<semaphore_mem>>
    tpu.wait_dma2 semaphore(%300 : memref<!tpu.dma_semaphore, #tpu.memory_space<semaphore_mem>>) src(%arg6 : memref<2x128x512xbf16, #tpu.memory_space<any>>) dst(%arg14 : memref<2x128x512xbf16, #tpu.memory_space<vmem>>)
    %c1_i32_87 = arith.constant 1 : i32
    %301 = tpu.memref_slice %arg19[%c1_i32_87] : memref<5x!tpu.dma_semaphore, #tpu.memory_space<semaphore_mem>> -> memref<1x!tpu.dma_semaphore, #tpu.memory_space<semaphore_mem>>
    %302 = tpu.memref_squeeze %301 : memref<1x!tpu.dma_semaphore, #tpu.memory_space<semaphore_mem>> -> memref<!tpu.dma_semaphore, #tpu.memory_space<semaphore_mem>>
    tpu.wait_dma2 semaphore(%302 : memref<!tpu.dma_semaphore, #tpu.memory_space<semaphore_mem>>) src(%arg7 : memref<2x128x512xbf16, #tpu.memory_space<any>>) dst(%arg15 : memref<2x128x512xbf16, #tpu.memory_space<vmem>>)
    %c0_88 = arith.constant 0 : index
    %c0_89 = arith.constant 0 : index
    %303 = vector.load %arg13[%c0_88, %c0_89] : memref<64x128xbf16, #tpu.memory_space<vmem>>, vector<64x128xbf16>
    %c0_90 = arith.constant 0 : index
    %c0_91 = arith.constant 0 : index
    %c0_92 = arith.constant 0 : index
    %304 = vector.load %arg14[%c0_90, %c0_91, %c0_92] : memref<2x128x512xbf16, #tpu.memory_space<vmem>>, vector<1x128x512xbf16>
    %305 = vector.shape_cast %304 : vector<1x128x512xbf16> to vector<128x512xbf16>
    %c1 = arith.constant 1 : index
    %c0_93 = arith.constant 0 : index
    %306 = vector.load %arg3[%c1, %c0_93] : memref<3x512xf32, #tpu.memory_space<vmem>>, vector<1x512xf32>
    %cst_94 = arith.constant dense<0.000000e+00> : vector<64x512xf32>
    %307 = tpu.matmul %303, %305, %cst_94 {dimension_numbers = #tpu.dot_dimension_numbers<[1], [0], [0], [1], [0, 0, 1, 1], [], []>} : vector<64x128xbf16>, vector<128x512xbf16>, vector<64x512xf32> -> vector<64x512xf32>
    %308 = vector.broadcast %306 : vector<1x512xf32> to vector<64x512xf32>
    %309 = arith.addf %307, %308 : vector<64x512xf32>
    %c0_95 = arith.constant 0 : index
    %c0_96 = arith.constant 0 : index
    %310 = vector.load %arg12[%c0_95, %c0_96] : memref<64x512xf32, #tpu.memory_space<vmem>>, vector<64x512xf32>
    tpu.vector_store %arg12[%c0_95, %c0_96], %309 {strides = array<i32>} : memref<64x512xf32, #tpu.memory_space<vmem>>, vector<64x512xf32>,
    %cst_97 = arith.constant 0.000000e+00 : bf16
    %311 = vector.broadcast %cst_97 : bf16 to vector<8x128xbf16>
    %cst_98 = arith.constant 0.000000e+00 : f32
    %312 = vector.broadcast %cst_98 : f32 to vector<8x128xf32>
    %c0_i32_99 = arith.constant 0 : i32
    %c0_i32_100 = arith.constant 0 : i32
    %c8_i32_101 = arith.constant 8 : i32
    %313 = arith.muli %c0_i32_100, %c8_i32_101 : i32
    %314 = tpu.assume_multiple %313, 8 : i32
    %315 = arith.index_cast %314 : i32 to index
    %c0_102 = arith.constant 0 : index
    %316 = vector.load %arg12[%315, %c0_102] : memref<64x512xf32, #tpu.memory_space<vmem>>, vector<8x512xf32>
    %317 = arith.index_cast %c0_i32_99 : i32 to index
    %c0_103 = arith.constant 0 : index
    %c0_104 = arith.constant 0 : index
    %318 = vector.load %arg15[%317, %c0_103, %c0_104] : memref<2x128x512xbf16, #tpu.memory_space<vmem>>, vector<1x128x512xbf16>
    %319 = vector.shape_cast %318 : vector<1x128x512xbf16> to vector<128x512xbf16>
    %cst_105 = arith.constant dense<0.000000e+00> : vector<8x512xf32>
    %320 = tpu.matmul %311, %319, %cst_105 {dimension_numbers = #tpu.dot_dimension_numbers<[1], [0], [0], [1], [0, 0, 1, 1], [], []>} : vector<8x128xbf16>, vector<128x512xbf16>, vector<8x512xf32> -> vector<8x512xf32>
    %321 = arith.addf %316, %320 : vector<8x512xf32>
    %322 = vector.extract_strided_slice %321 {offsets = [0, 0], sizes = [8, 128], strides = [1, 1]} : vector<8x512xf32> to vector<8x128xf32>
    %323 = arith.negf %322 : vector<8x128xf32>
    %324 = math.exp %323 : vector<8x128xf32>
    %cst_106 = arith.constant 1.000000e+00 : f32
    %325 = vector.broadcast %cst_106 : f32 to vector<8x128xf32>
    %326 = arith.addf %325, %324 : vector<8x128xf32>
    %327 = arith.divf %325, %326 : vector<8x128xf32>
    %328 = vector.extract_strided_slice %321 {offsets = [0, 128], sizes = [8, 128], strides = [1, 1]} : vector<8x512xf32> to vector<8x128xf32>
    %329 = arith.negf %328 : vector<8x128xf32>
    %330 = math.exp %329 : vector<8x128xf32>
    %cst_107 = arith.constant 1.000000e+00 : f32
    %331 = vector.broadcast %cst_107 : f32 to vector<8x128xf32>
    %332 = arith.addf %331, %330 : vector<8x128xf32>
    %333 = arith.divf %331, %332 : vector<8x128xf32>
    %334 = vector.extract_strided_slice %321 {offsets = [0, 256], sizes = [8, 128], strides = [1, 1]} : vector<8x512xf32> to vector<8x128xf32>
    %335 = math.tanh %334 : vector<8x128xf32>
    %336 = vector.extract_strided_slice %321 {offsets = [0, 384], sizes = [8, 128], strides = [1, 1]} : vector<8x512xf32> to vector<8x128xf32>
    %337 = arith.negf %336 : vector<8x128xf32>
    %338 = math.exp %337 : vector<8x128xf32>
    %cst_108 = arith.constant 1.000000e+00 : f32
    %339 = vector.broadcast %cst_108 : f32 to vector<8x128xf32>
    %340 = arith.addf %339, %338 : vector<8x128xf32>
    %341 = arith.divf %339, %340 : vector<8x128xf32>
    %342 = arith.mulf %333, %312 : vector<8x128xf32>
    %343 = arith.mulf %327, %335 : vector<8x128xf32>
    %344 = arith.addf %342, %343 : vector<8x128xf32>
    %345 = math.tanh %344 : vector<8x128xf32>
    %346 = arith.mulf %341, %345 : vector<8x128xf32>
    %347 = arith.truncf %346 : vector<8x128xf32> to vector<8x128xbf16>
    %348 = arith.index_cast %314 : i32 to index
    %c0_109 = arith.constant 0 : index
    %349 = vector.load %arg13[%348, %c0_109] : memref<64x128xbf16, #tpu.memory_space<vmem>>, vector<8x128xbf16>
    tpu.vector_store %arg13[%348, %c0_109], %347 {strides = array<i32>} : memref<64x128xbf16, #tpu.memory_space<vmem>>, vector<8x128xbf16>,
    %c1_i32_110 = arith.constant 1 : i32
    %c8_i32_111 = arith.constant 8 : i32
    %350 = arith.muli %c1_i32_110, %c8_i32_111 : i32
    %351 = tpu.assume_multiple %350, 8 : i32
    %352 = arith.index_cast %351 : i32 to index
    %c0_112 = arith.constant 0 : index
    %353 = vector.load %arg12[%352, %c0_112] : memref<64x512xf32, #tpu.memory_space<vmem>>, vector<8x512xf32>
    %354 = arith.index_cast %c0_i32_99 : i32 to index
    %c0_113 = arith.constant 0 : index
    %c0_114 = arith.constant 0 : index
    %355 = vector.load %arg15[%354, %c0_113, %c0_114] : memref<2x128x512xbf16, #tpu.memory_space<vmem>>, vector<1x128x512xbf16>
    %356 = vector.shape_cast %355 : vector<1x128x512xbf16> to vector<128x512xbf16>
    %cst_115 = arith.constant dense<0.000000e+00> : vector<8x512xf32>
    %357 = tpu.matmul %347, %356, %cst_115 {dimension_numbers = #tpu.dot_dimension_numbers<[1], [0], [0], [1], [0, 0, 1, 1], [], []>} : vector<8x128xbf16>, vector<128x512xbf16>, vector<8x512xf32> -> vector<8x512xf32>
    %358 = arith.addf %353, %357 : vector<8x512xf32>
    %359 = vector.extract_strided_slice %358 {offsets = [0, 0], sizes = [8, 128], strides = [1, 1]} : vector<8x512xf32> to vector<8x128xf32>
    %360 = arith.negf %359 : vector<8x128xf32>
    %361 = math.exp %360 : vector<8x128xf32>
    %cst_116 = arith.constant 1.000000e+00 : f32
    %362 = vector.broadcast %cst_116 : f32 to vector<8x128xf32>
    %363 = arith.addf %362, %361 : vector<8x128xf32>
    %364 = arith.divf %362, %363 : vector<8x128xf32>
    %365 = vector.extract_strided_slice %358 {offsets = [0, 128], sizes = [8, 128], strides = [1, 1]} : vector<8x512xf32> to vector<8x128xf32>
    %366 = arith.negf %365 : vector<8x128xf32>
    %367 = math.exp %366 : vector<8x128xf32>
    %cst_117 = arith.constant 1.000000e+00 : f32
    %368 = vector.broadcast %cst_117 : f32 to vector<8x128xf32>
    %369 = arith.addf %368, %367 : vector<8x128xf32>
    %370 = arith.divf %368, %369 : vector<8x128xf32>
    %371 = vector.extract_strided_slice %358 {offsets = [0, 256], sizes = [8, 128], strides = [1, 1]} : vector<8x512xf32> to vector<8x128xf32>
    %372 = math.tanh %371 : vector<8x128xf32>
    %373 = vector.extract_strided_slice %358 {offsets = [0, 384], sizes = [8, 128], strides = [1, 1]} : vector<8x512xf32> to vector<8x128xf32>
    %374 = arith.negf %373 : vector<8x128xf32>
    %375 = math.exp %374 : vector<8x128xf32>
    %cst_118 = arith.constant 1.000000e+00 : f32
    %376 = vector.broadcast %cst_118 : f32 to vector<8x128xf32>
    %377 = arith.addf %376, %375 : vector<8x128xf32>
    %378 = arith.divf %376, %377 : vector<8x128xf32>
    %379 = arith.mulf %370, %344 : vector<8x128xf32>
    %380 = arith.mulf %364, %372 : vector<8x128xf32>
    %381 = arith.addf %379, %380 : vector<8x128xf32>
    %382 = math.tanh %381 : vector<8x128xf32>
    %383 = arith.mulf %378, %382 : vector<8x128xf32>
    %384 = arith.truncf %383 : vector<8x128xf32> to vector<8x128xbf16>
    %385 = arith.index_cast %351 : i32 to index
    %c0_119 = arith.constant 0 : index
    %386 = vector.load %arg13[%385, %c0_119] : memref<64x128xbf16, #tpu.memory_space<vmem>>, vector<8x128xbf16>
    tpu.vector_store %arg13[%385, %c0_119], %384 {strides = array<i32>} : memref<64x128xbf16, #tpu.memory_space<vmem>>, vector<8x128xbf16>,
    %c2_i32_120 = arith.constant 2 : i32
    %c8_i32_121 = arith.constant 8 : i32
    %387 = arith.muli %c2_i32_120, %c8_i32_121 : i32
    %388 = tpu.assume_multiple %387, 8 : i32
    %389 = arith.index_cast %388 : i32 to index
    %c0_122 = arith.constant 0 : index
    %390 = vector.load %arg12[%389, %c0_122] : memref<64x512xf32, #tpu.memory_space<vmem>>, vector<8x512xf32>
    %391 = arith.index_cast %c0_i32_99 : i32 to index
    %c0_123 = arith.constant 0 : index
    %c0_124 = arith.constant 0 : index
    %392 = vector.load %arg15[%391, %c0_123, %c0_124] : memref<2x128x512xbf16, #tpu.memory_space<vmem>>, vector<1x128x512xbf16>
    %393 = vector.shape_cast %392 : vector<1x128x512xbf16> to vector<128x512xbf16>
    %cst_125 = arith.constant dense<0.000000e+00> : vector<8x512xf32>
    %394 = tpu.matmul %384, %393, %cst_125 {dimension_numbers = #tpu.dot_dimension_numbers<[1], [0], [0], [1], [0, 0, 1, 1], [], []>} : vector<8x128xbf16>, vector<128x512xbf16>, vector<8x512xf32> -> vector<8x512xf32>
    %395 = arith.addf %390, %394 : vector<8x512xf32>
    %396 = vector.extract_strided_slice %395 {offsets = [0, 0], sizes = [8, 128], strides = [1, 1]} : vector<8x512xf32> to vector<8x128xf32>
    %397 = arith.negf %396 : vector<8x128xf32>
    %398 = math.exp %397 : vector<8x128xf32>
    %cst_126 = arith.constant 1.000000e+00 : f32
    %399 = vector.broadcast %cst_126 : f32 to vector<8x128xf32>
    %400 = arith.addf %399, %398 : vector<8x128xf32>
    %401 = arith.divf %399, %400 : vector<8x128xf32>
    %402 = vector.extract_strided_slice %395 {offsets = [0, 128], sizes = [8, 128], strides = [1, 1]} : vector<8x512xf32> to vector<8x128xf32>
    %403 = arith.negf %402 : vector<8x128xf32>
    %404 = math.exp %403 : vector<8x128xf32>
    %cst_127 = arith.constant 1.000000e+00 : f32
    %405 = vector.broadcast %cst_127 : f32 to vector<8x128xf32>
    %406 = arith.addf %405, %404 : vector<8x128xf32>
    %407 = arith.divf %405, %406 : vector<8x128xf32>
    %408 = vector.extract_strided_slice %395 {offsets = [0, 256], sizes = [8, 128], strides = [1, 1]} : vector<8x512xf32> to vector<8x128xf32>
    %409 = math.tanh %408 : vector<8x128xf32>
    %410 = vector.extract_strided_slice %395 {offsets = [0, 384], sizes = [8, 128], strides = [1, 1]} : vector<8x512xf32> to vector<8x128xf32>
    %411 = arith.negf %410 : vector<8x128xf32>
    %412 = math.exp %411 : vector<8x128xf32>
    %cst_128 = arith.constant 1.000000e+00 : f32
    %413 = vector.broadcast %cst_128 : f32 to vector<8x128xf32>
    %414 = arith.addf %413, %412 : vector<8x128xf32>
    %415 = arith.divf %413, %414 : vector<8x128xf32>
    %416 = arith.mulf %407, %381 : vector<8x128xf32>
    %417 = arith.mulf %401, %409 : vector<8x128xf32>
    %418 = arith.addf %416, %417 : vector<8x128xf32>
    %419 = math.tanh %418 : vector<8x128xf32>
    %420 = arith.mulf %415, %419 : vector<8x128xf32>
    %421 = arith.truncf %420 : vector<8x128xf32> to vector<8x128xbf16>
    %422 = arith.index_cast %388 : i32 to index
    %c0_129 = arith.constant 0 : index
    %423 = vector.load %arg13[%422, %c0_129] : memref<64x128xbf16, #tpu.memory_space<vmem>>, vector<8x128xbf16>
    tpu.vector_store %arg13[%422, %c0_129], %421 {strides = array<i32>} : memref<64x128xbf16, #tpu.memory_space<vmem>>, vector<8x128xbf16>,
    %c3_i32_130 = arith.constant 3 : i32
    %c8_i32_131 = arith.constant 8 : i32
    %424 = arith.muli %c3_i32_130, %c8_i32_131 : i32
    %425 = tpu.assume_multiple %424, 8 : i32
    %426 = arith.index_cast %425 : i32 to index
    %c0_132 = arith.constant 0 : index
    %427 = vector.load %arg12[%426, %c0_132] : memref<64x512xf32, #tpu.memory_space<vmem>>, vector<8x512xf32>
    %428 = arith.index_cast %c0_i32_99 : i32 to index
    %c0_133 = arith.constant 0 : index
    %c0_134 = arith.constant 0 : index
    %429 = vector.load %arg15[%428, %c0_133, %c0_134] : memref<2x128x512xbf16, #tpu.memory_space<vmem>>, vector<1x128x512xbf16>
    %430 = vector.shape_cast %429 : vector<1x128x512xbf16> to vector<128x512xbf16>
    %cst_135 = arith.constant dense<0.000000e+00> : vector<8x512xf32>
    %431 = tpu.matmul %421, %430, %cst_135 {dimension_numbers = #tpu.dot_dimension_numbers<[1], [0], [0], [1], [0, 0, 1, 1], [], []>} : vector<8x128xbf16>, vector<128x512xbf16>, vector<8x512xf32> -> vector<8x512xf32>
    %432 = arith.addf %427, %431 : vector<8x512xf32>
    %433 = vector.extract_strided_slice %432 {offsets = [0, 0], sizes = [8, 128], strides = [1, 1]} : vector<8x512xf32> to vector<8x128xf32>
    %434 = arith.negf %433 : vector<8x128xf32>
    %435 = math.exp %434 : vector<8x128xf32>
    %cst_136 = arith.constant 1.000000e+00 : f32
    %436 = vector.broadcast %cst_136 : f32 to vector<8x128xf32>
    %437 = arith.addf %436, %435 : vector<8x128xf32>
    %438 = arith.divf %436, %437 : vector<8x128xf32>
    %439 = vector.extract_strided_slice %432 {offsets = [0, 128], sizes = [8, 128], strides = [1, 1]} : vector<8x512xf32> to vector<8x128xf32>
    %440 = arith.negf %439 : vector<8x128xf32>
    %441 = math.exp %440 : vector<8x128xf32>
    %cst_137 = arith.constant 1.000000e+00 : f32
    %442 = vector.broadcast %cst_137 : f32 to vector<8x128xf32>
    %443 = arith.addf %442, %441 : vector<8x128xf32>
    %444 = arith.divf %442, %443 : vector<8x128xf32>
    %445 = vector.extract_strided_slice %432 {offsets = [0, 256], sizes = [8, 128], strides = [1, 1]} : vector<8x512xf32> to vector<8x128xf32>
    %446 = math.tanh %445 : vector<8x128xf32>
    %447 = vector.extract_strided_slice %432 {offsets = [0, 384], sizes = [8, 128], strides = [1, 1]} : vector<8x512xf32> to vector<8x128xf32>
    %448 = arith.negf %447 : vector<8x128xf32>
    %449 = math.exp %448 : vector<8x128xf32>
    %cst_138 = arith.constant 1.000000e+00 : f32
    %450 = vector.broadcast %cst_138 : f32 to vector<8x128xf32>
    %451 = arith.addf %450, %449 : vector<8x128xf32>
    %452 = arith.divf %450, %451 : vector<8x128xf32>
    %453 = arith.mulf %444, %418 : vector<8x128xf32>
    %454 = arith.mulf %438, %446 : vector<8x128xf32>
    %455 = arith.addf %453, %454 : vector<8x128xf32>
    %456 = math.tanh %455 : vector<8x128xf32>
    %457 = arith.mulf %452, %456 : vector<8x128xf32>
    %458 = arith.truncf %457 : vector<8x128xf32> to vector<8x128xbf16>
    %459 = arith.index_cast %425 : i32 to index
    %c0_139 = arith.constant 0 : index
    %460 = vector.load %arg13[%459, %c0_139] : memref<64x128xbf16, #tpu.memory_space<vmem>>, vector<8x128xbf16>
    tpu.vector_store %arg13[%459, %c0_139], %458 {strides = array<i32>} : memref<64x128xbf16, #tpu.memory_space<vmem>>, vector<8x128xbf16>,
    %c4_i32_140 = arith.constant 4 : i32
    %c8_i32_141 = arith.constant 8 : i32
    %461 = arith.muli %c4_i32_140, %c8_i32_141 : i32
    %462 = tpu.assume_multiple %461, 8 : i32
    %463 = arith.index_cast %462 : i32 to index
    %c0_142 = arith.constant 0 : index
    %464 = vector.load %arg12[%463, %c0_142] : memref<64x512xf32, #tpu.memory_space<vmem>>, vector<8x512xf32>
    %465 = arith.index_cast %c0_i32_99 : i32 to index
    %c0_143 = arith.constant 0 : index
    %c0_144 = arith.constant 0 : index
    %466 = vector.load %arg15[%465, %c0_143, %c0_144] : memref<2x128x512xbf16, #tpu.memory_space<vmem>>, vector<1x128x512xbf16>
    %467 = vector.shape_cast %466 : vector<1x128x512xbf16> to vector<128x512xbf16>
    %cst_145 = arith.constant dense<0.000000e+00> : vector<8x512xf32>
    %468 = tpu.matmul %458, %467, %cst_145 {dimension_numbers = #tpu.dot_dimension_numbers<[1], [0], [0], [1], [0, 0, 1, 1], [], []>} : vector<8x128xbf16>, vector<128x512xbf16>, vector<8x512xf32> -> vector<8x512xf32>
    %469 = arith.addf %464, %468 : vector<8x512xf32>
    %470 = vector.extract_strided_slice %469 {offsets = [0, 0], sizes = [8, 128], strides = [1, 1]} : vector<8x512xf32> to vector<8x128xf32>
    %471 = arith.negf %470 : vector<8x128xf32>
    %472 = math.exp %471 : vector<8x128xf32>
    %cst_146 = arith.constant 1.000000e+00 : f32
    %473 = vector.broadcast %cst_146 : f32 to vector<8x128xf32>
    %474 = arith.addf %473, %472 : vector<8x128xf32>
    %475 = arith.divf %473, %474 : vector<8x128xf32>
    %476 = vector.extract_strided_slice %469 {offsets = [0, 128], sizes = [8, 128], strides = [1, 1]} : vector<8x512xf32> to vector<8x128xf32>
    %477 = arith.negf %476 : vector<8x128xf32>
    %478 = math.exp %477 : vector<8x128xf32>
    %cst_147 = arith.constant 1.000000e+00 : f32
    %479 = vector.broadcast %cst_147 : f32 to vector<8x128xf32>
    %480 = arith.addf %479, %478 : vector<8x128xf32>
    %481 = arith.divf %479, %480 : vector<8x128xf32>
    %482 = vector.extract_strided_slice %469 {offsets = [0, 256], sizes = [8, 128], strides = [1, 1]} : vector<8x512xf32> to vector<8x128xf32>
    %483 = math.tanh %482 : vector<8x128xf32>
    %484 = vector.extract_strided_slice %469 {offsets = [0, 384], sizes = [8, 128], strides = [1, 1]} : vector<8x512xf32> to vector<8x128xf32>
    %485 = arith.negf %484 : vector<8x128xf32>
    %486 = math.exp %485 : vector<8x128xf32>
    %cst_148 = arith.constant 1.000000e+00 : f32
    %487 = vector.broadcast %cst_148 : f32 to vector<8x128xf32>
    %488 = arith.addf %487, %486 : vector<8x128xf32>
    %489 = arith.divf %487, %488 : vector<8x128xf32>
    %490 = arith.mulf %481, %455 : vector<8x128xf32>
    %491 = arith.mulf %475, %483 : vector<8x128xf32>
    %492 = arith.addf %490, %491 : vector<8x128xf32>
    %493 = math.tanh %492 : vector<8x128xf32>
    %494 = arith.mulf %489, %493 : vector<8x128xf32>
    %495 = arith.truncf %494 : vector<8x128xf32> to vector<8x128xbf16>
    %496 = arith.index_cast %462 : i32 to index
    %c0_149 = arith.constant 0 : index
    %497 = vector.load %arg13[%496, %c0_149] : memref<64x128xbf16, #tpu.memory_space<vmem>>, vector<8x128xbf16>
    tpu.vector_store %arg13[%496, %c0_149], %495 {strides = array<i32>} : memref<64x128xbf16, #tpu.memory_space<vmem>>, vector<8x128xbf16>,
    %c5_i32_150 = arith.constant 5 : i32
    %c8_i32_151 = arith.constant 8 : i32
    %498 = arith.muli %c5_i32_150, %c8_i32_151 : i32
    %499 = tpu.assume_multiple %498, 8 : i32
    %500 = arith.index_cast %499 : i32 to index
    %c0_152 = arith.constant 0 : index
    %501 = vector.load %arg12[%500, %c0_152] : memref<64x512xf32, #tpu.memory_space<vmem>>, vector<8x512xf32>
    %502 = arith.index_cast %c0_i32_99 : i32 to index
    %c0_153 = arith.constant 0 : index
    %c0_154 = arith.constant 0 : index
    %503 = vector.load %arg15[%502, %c0_153, %c0_154] : memref<2x128x512xbf16, #tpu.memory_space<vmem>>, vector<1x128x512xbf16>
    %504 = vector.shape_cast %503 : vector<1x128x512xbf16> to vector<128x512xbf16>
    %cst_155 = arith.constant dense<0.000000e+00> : vector<8x512xf32>
    %505 = tpu.matmul %495, %504, %cst_155 {dimension_numbers = #tpu.dot_dimension_numbers<[1], [0], [0], [1], [0, 0, 1, 1], [], []>} : vector<8x128xbf16>, vector<128x512xbf16>, vector<8x512xf32> -> vector<8x512xf32>
    %506 = arith.addf %501, %505 : vector<8x512xf32>
    %507 = vector.extract_strided_slice %506 {offsets = [0, 0], sizes = [8, 128], strides = [1, 1]} : vector<8x512xf32> to vector<8x128xf32>
    %508 = arith.negf %507 : vector<8x128xf32>
    %509 = math.exp %508 : vector<8x128xf32>
    %cst_156 = arith.constant 1.000000e+00 : f32
    %510 = vector.broadcast %cst_156 : f32 to vector<8x128xf32>
    %511 = arith.addf %510, %509 : vector<8x128xf32>
    %512 = arith.divf %510, %511 : vector<8x128xf32>
    %513 = vector.extract_strided_slice %506 {offsets = [0, 128], sizes = [8, 128], strides = [1, 1]} : vector<8x512xf32> to vector<8x128xf32>
    %514 = arith.negf %513 : vector<8x128xf32>
    %515 = math.exp %514 : vector<8x128xf32>
    %cst_157 = arith.constant 1.000000e+00 : f32
    %516 = vector.broadcast %cst_157 : f32 to vector<8x128xf32>
    %517 = arith.addf %516, %515 : vector<8x128xf32>
    %518 = arith.divf %516, %517 : vector<8x128xf32>
    %519 = vector.extract_strided_slice %506 {offsets = [0, 256], sizes = [8, 128], strides = [1, 1]} : vector<8x512xf32> to vector<8x128xf32>
    %520 = math.tanh %519 : vector<8x128xf32>
    %521 = vector.extract_strided_slice %506 {offsets = [0, 384], sizes = [8, 128], strides = [1, 1]} : vector<8x512xf32> to vector<8x128xf32>
    %522 = arith.negf %521 : vector<8x128xf32>
    %523 = math.exp %522 : vector<8x128xf32>
    %cst_158 = arith.constant 1.000000e+00 : f32
    %524 = vector.broadcast %cst_158 : f32 to vector<8x128xf32>
    %525 = arith.addf %524, %523 : vector<8x128xf32>
    %526 = arith.divf %524, %525 : vector<8x128xf32>
    %527 = arith.mulf %518, %492 : vector<8x128xf32>
    %528 = arith.mulf %512, %520 : vector<8x128xf32>
    %529 = arith.addf %527, %528 : vector<8x128xf32>
    %530 = math.tanh %529 : vector<8x128xf32>
    %531 = arith.mulf %526, %530 : vector<8x128xf32>
    %532 = arith.truncf %531 : vector<8x128xf32> to vector<8x128xbf16>
    %533 = arith.index_cast %499 : i32 to index
    %c0_159 = arith.constant 0 : index
    %534 = vector.load %arg13[%533, %c0_159] : memref<64x128xbf16, #tpu.memory_space<vmem>>, vector<8x128xbf16>
    tpu.vector_store %arg13[%533, %c0_159], %532 {strides = array<i32>} : memref<64x128xbf16, #tpu.memory_space<vmem>>, vector<8x128xbf16>,
    %c6_i32_160 = arith.constant 6 : i32
    %c8_i32_161 = arith.constant 8 : i32
    %535 = arith.muli %c6_i32_160, %c8_i32_161 : i32
    %536 = tpu.assume_multiple %535, 8 : i32
    %537 = arith.index_cast %536 : i32 to index
    %c0_162 = arith.constant 0 : index
    %538 = vector.load %arg12[%537, %c0_162] : memref<64x512xf32, #tpu.memory_space<vmem>>, vector<8x512xf32>
    %539 = arith.index_cast %c0_i32_99 : i32 to index
    %c0_163 = arith.constant 0 : index
    %c0_164 = arith.constant 0 : index
    %540 = vector.load %arg15[%539, %c0_163, %c0_164] : memref<2x128x512xbf16, #tpu.memory_space<vmem>>, vector<1x128x512xbf16>
    %541 = vector.shape_cast %540 : vector<1x128x512xbf16> to vector<128x512xbf16>
    %cst_165 = arith.constant dense<0.000000e+00> : vector<8x512xf32>
    %542 = tpu.matmul %532, %541, %cst_165 {dimension_numbers = #tpu.dot_dimension_numbers<[1], [0], [0], [1], [0, 0, 1, 1], [], []>} : vector<8x128xbf16>, vector<128x512xbf16>, vector<8x512xf32> -> vector<8x512xf32>
    %543 = arith.addf %538, %542 : vector<8x512xf32>
    %544 = vector.extract_strided_slice %543 {offsets = [0, 0], sizes = [8, 128], strides = [1, 1]} : vector<8x512xf32> to vector<8x128xf32>
    %545 = arith.negf %544 : vector<8x128xf32>
    %546 = math.exp %545 : vector<8x128xf32>
    %cst_166 = arith.constant 1.000000e+00 : f32
    %547 = vector.broadcast %cst_166 : f32 to vector<8x128xf32>
    %548 = arith.addf %547, %546 : vector<8x128xf32>
    %549 = arith.divf %547, %548 : vector<8x128xf32>
    %550 = vector.extract_strided_slice %543 {offsets = [0, 128], sizes = [8, 128], strides = [1, 1]} : vector<8x512xf32> to vector<8x128xf32>
    %551 = arith.negf %550 : vector<8x128xf32>
    %552 = math.exp %551 : vector<8x128xf32>
    %cst_167 = arith.constant 1.000000e+00 : f32
    %553 = vector.broadcast %cst_167 : f32 to vector<8x128xf32>
    %554 = arith.addf %553, %552 : vector<8x128xf32>
    %555 = arith.divf %553, %554 : vector<8x128xf32>
    %556 = vector.extract_strided_slice %543 {offsets = [0, 256], sizes = [8, 128], strides = [1, 1]} : vector<8x512xf32> to vector<8x128xf32>
    %557 = math.tanh %556 : vector<8x128xf32>
    %558 = vector.extract_strided_slice %543 {offsets = [0, 384], sizes = [8, 128], strides = [1, 1]} : vector<8x512xf32> to vector<8x128xf32>
    %559 = arith.negf %558 : vector<8x128xf32>
    %560 = math.exp %559 : vector<8x128xf32>
    %cst_168 = arith.constant 1.000000e+00 : f32
    %561 = vector.broadcast %cst_168 : f32 to vector<8x128xf32>
    %562 = arith.addf %561, %560 : vector<8x128xf32>
    %563 = arith.divf %561, %562 : vector<8x128xf32>
    %564 = arith.mulf %555, %529 : vector<8x128xf32>
    %565 = arith.mulf %549, %557 : vector<8x128xf32>
    %566 = arith.addf %564, %565 : vector<8x128xf32>
    %567 = math.tanh %566 : vector<8x128xf32>
    %568 = arith.mulf %563, %567 : vector<8x128xf32>
    %569 = arith.truncf %568 : vector<8x128xf32> to vector<8x128xbf16>
    %570 = arith.index_cast %536 : i32 to index
    %c0_169 = arith.constant 0 : index
    %571 = vector.load %arg13[%570, %c0_169] : memref<64x128xbf16, #tpu.memory_space<vmem>>, vector<8x128xbf16>
    tpu.vector_store %arg13[%570, %c0_169], %569 {strides = array<i32>} : memref<64x128xbf16, #tpu.memory_space<vmem>>, vector<8x128xbf16>,
    %c7_i32_170 = arith.constant 7 : i32
    %c8_i32_171 = arith.constant 8 : i32
    %572 = arith.muli %c7_i32_170, %c8_i32_171 : i32
    %573 = tpu.assume_multiple %572, 8 : i32
    %574 = arith.index_cast %573 : i32 to index
    %c0_172 = arith.constant 0 : index
    %575 = vector.load %arg12[%574, %c0_172] : memref<64x512xf32, #tpu.memory_space<vmem>>, vector<8x512xf32>
    %576 = arith.index_cast %c0_i32_99 : i32 to index
    %c0_173 = arith.constant 0 : index
    %c0_174 = arith.constant 0 : index
    %577 = vector.load %arg15[%576, %c0_173, %c0_174] : memref<2x128x512xbf16, #tpu.memory_space<vmem>>, vector<1x128x512xbf16>
    %578 = vector.shape_cast %577 : vector<1x128x512xbf16> to vector<128x512xbf16>
    %cst_175 = arith.constant dense<0.000000e+00> : vector<8x512xf32>
    %579 = tpu.matmul %569, %578, %cst_175 {dimension_numbers = #tpu.dot_dimension_numbers<[1], [0], [0], [1], [0, 0, 1, 1], [], []>} : vector<8x128xbf16>, vector<128x512xbf16>, vector<8x512xf32> -> vector<8x512xf32>
    %580 = arith.addf %575, %579 : vector<8x512xf32>
    %581 = vector.extract_strided_slice %580 {offsets = [0, 0], sizes = [8, 128], strides = [1, 1]} : vector<8x512xf32> to vector<8x128xf32>
    %582 = arith.negf %581 : vector<8x128xf32>
    %583 = math.exp %582 : vector<8x128xf32>
    %cst_176 = arith.constant 1.000000e+00 : f32
    %584 = vector.broadcast %cst_176 : f32 to vector<8x128xf32>
    %585 = arith.addf %584, %583 : vector<8x128xf32>
    %586 = arith.divf %584, %585 : vector<8x128xf32>
    %587 = vector.extract_strided_slice %580 {offsets = [0, 128], sizes = [8, 128], strides = [1, 1]} : vector<8x512xf32> to vector<8x128xf32>
    %588 = arith.negf %587 : vector<8x128xf32>
    %589 = math.exp %588 : vector<8x128xf32>
    %cst_177 = arith.constant 1.000000e+00 : f32
    %590 = vector.broadcast %cst_177 : f32 to vector<8x128xf32>
    %591 = arith.addf %590, %589 : vector<8x128xf32>
    %592 = arith.divf %590, %591 : vector<8x128xf32>
    %593 = vector.extract_strided_slice %580 {offsets = [0, 256], sizes = [8, 128], strides = [1, 1]} : vector<8x512xf32> to vector<8x128xf32>
    %594 = math.tanh %593 : vector<8x128xf32>
    %595 = vector.extract_strided_slice %580 {offsets = [0, 384], sizes = [8, 128], strides = [1, 1]} : vector<8x512xf32> to vector<8x128xf32>
    %596 = arith.negf %595 : vector<8x128xf32>
    %597 = math.exp %596 : vector<8x128xf32>
    %cst_178 = arith.constant 1.000000e+00 : f32
    %598 = vector.broadcast %cst_178 : f32 to vector<8x128xf32>
    %599 = arith.addf %598, %597 : vector<8x128xf32>
    %600 = arith.divf %598, %599 : vector<8x128xf32>
    %601 = arith.mulf %592, %566 : vector<8x128xf32>
    %602 = arith.mulf %586, %594 : vector<8x128xf32>
    %603 = arith.addf %601, %602 : vector<8x128xf32>
    %604 = math.tanh %603 : vector<8x128xf32>
    %605 = arith.mulf %600, %604 : vector<8x128xf32>
    %606 = arith.truncf %605 : vector<8x128xf32> to vector<8x128xbf16>
    %607 = arith.index_cast %573 : i32 to index
    %c0_179 = arith.constant 0 : index
    %608 = vector.load %arg13[%607, %c0_179] : memref<64x128xbf16, #tpu.memory_space<vmem>>, vector<8x128xbf16>
    tpu.vector_store %arg13[%607, %c0_179], %606 {strides = array<i32>} : memref<64x128xbf16, #tpu.memory_space<vmem>>, vector<8x128xbf16>,
    %c8_i32_180 = arith.constant 8 : i32
    %c0_181 = arith.constant 0 : index
    %c0_182 = arith.constant 0 : index
    %609 = vector.load %arg13[%c0_181, %c0_182] : memref<64x128xbf16, #tpu.memory_space<vmem>>, vector<64x128xbf16>
    %c1_183 = arith.constant 1 : index
    %c0_184 = arith.constant 0 : index
    %c0_185 = arith.constant 0 : index
    %610 = vector.load %arg14[%c1_183, %c0_184, %c0_185] : memref<2x128x512xbf16, #tpu.memory_space<vmem>>, vector<1x128x512xbf16>
    %611 = vector.shape_cast %610 : vector<1x128x512xbf16> to vector<128x512xbf16>
    %c2 = arith.constant 2 : index
    %c0_186 = arith.constant 0 : index
    %612 = vector.load %arg3[%c2, %c0_186] : memref<3x512xf32, #tpu.memory_space<vmem>>, vector<1x512xf32>
    %cst_187 = arith.constant dense<0.000000e+00> : vector<64x512xf32>
    %613 = tpu.matmul %609, %611, %cst_187 {dimension_numbers = #tpu.dot_dimension_numbers<[1], [0], [0], [1], [0, 0, 1, 1], [], []>} : vector<64x128xbf16>, vector<128x512xbf16>, vector<64x512xf32> -> vector<64x512xf32>
    %614 = vector.broadcast %612 : vector<1x512xf32> to vector<64x512xf32>
    %615 = arith.addf %613, %614 : vector<64x512xf32>
    %c0_188 = arith.constant 0 : index
    %c0_189 = arith.constant 0 : index
    %616 = vector.load %arg12[%c0_188, %c0_189] : memref<64x512xf32, #tpu.memory_space<vmem>>, vector<64x512xf32>
    tpu.vector_store %arg12[%c0_188, %c0_189], %615 {strides = array<i32>} : memref<64x512xf32, #tpu.memory_space<vmem>>, vector<64x512xf32>,
    %cst_190 = arith.constant 0.000000e+00 : bf16
    %617 = vector.broadcast %cst_190 : bf16 to vector<8x128xbf16>
    %cst_191 = arith.constant 0.000000e+00 : f32
    %618 = vector.broadcast %cst_191 : f32 to vector<8x128xf32>
    %c1_i32_192 = arith.constant 1 : i32
    %c0_i32_193 = arith.constant 0 : i32
    %c8_i32_194 = arith.constant 8 : i32
    %619 = arith.muli %c0_i32_193, %c8_i32_194 : i32
    %620 = tpu.assume_multiple %619, 8 : i32
    %621 = arith.index_cast %620 : i32 to index
    %c0_195 = arith.constant 0 : index
    %622 = vector.load %arg12[%621, %c0_195] : memref<64x512xf32, #tpu.memory_space<vmem>>, vector<8x512xf32>
    %623 = arith.index_cast %c1_i32_192 : i32 to index
    %c0_196 = arith.constant 0 : index
    %c0_197 = arith.constant 0 : index
    %624 = vector.load %arg15[%623, %c0_196, %c0_197] : memref<2x128x512xbf16, #tpu.memory_space<vmem>>, vector<1x128x512xbf16>
    %625 = vector.shape_cast %624 : vector<1x128x512xbf16> to vector<128x512xbf16>
    %cst_198 = arith.constant dense<0.000000e+00> : vector<8x512xf32>
    %626 = tpu.matmul %617, %625, %cst_198 {dimension_numbers = #tpu.dot_dimension_numbers<[1], [0], [0], [1], [0, 0, 1, 1], [], []>} : vector<8x128xbf16>, vector<128x512xbf16>, vector<8x512xf32> -> vector<8x512xf32>
    %627 = arith.addf %622, %626 : vector<8x512xf32>
    %628 = vector.extract_strided_slice %627 {offsets = [0, 0], sizes = [8, 128], strides = [1, 1]} : vector<8x512xf32> to vector<8x128xf32>
    %629 = arith.negf %628 : vector<8x128xf32>
    %630 = math.exp %629 : vector<8x128xf32>
    %cst_199 = arith.constant 1.000000e+00 : f32
    %631 = vector.broadcast %cst_199 : f32 to vector<8x128xf32>
    %632 = arith.addf %631, %630 : vector<8x128xf32>
    %633 = arith.divf %631, %632 : vector<8x128xf32>
    %634 = vector.extract_strided_slice %627 {offsets = [0, 128], sizes = [8, 128], strides = [1, 1]} : vector<8x512xf32> to vector<8x128xf32>
    %635 = arith.negf %634 : vector<8x128xf32>
    %636 = math.exp %635 : vector<8x128xf32>
    %cst_200 = arith.constant 1.000000e+00 : f32
    %637 = vector.broadcast %cst_200 : f32 to vector<8x128xf32>
    %638 = arith.addf %637, %636 : vector<8x128xf32>
    %639 = arith.divf %637, %638 : vector<8x128xf32>
    %640 = vector.extract_strided_slice %627 {offsets = [0, 256], sizes = [8, 128], strides = [1, 1]} : vector<8x512xf32> to vector<8x128xf32>
    %641 = math.tanh %640 : vector<8x128xf32>
    %642 = vector.extract_strided_slice %627 {offsets = [0, 384], sizes = [8, 128], strides = [1, 1]} : vector<8x512xf32> to vector<8x128xf32>
    %643 = arith.negf %642 : vector<8x128xf32>
    %644 = math.exp %643 : vector<8x128xf32>
    %cst_201 = arith.constant 1.000000e+00 : f32
    %645 = vector.broadcast %cst_201 : f32 to vector<8x128xf32>
    %646 = arith.addf %645, %644 : vector<8x128xf32>
    %647 = arith.divf %645, %646 : vector<8x128xf32>
    %648 = arith.mulf %639, %618 : vector<8x128xf32>
    %649 = arith.mulf %633, %641 : vector<8x128xf32>
    %650 = arith.addf %648, %649 : vector<8x128xf32>
    %651 = math.tanh %650 : vector<8x128xf32>
    %652 = arith.mulf %647, %651 : vector<8x128xf32>
    %653 = arith.truncf %652 : vector<8x128xf32> to vector<8x128xbf16>
    %c1_i32_202 = arith.constant 1 : i32
    %c8_i32_203 = arith.constant 8 : i32
    %654 = arith.muli %c1_i32_202, %c8_i32_203 : i32
    %655 = tpu.assume_multiple %654, 8 : i32
    %656 = arith.index_cast %655 : i32 to index
    %c0_204 = arith.constant 0 : index
    %657 = vector.load %arg12[%656, %c0_204] : memref<64x512xf32, #tpu.memory_space<vmem>>, vector<8x512xf32>
    %658 = arith.index_cast %c1_i32_192 : i32 to index
    %c0_205 = arith.constant 0 : index
    %c0_206 = arith.constant 0 : index
    %659 = vector.load %arg15[%658, %c0_205, %c0_206] : memref<2x128x512xbf16, #tpu.memory_space<vmem>>, vector<1x128x512xbf16>
    %660 = vector.shape_cast %659 : vector<1x128x512xbf16> to vector<128x512xbf16>
    %cst_207 = arith.constant dense<0.000000e+00> : vector<8x512xf32>
    %661 = tpu.matmul %653, %660, %cst_207 {dimension_numbers = #tpu.dot_dimension_numbers<[1], [0], [0], [1], [0, 0, 1, 1], [], []>} : vector<8x128xbf16>, vector<128x512xbf16>, vector<8x512xf32> -> vector<8x512xf32>
    %662 = arith.addf %657, %661 : vector<8x512xf32>
    %663 = vector.extract_strided_slice %662 {offsets = [0, 0], sizes = [8, 128], strides = [1, 1]} : vector<8x512xf32> to vector<8x128xf32>
    %664 = arith.negf %663 : vector<8x128xf32>
    %665 = math.exp %664 : vector<8x128xf32>
    %cst_208 = arith.constant 1.000000e+00 : f32
    %666 = vector.broadcast %cst_208 : f32 to vector<8x128xf32>
    %667 = arith.addf %666, %665 : vector<8x128xf32>
    %668 = arith.divf %666, %667 : vector<8x128xf32>
    %669 = vector.extract_strided_slice %662 {offsets = [0, 128], sizes = [8, 128], strides = [1, 1]} : vector<8x512xf32> to vector<8x128xf32>
    %670 = arith.negf %669 : vector<8x128xf32>
    %671 = math.exp %670 : vector<8x128xf32>
    %cst_209 = arith.constant 1.000000e+00 : f32
    %672 = vector.broadcast %cst_209 : f32 to vector<8x128xf32>
    %673 = arith.addf %672, %671 : vector<8x128xf32>
    %674 = arith.divf %672, %673 : vector<8x128xf32>
    %675 = vector.extract_strided_slice %662 {offsets = [0, 256], sizes = [8, 128], strides = [1, 1]} : vector<8x512xf32> to vector<8x128xf32>
    %676 = math.tanh %675 : vector<8x128xf32>
    %677 = vector.extract_strided_slice %662 {offsets = [0, 384], sizes = [8, 128], strides = [1, 1]} : vector<8x512xf32> to vector<8x128xf32>
    %678 = arith.negf %677 : vector<8x128xf32>
    %679 = math.exp %678 : vector<8x128xf32>
    %cst_210 = arith.constant 1.000000e+00 : f32
    %680 = vector.broadcast %cst_210 : f32 to vector<8x128xf32>
    %681 = arith.addf %680, %679 : vector<8x128xf32>
    %682 = arith.divf %680, %681 : vector<8x128xf32>
    %683 = arith.mulf %674, %650 : vector<8x128xf32>
    %684 = arith.mulf %668, %676 : vector<8x128xf32>
    %685 = arith.addf %683, %684 : vector<8x128xf32>
    %686 = math.tanh %685 : vector<8x128xf32>
    %687 = arith.mulf %682, %686 : vector<8x128xf32>
    %688 = arith.truncf %687 : vector<8x128xf32> to vector<8x128xbf16>
    %c2_i32_211 = arith.constant 2 : i32
    %c8_i32_212 = arith.constant 8 : i32
    %689 = arith.muli %c2_i32_211, %c8_i32_212 : i32
    %690 = tpu.assume_multiple %689, 8 : i32
    %691 = arith.index_cast %690 : i32 to index
    %c0_213 = arith.constant 0 : index
    %692 = vector.load %arg12[%691, %c0_213] : memref<64x512xf32, #tpu.memory_space<vmem>>, vector<8x512xf32>
    %693 = arith.index_cast %c1_i32_192 : i32 to index
    %c0_214 = arith.constant 0 : index
    %c0_215 = arith.constant 0 : index
    %694 = vector.load %arg15[%693, %c0_214, %c0_215] : memref<2x128x512xbf16, #tpu.memory_space<vmem>>, vector<1x128x512xbf16>
    %695 = vector.shape_cast %694 : vector<1x128x512xbf16> to vector<128x512xbf16>
    %cst_216 = arith.constant dense<0.000000e+00> : vector<8x512xf32>
    %696 = tpu.matmul %688, %695, %cst_216 {dimension_numbers = #tpu.dot_dimension_numbers<[1], [0], [0], [1], [0, 0, 1, 1], [], []>} : vector<8x128xbf16>, vector<128x512xbf16>, vector<8x512xf32> -> vector<8x512xf32>
    %697 = arith.addf %692, %696 : vector<8x512xf32>
    %698 = vector.extract_strided_slice %697 {offsets = [0, 0], sizes = [8, 128], strides = [1, 1]} : vector<8x512xf32> to vector<8x128xf32>
    %699 = arith.negf %698 : vector<8x128xf32>
    %700 = math.exp %699 : vector<8x128xf32>
    %cst_217 = arith.constant 1.000000e+00 : f32
    %701 = vector.broadcast %cst_217 : f32 to vector<8x128xf32>
    %702 = arith.addf %701, %700 : vector<8x128xf32>
    %703 = arith.divf %701, %702 : vector<8x128xf32>
    %704 = vector.extract_strided_slice %697 {offsets = [0, 128], sizes = [8, 128], strides = [1, 1]} : vector<8x512xf32> to vector<8x128xf32>
    %705 = arith.negf %704 : vector<8x128xf32>
    %706 = math.exp %705 : vector<8x128xf32>
    %cst_218 = arith.constant 1.000000e+00 : f32
    %707 = vector.broadcast %cst_218 : f32 to vector<8x128xf32>
    %708 = arith.addf %707, %706 : vector<8x128xf32>
    %709 = arith.divf %707, %708 : vector<8x128xf32>
    %710 = vector.extract_strided_slice %697 {offsets = [0, 256], sizes = [8, 128], strides = [1, 1]} : vector<8x512xf32> to vector<8x128xf32>
    %711 = math.tanh %710 : vector<8x128xf32>
    %712 = vector.extract_strided_slice %697 {offsets = [0, 384], sizes = [8, 128], strides = [1, 1]} : vector<8x512xf32> to vector<8x128xf32>
    %713 = arith.negf %712 : vector<8x128xf32>
    %714 = math.exp %713 : vector<8x128xf32>
    %cst_219 = arith.constant 1.000000e+00 : f32
    %715 = vector.broadcast %cst_219 : f32 to vector<8x128xf32>
    %716 = arith.addf %715, %714 : vector<8x128xf32>
    %717 = arith.divf %715, %716 : vector<8x128xf32>
    %718 = arith.mulf %709, %685 : vector<8x128xf32>
    %719 = arith.mulf %703, %711 : vector<8x128xf32>
    %720 = arith.addf %718, %719 : vector<8x128xf32>
    %721 = math.tanh %720 : vector<8x128xf32>
    %722 = arith.mulf %717, %721 : vector<8x128xf32>
    %723 = arith.truncf %722 : vector<8x128xf32> to vector<8x128xbf16>
    %c3_i32_220 = arith.constant 3 : i32
    %c8_i32_221 = arith.constant 8 : i32
    %724 = arith.muli %c3_i32_220, %c8_i32_221 : i32
    %725 = tpu.assume_multiple %724, 8 : i32
    %726 = arith.index_cast %725 : i32 to index
    %c0_222 = arith.constant 0 : index
    %727 = vector.load %arg12[%726, %c0_222] : memref<64x512xf32, #tpu.memory_space<vmem>>, vector<8x512xf32>
    %728 = arith.index_cast %c1_i32_192 : i32 to index
    %c0_223 = arith.constant 0 : index
    %c0_224 = arith.constant 0 : index
    %729 = vector.load %arg15[%728, %c0_223, %c0_224] : memref<2x128x512xbf16, #tpu.memory_space<vmem>>, vector<1x128x512xbf16>
    %730 = vector.shape_cast %729 : vector<1x128x512xbf16> to vector<128x512xbf16>
    %cst_225 = arith.constant dense<0.000000e+00> : vector<8x512xf32>
    %731 = tpu.matmul %723, %730, %cst_225 {dimension_numbers = #tpu.dot_dimension_numbers<[1], [0], [0], [1], [0, 0, 1, 1], [], []>} : vector<8x128xbf16>, vector<128x512xbf16>, vector<8x512xf32> -> vector<8x512xf32>
    %732 = arith.addf %727, %731 : vector<8x512xf32>
    %733 = vector.extract_strided_slice %732 {offsets = [0, 0], sizes = [8, 128], strides = [1, 1]} : vector<8x512xf32> to vector<8x128xf32>
    %734 = arith.negf %733 : vector<8x128xf32>
    %735 = math.exp %734 : vector<8x128xf32>
    %cst_226 = arith.constant 1.000000e+00 : f32
    %736 = vector.broadcast %cst_226 : f32 to vector<8x128xf32>
    %737 = arith.addf %736, %735 : vector<8x128xf32>
    %738 = arith.divf %736, %737 : vector<8x128xf32>
    %739 = vector.extract_strided_slice %732 {offsets = [0, 128], sizes = [8, 128], strides = [1, 1]} : vector<8x512xf32> to vector<8x128xf32>
    %740 = arith.negf %739 : vector<8x128xf32>
    %741 = math.exp %740 : vector<8x128xf32>
    %cst_227 = arith.constant 1.000000e+00 : f32
    %742 = vector.broadcast %cst_227 : f32 to vector<8x128xf32>
    %743 = arith.addf %742, %741 : vector<8x128xf32>
    %744 = arith.divf %742, %743 : vector<8x128xf32>
    %745 = vector.extract_strided_slice %732 {offsets = [0, 256], sizes = [8, 128], strides = [1, 1]} : vector<8x512xf32> to vector<8x128xf32>
    %746 = math.tanh %745 : vector<8x128xf32>
    %747 = vector.extract_strided_slice %732 {offsets = [0, 384], sizes = [8, 128], strides = [1, 1]} : vector<8x512xf32> to vector<8x128xf32>
    %748 = arith.negf %747 : vector<8x128xf32>
    %749 = math.exp %748 : vector<8x128xf32>
    %cst_228 = arith.constant 1.000000e+00 : f32
    %750 = vector.broadcast %cst_228 : f32 to vector<8x128xf32>
    %751 = arith.addf %750, %749 : vector<8x128xf32>
    %752 = arith.divf %750, %751 : vector<8x128xf32>
    %753 = arith.mulf %744, %720 : vector<8x128xf32>
    %754 = arith.mulf %738, %746 : vector<8x128xf32>
    %755 = arith.addf %753, %754 : vector<8x128xf32>
    %756 = math.tanh %755 : vector<8x128xf32>
    %757 = arith.mulf %752, %756 : vector<8x128xf32>
    %758 = arith.truncf %757 : vector<8x128xf32> to vector<8x128xbf16>
    %c4_i32_229 = arith.constant 4 : i32
    %c8_i32_230 = arith.constant 8 : i32
    %759 = arith.muli %c4_i32_229, %c8_i32_230 : i32
    %760 = tpu.assume_multiple %759, 8 : i32
    %761 = arith.index_cast %760 : i32 to index
    %c0_231 = arith.constant 0 : index
    %762 = vector.load %arg12[%761, %c0_231] : memref<64x512xf32, #tpu.memory_space<vmem>>, vector<8x512xf32>
    %763 = arith.index_cast %c1_i32_192 : i32 to index
    %c0_232 = arith.constant 0 : index
    %c0_233 = arith.constant 0 : index
    %764 = vector.load %arg15[%763, %c0_232, %c0_233] : memref<2x128x512xbf16, #tpu.memory_space<vmem>>, vector<1x128x512xbf16>
    %765 = vector.shape_cast %764 : vector<1x128x512xbf16> to vector<128x512xbf16>
    %cst_234 = arith.constant dense<0.000000e+00> : vector<8x512xf32>
    %766 = tpu.matmul %758, %765, %cst_234 {dimension_numbers = #tpu.dot_dimension_numbers<[1], [0], [0], [1], [0, 0, 1, 1], [], []>} : vector<8x128xbf16>, vector<128x512xbf16>, vector<8x512xf32> -> vector<8x512xf32>
    %767 = arith.addf %762, %766 : vector<8x512xf32>
    %768 = vector.extract_strided_slice %767 {offsets = [0, 0], sizes = [8, 128], strides = [1, 1]} : vector<8x512xf32> to vector<8x128xf32>
    %769 = arith.negf %768 : vector<8x128xf32>
    %770 = math.exp %769 : vector<8x128xf32>
    %cst_235 = arith.constant 1.000000e+00 : f32
    %771 = vector.broadcast %cst_235 : f32 to vector<8x128xf32>
    %772 = arith.addf %771, %770 : vector<8x128xf32>
    %773 = arith.divf %771, %772 : vector<8x128xf32>
    %774 = vector.extract_strided_slice %767 {offsets = [0, 128], sizes = [8, 128], strides = [1, 1]} : vector<8x512xf32> to vector<8x128xf32>
    %775 = arith.negf %774 : vector<8x128xf32>
    %776 = math.exp %775 : vector<8x128xf32>
    %cst_236 = arith.constant 1.000000e+00 : f32
    %777 = vector.broadcast %cst_236 : f32 to vector<8x128xf32>
    %778 = arith.addf %777, %776 : vector<8x128xf32>
    %779 = arith.divf %777, %778 : vector<8x128xf32>
    %780 = vector.extract_strided_slice %767 {offsets = [0, 256], sizes = [8, 128], strides = [1, 1]} : vector<8x512xf32> to vector<8x128xf32>
    %781 = math.tanh %780 : vector<8x128xf32>
    %782 = vector.extract_strided_slice %767 {offsets = [0, 384], sizes = [8, 128], strides = [1, 1]} : vector<8x512xf32> to vector<8x128xf32>
    %783 = arith.negf %782 : vector<8x128xf32>
    %784 = math.exp %783 : vector<8x128xf32>
    %cst_237 = arith.constant 1.000000e+00 : f32
    %785 = vector.broadcast %cst_237 : f32 to vector<8x128xf32>
    %786 = arith.addf %785, %784 : vector<8x128xf32>
    %787 = arith.divf %785, %786 : vector<8x128xf32>
    %788 = arith.mulf %779, %755 : vector<8x128xf32>
    %789 = arith.mulf %773, %781 : vector<8x128xf32>
    %790 = arith.addf %788, %789 : vector<8x128xf32>
    %791 = math.tanh %790 : vector<8x128xf32>
    %792 = arith.mulf %787, %791 : vector<8x128xf32>
    %793 = arith.truncf %792 : vector<8x128xf32> to vector<8x128xbf16>
    %c5_i32_238 = arith.constant 5 : i32
    %c8_i32_239 = arith.constant 8 : i32
    %794 = arith.muli %c5_i32_238, %c8_i32_239 : i32
    %795 = tpu.assume_multiple %794, 8 : i32
    %796 = arith.index_cast %795 : i32 to index
    %c0_240 = arith.constant 0 : index
    %797 = vector.load %arg12[%796, %c0_240] : memref<64x512xf32, #tpu.memory_space<vmem>>, vector<8x512xf32>
    %798 = arith.index_cast %c1_i32_192 : i32 to index
    %c0_241 = arith.constant 0 : index
    %c0_242 = arith.constant 0 : index
    %799 = vector.load %arg15[%798, %c0_241, %c0_242] : memref<2x128x512xbf16, #tpu.memory_space<vmem>>, vector<1x128x512xbf16>
    %800 = vector.shape_cast %799 : vector<1x128x512xbf16> to vector<128x512xbf16>
    %cst_243 = arith.constant dense<0.000000e+00> : vector<8x512xf32>
    %801 = tpu.matmul %793, %800, %cst_243 {dimension_numbers = #tpu.dot_dimension_numbers<[1], [0], [0], [1], [0, 0, 1, 1], [], []>} : vector<8x128xbf16>, vector<128x512xbf16>, vector<8x512xf32> -> vector<8x512xf32>
    %802 = arith.addf %797, %801 : vector<8x512xf32>
    %803 = vector.extract_strided_slice %802 {offsets = [0, 0], sizes = [8, 128], strides = [1, 1]} : vector<8x512xf32> to vector<8x128xf32>
    %804 = arith.negf %803 : vector<8x128xf32>
    %805 = math.exp %804 : vector<8x128xf32>
    %cst_244 = arith.constant 1.000000e+00 : f32
    %806 = vector.broadcast %cst_244 : f32 to vector<8x128xf32>
    %807 = arith.addf %806, %805 : vector<8x128xf32>
    %808 = arith.divf %806, %807 : vector<8x128xf32>
    %809 = vector.extract_strided_slice %802 {offsets = [0, 128], sizes = [8, 128], strides = [1, 1]} : vector<8x512xf32> to vector<8x128xf32>
    %810 = arith.negf %809 : vector<8x128xf32>
    %811 = math.exp %810 : vector<8x128xf32>
    %cst_245 = arith.constant 1.000000e+00 : f32
    %812 = vector.broadcast %cst_245 : f32 to vector<8x128xf32>
    %813 = arith.addf %812, %811 : vector<8x128xf32>
    %814 = arith.divf %812, %813 : vector<8x128xf32>
    %815 = vector.extract_strided_slice %802 {offsets = [0, 256], sizes = [8, 128], strides = [1, 1]} : vector<8x512xf32> to vector<8x128xf32>
    %816 = math.tanh %815 : vector<8x128xf32>
    %817 = vector.extract_strided_slice %802 {offsets = [0, 384], sizes = [8, 128], strides = [1, 1]} : vector<8x512xf32> to vector<8x128xf32>
    %818 = arith.negf %817 : vector<8x128xf32>
    %819 = math.exp %818 : vector<8x128xf32>
    %cst_246 = arith.constant 1.000000e+00 : f32
    %820 = vector.broadcast %cst_246 : f32 to vector<8x128xf32>
    %821 = arith.addf %820, %819 : vector<8x128xf32>
    %822 = arith.divf %820, %821 : vector<8x128xf32>
    %823 = arith.mulf %814, %790 : vector<8x128xf32>
    %824 = arith.mulf %808, %816 : vector<8x128xf32>
    %825 = arith.addf %823, %824 : vector<8x128xf32>
    %826 = math.tanh %825 : vector<8x128xf32>
    %827 = arith.mulf %822, %826 : vector<8x128xf32>
    %828 = arith.truncf %827 : vector<8x128xf32> to vector<8x128xbf16>
    %c6_i32_247 = arith.constant 6 : i32
    %c8_i32_248 = arith.constant 8 : i32
    %829 = arith.muli %c6_i32_247, %c8_i32_248 : i32
    %830 = tpu.assume_multiple %829, 8 : i32
    %831 = arith.index_cast %830 : i32 to index
    %c0_249 = arith.constant 0 : index
    %832 = vector.load %arg12[%831, %c0_249] : memref<64x512xf32, #tpu.memory_space<vmem>>, vector<8x512xf32>
    %833 = arith.index_cast %c1_i32_192 : i32 to index
    %c0_250 = arith.constant 0 : index
    %c0_251 = arith.constant 0 : index
    %834 = vector.load %arg15[%833, %c0_250, %c0_251] : memref<2x128x512xbf16, #tpu.memory_space<vmem>>, vector<1x128x512xbf16>
    %835 = vector.shape_cast %834 : vector<1x128x512xbf16> to vector<128x512xbf16>
    %cst_252 = arith.constant dense<0.000000e+00> : vector<8x512xf32>
    %836 = tpu.matmul %828, %835, %cst_252 {dimension_numbers = #tpu.dot_dimension_numbers<[1], [0], [0], [1], [0, 0, 1, 1], [], []>} : vector<8x128xbf16>, vector<128x512xbf16>, vector<8x512xf32> -> vector<8x512xf32>
    %837 = arith.addf %832, %836 : vector<8x512xf32>
    %838 = vector.extract_strided_slice %837 {offsets = [0, 0], sizes = [8, 128], strides = [1, 1]} : vector<8x512xf32> to vector<8x128xf32>
    %839 = arith.negf %838 : vector<8x128xf32>
    %840 = math.exp %839 : vector<8x128xf32>
    %cst_253 = arith.constant 1.000000e+00 : f32
    %841 = vector.broadcast %cst_253 : f32 to vector<8x128xf32>
    %842 = arith.addf %841, %840 : vector<8x128xf32>
    %843 = arith.divf %841, %842 : vector<8x128xf32>
    %844 = vector.extract_strided_slice %837 {offsets = [0, 128], sizes = [8, 128], strides = [1, 1]} : vector<8x512xf32> to vector<8x128xf32>
    %845 = arith.negf %844 : vector<8x128xf32>
    %846 = math.exp %845 : vector<8x128xf32>
    %cst_254 = arith.constant 1.000000e+00 : f32
    %847 = vector.broadcast %cst_254 : f32 to vector<8x128xf32>
    %848 = arith.addf %847, %846 : vector<8x128xf32>
    %849 = arith.divf %847, %848 : vector<8x128xf32>
    %850 = vector.extract_strided_slice %837 {offsets = [0, 256], sizes = [8, 128], strides = [1, 1]} : vector<8x512xf32> to vector<8x128xf32>
    %851 = math.tanh %850 : vector<8x128xf32>
    %852 = vector.extract_strided_slice %837 {offsets = [0, 384], sizes = [8, 128], strides = [1, 1]} : vector<8x512xf32> to vector<8x128xf32>
    %853 = arith.negf %852 : vector<8x128xf32>
    %854 = math.exp %853 : vector<8x128xf32>
    %cst_255 = arith.constant 1.000000e+00 : f32
    %855 = vector.broadcast %cst_255 : f32 to vector<8x128xf32>
    %856 = arith.addf %855, %854 : vector<8x128xf32>
    %857 = arith.divf %855, %856 : vector<8x128xf32>
    %858 = arith.mulf %849, %825 : vector<8x128xf32>
    %859 = arith.mulf %843, %851 : vector<8x128xf32>
    %860 = arith.addf %858, %859 : vector<8x128xf32>
    %861 = math.tanh %860 : vector<8x128xf32>
    %862 = arith.mulf %857, %861 : vector<8x128xf32>
    %863 = arith.truncf %862 : vector<8x128xf32> to vector<8x128xbf16>
    %c7_i32_256 = arith.constant 7 : i32
    %c8_i32_257 = arith.constant 8 : i32
    %864 = arith.muli %c7_i32_256, %c8_i32_257 : i32
    %865 = tpu.assume_multiple %864, 8 : i32
    %866 = arith.index_cast %865 : i32 to index
    %c0_258 = arith.constant 0 : index
    %867 = vector.load %arg12[%866, %c0_258] : memref<64x512xf32, #tpu.memory_space<vmem>>, vector<8x512xf32>
    %868 = arith.index_cast %c1_i32_192 : i32 to index
    %c0_259 = arith.constant 0 : index
    %c0_260 = arith.constant 0 : index
    %869 = vector.load %arg15[%868, %c0_259, %c0_260] : memref<2x128x512xbf16, #tpu.memory_space<vmem>>, vector<1x128x512xbf16>
    %870 = vector.shape_cast %869 : vector<1x128x512xbf16> to vector<128x512xbf16>
    %cst_261 = arith.constant dense<0.000000e+00> : vector<8x512xf32>
    %871 = tpu.matmul %863, %870, %cst_261 {dimension_numbers = #tpu.dot_dimension_numbers<[1], [0], [0], [1], [0, 0, 1, 1], [], []>} : vector<8x128xbf16>, vector<128x512xbf16>, vector<8x512xf32> -> vector<8x512xf32>
    %872 = arith.addf %867, %871 : vector<8x512xf32>
    %873 = vector.extract_strided_slice %872 {offsets = [0, 0], sizes = [8, 128], strides = [1, 1]} : vector<8x512xf32> to vector<8x128xf32>
    %874 = arith.negf %873 : vector<8x128xf32>
    %875 = math.exp %874 : vector<8x128xf32>
    %cst_262 = arith.constant 1.000000e+00 : f32
    %876 = vector.broadcast %cst_262 : f32 to vector<8x128xf32>
    %877 = arith.addf %876, %875 : vector<8x128xf32>
    %878 = arith.divf %876, %877 : vector<8x128xf32>
    %879 = vector.extract_strided_slice %872 {offsets = [0, 128], sizes = [8, 128], strides = [1, 1]} : vector<8x512xf32> to vector<8x128xf32>
    %880 = arith.negf %879 : vector<8x128xf32>
    %881 = math.exp %880 : vector<8x128xf32>
    %cst_263 = arith.constant 1.000000e+00 : f32
    %882 = vector.broadcast %cst_263 : f32 to vector<8x128xf32>
    %883 = arith.addf %882, %881 : vector<8x128xf32>
    %884 = arith.divf %882, %883 : vector<8x128xf32>
    %885 = vector.extract_strided_slice %872 {offsets = [0, 256], sizes = [8, 128], strides = [1, 1]} : vector<8x512xf32> to vector<8x128xf32>
    %886 = math.tanh %885 : vector<8x128xf32>
    %887 = vector.extract_strided_slice %872 {offsets = [0, 384], sizes = [8, 128], strides = [1, 1]} : vector<8x512xf32> to vector<8x128xf32>
    %888 = arith.negf %887 : vector<8x128xf32>
    %889 = math.exp %888 : vector<8x128xf32>
    %cst_264 = arith.constant 1.000000e+00 : f32
    %890 = vector.broadcast %cst_264 : f32 to vector<8x128xf32>
    %891 = arith.addf %890, %889 : vector<8x128xf32>
    %892 = arith.divf %890, %891 : vector<8x128xf32>
    %893 = arith.mulf %884, %860 : vector<8x128xf32>
    %894 = arith.mulf %878, %886 : vector<8x128xf32>
    %895 = arith.addf %893, %894 : vector<8x128xf32>
    %896 = math.tanh %895 : vector<8x128xf32>
    %897 = arith.mulf %892, %896 : vector<8x128xf32>
    %898 = arith.truncf %897 : vector<8x128xf32> to vector<8x128xbf16>
    %c8_i32_265 = arith.constant 8 : i32
    %c2_i32_266 = arith.constant 2 : i32
    %899 = tpu.memref_slice %arg19[%c2_i32_266] : memref<5x!tpu.dma_semaphore, #tpu.memory_space<semaphore_mem>> -> memref<1x!tpu.dma_semaphore, #tpu.memory_space<semaphore_mem>>
    %900 = tpu.memref_squeeze %899 : memref<1x!tpu.dma_semaphore, #tpu.memory_space<semaphore_mem>> -> memref<!tpu.dma_semaphore, #tpu.memory_space<semaphore_mem>>
    tpu.wait_dma2 semaphore(%900 : memref<!tpu.dma_semaphore, #tpu.memory_space<semaphore_mem>>) src(%arg8 : memref<3x128x128xbf16, #tpu.memory_space<any>>) dst(%arg16 : memref<3x128x128xbf16, #tpu.memory_space<vmem>>)
    %c3_i32_267 = arith.constant 3 : i32
    %901 = tpu.memref_slice %arg19[%c3_i32_267] : memref<5x!tpu.dma_semaphore, #tpu.memory_space<semaphore_mem>> -> memref<1x!tpu.dma_semaphore, #tpu.memory_space<semaphore_mem>>
    %902 = tpu.memref_squeeze %901 : memref<1x!tpu.dma_semaphore, #tpu.memory_space<semaphore_mem>> -> memref<!tpu.dma_semaphore, #tpu.memory_space<semaphore_mem>>
    tpu.wait_dma2 semaphore(%902 : memref<!tpu.dma_semaphore, #tpu.memory_space<semaphore_mem>>) src(%arg9 : memref<128x256xbf16, #tpu.memory_space<any>>) dst(%arg17 : memref<128x256xbf16, #tpu.memory_space<vmem>>)
    %c4_i32_268 = arith.constant 4 : i32
    %903 = tpu.memref_slice %arg19[%c4_i32_268] : memref<5x!tpu.dma_semaphore, #tpu.memory_space<semaphore_mem>> -> memref<1x!tpu.dma_semaphore, #tpu.memory_space<semaphore_mem>>
    %904 = tpu.memref_squeeze %903 : memref<1x!tpu.dma_semaphore, #tpu.memory_space<semaphore_mem>> -> memref<!tpu.dma_semaphore, #tpu.memory_space<semaphore_mem>>
    tpu.wait_dma2 semaphore(%904 : memref<!tpu.dma_semaphore, #tpu.memory_space<semaphore_mem>>) src(%arg10 : memref<2x256x256xbf16, #tpu.memory_space<any>>) dst(%arg18 : memref<2x256x256xbf16, #tpu.memory_space<vmem>>)
    %c0_269 = arith.constant 0 : index
    %c0_270 = arith.constant 0 : index
    %c0_271 = arith.constant 0 : index
    %905 = vector.load %arg16[%c0_269, %c0_270, %c0_271] : memref<3x128x128xbf16, #tpu.memory_space<vmem>>, vector<1x128x128xbf16>
    %906 = vector.shape_cast %905 : vector<1x128x128xbf16> to vector<128x128xbf16>
    %c0_272 = arith.constant 0 : index
    %c0_273 = arith.constant 0 : index
    %907 = vector.load %arg4[%c0_272, %c0_273] : memref<3x128xf32, #tpu.memory_space<vmem>>, vector<1x128xf32>
    %cst_274 = arith.constant dense<0.000000e+00> : vector<8x128xf32>
    %908 = tpu.matmul %898, %906, %cst_274 {dimension_numbers = #tpu.dot_dimension_numbers<[1], [0], [0], [1], [0, 0, 1, 1], [], []>} : vector<8x128xbf16>, vector<128x128xbf16>, vector<8x128xf32> -> vector<8x128xf32>
    %909 = vector.broadcast %907 : vector<1x128xf32> to vector<8x128xf32>
    %910 = arith.addf %908, %909 : vector<8x128xf32>
    %cst_275 = arith.constant 0.000000e+00 : f32
    %911 = vector.broadcast %cst_275 : f32 to vector<8x128xf32>
    %912 = arith.maximumf %910, %911 : vector<8x128xf32>
    %913 = arith.truncf %912 : vector<8x128xf32> to vector<8x128xbf16>
    %c1_276 = arith.constant 1 : index
    %c0_277 = arith.constant 0 : index
    %c0_278 = arith.constant 0 : index
    %914 = vector.load %arg16[%c1_276, %c0_277, %c0_278] : memref<3x128x128xbf16, #tpu.memory_space<vmem>>, vector<1x128x128xbf16>
    %915 = vector.shape_cast %914 : vector<1x128x128xbf16> to vector<128x128xbf16>
    %c1_279 = arith.constant 1 : index
    %c0_280 = arith.constant 0 : index
    %916 = vector.load %arg4[%c1_279, %c0_280] : memref<3x128xf32, #tpu.memory_space<vmem>>, vector<1x128xf32>
    %cst_281 = arith.constant dense<0.000000e+00> : vector<8x128xf32>
    %917 = tpu.matmul %913, %915, %cst_281 {dimension_numbers = #tpu.dot_dimension_numbers<[1], [0], [0], [1], [0, 0, 1, 1], [], []>} : vector<8x128xbf16>, vector<128x128xbf16>, vector<8x128xf32> -> vector<8x128xf32>
    %918 = vector.broadcast %916 : vector<1x128xf32> to vector<8x128xf32>
    %919 = arith.addf %917, %918 : vector<8x128xf32>
    %cst_282 = arith.constant 0.000000e+00 : f32
    %920 = vector.broadcast %cst_282 : f32 to vector<8x128xf32>
    %921 = arith.maximumf %919, %920 : vector<8x128xf32>
    %922 = arith.truncf %921 : vector<8x128xf32> to vector<8x128xbf16>
    %c2_283 = arith.constant 2 : index
    %c0_284 = arith.constant 0 : index
    %c0_285 = arith.constant 0 : index
    %923 = vector.load %arg16[%c2_283, %c0_284, %c0_285] : memref<3x128x128xbf16, #tpu.memory_space<vmem>>, vector<1x128x128xbf16>
    %924 = vector.shape_cast %923 : vector<1x128x128xbf16> to vector<128x128xbf16>
    %c2_286 = arith.constant 2 : index
    %c0_287 = arith.constant 0 : index
    %925 = vector.load %arg4[%c2_286, %c0_287] : memref<3x128xf32, #tpu.memory_space<vmem>>, vector<1x128xf32>
    %cst_288 = arith.constant dense<0.000000e+00> : vector<8x128xf32>
    %926 = tpu.matmul %922, %924, %cst_288 {dimension_numbers = #tpu.dot_dimension_numbers<[1], [0], [0], [1], [0, 0, 1, 1], [], []>} : vector<8x128xbf16>, vector<128x128xbf16>, vector<8x128xf32> -> vector<8x128xf32>
    %927 = vector.broadcast %925 : vector<1x128xf32> to vector<8x128xf32>
    %928 = arith.addf %926, %927 : vector<8x128xf32>
    %929 = arith.truncf %928 : vector<8x128xf32> to vector<8x128xbf16>
    %c0_289 = arith.constant 0 : index
    %c0_290 = arith.constant 0 : index
    %930 = vector.load %arg17[%c0_289, %c0_290] : memref<128x256xbf16, #tpu.memory_space<vmem>>, vector<128x256xbf16>
    %c0_291 = arith.constant 0 : index
    %c0_292 = arith.constant 0 : index
    %931 = vector.load %arg5[%c0_291, %c0_292] : memref<3x256xf32, #tpu.memory_space<vmem>>, vector<1x256xf32>
    %cst_293 = arith.constant dense<0.000000e+00> : vector<8x256xf32>
    %932 = tpu.matmul %929, %930, %cst_293 {dimension_numbers = #tpu.dot_dimension_numbers<[1], [0], [0], [1], [0, 0, 1, 1], [], []>} : vector<8x128xbf16>, vector<128x256xbf16>, vector<8x256xf32> -> vector<8x256xf32>
    %933 = vector.broadcast %931 : vector<1x256xf32> to vector<8x256xf32>
    %934 = arith.addf %932, %933 : vector<8x256xf32>
    %cst_294 = arith.constant 0.000000e+00 : f32
    %935 = vector.broadcast %cst_294 : f32 to vector<8x256xf32>
    %936 = arith.maximumf %934, %935 : vector<8x256xf32>
    %937 = arith.truncf %936 : vector<8x256xf32> to vector<8x256xbf16>
    %c0_295 = arith.constant 0 : index
    %c0_296 = arith.constant 0 : index
    %c0_297 = arith.constant 0 : index
    %938 = vector.load %arg18[%c0_295, %c0_296, %c0_297] : memref<2x256x256xbf16, #tpu.memory_space<vmem>>, vector<1x256x256xbf16>
    %939 = vector.shape_cast %938 : vector<1x256x256xbf16> to vector<256x256xbf16>
    %c1_298 = arith.constant 1 : index
    %c0_299 = arith.constant 0 : index
    %940 = vector.load %arg5[%c1_298, %c0_299] : memref<3x256xf32, #tpu.memory_space<vmem>>, vector<1x256xf32>
    %cst_300 = arith.constant dense<0.000000e+00> : vector<8x256xf32>
    %941 = tpu.matmul %937, %939, %cst_300 {dimension_numbers = #tpu.dot_dimension_numbers<[1], [0], [0], [1], [0, 0, 1, 1], [], []>} : vector<8x256xbf16>, vector<256x256xbf16>, vector<8x256xf32> -> vector<8x256xf32>
    %942 = vector.broadcast %940 : vector<1x256xf32> to vector<8x256xf32>
    %943 = arith.addf %941, %942 : vector<8x256xf32>
    %cst_301 = arith.constant 0.000000e+00 : f32
    %944 = vector.broadcast %cst_301 : f32 to vector<8x256xf32>
    %945 = arith.maximumf %943, %944 : vector<8x256xf32>
    %946 = arith.truncf %945 : vector<8x256xf32> to vector<8x256xbf16>
    %c1_302 = arith.constant 1 : index
    %c0_303 = arith.constant 0 : index
    %c0_304 = arith.constant 0 : index
    %947 = vector.load %arg18[%c1_302, %c0_303, %c0_304] : memref<2x256x256xbf16, #tpu.memory_space<vmem>>, vector<1x256x256xbf16>
    %948 = vector.shape_cast %947 : vector<1x256x256xbf16> to vector<256x256xbf16>
    %c2_305 = arith.constant 2 : index
    %c0_306 = arith.constant 0 : index
    %949 = vector.load %arg5[%c2_305, %c0_306] : memref<3x256xf32, #tpu.memory_space<vmem>>, vector<1x256xf32>
    %cst_307 = arith.constant dense<0.000000e+00> : vector<8x256xf32>
    %950 = tpu.matmul %946, %948, %cst_307 {dimension_numbers = #tpu.dot_dimension_numbers<[1], [0], [0], [1], [0, 0, 1, 1], [], []>} : vector<8x256xbf16>, vector<256x256xbf16>, vector<8x256xf32> -> vector<8x256xf32>
    %951 = vector.broadcast %949 : vector<1x256xf32> to vector<8x256xf32>
    %952 = arith.addf %950, %951 : vector<8x256xf32>
    %953 = arith.extf %898 : vector<8x128xbf16> to vector<8x128xf32>
    %c0_308 = arith.constant 0 : index
    %c0_309 = arith.constant 0 : index
    %954 = vector.load %arg11[%c0_308, %c0_309] : memref<8x512xf32, #tpu.memory_space<vmem>>, vector<8x128xf32>
    tpu.vector_store %arg11[%c0_308, %c0_309], %953 {strides = array<i32>} : memref<8x512xf32, #tpu.memory_space<vmem>>, vector<8x128xf32>,
    %c0_310 = arith.constant 0 : index
    %c128 = arith.constant 128 : index
    %955 = vector.load %arg11[%c0_310, %c128] : memref<8x512xf32, #tpu.memory_space<vmem>>, vector<8x128xf32>
    tpu.vector_store %arg11[%c0_310, %c128], %928 {strides = array<i32>} : memref<8x512xf32, #tpu.memory_space<vmem>>, vector<8x128xf32>,
    %c0_311 = arith.constant 0 : index
    %c256 = arith.constant 256 : index
    %956 = vector.load %arg11[%c0_311, %c256] : memref<8x512xf32, #tpu.memory_space<vmem>>, vector<8x256xf32>
    tpu.vector_store %arg11[%c0_311, %c256], %952 {strides = array<i32>} : memref<8x512xf32, #tpu.memory_space<vmem>>, vector<8x256xf32>,
    return
  }
}

</mosaic_0001>

<llo_original>
// kernel: hipot_forward.1
$region0: #{hipot_forward.1}
  #allocation0 [shape = 'u32[]', space=smem, size = 0x4, offset = 0x4, fixed_abs, tag = 'smem constant byte address 0x4 - core index']
  #allocation1 [shape = 'u32[144,128]{1,0:T(1,128)}', space=vmem, size = 0x12000, scoped, tag = 'internal scratch']
  #allocation2 [shape = 'f32[64,512]{1,0:T(8,128)}', space=vmem, size = 0x20000, scoped, tag = 'scratch operand']
  #allocation3 [shape = 'bf16[64,128]{1,0:T(8,128)(2,1)}', space=vmem, size = 0x4000, scoped, tag = 'scratch operand']
  #allocation4 [shape = 'bf16[2,128,512]{2,1,0:T(8,128)(2,1)}', space=vmem, size = 0x40000, scoped, tag = 'scratch operand']
  #allocation5 [shape = 'bf16[2,128,512]{2,1,0:T(8,128)(2,1)}', space=vmem, size = 0x40000, scoped, tag = 'scratch operand']
  #allocation6 [shape = 'bf16[3,128,128]{2,1,0:T(8,128)(2,1)}', space=vmem, size = 0x18000, scoped, tag = 'scratch operand']
  #allocation7 [shape = 'bf16[128,256]{1,0:T(8,128)(2,1)}', space=vmem, size = 0x10000, scoped, tag = 'scratch operand']
  #allocation8 [shape = 'bf16[2,256,256]{2,1,0:T(8,128)(2,1)}', space=vmem, size = 0x40000, scoped, tag = 'scratch operand']
  #allocation9 [shape = 's32[5]{0}', space=sflag, size = 0x14, scoped, tag = 'scratch operand']
  #allocation14 [shape = 's32[]', space=sflag, size = 0x4, offset = 0, fixed_abs, tag = 'sflag constant byte address 0x0 - dummy sync flag']
  #allocation15 [shape = 's32[]', space=sflag, size = 0x4, offset = 0, fixed_abs, tag = 'sflag constant byte address 0x0 - dummy sync flag']
  #allocation16 [shape = 'u32[]', space=smem, size = 0x4, offset = 0x44, fixed_abs, tag = 'smem constant byte address 0x44 - assertion arg 0']
  #allocation17 [shape = 'u32[]', space=smem, size = 0x4, offset = 0x48, fixed_abs, tag = 'smem constant byte address 0x48 - assertion arg 1']
  #allocation18 [shape = 's32[]', space=sflag, size = 0x4, offset = 0, fixed_abs, tag = 'sflag constant byte address 0x0 - dummy sync flag']
  #allocation19 [shape = 's32[]', space=sflag, size = 0x4, offset = 0, fixed_abs, tag = 'sflag constant byte address 0x0 - dummy sync flag']
  #allocation20 [shape = 's32[]', space=sflag, size = 0x4, offset = 0, fixed_abs, tag = 'sflag constant byte address 0x0 - dummy sync flag']
  #allocation21 [shape = 's32[]', space=sflag, size = 0x4, offset = 0, fixed_abs, tag = 'sflag constant byte address 0x0 - dummy sync flag']
  #allocation22 [shape = 's32[]', space=sflag, size = 0x4, offset = 0, fixed_abs, tag = 'sflag constant byte address 0x0 - dummy sync flag']
  #allocation23 [shape = 's32[]', space=sflag, size = 0x4, offset = 0, fixed_abs, tag = 'sflag constant byte address 0x0 - dummy sync flag']
  #allocation24 [shape = 's32[]', space=sflag, size = 0x4, offset = 0, fixed_abs, tag = 'sflag constant byte address 0x0 - dummy sync flag']
  %s0 = inlined_call_operand.vmem [shape: bf16[64,128], index: 0, kind: input, shape index: {}]
  %s1 = inlined_call_operand.hbm [shape: bf16[128,512], index: 1, kind: input, shape index: {}]
  %s2 = inlined_call_operand.hbm [shape: bf16[128,512], index: 2, kind: input, shape index: {}]
  %s3 = inlined_call_operand.vmem [shape: f32[3,512], index: 3, kind: input, shape index: {}]
  %s4 = inlined_call_operand.vmem [shape: f32[3,128], index: 4, kind: input, shape index: {}]
  %s5 = inlined_call_operand.vmem [shape: f32[3,256], index: 5, kind: input, shape index: {}]
  %s6 = inlined_call_operand.hbm [shape: bf16[2,128,512], index: 6, kind: input, shape index: {}]
  %s7 = inlined_call_operand.hbm [shape: bf16[2,128,512], index: 7, kind: input, shape index: {}]
  %s8 = inlined_call_operand.hbm [shape: bf16[3,128,128], index: 8, kind: input, shape index: {}]
  %s9 = inlined_call_operand.vmem [shape: bf16[128,256], index: 9, kind: input, shape index: {}]
  %s10 = inlined_call_operand.hbm [shape: bf16[2,256,256], index: 10, kind: input, shape index: {}]
  %s11 = inlined_call_operand.vmem [shape: f32[8,512], index: 11, kind: output, shape index: {}]
  %s12 = sld [smem:[#allocation0]]
  $region92: #{hipot_forward.1} parent=0
    _
  %s14 = ssub.s32 1, %s12
  %s15 = scalar_select 0, %s14, %s12
  $region1: #{hipot_forward.1} parent=0
    #allocation10 [shape = 'u8[131072]{0}', space=vmem, size = 0x20000, scoped, tag = 'input window, operand 1, single buffered']
    #allocation11 [shape = 's32[1]{0}', space=sflag, size = 0x4, scoped, tag = 'scoped memory for hipot_forward.1']
    #allocation12 [shape = 'u8[131072]{0}', space=vmem, size = 0x20000, scoped, tag = 'input window, operand 2, single buffered']
    #allocation13 [shape = 's32[1]{0}', space=sflag, size = 0x4, scoped, tag = 'scoped memory for hipot_forward.1']
    %16 = vsyncpa [#allocation11], 0
    %17 = vsyncpa [#allocation13], 0
    // Predicated region
    $region2: #{hipot_forward.1} parent=1 // pred_check
      _
    $region3: #{hipot_forward.1} parent=1 // pred_check_branch
      %19 = sbr.rel (0) target = $region5
    $region4: #{hipot_forward.1} parent=1 // pred_region
      _
    $region5: #{hipot_forward.1} parent=1 // pred_fallthru
      _
    // Predicated region
    $region6: #{hipot_forward.1} parent=1 // pred_check
      _
    $region7: #{hipot_forward.1} parent=1 // pred_check_branch
      %21 = sbr.rel (0) target = $region9
    $region8: #{hipot_forward.1} parent=1 // pred_region
      %s23 = ssub.s32 4096, 4096
      %24 = vsyncadd [#allocation11], %s23
      %s25 = sshll.u32 [#allocation10], 4
      %s26 = int_to_ptr.vmem [resolvable:$true] %s25
      %31 = dma.hbm_to_vmem [thread:$0]  %s1, 4096, %s26, [#allocation11], 256, 256, 16
    $region9: #{hipot_forward.1} parent=1 // pred_fallthru
      _
    // Predicated region
    $region10: #{hipot_forward.1} parent=1 // pred_check
      _
    $region11: #{hipot_forward.1} parent=1 // pred_check_branch
      %33 = sbr.rel (0) target = $region13
    $region12: #{hipot_forward.1} parent=1 // pred_region
      %s35 = ssub.s32 4096, 4096
      %36 = vsyncadd [#allocation13], %s35
      %s37 = sshll.u32 [#allocation12], 4
      %s38 = int_to_ptr.vmem [resolvable:$true] %s37
      %43 = dma.hbm_to_vmem [thread:$0]  %s2, 4096, %s38, [#allocation13], 256, 256, 16
    $region13: #{hipot_forward.1} parent=1 // pred_fallthru
      _
    // Predicated region
    $region14: #{hipot_forward.1} parent=1 // pred_check
      _
    $region15: #{hipot_forward.1} parent=1 // pred_check_branch
      %45 = sbr.rel (0) target = $region17
    $region16: #{hipot_forward.1} parent=1 // pred_region
      _
    $region17: #{hipot_forward.1} parent=1 // pred_fallthru
      _
    // Predicated region
    $region18: #{hipot_forward.1} parent=1 // pred_check
      _
    $region19: #{hipot_forward.1} parent=1 // pred_check_branch
      %47 = sbr.rel (0) target = $region21
    $region20: #{hipot_forward.1} parent=1 // pred_region
      _
    $region21: #{hipot_forward.1} parent=1 // pred_fallthru
      _
    // Predicated region
    $region22: #{hipot_forward.1} parent=1 // pred_check
      _
    $region23: #{hipot_forward.1} parent=1 // pred_check_branch
      %49 = sbr.rel (0) target = $region25
    $region24: #{hipot_forward.1} parent=1 // pred_region
      _
    $region25: #{hipot_forward.1} parent=1 // pred_fallthru
      _
    // Predicated region
    $region26: #{hipot_forward.1} parent=1 // pred_check
      _
    $region27: #{hipot_forward.1} parent=1 // pred_check_branch
      %51 = sbr.rel (0) target = $region29
    $region28: #{hipot_forward.1} parent=1 // pred_region
      %52 = dma.done [#allocation11], 4096
    $region29: #{hipot_forward.1} parent=1 // pred_fallthru
      _
    // Predicated region
    $region30: #{hipot_forward.1} parent=1 // pred_check
      _
    $region31: #{hipot_forward.1} parent=1 // pred_check_branch
      %54 = sbr.rel (0) target = $region33
    $region32: #{hipot_forward.1} parent=1 // pred_region
      %55 = dma.done [#allocation13], 4096
    $region33: #{hipot_forward.1} parent=1 // pred_fallthru
      _
    // Predicated region
    $region34: #{hipot_forward.1} parent=1 // pred_check
      _
    $region35: #{hipot_forward.1} parent=1 // pred_check_branch
      %58 = sbr.rel target = $region37
    $region36: #{hipot_forward.1} parent=1 // pred_region
      %59 = sst [smem:[#allocation16]] [#allocation15]
      %60 = sst [smem:[#allocation17]] [#allocation14]
    $region37: #{hipot_forward.1} parent=1 // pred_fallthru
      _
    %62 = shalt.err (0)
    %s64 = sshll.u32 [#allocation4], 4
    %s65 = int_to_ptr.vmem [resolvable:$true] %s64
    %67 = dma.hbm_to_vmem [thread:$0]  %s6, 8192, %s65, [#allocation9]
    %s68 = scalar_lea.sflag [#allocation9], 1
    // Predicated region
    $region38: #{hipot_forward.1} parent=1 // pred_check
      _
    $region39: #{hipot_forward.1} parent=1 // pred_check_branch
      %70 = sbr.rel target = $region41
    $region40: #{hipot_forward.1} parent=1 // pred_region
      %71 = sst [smem:[#allocation16]] [#allocation19]
      %72 = sst [smem:[#allocation17]] [#allocation18]
    $region41: #{hipot_forward.1} parent=1 // pred_fallthru
      _
    %74 = shalt.err (0)
    %s76 = sshll.u32 [#allocation5], 4
    %s77 = int_to_ptr.vmem [resolvable:$true] %s76
    %79 = dma.hbm_to_vmem [thread:$0]  %s7, 8192, %s77, %s68
    %s80 = scalar_lea.sflag [#allocation9], 2
    // Predicated region
    $region42: #{hipot_forward.1} parent=1 // pred_check
      _
    $region43: #{hipot_forward.1} parent=1 // pred_check_branch
      %82 = sbr.rel target = $region45
    $region44: #{hipot_forward.1} parent=1 // pred_region
      %83 = sst [smem:[#allocation16]] [#allocation21]
      %84 = sst [smem:[#allocation17]] [#allocation20]
    $region45: #{hipot_forward.1} parent=1 // pred_fallthru
      _
    %86 = shalt.err (0)
    %s88 = sshll.u32 [#allocation6], 4
    %s89 = int_to_ptr.vmem [resolvable:$true] %s88
    %91 = dma.hbm_to_vmem [thread:$0]  %s8, 3072, %s89, %s80
    %s92 = scalar_lea.sflag [#allocation9], 3
    %p94 = scmp.lt.u32.totalorder 128, 8
    %p95 = pneg %p94
    // Predicated region
    $region46: #{hipot_forward.1} parent=1 // pred_check
      _
    $region47: #{hipot_forward.1} parent=1 // pred_check_branch
      %97 = sbr.rel (%p94) target = $region49
    $region48: #{hipot_forward.1} parent=1 // pred_region
      %s113 = sand.u32 128, 7
      %p114 = scmp.eq.s32.totalorder %s113, 0
      // Predicated region
      $region61: #{hipot_forward.1} parent=48 // pred_check
        %p115 = pneg %p114
      $region62: #{hipot_forward.1} parent=48 // pred_check_branch
        %117 = sbr.rel (%p115) target = $region64
      $region63: #{hipot_forward.1} parent=48 // pred_region
        loop: start=0, step=1, limit=1
        $region65: #{hipot_forward.1} parent=63 // loop_pre_header
          _
        $region66: #{hipot_forward.1} parent=63 // loop_header
          %s119 = sphi 0, %s123
          %p120 = scmp.ge.s32.totalorder %s119, 1
          %s124 = sphi %s9, %s9
          %s125 = sphi [#allocation7], [#allocation7]
        $region67: #{hipot_forward.1} parent=63 // loop_header_branch
          %122 = sbr.rel (%p120) target = $region71
        $region68: #{hipot_forward.1} parent=63 // loop_body
          %v126 = vld [vmem:[%s124] sm:$0xff]
          %127 = vst [vmem:[%s125] sm:$0xff] %v126
          %v128 = vld [vmem:[%s124 + $0x8] sm:$0xff]
          %129 = vst [vmem:[%s125 + $0x8] sm:$0xff] %v128
          %v130 = vld [vmem:[%s124 + $0x10] sm:$0xff]
          %131 = vst [vmem:[%s125 + $0x10] sm:$0xff] %v130
          %v132 = vld [vmem:[%s124 + $0x18] sm:$0xff]
          %133 = vst [vmem:[%s125 + $0x18] sm:$0xff] %v132
          %v134 = vld [vmem:[%s124 + $0x20] sm:$0xff]
          %135 = vst [vmem:[%s125 + $0x20] sm:$0xff] %v134
          %v136 = vld [vmem:[%s124 + $0x28] sm:$0xff]
          %137 = vst [vmem:[%s125 + $0x28] sm:$0xff] %v136
          %v138 = vld [vmem:[%s124 + $0x30] sm:$0xff]
          %139 = vst [vmem:[%s125 + $0x30] sm:$0xff] %v138
          %v140 = vld [vmem:[%s124 + $0x38] sm:$0xff]
          %141 = vst [vmem:[%s125 + $0x38] sm:$0xff] %v140
          %v142 = vld [vmem:[%s124 + $0x40] sm:$0xff]
          %143 = vst [vmem:[%s125 + $0x40] sm:$0xff] %v142
          %v144 = vld [vmem:[%s124 + $0x48] sm:$0xff]
          %145 = vst [vmem:[%s125 + $0x48] sm:$0xff] %v144
          %v146 = vld [vmem:[%s124 + $0x50] sm:$0xff]
          %147 = vst [vmem:[%s125 + $0x50] sm:$0xff] %v146
          %v148 = vld [vmem:[%s124 + $0x58] sm:$0xff]
          %149 = vst [vmem:[%s125 + $0x58] sm:$0xff] %v148
          %v150 = vld [vmem:[%s124 + $0x60] sm:$0xff]
          %151 = vst [vmem:[%s125 + $0x60] sm:$0xff] %v150
          %v152 = vld [vmem:[%s124 + $0x68] sm:$0xff]
          %153 = vst [vmem:[%s125 + $0x68] sm:$0xff] %v152
          %v154 = vld [vmem:[%s124 + $0x70] sm:$0xff]
          %155 = vst [vmem:[%s125 + $0x70] sm:$0xff] %v154
          %v156 = vld [vmem:[%s124 + $0x78] sm:$0xff]
          %157 = vst [vmem:[%s125 + $0x78] sm:$0xff] %v156
        $region69: #{hipot_forward.1} parent=63 // loop_footer
          %s123 = sadd.s32 1, %s119
        $region70: #{hipot_forward.1} parent=63 // loop_footer_branch
          %118 = sbr.rel target = $region66
        $region71: #{hipot_forward.1} parent=63 // loop_exit
          _
      $region64: #{hipot_forward.1} parent=48 // pred_fallthru
        _
      %p158 = pneg %p114
      // Predicated region
      $region72: #{hipot_forward.1} parent=48 // pred_check
        _
      $region73: #{hipot_forward.1} parent=48 // pred_check_branch
        %160 = sbr.rel (%p114) target = $region75
      $region74: #{hipot_forward.1} parent=48 // pred_region
        %s161 = sand.u32 128, 7
      $region75: #{hipot_forward.1} parent=48 // pred_fallthru
        _
    $region49: #{hipot_forward.1} parent=1 // pred_fallthru
      _
    // Predicated region
    $region50: #{hipot_forward.1} parent=1 // pred_check
      %p98 = pneg %p94
    $region51: #{hipot_forward.1} parent=1 // pred_check_branch
      %100 = sbr.rel (%p98) target = $region53
    $region52: #{hipot_forward.1} parent=1 // pred_region
      %s101 = sshll.u32 1, 128
      %s102 = ssub.s32 %s101, 1
      loop: start=0, step=1, limit=1
      $region54: #{hipot_forward.1} parent=52 // loop_pre_header
        _
      $region55: #{hipot_forward.1} parent=52 // loop_header
        %s104 = sphi 0, %s108
        %p105 = scmp.ge.s32.totalorder %s104, 1
        %s109 = sphi %s9, %s9
        %s110 = sphi [#allocation7], [#allocation7]
      $region56: #{hipot_forward.1} parent=52 // loop_header_branch
        %107 = sbr.rel (%p105) target = $region60
      $region57: #{hipot_forward.1} parent=52 // loop_body
        %v111 = vld [vmem:[%s109] sm:%s102]
        %112 = vst [vmem:[%s110] sm:%s102] %v111
      $region58: #{hipot_forward.1} parent=52 // loop_footer
        %s108 = sadd.s32 1, %s104
      $region59: #{hipot_forward.1} parent=52 // loop_footer_branch
        %103 = sbr.rel target = $region55
      $region60: #{hipot_forward.1} parent=52 // loop_exit
        _
    $region53: #{hipot_forward.1} parent=1 // pred_fallthru
      _
    // Predicated region
    $region76: #{hipot_forward.1} parent=1 // pred_check
      _
    $region77: #{hipot_forward.1} parent=1 // pred_check_branch
      %164 = sbr.rel (0) target = $region79
    $region78: #{hipot_forward.1} parent=1 // pred_region
      %165 = vsyncadd %s92, 2048
    $region79: #{hipot_forward.1} parent=1 // pred_fallthru
      _
    %s166 = scalar_lea.sflag [#allocation9], 4
    // Predicated region
    $region80: #{hipot_forward.1} parent=1 // pred_check
      _
    $region81: #{hipot_forward.1} parent=1 // pred_check_branch
      %168 = sbr.rel target = $region83
    $region82: #{hipot_forward.1} parent=1 // pred_region
      %169 = sst [smem:[#allocation16]] [#allocation24]
      %170 = sst [smem:[#allocation17]] [#allocation23]
    $region83: #{hipot_forward.1} parent=1 // pred_fallthru
      _
    %172 = shalt.err (0)
    %s174 = sshll.u32 [#allocation8], 4
    %s175 = int_to_ptr.vmem [resolvable:$true] %s174
    %177 = dma.hbm_to_vmem [thread:$0]  %s10, 8192, %s175, %s166
    %v178 = vld [vmem:[%s0] sm:$0xf]
    %v179 = vld [vmem:[%s0 + $0x4] sm:$0xf]
    %v180 = vld [vmem:[%s0 + $0x8] sm:$0xf]
    %v181 = vld [vmem:[%s0 + $0xc] sm:$0xf]
    %v182 = vld [vmem:[%s0 + $0x10] sm:$0xf]
    %v183 = vld [vmem:[%s0 + $0x14] sm:$0xf]
    %v184 = vld [vmem:[%s0 + $0x18] sm:$0xf]
    %v185 = vld [vmem:[%s0 + $0x1c] sm:$0xf]
    %v186 = vld [vmem:[#allocation10] sm:$0xff]
    %v187 = vld [vmem:[#allocation10 + $0x8] sm:$0xff]
    %v188 = vld [vmem:[#allocation10 + $0x10] sm:$0xff]
    %v189 = vld [vmem:[#allocation10 + $0x18] sm:$0xff]
    %v190 = vld [vmem:[#allocation10 + $0x20] sm:$0xff]
    %v191 = vld [vmem:[#allocation10 + $0x28] sm:$0xff]
    %v192 = vld [vmem:[#allocation10 + $0x30] sm:$0xff]
    %v193 = vld [vmem:[#allocation10 + $0x38] sm:$0xff]
    %v194 = vld [vmem:[#allocation10 + $0x40] sm:$0xff]
    %v195 = vld [vmem:[#allocation10 + $0x48] sm:$0xff]
    %v196 = vld [vmem:[#allocation10 + $0x50] sm:$0xff]
    %v197 = vld [vmem:[#allocation10 + $0x58] sm:$0xff]
    %v198 = vld [vmem:[#allocation10 + $0x60] sm:$0xff]
    %v199 = vld [vmem:[#allocation10 + $0x68] sm:$0xff]
    %v200 = vld [vmem:[#allocation10 + $0x70] sm:$0xff]
    %v201 = vld [vmem:[#allocation10 + $0x78] sm:$0xff]
    %v202 = vld [vmem:[#allocation10 + $0x80] sm:$0xff]
    %v203 = vld [vmem:[#allocation10 + $0x88] sm:$0xff]
    %v204 = vld [vmem:[#allocation10 + $0x90] sm:$0xff]
    %v205 = vld [vmem:[#allocation10 + $0x98] sm:$0xff]
    %v206 = vld [vmem:[#allocation10 + $0xa0] sm:$0xff]
    %v207 = vld [vmem:[#allocation10 + $0xa8] sm:$0xff]
    %v208 = vld [vmem:[#allocation10 + $0xb0] sm:$0xff]
    %v209 = vld [vmem:[#allocation10 + $0xb8] sm:$0xff]
    %v210 = vld [vmem:[#allocation10 + $0xc0] sm:$0xff]
    %v211 = vld [vmem:[#allocation10 + $0xc8] sm:$0xff]
    %v212 = vld [vmem:[#allocation10 + $0xd0] sm:$0xff]
    %v213 = vld [vmem:[#allocation10 + $0xd8] sm:$0xff]
    %v214 = vld [vmem:[#allocation10 + $0xe0] sm:$0xff]
    %v215 = vld [vmem:[#allocation10 + $0xe8] sm:$0xff]
    %v216 = vld [vmem:[#allocation10 + $0xf0] sm:$0xff]
    %v217 = vld [vmem:[#allocation10 + $0xf8] sm:$0xff]
    %v218 = vld [vmem:[%s3] ss:$4 sm:$0xf]
    %v220 = vlaneseq
    %v221 = vshrl.u32 %v220, 7
    %v222 = vsub.s32 0, %v221
    %v223 = vrot.slane %v218, %v222
    %v224 = vlaneseq
    %v225 = vshrl.u32 %v224, 7
    %v226 = vsub.s32 1, %v225
    %v227 = vrot.slane %v218, %v226
    %v228 = vlaneseq
    %v229 = vshrl.u32 %v228, 7
    %v230 = vsub.s32 2, %v229
    %v231 = vrot.slane %v218, %v230
    %v232 = vlaneseq
    %v233 = vshrl.u32 %v232, 7
    %v234 = vsub.s32 3, %v233
    %v235 = vrot.slane %v218, %v234
    %v248 = vunpack.c.l.b16 %v178
    %v249 = vunpack.c.l.b16 %v179
    %v250 = vunpack.c.l.b16 %v180
    %v251 = vunpack.c.l.b16 %v181
    %v252 = vunpack.c.l.b16 %v182
    %v253 = vunpack.c.l.b16 %v183
    %v254 = vunpack.c.l.b16 %v184
    %v255 = vunpack.c.l.b16 %v185
    %v256 = vpack.c.b16 %v249, %v248
    %v257 = vpack.c.b16 %v251, %v250
    %v258 = vpack.c.b16 %v253, %v252
    %v259 = vpack.c.b16 %v255, %v254
    %v296 = vunpack.c.l.b16 %v186
    %v297 = vunpack.c.h.b16 %v186
    %v298 = vunpack.c.l.b16 %v187
    %v299 = vunpack.c.h.b16 %v187
    %v300 = vunpack.c.l.b16 %v188
    %v301 = vunpack.c.h.b16 %v188
    %v302 = vunpack.c.l.b16 %v189
    %v303 = vunpack.c.h.b16 %v189
    %v304 = vunpack.c.l.b16 %v190
    %v305 = vunpack.c.h.b16 %v190
    %v306 = vunpack.c.l.b16 %v191
    %v307 = vunpack.c.h.b16 %v191
    %v308 = vunpack.c.l.b16 %v192
    %v309 = vunpack.c.h.b16 %v192
    %v310 = vunpack.c.l.b16 %v193
    %v311 = vunpack.c.h.b16 %v193
    %v312 = vunpack.c.l.b16 %v194
    %v313 = vunpack.c.h.b16 %v194
    %v314 = vunpack.c.l.b16 %v195
    %v315 = vunpack.c.h.b16 %v195
    %v316 = vunpack.c.l.b16 %v196
    %v317 = vunpack.c.h.b16 %v196
    %v318 = vunpack.c.l.b16 %v197
    %v319 = vunpack.c.h.b16 %v197
    %v320 = vunpack.c.l.b16 %v198
    %v321 = vunpack.c.h.b16 %v198
    %v322 = vunpack.c.l.b16 %v199
    %v323 = vunpack.c.h.b16 %v199
    %v324 = vunpack.c.l.b16 %v200
    %v325 = vunpack.c.h.b16 %v200
    %v326 = vunpack.c.l.b16 %v201
    %v327 = vunpack.c.h.b16 %v201
    %v328 = vunpack.c.l.b16 %v202
    %v329 = vunpack.c.h.b16 %v202
    %v330 = vunpack.c.l.b16 %v203
    %v331 = vunpack.c.h.b16 %v203
    %v332 = vunpack.c.l.b16 %v204
    %v333 = vunpack.c.h.b16 %v204
    %v334 = vunpack.c.l.b16 %v205
    %v335 = vunpack.c.h.b16 %v205
    %v336 = vunpack.c.l.b16 %v206
    %v337 = vunpack.c.h.b16 %v206
    %v338 = vunpack.c.l.b16 %v207
    %v339 = vunpack.c.h.b16 %v207
    %v340 = vunpack.c.l.b16 %v208
    %v341 = vunpack.c.h.b16 %v208
    %v342 = vunpack.c.l.b16 %v209
    %v343 = vunpack.c.h.b16 %v209
    %v344 = vunpack.c.l.b16 %v210
    %v345 = vunpack.c.h.b16 %v210
    %v346 = vunpack.c.l.b16 %v211
    %v347 = vunpack.c.h.b16 %v211
    %v348 = vunpack.c.l.b16 %v212
    %v349 = vunpack.c.h.b16 %v212
    %v350 = vunpack.c.l.b16 %v213
    %v351 = vunpack.c.h.b16 %v213
    %v352 = vunpack.c.l.b16 %v214
    %v353 = vunpack.c.h.b16 %v214
    %v354 = vunpack.c.l.b16 %v215
    %v355 = vunpack.c.h.b16 %v215
    %v356 = vunpack.c.l.b16 %v216
    %v357 = vunpack.c.h.b16 %v216
    %v358 = vunpack.c.l.b16 %v217
    %v359 = vunpack.c.h.b16 %v217
    %v360 = vpack.c.b16 %v300, %v296
    %v361 = vpack.c.b16 %v301, %v297
    %v362 = vpack.c.b16 %v302, %v298
    %v363 = vpack.c.b16 %v303, %v299
    %v364 = vpack.c.b16 %v308, %v304
    %v365 = vpack.c.b16 %v309, %v305
    %v366 = vpack.c.b16 %v310, %v306
    %v367 = vpack.c.b16 %v311, %v307
    %v368 = vpack.c.b16 %v316, %v312
    %v369 = vpack.c.b16 %v317, %v313
    %v370 = vpack.c.b16 %v318, %v314
    %v371 = vpack.c.b16 %v319, %v315
    %v372 = vpack.c.b16 %v324, %v320
    %v373 = vpack.c.b16 %v325, %v321
    %v374 = vpack.c.b16 %v326, %v322
    %v375 = vpack.c.b16 %v327, %v323
    %v376 = vpack.c.b16 %v332, %v328
    %v377 = vpack.c.b16 %v333, %v329
    %v378 = vpack.c.b16 %v334, %v330
    %v379 = vpack.c.b16 %v335, %v331
    %v380 = vpack.c.b16 %v340, %v336
    %v381 = vpack.c.b16 %v341, %v337
    %v382 = vpack.c.b16 %v342, %v338
    %v383 = vpack.c.b16 %v343, %v339
    %v384 = vpack.c.b16 %v348, %v344
    %v385 = vpack.c.b16 %v349, %v345
    %v386 = vpack.c.b16 %v350, %v346
    %v387 = vpack.c.b16 %v351, %v347
    %v388 = vpack.c.b16 %v356, %v352
    %v389 = vpack.c.b16 %v357, %v353
    %v390 = vpack.c.b16 %v358, %v354
    %v391 = vpack.c.b16 %v359, %v355
    %424 = vmatprep.subr.bf16.mxu0 %v389
    %425 = vmatpush1.bf16.msra.mxu0 %v388
    %426 = vmatprep.subr.bf16.mxu0 %v385
    %427 = vmatpush1.bf16.msra.mxu0 %v384
    %428 = vmatprep.subr.bf16.mxu0 %v381
    %429 = vmatpush1.bf16.msra.mxu0 %v380
    %430 = vmatprep.subr.bf16.mxu0 %v377
    %431 = vmatpush1.bf16.msra.mxu0 %v376
    %432 = vmatprep.subr.bf16.mxu0 %v373
    %433 = vmatpush1.bf16.msra.mxu0 %v372
    %434 = vmatprep.subr.bf16.mxu0 %v369
    %435 = vmatpush1.bf16.msra.mxu0 %v368
    %436 = vmatprep.subr.bf16.mxu0 %v365
    %437 = vmatpush1.bf16.msra.mxu0 %v364
    %438 = vmatprep.subr.bf16.mxu0 %v361
    %439 = vmatpush1.bf16.msra.mxu0 %v360
    %440 = vmatprep.subr.bf16.mxu0 0
    %441 = vmatpush2.bf16.msra.mxu0 0
    %442 = vmatprep.subr.bf16.mxu0 0
    %443 = vmatpush2.bf16.msra.mxu0 0
    %444 = vmatprep.subr.bf16.mxu0 0
    %445 = vmatpush2.bf16.msra.mxu0 0
    %446 = vmatprep.subr.bf16.mxu0 0
    %447 = vmatpush2.bf16.msra.mxu0 0
    %448 = vmatprep.subr.bf16.mxu0 0
    %449 = vmatpush2.bf16.msra.mxu0 0
    %450 = vmatprep.subr.bf16.mxu0 0
    %451 = vmatpush2.bf16.msra.mxu0 0
    %452 = vmatprep.subr.bf16.mxu0 0
    %453 = vmatpush2.bf16.msra.mxu0 0
    %454 = vmatprep.subr.bf16.mxu0 0
    %455 = vmatpush2.bf16.msra.mxu0 0
    %456 = vmatprep.mubr.bf16.mxu0 0
    %457 = vmatmul.mubr.bf16.gmra.mxu0 %v256
    %v458 = vpop.f32.mrf.mxu0
    %v459 = vadd.f32 %v223, %v458
    %v460 = vpop.f32.mrf.mxu0
    %v461 = vadd.f32 %v227, %v460
    %v462 = vpop.f32.mrf.mxu0
    %v463 = vadd.f32 %v223, %v462
    %v464 = vpop.f32.mrf.mxu0
    %v465 = vadd.f32 %v227, %v464
    %466 = vmatprep.mubr.bf16.mxu0 0
    %467 = vmatmul.mubr.bf16.gmra.mxu0 %v257
    %v468 = vpop.f32.mrf.mxu0
    %v469 = vadd.f32 %v223, %v468
    %v470 = vpop.f32.mrf.mxu0
    %v471 = vadd.f32 %v227, %v470
    %v472 = vpop.f32.mrf.mxu0
    %v473 = vadd.f32 %v223, %v472
    %v474 = vpop.f32.mrf.mxu0
    %v475 = vadd.f32 %v227, %v474
    %476 = vmatprep.mubr.bf16.mxu0 0
    %477 = vmatmul.mubr.bf16.gmra.mxu0 %v258
    %v478 = vpop.f32.mrf.mxu0
    %v479 = vadd.f32 %v223, %v478
    %v480 = vpop.f32.mrf.mxu0
    %v481 = vadd.f32 %v227, %v480
    %v482 = vpop.f32.mrf.mxu0
    %v483 = vadd.f32 %v223, %v482
    %v484 = vpop.f32.mrf.mxu0
    %v485 = vadd.f32 %v227, %v484
    %486 = vmatprep.mubr.bf16.mxu0 0
    %487 = vmatmul.mubr.bf16.gmra.mxu0 %v259
    %v488 = vpop.f32.mrf.mxu0
    %v489 = vadd.f32 %v223, %v488
    %v490 = vpop.f32.mrf.mxu0
    %v491 = vadd.f32 %v227, %v490
    %v492 = vpop.f32.mrf.mxu0
    %v493 = vadd.f32 %v223, %v492
    %v494 = vpop.f32.mrf.mxu0
    %v495 = vadd.f32 %v227, %v494
    %496 = vdwg.mxu0
    %497 = vmatprep.subr.bf16.mxu0 %v391
    %498 = vmatpush1.bf16.msra.mxu0 %v390
    %499 = vmatprep.subr.bf16.mxu0 %v387
    %500 = vmatpush1.bf16.msra.mxu0 %v386
    %501 = vmatprep.subr.bf16.mxu0 %v383
    %502 = vmatpush1.bf16.msra.mxu0 %v382
    %503 = vmatprep.subr.bf16.mxu0 %v379
    %504 = vmatpush1.bf16.msra.mxu0 %v378
    %505 = vmatprep.subr.bf16.mxu0 %v375
    %506 = vmatpush1.bf16.msra.mxu0 %v374
    %507 = vmatprep.subr.bf16.mxu0 %v371
    %508 = vmatpush1.bf16.msra.mxu0 %v370
    %509 = vmatprep.subr.bf16.mxu0 %v367
    %510 = vmatpush1.bf16.msra.mxu0 %v366
    %511 = vmatprep.subr.bf16.mxu0 %v363
    %512 = vmatpush1.bf16.msra.mxu0 %v362
    %513 = vmatprep.subr.bf16.mxu0 0
    %514 = vmatpush2.bf16.msra.mxu0 0
    %515 = vmatprep.subr.bf16.mxu0 0
    %516 = vmatpush2.bf16.msra.mxu0 0
    %517 = vmatprep.subr.bf16.mxu0 0
    %518 = vmatpush2.bf16.msra.mxu0 0
    %519 = vmatprep.subr.bf16.mxu0 0
    %520 = vmatpush2.bf16.msra.mxu0 0
    %521 = vmatprep.subr.bf16.mxu0 0
    %522 = vmatpush2.bf16.msra.mxu0 0
    %523 = vmatprep.subr.bf16.mxu0 0
    %524 = vmatpush2.bf16.msra.mxu0 0
    %525 = vmatprep.subr.bf16.mxu0 0
    %526 = vmatpush2.bf16.msra.mxu0 0
    %527 = vmatprep.subr.bf16.mxu0 0
    %528 = vmatpush2.bf16.msra.mxu0 0
    %529 = vmatprep.mubr.bf16.mxu0 0
    %530 = vmatmul.mubr.bf16.gmra.mxu0 %v256
    %v531 = vpop.f32.mrf.mxu0
    %v532 = vadd.f32 %v231, %v531
    %v533 = vpop.f32.mrf.mxu0
    %v534 = vadd.f32 %v235, %v533
    %v535 = vpop.f32.mrf.mxu0
    %v536 = vadd.f32 %v231, %v535
    %v537 = vpop.f32.mrf.mxu0
    %v538 = vadd.f32 %v235, %v537
    %539 = vmatprep.mubr.bf16.mxu0 0
    %540 = vmatmul.mubr.bf16.gmra.mxu0 %v257
    %v541 = vpop.f32.mrf.mxu0
    %v542 = vadd.f32 %v231, %v541
    %v543 = vpop.f32.mrf.mxu0
    %v544 = vadd.f32 %v235, %v543
    %v545 = vpop.f32.mrf.mxu0
    %v546 = vadd.f32 %v231, %v545
    %v547 = vpop.f32.mrf.mxu0
    %v548 = vadd.f32 %v235, %v547
    %549 = vmatprep.mubr.bf16.mxu0 0
    %550 = vmatmul.mubr.bf16.gmra.mxu0 %v258
    %v551 = vpop.f32.mrf.mxu0
    %v552 = vadd.f32 %v231, %v551
    %v553 = vpop.f32.mrf.mxu0
    %v554 = vadd.f32 %v235, %v553
    %v555 = vpop.f32.mrf.mxu0
    %v556 = vadd.f32 %v231, %v555
    %v557 = vpop.f32.mrf.mxu0
    %v558 = vadd.f32 %v235, %v557
    %559 = vmatprep.mubr.bf16.mxu0 0
    %560 = vmatmul.mubr.bf16.gmra.mxu0 %v259
    %v561 = vpop.f32.mrf.mxu0
    %v562 = vadd.f32 %v231, %v561
    %v563 = vpop.f32.mrf.mxu0
    %v564 = vadd.f32 %v235, %v563
    %v565 = vpop.f32.mrf.mxu0
    %v566 = vadd.f32 %v231, %v565
    %v567 = vpop.f32.mrf.mxu0
    %v568 = vadd.f32 %v235, %v567
    %569 = vdwg.mxu0
    %570 = vst [vmem:[#allocation2] sm:$0xff] %v459
    %571 = vst [vmem:[#allocation2 + $0x8] sm:$0xff] %v461
    %572 = vst [vmem:[#allocation2 + $0x10] sm:$0xff] %v532
    %573 = vst [vmem:[#allocation2 + $0x18] sm:$0xff] %v534
    %574 = vst [vmem:[#allocation2 + $0x20] sm:$0xff] %v463
    %575 = vst [vmem:[#allocation2 + $0x28] sm:$0xff] %v465
    %576 = vst [vmem:[#allocation2 + $0x30] sm:$0xff] %v536
    %577 = vst [vmem:[#allocation2 + $0x38] sm:$0xff] %v538
    %578 = vst [vmem:[#allocation2 + $0x40] sm:$0xff] %v469
    %579 = vst [vmem:[#allocation2 + $0x48] sm:$0xff] %v471
    %580 = vst [vmem:[#allocation2 + $0x50] sm:$0xff] %v542
    %581 = vst [vmem:[#allocation2 + $0x58] sm:$0xff] %v544
    %582 = vst [vmem:[#allocation2 + $0x60] sm:$0xff] %v473
    %583 = vst [vmem:[#allocation2 + $0x68] sm:$0xff] %v475
    %584 = vst [vmem:[#allocation2 + $0x70] sm:$0xff] %v546
    %585 = vst [vmem:[#allocation2 + $0x78] sm:$0xff] %v548
    %586 = vst [vmem:[#allocation2 + $0x80] sm:$0xff] %v479
    %587 = vst [vmem:[#allocation2 + $0x88] sm:$0xff] %v481
    %588 = vst [vmem:[#allocation2 + $0x90] sm:$0xff] %v552
    %589 = vst [vmem:[#allocation2 + $0x98] sm:$0xff] %v554
    %590 = vst [vmem:[#allocation2 + $0xa0] sm:$0xff] %v483
    %591 = vst [vmem:[#allocation2 + $0xa8] sm:$0xff] %v485
    %592 = vst [vmem:[#allocation2 + $0xb0] sm:$0xff] %v556
    %593 = vst [vmem:[#allocation2 + $0xb8] sm:$0xff] %v558
    %594 = vst [vmem:[#allocation2 + $0xc0] sm:$0xff] %v489
    %595 = vst [vmem:[#allocation2 + $0xc8] sm:$0xff] %v491
    %596 = vst [vmem:[#allocation2 + $0xd0] sm:$0xff] %v562
    %597 = vst [vmem:[#allocation2 + $0xd8] sm:$0xff] %v564
    %598 = vst [vmem:[#allocation2 + $0xe0] sm:$0xff] %v493
    %599 = vst [vmem:[#allocation2 + $0xe8] sm:$0xff] %v495
    %600 = vst [vmem:[#allocation2 + $0xf0] sm:$0xff] %v566
    %601 = vst [vmem:[#allocation2 + $0xf8] sm:$0xff] %v568
    %s602 = smul.u32 0, 4
    %s603 = smul.addr %s602, 8
    %s604 = scalar_lea.vmem [#allocation2], %s603
    %v605 = vld [vmem:[%s604] sm:$0xff]
    %v606 = vld [vmem:[%s604 + $0x8] sm:$0xff]
    %v607 = vld [vmem:[%s604 + $0x10] sm:$0xff]
    %v608 = vld [vmem:[%s604 + $0x18] sm:$0xff]
    %v609 = vld [vmem:[#allocation12] sm:$0xff]
    %v610 = vld [vmem:[#allocation12 + $0x8] sm:$0xff]
    %v611 = vld [vmem:[#allocation12 + $0x10] sm:$0xff]
    %v612 = vld [vmem:[#allocation12 + $0x18] sm:$0xff]
    %v613 = vld [vmem:[#allocation12 + $0x20] sm:$0xff]
    %v614 = vld [vmem:[#allocation12 + $0x28] sm:$0xff]
    %v615 = vld [vmem:[#allocation12 + $0x30] sm:$0xff]
    %v616 = vld [vmem:[#allocation12 + $0x38] sm:$0xff]
    %v617 = vld [vmem:[#allocation12 + $0x40] sm:$0xff]
    %v618 = vld [vmem:[#allocation12 + $0x48] sm:$0xff]
    %v619 = vld [vmem:[#allocation12 + $0x50] sm:$0xff]
    %v620 = vld [vmem:[#allocation12 + $0x58] sm:$0xff]
    %v621 = vld [vmem:[#allocation12 + $0x60] sm:$0xff]
    %v622 = vld [vmem:[#allocation12 + $0x68] sm:$0xff]
    %v623 = vld [vmem:[#allocation12 + $0x70] sm:$0xff]
    %v624 = vld [vmem:[#allocation12 + $0x78] sm:$0xff]
    %v625 = vld [vmem:[#allocation12 + $0x80] sm:$0xff]
    %v626 = vld [vmem:[#allocation12 + $0x88] sm:$0xff]
    %v627 = vld [vmem:[#allocation12 + $0x90] sm:$0xff]
    %v628 = vld [vmem:[#allocation12 + $0x98] sm:$0xff]
    %v629 = vld [vmem:[#allocation12 + $0xa0] sm:$0xff]
    %v630 = vld [vmem:[#allocation12 + $0xa8] sm:$0xff]
    %v631 = vld [vmem:[#allocation12 + $0xb0] sm:$0xff]
    %v632 = vld [vmem:[#allocation12 + $0xb8] sm:$0xff]
    %v633 = vld [vmem:[#allocation12 + $0xc0] sm:$0xff]
    %v634 = vld [vmem:[#allocation12 + $0xc8] sm:$0xff]
    %v635 = vld [vmem:[#allocation12 + $0xd0] sm:$0xff]
    %v636 = vld [vmem:[#allocation12 + $0xd8] sm:$0xff]
    %v637 = vld [vmem:[#allocation12 + $0xe0] sm:$0xff]
    %v638 = vld [vmem:[#allocation12 + $0xe8] sm:$0xff]
    %v639 = vld [vmem:[#allocation12 + $0xf0] sm:$0xff]
    %v640 = vld [vmem:[#allocation12 + $0xf8] sm:$0xff]
    %v673 = vunpack.c.l.b16 %v609
    %v674 = vunpack.c.h.b16 %v609
    %v675 = vunpack.c.l.b16 %v610
    %v676 = vunpack.c.h.b16 %v610
    %v677 = vunpack.c.l.b16 %v611
    %v678 = vunpack.c.h.b16 %v611
    %v679 = vunpack.c.l.b16 %v612
    %v680 = vunpack.c.h.b16 %v612
    %v681 = vunpack.c.l.b16 %v613
    %v682 = vunpack.c.h.b16 %v613
    %v683 = vunpack.c.l.b16 %v614
    %v684 = vunpack.c.h.b16 %v614
    %v685 = vunpack.c.l.b16 %v615
    %v686 = vunpack.c.h.b16 %v615
    %v687 = vunpack.c.l.b16 %v616
    %v688 = vunpack.c.h.b16 %v616
    %v689 = vunpack.c.l.b16 %v617
    %v690 = vunpack.c.h.b16 %v617
    %v691 = vunpack.c.l.b16 %v618
    %v692 = vunpack.c.h.b16 %v618
    %v693 = vunpack.c.l.b16 %v619
    %v694 = vunpack.c.h.b16 %v619
    %v695 = vunpack.c.l.b16 %v620
    %v696 = vunpack.c.h.b16 %v620
    %v697 = vunpack.c.l.b16 %v621
    %v698 = vunpack.c.h.b16 %v621
    %v699 = vunpack.c.l.b16 %v622
    %v700 = vunpack.c.h.b16 %v622
    %v701 = vunpack.c.l.b16 %v623
    %v702 = vunpack.c.h.b16 %v623
    %v703 = vunpack.c.l.b16 %v624
    %v704 = vunpack.c.h.b16 %v624
    %v705 = vunpack.c.l.b16 %v625
    %v706 = vunpack.c.h.b16 %v625
    %v707 = vunpack.c.l.b16 %v626
    %v708 = vunpack.c.h.b16 %v626
    %v709 = vunpack.c.l.b16 %v627
    %v710 = vunpack.c.h.b16 %v627
    %v711 = vunpack.c.l.b16 %v628
    %v712 = vunpack.c.h.b16 %v628
    %v713 = vunpack.c.l.b16 %v629
    %v714 = vunpack.c.h.b16 %v629
    %v715 = vunpack.c.l.b16 %v630
    %v716 = vunpack.c.h.b16 %v630
    %v717 = vunpack.c.l.b16 %v631
    %v718 = vunpack.c.h.b16 %v631
    %v719 = vunpack.c.l.b16 %v632
    %v720 = vunpack.c.h.b16 %v632
    %v721 = vunpack.c.l.b16 %v633
    %v722 = vunpack.c.h.b16 %v633
    %v723 = vunpack.c.l.b16 %v634
    %v724 = vunpack.c.h.b16 %v634
    %v725 = vunpack.c.l.b16 %v635
    %v726 = vunpack.c.h.b16 %v635
    %v727 = vunpack.c.l.b16 %v636
    %v728 = vunpack.c.h.b16 %v636
    %v729 = vunpack.c.l.b16 %v637
    %v730 = vunpack.c.h.b16 %v637
    %v731 = vunpack.c.l.b16 %v638
    %v732 = vunpack.c.h.b16 %v638
    %v733 = vunpack.c.l.b16 %v639
    %v734 = vunpack.c.h.b16 %v639
    %v735 = vunpack.c.l.b16 %v640
    %v736 = vunpack.c.h.b16 %v640
    %v737 = vpack.c.b16 %v677, %v673
    %v738 = vpack.c.b16 %v678, %v674
    %v739 = vpack.c.b16 %v679, %v675
    %v740 = vpack.c.b16 %v680, %v676
    %v741 = vpack.c.b16 %v685, %v681
    %v742 = vpack.c.b16 %v686, %v682
    %v743 = vpack.c.b16 %v687, %v683
    %v744 = vpack.c.b16 %v688, %v684
    %v745 = vpack.c.b16 %v693, %v689
    %v746 = vpack.c.b16 %v694, %v690
    %v747 = vpack.c.b16 %v695, %v691
    %v748 = vpack.c.b16 %v696, %v692
    %v749 = vpack.c.b16 %v701, %v697
    %v750 = vpack.c.b16 %v702, %v698
    %v751 = vpack.c.b16 %v703, %v699
    %v752 = vpack.c.b16 %v704, %v700
    %v753 = vpack.c.b16 %v709, %v705
    %v754 = vpack.c.b16 %v710, %v706
    %v755 = vpack.c.b16 %v711, %v707
    %v756 = vpack.c.b16 %v712, %v708
    %v757 = vpack.c.b16 %v717, %v713
    %v758 = vpack.c.b16 %v718, %v714
    %v759 = vpack.c.b16 %v719, %v715
    %v760 = vpack.c.b16 %v720, %v716
    %v761 = vpack.c.b16 %v725, %v721
    %v762 = vpack.c.b16 %v726, %v722
    %v763 = vpack.c.b16 %v727, %v723
    %v764 = vpack.c.b16 %v728, %v724
    %v765 = vpack.c.b16 %v733, %v729
    %v766 = vpack.c.b16 %v734, %v730
    %v767 = vpack.c.b16 %v735, %v731
    %v768 = vpack.c.b16 %v736, %v732
    %801 = vmatprep.subr.bf16.mxu0 %v766
    %802 = vmatpush1.bf16.msra.mxu0 %v765
    %803 = vmatprep.subr.bf16.mxu0 %v762
    %804 = vmatpush1.bf16.msra.mxu0 %v761
    %805 = vmatprep.subr.bf16.mxu0 %v758
    %806 = vmatpush1.bf16.msra.mxu0 %v757
    %807 = vmatprep.subr.bf16.mxu0 %v754
    %808 = vmatpush1.bf16.msra.mxu0 %v753
    %809 = vmatprep.subr.bf16.mxu0 %v750
    %810 = vmatpush1.bf16.msra.mxu0 %v749
    %811 = vmatprep.subr.bf16.mxu0 %v746
    %812 = vmatpush1.bf16.msra.mxu0 %v745
    %813 = vmatprep.subr.bf16.mxu0 %v742
    %814 = vmatpush1.bf16.msra.mxu0 %v741
    %815 = vmatprep.subr.bf16.mxu0 %v738
    %816 = vmatpush1.bf16.msra.mxu0 %v737
    %817 = vmatprep.subr.bf16.mxu0 0
    %818 = vmatpush2.bf16.msra.mxu0 0
    %819 = vmatprep.subr.bf16.mxu0 0
    %820 = vmatpush2.bf16.msra.mxu0 0
    %821 = vmatprep.subr.bf16.mxu0 0
    %822 = vmatpush2.bf16.msra.mxu0 0
    %823 = vmatprep.subr.bf16.mxu0 0
    %824 = vmatpush2.bf16.msra.mxu0 0
    %825 = vmatprep.subr.bf16.mxu0 0
    %826 = vmatpush2.bf16.msra.mxu0 0
    %827 = vmatprep.subr.bf16.mxu0 0
    %828 = vmatpush2.bf16.msra.mxu0 0
    %829 = vmatprep.subr.bf16.mxu0 0
    %830 = vmatpush2.bf16.msra.mxu0 0
    %831 = vmatprep.subr.bf16.mxu0 0
    %832 = vmatpush2.bf16.msra.mxu0 0
    %833 = vmatprep.mubr.bf16.mxu0 0
    %834 = vmatmul.mubr.bf16.gmra.mxu0 0
    %v835 = vpop.f32.mrf.mxu0
    %v836 = vadd.f32 0.0, %v835
    %v837 = vpop.f32.mrf.mxu0
    %v838 = vadd.f32 0.0, %v837
    %v839 = vpop.f32.mrf.mxu0
    %v840 = vpop.f32.mrf.mxu0
    %841 = vdwg.mxu0
    %842 = vmatprep.subr.bf16.mxu0 %v768
    %843 = vmatpush1.bf16.msra.mxu0 %v767
    %844 = vmatprep.subr.bf16.mxu0 %v764
    %845 = vmatpush1.bf16.msra.mxu0 %v763
    %846 = vmatprep.subr.bf16.mxu0 %v760
    %847 = vmatpush1.bf16.msra.mxu0 %v759
    %848 = vmatprep.subr.bf16.mxu0 %v756
    %849 = vmatpush1.bf16.msra.mxu0 %v755
    %850 = vmatprep.subr.bf16.mxu0 %v752
    %851 = vmatpush1.bf16.msra.mxu0 %v751
    %852 = vmatprep.subr.bf16.mxu0 %v748
    %853 = vmatpush1.bf16.msra.mxu0 %v747
    %854 = vmatprep.subr.bf16.mxu0 %v744
    %855 = vmatpush1.bf16.msra.mxu0 %v743
    %856 = vmatprep.subr.bf16.mxu0 %v740
    %857 = vmatpush1.bf16.msra.mxu0 %v739
    %858 = vmatprep.subr.bf16.mxu0 0
    %859 = vmatpush2.bf16.msra.mxu0 0
    %860 = vmatprep.subr.bf16.mxu0 0
    %861 = vmatpush2.bf16.msra.mxu0 0
    %862 = vmatprep.subr.bf16.mxu0 0
    %863 = vmatpush2.bf16.msra.mxu0 0
    %864 = vmatprep.subr.bf16.mxu0 0
    %865 = vmatpush2.bf16.msra.mxu0 0
    %866 = vmatprep.subr.bf16.mxu0 0
    %867 = vmatpush2.bf16.msra.mxu0 0
    %868 = vmatprep.subr.bf16.mxu0 0
    %869 = vmatpush2.bf16.msra.mxu0 0
    %870 = vmatprep.subr.bf16.mxu0 0
    %871 = vmatpush2.bf16.msra.mxu0 0
    %872 = vmatprep.subr.bf16.mxu0 0
    %873 = vmatpush2.bf16.msra.mxu0 0
    %874 = vmatprep.mubr.bf16.mxu0 0
    %875 = vmatmul.mubr.bf16.gmra.mxu0 0
    %v876 = vpop.f32.mrf.mxu0
    %v877 = vadd.f32 0.0, %v876
    %v878 = vpop.f32.mrf.mxu0
    %v879 = vadd.f32 0.0, %v878
    %v880 = vpop.f32.mrf.mxu0
    %v881 = vpop.f32.mrf.mxu0
    %882 = vdwg.mxu0
    %v883 = vadd.f32 %v605, %v836
    %v884 = vadd.f32 %v606, %v838
    %v885 = vadd.f32 %v607, %v877
    %v886 = vadd.f32 %v608, %v879
    %v887 = vxor.u32 %v883, 2147483648
    %v888 = vmul.f32 %v887, 1.442695
    %v889 = vpow.pop %v888
    %v890 = vadd.f32 %v889, 1.0
    %v891 = vrcp.pop %v890
    %v892 = vmul.f32 1.0, %v891
    %v893 = vxor.u32 %v884, 2147483648
    %v894 = vmul.f32 %v893, 1.442695
    %v895 = vpow.pop %v894
    %v896 = vadd.f32 %v895, 1.0
    %v897 = vrcp.pop %v896
    %v898 = vmul.f32 1.0, %v897
    %v899 = vtanh.pop %v885
    %v900 = vxor.u32 %v886, 2147483648
    %v901 = vmul.f32 %v900, 1.442695
    %v902 = vpow.pop %v901
    %v903 = vadd.f32 %v902, 1.0
    %v904 = vrcp.pop %v903
    %v905 = vmul.f32 1.0, %v904
    %v906 = vmul.f32 %v898, 0.0
    %v907 = vmul.f32 %v892, %v899
    %v908 = vadd.f32 %v906, %v907
    %v909 = vtanh.pop %v908
    %v910 = vmul.f32 %v905, %v909
    %v911 = vpack.c.bf16 %v910, %v910
    %912 = vst [vmem:[#allocation3] sm:$0xf] %v911
    %s913 = smul.u32 1, 4
    %s914 = smul.addr %s913, 8
    %s915 = scalar_lea.vmem [#allocation2], %s914
    %v916 = vld [vmem:[%s915] sm:$0xff]
    %v917 = vld [vmem:[%s915 + $0x8] sm:$0xff]
    %v918 = vld [vmem:[%s915 + $0x10] sm:$0xff]
    %v919 = vld [vmem:[%s915 + $0x18] sm:$0xff]
    %v920 = vld [vmem:[#allocation12] sm:$0xff]
    %v921 = vld [vmem:[#allocation12 + $0x8] sm:$0xff]
    %v922 = vld [vmem:[#allocation12 + $0x10] sm:$0xff]
    %v923 = vld [vmem:[#allocation12 + $0x18] sm:$0xff]
    %v924 = vld [vmem:[#allocation12 + $0x20] sm:$0xff]
    %v925 = vld [vmem:[#allocation12 + $0x28] sm:$0xff]
    %v926 = vld [vmem:[#allocation12 + $0x30] sm:$0xff]
    %v927 = vld [vmem:[#allocation12 + $0x38] sm:$0xff]
    %v928 = vld [vmem:[#allocation12 + $0x40] sm:$0xff]
    %v929 = vld [vmem:[#allocation12 + $0x48] sm:$0xff]
    %v930 = vld [vmem:[#allocation12 + $0x50] sm:$0xff]
    %v931 = vld [vmem:[#allocation12 + $0x58] sm:$0xff]
    %v932 = vld [vmem:[#allocation12 + $0x60] sm:$0xff]
    %v933 = vld [vmem:[#allocation12 + $0x68] sm:$0xff]
    %v934 = vld [vmem:[#allocation12 + $0x70] sm:$0xff]
    %v935 = vld [vmem:[#allocation12 + $0x78] sm:$0xff]
    %v936 = vld [vmem:[#allocation12 + $0x80] sm:$0xff]
    %v937 = vld [vmem:[#allocation12 + $0x88] sm:$0xff]
    %v938 = vld [vmem:[#allocation12 + $0x90] sm:$0xff]
    %v939 = vld [vmem:[#allocation12 + $0x98] sm:$0xff]
    %v940 = vld [vmem:[#allocation12 + $0xa0] sm:$0xff]
    %v941 = vld [vmem:[#allocation12 + $0xa8] sm:$0xff]
    %v942 = vld [vmem:[#allocation12 + $0xb0] sm:$0xff]
    %v943 = vld [vmem:[#allocation12 + $0xb8] sm:$0xff]
    %v944 = vld [vmem:[#allocation12 + $0xc0] sm:$0xff]
    %v945 = vld [vmem:[#allocation12 + $0xc8] sm:$0xff]
    %v946 = vld [vmem:[#allocation12 + $0xd0] sm:$0xff]
    %v947 = vld [vmem:[#allocation12 + $0xd8] sm:$0xff]
    %v948 = vld [vmem:[#allocation12 + $0xe0] sm:$0xff]
    %v949 = vld [vmem:[#allocation12 + $0xe8] sm:$0xff]
    %v950 = vld [vmem:[#allocation12 + $0xf0] sm:$0xff]
    %v951 = vld [vmem:[#allocation12 + $0xf8] sm:$0xff]
    %v984 = vunpack.c.l.b16 %v920
    %v985 = vunpack.c.h.b16 %v920
    %v986 = vunpack.c.l.b16 %v921
    %v987 = vunpack.c.h.b16 %v921
    %v988 = vunpack.c.l.b16 %v922
    %v989 = vunpack.c.h.b16 %v922
    %v990 = vunpack.c.l.b16 %v923
    %v991 = vunpack.c.h.b16 %v923
    %v992 = vunpack.c.l.b16 %v924
    %v993 = vunpack.c.h.b16 %v924
    %v994 = vunpack.c.l.b16 %v925
    %v995 = vunpack.c.h.b16 %v925
    %v996 = vunpack.c.l.b16 %v926
    %v997 = vunpack.c.h.b16 %v926
    %v998 = vunpack.c.l.b16 %v927
    %v999 = vunpack.c.h.b16 %v927
    %v1000 = vunpack.c.l.b16 %v928
    %v1001 = vunpack.c.h.b16 %v928
    %v1002 = vunpack.c.l.b16 %v929
    %v1003 = vunpack.c.h.b16 %v929
    %v1004 = vunpack.c.l.b16 %v930
    %v1005 = vunpack.c.h.b16 %v930
    %v1006 = vunpack.c.l.b16 %v931
    %v1007 = vunpack.c.h.b16 %v931
    %v1008 = vunpack.c.l.b16 %v932
    %v1009 = vunpack.c.h.b16 %v932
    %v1010 = vunpack.c.l.b16 %v933
    %v1011 = vunpack.c.h.b16 %v933
    %v1012 = vunpack.c.l.b16 %v934
    %v1013 = vunpack.c.h.b16 %v934
    %v1014 = vunpack.c.l.b16 %v935
    %v1015 = vunpack.c.h.b16 %v935
    %v1016 = vunpack.c.l.b16 %v936
    %v1017 = vunpack.c.h.b16 %v936
    %v1018 = vunpack.c.l.b16 %v937
    %v1019 = vunpack.c.h.b16 %v937
    %v1020 = vunpack.c.l.b16 %v938
    %v1021 = vunpack.c.h.b16 %v938
    %v1022 = vunpack.c.l.b16 %v939
    %v1023 = vunpack.c.h.b16 %v939
    %v1024 = vunpack.c.l.b16 %v940
    %v1025 = vunpack.c.h.b16 %v940
    %v1026 = vunpack.c.l.b16 %v941
    %v1027 = vunpack.c.h.b16 %v941
    %v1028 = vunpack.c.l.b16 %v942
    %v1029 = vunpack.c.h.b16 %v942
    %v1030 = vunpack.c.l.b16 %v943
    %v1031 = vunpack.c.h.b16 %v943
    %v1032 = vunpack.c.l.b16 %v944
    %v1033 = vunpack.c.h.b16 %v944
    %v1034 = vunpack.c.l.b16 %v945
    %v1035 = vunpack.c.h.b16 %v945
    %v1036 = vunpack.c.l.b16 %v946
    %v1037 = vunpack.c.h.b16 %v946
    %v1038 = vunpack.c.l.b16 %v947
    %v1039 = vunpack.c.h.b16 %v947
    %v1040 = vunpack.c.l.b16 %v948
    %v1041 = vunpack.c.h.b16 %v948
    %v1042 = vunpack.c.l.b16 %v949
    %v1043 = vunpack.c.h.b16 %v949
    %v1044 = vunpack.c.l.b16 %v950
    %v1045 = vunpack.c.h.b16 %v950
    %v1046 = vunpack.c.l.b16 %v951
    %v1047 = vunpack.c.h.b16 %v951
    %v1048 = vpack.c.b16 %v988, %v984
    %v1049 = vpack.c.b16 %v989, %v985
    %v1050 = vpack.c.b16 %v990, %v986
    %v1051 = vpack.c.b16 %v991, %v987
    %v1052 = vpack.c.b16 %v996, %v992
    %v1053 = vpack.c.b16 %v997, %v993
    %v1054 = vpack.c.b16 %v998, %v994
    %v1055 = vpack.c.b16 %v999, %v995
    %v1056 = vpack.c.b16 %v1004, %v1000
    %v1057 = vpack.c.b16 %v1005, %v1001
    %v1058 = vpack.c.b16 %v1006, %v1002
    %v1059 = vpack.c.b16 %v1007, %v1003
    %v1060 = vpack.c.b16 %v1012, %v1008
    %v1061 = vpack.c.b16 %v1013, %v1009
    %v1062 = vpack.c.b16 %v1014, %v1010
    %v1063 = vpack.c.b16 %v1015, %v1011
    %v1064 = vpack.c.b16 %v1020, %v1016
    %v1065 = vpack.c.b16 %v1021, %v1017
    %v1066 = vpack.c.b16 %v1022, %v1018
    %v1067 = vpack.c.b16 %v1023, %v1019
    %v1068 = vpack.c.b16 %v1028, %v1024
    %v1069 = vpack.c.b16 %v1029, %v1025
    %v1070 = vpack.c.b16 %v1030, %v1026
    %v1071 = vpack.c.b16 %v1031, %v1027
    %v1072 = vpack.c.b16 %v1036, %v1032
    %v1073 = vpack.c.b16 %v1037, %v1033
    %v1074 = vpack.c.b16 %v1038, %v1034
    %v1075 = vpack.c.b16 %v1039, %v1035
    %v1076 = vpack.c.b16 %v1044, %v1040
    %v1077 = vpack.c.b16 %v1045, %v1041
    %v1078 = vpack.c.b16 %v1046, %v1042
    %v1079 = vpack.c.b16 %v1047, %v1043
    %1112 = vmatprep.subr.bf16.mxu0 %v1077
    %1113 = vmatpush1.bf16.msra.mxu0 %v1076
    %1114 = vmatprep.subr.bf16.mxu0 %v1073
    %1115 = vmatpush1.bf16.msra.mxu0 %v1072
    %1116 = vmatprep.subr.bf16.mxu0 %v1069
    %1117 = vmatpush1.bf16.msra.mxu0 %v1068
    %1118 = vmatprep.subr.bf16.mxu0 %v1065
    %1119 = vmatpush1.bf16.msra.mxu0 %v1064
    %1120 = vmatprep.subr.bf16.mxu0 %v1061
    %1121 = vmatpush1.bf16.msra.mxu0 %v1060
    %1122 = vmatprep.subr.bf16.mxu0 %v1057
    %1123 = vmatpush1.bf16.msra.mxu0 %v1056
    %1124 = vmatprep.subr.bf16.mxu0 %v1053
    %1125 = vmatpush1.bf16.msra.mxu0 %v1052
    %1126 = vmatprep.subr.bf16.mxu0 %v1049
    %1127 = vmatpush1.bf16.msra.mxu0 %v1048
    %1128 = vmatprep.subr.bf16.mxu0 0
    %1129 = vmatpush2.bf16.msra.mxu0 0
    %1130 = vmatprep.subr.bf16.mxu0 0
    %1131 = vmatpush2.bf16.msra.mxu0 0
    %1132 = vmatprep.subr.bf16.mxu0 0
    %1133 = vmatpush2.bf16.msra.mxu0 0
    %1134 = vmatprep.subr.bf16.mxu0 0
    %1135 = vmatpush2.bf16.msra.mxu0 0
    %1136 = vmatprep.subr.bf16.mxu0 0
    %1137 = vmatpush2.bf16.msra.mxu0 0
    %1138 = vmatprep.subr.bf16.mxu0 0
    %1139 = vmatpush2.bf16.msra.mxu0 0
    %1140 = vmatprep.subr.bf16.mxu0 0
    %1141 = vmatpush2.bf16.msra.mxu0 0
    %1142 = vmatprep.subr.bf16.mxu0 0
    %1143 = vmatpush2.bf16.msra.mxu0 0
    %1144 = vmatprep.mubr.bf16.mxu0 0
    %1145 = vmatmul.mubr.bf16.gmra.mxu0 %v911
    %v1146 = vpop.f32.mrf.mxu0
    %v1147 = vadd.f32 0.0, %v1146
    %v1148 = vpop.f32.mrf.mxu0
    %v1149 = vadd.f32 0.0, %v1148
    %v1150 = vpop.f32.mrf.mxu0
    %v1151 = vpop.f32.mrf.mxu0
    %1152 = vdwg.mxu0
    %1153 = vmatprep.subr.bf16.mxu0 %v1079
    %1154 = vmatpush1.bf16.msra.mxu0 %v1078
    %1155 = vmatprep.subr.bf16.mxu0 %v1075
    %1156 = vmatpush1.bf16.msra.mxu0 %v1074
    %1157 = vmatprep.subr.bf16.mxu0 %v1071
    %1158 = vmatpush1.bf16.msra.mxu0 %v1070
    %1159 = vmatprep.subr.bf16.mxu0 %v1067
    %1160 = vmatpush1.bf16.msra.mxu0 %v1066
    %1161 = vmatprep.subr.bf16.mxu0 %v1063
    %1162 = vmatpush1.bf16.msra.mxu0 %v1062
    %1163 = vmatprep.subr.bf16.mxu0 %v1059
    %1164 = vmatpush1.bf16.msra.mxu0 %v1058
    %1165 = vmatprep.subr.bf16.mxu0 %v1055
    %1166 = vmatpush1.bf16.msra.mxu0 %v1054
    %1167 = vmatprep.subr.bf16.mxu0 %v1051
    %1168 = vmatpush1.bf16.msra.mxu0 %v1050
    %1169 = vmatprep.subr.bf16.mxu0 0
    %1170 = vmatpush2.bf16.msra.mxu0 0
    %1171 = vmatprep.subr.bf16.mxu0 0
    %1172 = vmatpush2.bf16.msra.mxu0 0
    %1173 = vmatprep.subr.bf16.mxu0 0
    %1174 = vmatpush2.bf16.msra.mxu0 0
    %1175 = vmatprep.subr.bf16.mxu0 0
    %1176 = vmatpush2.bf16.msra.mxu0 0
    %1177 = vmatprep.subr.bf16.mxu0 0
    %1178 = vmatpush2.bf16.msra.mxu0 0
    %1179 = vmatprep.subr.bf16.mxu0 0
    %1180 = vmatpush2.bf16.msra.mxu0 0
    %1181 = vmatprep.subr.bf16.mxu0 0
    %1182 = vmatpush2.bf16.msra.mxu0 0
    %1183 = vmatprep.subr.bf16.mxu0 0
    %1184 = vmatpush2.bf16.msra.mxu0 0
    %1185 = vmatprep.mubr.bf16.mxu0 0
    %1186 = vmatmul.mubr.bf16.gmra.mxu0 %v911
    %v1187 = vpop.f32.mrf.mxu0
    %v1188 = vadd.f32 0.0, %v1187
    %v1189 = vpop.f32.mrf.mxu0
    %v1190 = vadd.f32 0.0, %v1189
    %v1191 = vpop.f32.mrf.mxu0
    %v1192 = vpop.f32.mrf.mxu0
    %1193 = vdwg.mxu0
    %v1194 = vadd.f32 %v916, %v1147
    %v1195 = vadd.f32 %v917, %v1149
    %v1196 = vadd.f32 %v918, %v1188
    %v1197 = vadd.f32 %v919, %v1190
    %v1198 = vxor.u32 %v1194, 2147483648
    %v1199 = vmul.f32 %v1198, 1.442695
    %v1200 = vpow.pop %v1199
    %v1201 = vadd.f32 %v1200, 1.0
    %v1202 = vrcp.pop %v1201
    %v1203 = vmul.f32 1.0, %v1202
    %v1204 = vxor.u32 %v1195, 2147483648
    %v1205 = vmul.f32 %v1204, 1.442695
    %v1206 = vpow.pop %v1205
    %v1207 = vadd.f32 %v1206, 1.0
    %v1208 = vrcp.pop %v1207
    %v1209 = vmul.f32 1.0, %v1208
    %v1210 = vtanh.pop %v1196
    %v1211 = vxor.u32 %v1197, 2147483648
    %v1212 = vmul.f32 %v1211, 1.442695
    %v1213 = vpow.pop %v1212
    %v1214 = vadd.f32 %v1213, 1.0
    %v1215 = vrcp.pop %v1214
    %v1216 = vmul.f32 1.0, %v1215
    %v1217 = vmul.f32 %v1209, %v908
    %v1218 = vmul.f32 %v1203, %v1210
    %v1219 = vadd.f32 %v1217, %v1218
    %v1220 = vtanh.pop %v1219
    %v1221 = vmul.f32 %v1216, %v1220
    %v1222 = vpack.c.bf16 %v1221, %v1221
    %s1223 = scalar_lea.vmem [#allocation3], 4
    %1224 = vst [vmem:[%s1223] sm:$0xf] %v1222
    %s1225 = smul.u32 2, 4
    %s1226 = smul.addr %s1225, 8
    %s1227 = scalar_lea.vmem [#allocation2], %s1226
    %v1228 = vld [vmem:[%s1227] sm:$0xff]
    %v1229 = vld [vmem:[%s1227 + $0x8] sm:$0xff]
    %v1230 = vld [vmem:[%s1227 + $0x10] sm:$0xff]
    %v1231 = vld [vmem:[%s1227 + $0x18] sm:$0xff]
    %v1232 = vld [vmem:[#allocation12] sm:$0xff]
    %v1233 = vld [vmem:[#allocation12 + $0x8] sm:$0xff]
    %v1234 = vld [vmem:[#allocation12 + $0x10] sm:$0xff]
    %v1235 = vld [vmem:[#allocation12 + $0x18] sm:$0xff]
    %v1236 = vld [vmem:[#allocation12 + $0x20] sm:$0xff]
    %v1237 = vld [vmem:[#allocation12 + $0x28] sm:$0xff]
    %v1238 = vld [vmem:[#allocation12 + $0x30] sm:$0xff]
    %v1239 = vld [vmem:[#allocation12 + $0x38] sm:$0xff]
    %v1240 = vld [vmem:[#allocation12 + $0x40] sm:$0xff]
    %v1241 = vld [vmem:[#allocation12 + $0x48] sm:$0xff]
    %v1242 = vld [vmem:[#allocation12 + $0x50] sm:$0xff]
    %v1243 = vld [vmem:[#allocation12 + $0x58] sm:$0xff]
    %v1244 = vld [vmem:[#allocation12 + $0x60] sm:$0xff]
    %v1245 = vld [vmem:[#allocation12 + $0x68] sm:$0xff]
    %v1246 = vld [vmem:[#allocation12 + $0x70] sm:$0xff]
    %v1247 = vld [vmem:[#allocation12 + $0x78] sm:$0xff]
    %v1248 = vld [vmem:[#allocation12 + $0x80] sm:$0xff]
    %v1249 = vld [vmem:[#allocation12 + $0x88] sm:$0xff]
    %v1250 = vld [vmem:[#allocation12 + $0x90] sm:$0xff]
    %v1251 = vld [vmem:[#allocation12 + $0x98] sm:$0xff]
    %v1252 = vld [vmem:[#allocation12 + $0xa0] sm:$0xff]
    %v1253 = vld [vmem:[#allocation12 + $0xa8] sm:$0xff]
    %v1254 = vld [vmem:[#allocation12 + $0xb0] sm:$0xff]
    %v1255 = vld [vmem:[#allocation12 + $0xb8] sm:$0xff]
    %v1256 = vld [vmem:[#allocation12 + $0xc0] sm:$0xff]
    %v1257 = vld [vmem:[#allocation12 + $0xc8] sm:$0xff]
    %v1258 = vld [vmem:[#allocation12 + $0xd0] sm:$0xff]
    %v1259 = vld [vmem:[#allocation12 + $0xd8] sm:$0xff]
    %v1260 = vld [vmem:[#allocation12 + $0xe0] sm:$0xff]
    %v1261 = vld [vmem:[#allocation12 + $0xe8] sm:$0xff]
    %v1262 = vld [vmem:[#allocation12 + $0xf0] sm:$0xff]
    %v1263 = vld [vmem:[#allocation12 + $0xf8] sm:$0xff]
    %v1296 = vunpack.c.l.b16 %v1232
    %v1297 = vunpack.c.h.b16 %v1232
    %v1298 = vunpack.c.l.b16 %v1233
    %v1299 = vunpack.c.h.b16 %v1233
    %v1300 = vunpack.c.l.b16 %v1234
    %v1301 = vunpack.c.h.b16 %v1234
    %v1302 = vunpack.c.l.b16 %v1235
    %v1303 = vunpack.c.h.b16 %v1235
    %v1304 = vunpack.c.l.b16 %v1236
    %v1305 = vunpack.c.h.b16 %v1236
    %v1306 = vunpack.c.l.b16 %v1237
    %v1307 = vunpack.c.h.b16 %v1237
    %v1308 = vunpack.c.l.b16 %v1238
    %v1309 = vunpack.c.h.b16 %v1238
    %v1310 = vunpack.c.l.b16 %v1239
    %v1311 = vunpack.c.h.b16 %v1239
    %v1312 = vunpack.c.l.b16 %v1240
    %v1313 = vunpack.c.h.b16 %v1240
    %v1314 = vunpack.c.l.b16 %v1241
    %v1315 = vunpack.c.h.b16 %v1241
    %v1316 = vunpack.c.l.b16 %v1242
    %v1317 = vunpack.c.h.b16 %v1242
    %v1318 = vunpack.c.l.b16 %v1243
    %v1319 = vunpack.c.h.b16 %v1243
    %v1320 = vunpack.c.l.b16 %v1244
    %v1321 = vunpack.c.h.b16 %v1244
    %v1322 = vunpack.c.l.b16 %v1245
    %v1323 = vunpack.c.h.b16 %v1245
    %v1324 = vunpack.c.l.b16 %v1246
    %v1325 = vunpack.c.h.b16 %v1246
    %v1326 = vunpack.c.l.b16 %v1247
    %v1327 = vunpack.c.h.b16 %v1247
    %v1328 = vunpack.c.l.b16 %v1248
    %v1329 = vunpack.c.h.b16 %v1248
    %v1330 = vunpack.c.l.b16 %v1249
    %v1331 = vunpack.c.h.b16 %v1249
    %v1332 = vunpack.c.l.b16 %v1250
    %v1333 = vunpack.c.h.b16 %v1250
    %v1334 = vunpack.c.l.b16 %v1251
    %v1335 = vunpack.c.h.b16 %v1251
    %v1336 = vunpack.c.l.b16 %v1252
    %v1337 = vunpack.c.h.b16 %v1252
    %v1338 = vunpack.c.l.b16 %v1253
    %v1339 = vunpack.c.h.b16 %v1253
    %v1340 = vunpack.c.l.b16 %v1254
    %v1341 = vunpack.c.h.b16 %v1254
    %v1342 = vunpack.c.l.b16 %v1255
    %v1343 = vunpack.c.h.b16 %v1255
    %v1344 = vunpack.c.l.b16 %v1256
    %v1345 = vunpack.c.h.b16 %v1256
    %v1346 = vunpack.c.l.b16 %v1257
    %v1347 = vunpack.c.h.b16 %v1257
    %v1348 = vunpack.c.l.b16 %v1258
    %v1349 = vunpack.c.h.b16 %v1258
    %v1350 = vunpack.c.l.b16 %v1259
    %v1351 = vunpack.c.h.b16 %v1259
    %v1352 = vunpack.c.l.b16 %v1260
    %v1353 = vunpack.c.h.b16 %v1260
    %v1354 = vunpack.c.l.b16 %v1261
    %v1355 = vunpack.c.h.b16 %v1261
    %v1356 = vunpack.c.l.b16 %v1262
    %v1357 = vunpack.c.h.b16 %v1262
    %v1358 = vunpack.c.l.b16 %v1263
    %v1359 = vunpack.c.h.b16 %v1263
    %v1360 = vpack.c.b16 %v1300, %v1296
    %v1361 = vpack.c.b16 %v1301, %v1297
    %v1362 = vpack.c.b16 %v1302, %v1298
    %v1363 = vpack.c.b16 %v1303, %v1299
    %v1364 = vpack.c.b16 %v1308, %v1304
    %v1365 = vpack.c.b16 %v1309, %v1305
    %v1366 = vpack.c.b16 %v1310, %v1306
    %v1367 = vpack.c.b16 %v1311, %v1307
    %v1368 = vpack.c.b16 %v1316, %v1312
    %v1369 = vpack.c.b16 %v1317, %v1313
    %v1370 = vpack.c.b16 %v1318, %v1314
    %v1371 = vpack.c.b16 %v1319, %v1315
    %v1372 = vpack.c.b16 %v1324, %v1320
    %v1373 = vpack.c.b16 %v1325, %v1321
    %v1374 = vpack.c.b16 %v1326, %v1322
    %v1375 = vpack.c.b16 %v1327, %v1323
    %v1376 = vpack.c.b16 %v1332, %v1328
    %v1377 = vpack.c.b16 %v1333, %v1329
    %v1378 = vpack.c.b16 %v1334, %v1330
    %v1379 = vpack.c.b16 %v1335, %v1331
    %v1380 = vpack.c.b16 %v1340, %v1336
    %v1381 = vpack.c.b16 %v1341, %v1337
    %v1382 = vpack.c.b16 %v1342, %v1338
    %v1383 = vpack.c.b16 %v1343, %v1339
    %v1384 = vpack.c.b16 %v1348, %v1344
    %v1385 = vpack.c.b16 %v1349, %v1345
    %v1386 = vpack.c.b16 %v1350, %v1346
    %v1387 = vpack.c.b16 %v1351, %v1347
    %v1388 = vpack.c.b16 %v1356, %v1352
    %v1389 = vpack.c.b16 %v1357, %v1353
    %v1390 = vpack.c.b16 %v1358, %v1354
    %v1391 = vpack.c.b16 %v1359, %v1355
    %1424 = vmatprep.subr.bf16.mxu0 %v1389
    %1425 = vmatpush1.bf16.msra.mxu0 %v1388
    %1426 = vmatprep.subr.bf16.mxu0 %v1385
    %1427 = vmatpush1.bf16.msra.mxu0 %v1384
    %1428 = vmatprep.subr.bf16.mxu0 %v1381
    %1429 = vmatpush1.bf16.msra.mxu0 %v1380
    %1430 = vmatprep.subr.bf16.mxu0 %v1377
    %1431 = vmatpush1.bf16.msra.mxu0 %v1376
    %1432 = vmatprep.subr.bf16.mxu0 %v1373
    %1433 = vmatpush1.bf16.msra.mxu0 %v1372
    %1434 = vmatprep.subr.bf16.mxu0 %v1369
    %1435 = vmatpush1.bf16.msra.mxu0 %v1368
    %1436 = vmatprep.subr.bf16.mxu0 %v1365
    %1437 = vmatpush1.bf16.msra.mxu0 %v1364
    %1438 = vmatprep.subr.bf16.mxu0 %v1361
    %1439 = vmatpush1.bf16.msra.mxu0 %v1360
    %1440 = vmatprep.subr.bf16.mxu0 0
    %1441 = vmatpush2.bf16.msra.mxu0 0
    %1442 = vmatprep.subr.bf16.mxu0 0
    %1443 = vmatpush2.bf16.msra.mxu0 0
    %1444 = vmatprep.subr.bf16.mxu0 0
    %1445 = vmatpush2.bf16.msra.mxu0 0
    %1446 = vmatprep.subr.bf16.mxu0 0
    %1447 = vmatpush2.bf16.msra.mxu0 0
    %1448 = vmatprep.subr.bf16.mxu0 0
    %1449 = vmatpush2.bf16.msra.mxu0 0
    %1450 = vmatprep.subr.bf16.mxu0 0
    %1451 = vmatpush2.bf16.msra.mxu0 0
    %1452 = vmatprep.subr.bf16.mxu0 0
    %1453 = vmatpush2.bf16.msra.mxu0 0
    %1454 = vmatprep.subr.bf16.mxu0 0
    %1455 = vmatpush2.bf16.msra.mxu0 0
    %1456 = vmatprep.mubr.bf16.mxu0 0
    %1457 = vmatmul.mubr.bf16.gmra.mxu0 %v1222
    %v1458 = vpop.f32.mrf.mxu0
    %v1459 = vadd.f32 0.0, %v1458
    %v1460 = vpop.f32.mrf.mxu0
    %v1461 = vadd.f32 0.0, %v1460
    %v1462 = vpop.f32.mrf.mxu0
    %v1463 = vpop.f32.mrf.mxu0
    %1464 = vdwg.mxu0
    %1465 = vmatprep.subr.bf16.mxu0 %v1391
    %1466 = vmatpush1.bf16.msra.mxu0 %v1390
    %1467 = vmatprep.subr.bf16.mxu0 %v1387
    %1468 = vmatpush1.bf16.msra.mxu0 %v1386
    %1469 = vmatprep.subr.bf16.mxu0 %v1383
    %1470 = vmatpush1.bf16.msra.mxu0 %v1382
    %1471 = vmatprep.subr.bf16.mxu0 %v1379
    %1472 = vmatpush1.bf16.msra.mxu0 %v1378
    %1473 = vmatprep.subr.bf16.mxu0 %v1375
    %1474 = vmatpush1.bf16.msra.mxu0 %v1374
    %1475 = vmatprep.subr.bf16.mxu0 %v1371
    %1476 = vmatpush1.bf16.msra.mxu0 %v1370
    %1477 = vmatprep.subr.bf16.mxu0 %v1367
    %1478 = vmatpush1.bf16.msra.mxu0 %v1366
    %1479 = vmatprep.subr.bf16.mxu0 %v1363
    %1480 = vmatpush1.bf16.msra.mxu0 %v1362
    %1481 = vmatprep.subr.bf16.mxu0 0
    %1482 = vmatpush2.bf16.msra.mxu0 0
    %1483 = vmatprep.subr.bf16.mxu0 0
    %1484 = vmatpush2.bf16.msra.mxu0 0
    %1485 = vmatprep.subr.bf16.mxu0 0
    %1486 = vmatpush2.bf16.msra.mxu0 0
    %1487 = vmatprep.subr.bf16.mxu0 0
    %1488 = vmatpush2.bf16.msra.mxu0 0
    %1489 = vmatprep.subr.bf16.mxu0 0
    %1490 = vmatpush2.bf16.msra.mxu0 0
    %1491 = vmatprep.subr.bf16.mxu0 0
    %1492 = vmatpush2.bf16.msra.mxu0 0
    %1493 = vmatprep.subr.bf16.mxu0 0
    %1494 = vmatpush2.bf16.msra.mxu0 0
    %1495 = vmatprep.subr.bf16.mxu0 0
    %1496 = vmatpush2.bf16.msra.mxu0 0
    %1497 = vmatprep.mubr.bf16.mxu0 0
    %1498 = vmatmul.mubr.bf16.gmra.mxu0 %v1222
    %v1499 = vpop.f32.mrf.mxu0
    %v1500 = vadd.f32 0.0, %v1499
    %v1501 = vpop.f32.mrf.mxu0
    %v1502 = vadd.f32 0.0, %v1501
    %v1503 = vpop.f32.mrf.mxu0
    %v1504 = vpop.f32.mrf.mxu0
    %1505 = vdwg.mxu0
    %v1506 = vadd.f32 %v1228, %v1459
    %v1507 = vadd.f32 %v1229, %v1461
    %v1508 = vadd.f32 %v1230, %v1500
    %v1509 = vadd.f32 %v1231, %v1502
    %v1510 = vxor.u32 %v1506, 2147483648
    %v1511 = vmul.f32 %v1510, 1.442695
    %v1512 = vpow.pop %v1511
    %v1513 = vadd.f32 %v1512, 1.0
    %v1514 = vrcp.pop %v1513
    %v1515 = vmul.f32 1.0, %v1514
    %v1516 = vxor.u32 %v1507, 2147483648
    %v1517 = vmul.f32 %v1516, 1.442695
    %v1518 = vpow.pop %v1517
    %v1519 = vadd.f32 %v1518, 1.0
    %v1520 = vrcp.pop %v1519
    %v1521 = vmul.f32 1.0, %v1520
    %v1522 = vtanh.pop %v1508
    %v1523 = vxor.u32 %v1509, 2147483648
    %v1524 = vmul.f32 %v1523, 1.442695
    %v1525 = vpow.pop %v1524
    %v1526 = vadd.f32 %v1525, 1.0
    %v1527 = vrcp.pop %v1526
    %v1528 = vmul.f32 1.0, %v1527
    %v1529 = vmul.f32 %v1521, %v1219
    %v1530 = vmul.f32 %v1515, %v1522
    %v1531 = vadd.f32 %v1529, %v1530
    %v1532 = vtanh.pop %v1531
    %v1533 = vmul.f32 %v1528, %v1532
    %v1534 = vpack.c.bf16 %v1533, %v1533
    %s1535 = scalar_lea.vmem [#allocation3], 8
    %1536 = vst [vmem:[%s1535] sm:$0xf] %v1534
    %s1537 = smul.u32 3, 4
    %s1538 = smul.addr %s1537, 8
    %s1539 = scalar_lea.vmem [#allocation2], %s1538
    %v1540 = vld [vmem:[%s1539] sm:$0xff]
    %v1541 = vld [vmem:[%s1539 + $0x8] sm:$0xff]
    %v1542 = vld [vmem:[%s1539 + $0x10] sm:$0xff]
    %v1543 = vld [vmem:[%s1539 + $0x18] sm:$0xff]
    %v1544 = vld [vmem:[#allocation12] sm:$0xff]
    %v1545 = vld [vmem:[#allocation12 + $0x8] sm:$0xff]
    %v1546 = vld [vmem:[#allocation12 + $0x10] sm:$0xff]
    %v1547 = vld [vmem:[#allocation12 + $0x18] sm:$0xff]
    %v1548 = vld [vmem:[#allocation12 + $0x20] sm:$0xff]
    %v1549 = vld [vmem:[#allocation12 + $0x28] sm:$0xff]
    %v1550 = vld [vmem:[#allocation12 + $0x30] sm:$0xff]
    %v1551 = vld [vmem:[#allocation12 + $0x38] sm:$0xff]
    %v1552 = vld [vmem:[#allocation12 + $0x40] sm:$0xff]
    %v1553 = vld [vmem:[#allocation12 + $0x48] sm:$0xff]
    %v1554 = vld [vmem:[#allocation12 + $0x50] sm:$0xff]
    %v1555 = vld [vmem:[#allocation12 + $0x58] sm:$0xff]
    %v1556 = vld [vmem:[#allocation12 + $0x60] sm:$0xff]
    %v1557 = vld [vmem:[#allocation12 + $0x68] sm:$0xff]
    %v1558 = vld [vmem:[#allocation12 + $0x70] sm:$0xff]
    %v1559 = vld [vmem:[#allocation12 + $0x78] sm:$0xff]
    %v1560 = vld [vmem:[#allocation12 + $0x80] sm:$0xff]
    %v1561 = vld [vmem:[#allocation12 + $0x88] sm:$0xff]
    %v1562 = vld [vmem:[#allocation12 + $0x90] sm:$0xff]
    %v1563 = vld [vmem:[#allocation12 + $0x98] sm:$0xff]
    %v1564 = vld [vmem:[#allocation12 + $0xa0] sm:$0xff]
    %v1565 = vld [vmem:[#allocation12 + $0xa8] sm:$0xff]
    %v1566 = vld [vmem:[#allocation12 + $0xb0] sm:$0xff]
    %v1567 = vld [vmem:[#allocation12 + $0xb8] sm:$0xff]
    %v1568 = vld [vmem:[#allocation12 + $0xc0] sm:$0xff]
    %v1569 = vld [vmem:[#allocation12 + $0xc8] sm:$0xff]
    %v1570 = vld [vmem:[#allocation12 + $0xd0] sm:$0xff]
    %v1571 = vld [vmem:[#allocation12 + $0xd8] sm:$0xff]
    %v1572 = vld [vmem:[#allocation12 + $0xe0] sm:$0xff]
    %v1573 = vld [vmem:[#allocation12 + $0xe8] sm:$0xff]
    %v1574 = vld [vmem:[#allocation12 + $0xf0] sm:$0xff]
    %v1575 = vld [vmem:[#allocation12 + $0xf8] sm:$0xff]
    %v1608 = vunpack.c.l.b16 %v1544
    %v1609 = vunpack.c.h.b16 %v1544
    %v1610 = vunpack.c.l.b16 %v1545
    %v1611 = vunpack.c.h.b16 %v1545
    %v1612 = vunpack.c.l.b16 %v1546
    %v1613 = vunpack.c.h.b16 %v1546
    %v1614 = vunpack.c.l.b16 %v1547
    %v1615 = vunpack.c.h.b16 %v1547
    %v1616 = vunpack.c.l.b16 %v1548
    %v1617 = vunpack.c.h.b16 %v1548
    %v1618 = vunpack.c.l.b16 %v1549
    %v1619 = vunpack.c.h.b16 %v1549
    %v1620 = vunpack.c.l.b16 %v1550
    %v1621 = vunpack.c.h.b16 %v1550
    %v1622 = vunpack.c.l.b16 %v1551
    %v1623 = vunpack.c.h.b16 %v1551
    %v1624 = vunpack.c.l.b16 %v1552
    %v1625 = vunpack.c.h.b16 %v1552
    %v1626 = vunpack.c.l.b16 %v1553
    %v1627 = vunpack.c.h.b16 %v1553
    %v1628 = vunpack.c.l.b16 %v1554
    %v1629 = vunpack.c.h.b16 %v1554
    %v1630 = vunpack.c.l.b16 %v1555
    %v1631 = vunpack.c.h.b16 %v1555
    %v1632 = vunpack.c.l.b16 %v1556
    %v1633 = vunpack.c.h.b16 %v1556
    %v1634 = vunpack.c.l.b16 %v1557
    %v1635 = vunpack.c.h.b16 %v1557
    %v1636 = vunpack.c.l.b16 %v1558
    %v1637 = vunpack.c.h.b16 %v1558
    %v1638 = vunpack.c.l.b16 %v1559
    %v1639 = vunpack.c.h.b16 %v1559
    %v1640 = vunpack.c.l.b16 %v1560
    %v1641 = vunpack.c.h.b16 %v1560
    %v1642 = vunpack.c.l.b16 %v1561
    %v1643 = vunpack.c.h.b16 %v1561
    %v1644 = vunpack.c.l.b16 %v1562
    %v1645 = vunpack.c.h.b16 %v1562
    %v1646 = vunpack.c.l.b16 %v1563
    %v1647 = vunpack.c.h.b16 %v1563
    %v1648 = vunpack.c.l.b16 %v1564
    %v1649 = vunpack.c.h.b16 %v1564
    %v1650 = vunpack.c.l.b16 %v1565
    %v1651 = vunpack.c.h.b16 %v1565
    %v1652 = vunpack.c.l.b16 %v1566
    %v1653 = vunpack.c.h.b16 %v1566
    %v1654 = vunpack.c.l.b16 %v1567
    %v1655 = vunpack.c.h.b16 %v1567
    %v1656 = vunpack.c.l.b16 %v1568
    %v1657 = vunpack.c.h.b16 %v1568
    %v1658 = vunpack.c.l.b16 %v1569
    %v1659 = vunpack.c.h.b16 %v1569
    %v1660 = vunpack.c.l.b16 %v1570
    %v1661 = vunpack.c.h.b16 %v1570
    %v1662 = vunpack.c.l.b16 %v1571
    %v1663 = vunpack.c.h.b16 %v1571
    %v1664 = vunpack.c.l.b16 %v1572
    %v1665 = vunpack.c.h.b16 %v1572
    %v1666 = vunpack.c.l.b16 %v1573
    %v1667 = vunpack.c.h.b16 %v1573
    %v1668 = vunpack.c.l.b16 %v1574
    %v1669 = vunpack.c.h.b16 %v1574
    %v1670 = vunpack.c.l.b16 %v1575
    %v1671 = vunpack.c.h.b16 %v1575
    %v1672 = vpack.c.b16 %v1612, %v1608
    %v1673 = vpack.c.b16 %v1613, %v1609
    %v1674 = vpack.c.b16 %v1614, %v1610
    %v1675 = vpack.c.b16 %v1615, %v1611
    %v1676 = vpack.c.b16 %v1620, %v1616
    %v1677 = vpack.c.b16 %v1621, %v1617
    %v1678 = vpack.c.b16 %v1622, %v1618
    %v1679 = vpack.c.b16 %v1623, %v1619
    %v1680 = vpack.c.b16 %v1628, %v1624
    %v1681 = vpack.c.b16 %v1629, %v1625
    %v1682 = vpack.c.b16 %v1630, %v1626
    %v1683 = vpack.c.b16 %v1631, %v1627
    %v1684 = vpack.c.b16 %v1636, %v1632
    %v1685 = vpack.c.b16 %v1637, %v1633
    %v1686 = vpack.c.b16 %v1638, %v1634
    %v1687 = vpack.c.b16 %v1639, %v1635
    %v1688 = vpack.c.b16 %v1644, %v1640
    %v1689 = vpack.c.b16 %v1645, %v1641
    %v1690 = vpack.c.b16 %v1646, %v1642
    %v1691 = vpack.c.b16 %v1647, %v1643
    %v1692 = vpack.c.b16 %v1652, %v1648
    %v1693 = vpack.c.b16 %v1653, %v1649
    %v1694 = vpack.c.b16 %v1654, %v1650
    %v1695 = vpack.c.b16 %v1655, %v1651
    %v1696 = vpack.c.b16 %v1660, %v1656
    %v1697 = vpack.c.b16 %v1661, %v1657
    %v1698 = vpack.c.b16 %v1662, %v1658
    %v1699 = vpack.c.b16 %v1663, %v1659
    %v1700 = vpack.c.b16 %v1668, %v1664
    %v1701 = vpack.c.b16 %v1669, %v1665
    %v1702 = vpack.c.b16 %v1670, %v1666
    %v1703 = vpack.c.b16 %v1671, %v1667
    %1736 = vmatprep.subr.bf16.mxu0 %v1701
    %1737 = vmatpush1.bf16.msra.mxu0 %v1700
    %1738 = vmatprep.subr.bf16.mxu0 %v1697
    %1739 = vmatpush1.bf16.msra.mxu0 %v1696
    %1740 = vmatprep.subr.bf16.mxu0 %v1693
    %1741 = vmatpush1.bf16.msra.mxu0 %v1692
    %1742 = vmatprep.subr.bf16.mxu0 %v1689
    %1743 = vmatpush1.bf16.msra.mxu0 %v1688
    %1744 = vmatprep.subr.bf16.mxu0 %v1685
    %1745 = vmatpush1.bf16.msra.mxu0 %v1684
    %1746 = vmatprep.subr.bf16.mxu0 %v1681
    %1747 = vmatpush1.bf16.msra.mxu0 %v1680
    %1748 = vmatprep.subr.bf16.mxu0 %v1677
    %1749 = vmatpush1.bf16.msra.mxu0 %v1676
    %1750 = vmatprep.subr.bf16.mxu0 %v1673
    %1751 = vmatpush1.bf16.msra.mxu0 %v1672
    %1752 = vmatprep.subr.bf16.mxu0 0
    %1753 = vmatpush2.bf16.msra.mxu0 0
    %1754 = vmatprep.subr.bf16.mxu0 0
    %1755 = vmatpush2.bf16.msra.mxu0 0
    %1756 = vmatprep.subr.bf16.mxu0 0
    %1757 = vmatpush2.bf16.msra.mxu0 0
    %1758 = vmatprep.subr.bf16.mxu0 0
    %1759 = vmatpush2.bf16.msra.mxu0 0
    %1760 = vmatprep.subr.bf16.mxu0 0
    %1761 = vmatpush2.bf16.msra.mxu0 0
    %1762 = vmatprep.subr.bf16.mxu0 0
    %1763 = vmatpush2.bf16.msra.mxu0 0
    %1764 = vmatprep.subr.bf16.mxu0 0
    %1765 = vmatpush2.bf16.msra.mxu0 0
    %1766 = vmatprep.subr.bf16.mxu0 0
    %1767 = vmatpush2.bf16.msra.mxu0 0
    %1768 = vmatprep.mubr.bf16.mxu0 0
    %1769 = vmatmul.mubr.bf16.gmra.mxu0 %v1534
    %v1770 = vpop.f32.mrf.mxu0
    %v1771 = vadd.f32 0.0, %v1770
    %v1772 = vpop.f32.mrf.mxu0
    %v1773 = vadd.f32 0.0, %v1772
    %v1774 = vpop.f32.mrf.mxu0
    %v1775 = vpop.f32.mrf.mxu0
    %1776 = vdwg.mxu0
    %1777 = vmatprep.subr.bf16.mxu0 %v1703
    %1778 = vmatpush1.bf16.msra.mxu0 %v1702
    %1779 = vmatprep.subr.bf16.mxu0 %v1699
    %1780 = vmatpush1.bf16.msra.mxu0 %v1698
    %1781 = vmatprep.subr.bf16.mxu0 %v1695
    %1782 = vmatpush1.bf16.msra.mxu0 %v1694
    %1783 = vmatprep.subr.bf16.mxu0 %v1691
    %1784 = vmatpush1.bf16.msra.mxu0 %v1690
    %1785 = vmatprep.subr.bf16.mxu0 %v1687
    %1786 = vmatpush1.bf16.msra.mxu0 %v1686
    %1787 = vmatprep.subr.bf16.mxu0 %v1683
    %1788 = vmatpush1.bf16.msra.mxu0 %v1682
    %1789 = vmatprep.subr.bf16.mxu0 %v1679
    %1790 = vmatpush1.bf16.msra.mxu0 %v1678
    %1791 = vmatprep.subr.bf16.mxu0 %v1675
    %1792 = vmatpush1.bf16.msra.mxu0 %v1674
    %1793 = vmatprep.subr.bf16.mxu0 0
    %1794 = vmatpush2.bf16.msra.mxu0 0
    %1795 = vmatprep.subr.bf16.mxu0 0
    %1796 = vmatpush2.bf16.msra.mxu0 0
    %1797 = vmatprep.subr.bf16.mxu0 0
    %1798 = vmatpush2.bf16.msra.mxu0 0
    %1799 = vmatprep.subr.bf16.mxu0 0
    %1800 = vmatpush2.bf16.msra.mxu0 0
    %1801 = vmatprep.subr.bf16.mxu0 0
    %1802 = vmatpush2.bf16.msra.mxu0 0
    %1803 = vmatprep.subr.bf16.mxu0 0
    %1804 = vmatpush2.bf16.msra.mxu0 0
    %1805 = vmatprep.subr.bf16.mxu0 0
    %1806 = vmatpush2.bf16.msra.mxu0 0
    %1807 = vmatprep.subr.bf16.mxu0 0
    %1808 = vmatpush2.bf16.msra.mxu0 0
    %1809 = vmatprep.mubr.bf16.mxu0 0
    %1810 = vmatmul.mubr.bf16.gmra.mxu0 %v1534
    %v1811 = vpop.f32.mrf.mxu0
    %v1812 = vadd.f32 0.0, %v1811
    %v1813 = vpop.f32.mrf.mxu0
    %v1814 = vadd.f32 0.0, %v1813
    %v1815 = vpop.f32.mrf.mxu0
    %v1816 = vpop.f32.mrf.mxu0
    %1817 = vdwg.mxu0
    %v1818 = vadd.f32 %v1540, %v1771
    %v1819 = vadd.f32 %v1541, %v1773
    %v1820 = vadd.f32 %v1542, %v1812
    %v1821 = vadd.f32 %v1543, %v1814
    %v1822 = vxor.u32 %v1818, 2147483648
    %v1823 = vmul.f32 %v1822, 1.442695
    %v1824 = vpow.pop %v1823
    %v1825 = vadd.f32 %v1824, 1.0
    %v1826 = vrcp.pop %v1825
    %v1827 = vmul.f32 1.0, %v1826
    %v1828 = vxor.u32 %v1819, 2147483648
    %v1829 = vmul.f32 %v1828, 1.442695
    %v1830 = vpow.pop %v1829
    %v1831 = vadd.f32 %v1830, 1.0
    %v1832 = vrcp.pop %v1831
    %v1833 = vmul.f32 1.0, %v1832
    %v1834 = vtanh.pop %v1820
    %v1835 = vxor.u32 %v1821, 2147483648
    %v1836 = vmul.f32 %v1835, 1.442695
    %v1837 = vpow.pop %v1836
    %v1838 = vadd.f32 %v1837, 1.0
    %v1839 = vrcp.pop %v1838
    %v1840 = vmul.f32 1.0, %v1839
    %v1841 = vmul.f32 %v1833, %v1531
    %v1842 = vmul.f32 %v1827, %v1834
    %v1843 = vadd.f32 %v1841, %v1842
    %v1844 = vtanh.pop %v1843
    %v1845 = vmul.f32 %v1840, %v1844
    %v1846 = vpack.c.bf16 %v1845, %v1845
    %s1847 = scalar_lea.vmem [#allocation3], 12
    %1848 = vst [vmem:[%s1847] sm:$0xf] %v1846
    %s1849 = smul.u32 4, 4
    %s1850 = smul.addr %s1849, 8
    %s1851 = scalar_lea.vmem [#allocation2], %s1850
    %v1852 = vld [vmem:[%s1851] sm:$0xff]
    %v1853 = vld [vmem:[%s1851 + $0x8] sm:$0xff]
    %v1854 = vld [vmem:[%s1851 + $0x10] sm:$0xff]
    %v1855 = vld [vmem:[%s1851 + $0x18] sm:$0xff]
    %v1856 = vld [vmem:[#allocation12] sm:$0xff]
    %v1857 = vld [vmem:[#allocation12 + $0x8] sm:$0xff]
    %v1858 = vld [vmem:[#allocation12 + $0x10] sm:$0xff]
    %v1859 = vld [vmem:[#allocation12 + $0x18] sm:$0xff]
    %v1860 = vld [vmem:[#allocation12 + $0x20] sm:$0xff]
    %v1861 = vld [vmem:[#allocation12 + $0x28] sm:$0xff]
    %v1862 = vld [vmem:[#allocation12 + $0x30] sm:$0xff]
    %v1863 = vld [vmem:[#allocation12 + $0x38] sm:$0xff]
    %v1864 = vld [vmem:[#allocation12 + $0x40] sm:$0xff]
    %v1865 = vld [vmem:[#allocation12 + $0x48] sm:$0xff]
    %v1866 = vld [vmem:[#allocation12 + $0x50] sm:$0xff]
    %v1867 = vld [vmem:[#allocation12 + $0x58] sm:$0xff]
    %v1868 = vld [vmem:[#allocation12 + $0x60] sm:$0xff]
    %v1869 = vld [vmem:[#allocation12 + $0x68] sm:$0xff]
    %v1870 = vld [vmem:[#allocation12 + $0x70] sm:$0xff]
    %v1871 = vld [vmem:[#allocation12 + $0x78] sm:$0xff]
    %v1872 = vld [vmem:[#allocation12 + $0x80] sm:$0xff]
    %v1873 = vld [vmem:[#allocation12 + $0x88] sm:$0xff]
    %v1874 = vld [vmem:[#allocation12 + $0x90] sm:$0xff]
    %v1875 = vld [vmem:[#allocation12 + $0x98] sm:$0xff]
    %v1876 = vld [vmem:[#allocation12 + $0xa0] sm:$0xff]
    %v1877 = vld [vmem:[#allocation12 + $0xa8] sm:$0xff]
    %v1878 = vld [vmem:[#allocation12 + $0xb0] sm:$0xff]
    %v1879 = vld [vmem:[#allocation12 + $0xb8] sm:$0xff]
    %v1880 = vld [vmem:[#allocation12 + $0xc0] sm:$0xff]
    %v1881 = vld [vmem:[#allocation12 + $0xc8] sm:$0xff]
    %v1882 = vld [vmem:[#allocation12 + $0xd0] sm:$0xff]
    %v1883 = vld [vmem:[#allocation12 + $0xd8] sm:$0xff]
    %v1884 = vld [vmem:[#allocation12 + $0xe0] sm:$0xff]
    %v1885 = vld [vmem:[#allocation12 + $0xe8] sm:$0xff]
    %v1886 = vld [vmem:[#allocation12 + $0xf0] sm:$0xff]
    %v1887 = vld [vmem:[#allocation12 + $0xf8] sm:$0xff]
    %v1920 = vunpack.c.l.b16 %v1856
    %v1921 = vunpack.c.h.b16 %v1856
    %v1922 = vunpack.c.l.b16 %v1857
    %v1923 = vunpack.c.h.b16 %v1857
    %v1924 = vunpack.c.l.b16 %v1858
    %v1925 = vunpack.c.h.b16 %v1858
    %v1926 = vunpack.c.l.b16 %v1859
    %v1927 = vunpack.c.h.b16 %v1859
    %v1928 = vunpack.c.l.b16 %v1860
    %v1929 = vunpack.c.h.b16 %v1860
    %v1930 = vunpack.c.l.b16 %v1861
    %v1931 = vunpack.c.h.b16 %v1861
    %v1932 = vunpack.c.l.b16 %v1862
    %v1933 = vunpack.c.h.b16 %v1862
    %v1934 = vunpack.c.l.b16 %v1863
    %v1935 = vunpack.c.h.b16 %v1863
    %v1936 = vunpack.c.l.b16 %v1864
    %v1937 = vunpack.c.h.b16 %v1864
    %v1938 = vunpack.c.l.b16 %v1865
    %v1939 = vunpack.c.h.b16 %v1865
    %v1940 = vunpack.c.l.b16 %v1866
    %v1941 = vunpack.c.h.b16 %v1866
    %v1942 = vunpack.c.l.b16 %v1867
    %v1943 = vunpack.c.h.b16 %v1867
    %v1944 = vunpack.c.l.b16 %v1868
    %v1945 = vunpack.c.h.b16 %v1868
    %v1946 = vunpack.c.l.b16 %v1869
    %v1947 = vunpack.c.h.b16 %v1869
    %v1948 = vunpack.c.l.b16 %v1870
    %v1949 = vunpack.c.h.b16 %v1870
    %v1950 = vunpack.c.l.b16 %v1871
    %v1951 = vunpack.c.h.b16 %v1871
    %v1952 = vunpack.c.l.b16 %v1872
    %v1953 = vunpack.c.h.b16 %v1872
    %v1954 = vunpack.c.l.b16 %v1873
    %v1955 = vunpack.c.h.b16 %v1873
    %v1956 = vunpack.c.l.b16 %v1874
    %v1957 = vunpack.c.h.b16 %v1874
    %v1958 = vunpack.c.l.b16 %v1875
    %v1959 = vunpack.c.h.b16 %v1875
    %v1960 = vunpack.c.l.b16 %v1876
    %v1961 = vunpack.c.h.b16 %v1876
    %v1962 = vunpack.c.l.b16 %v1877
    %v1963 = vunpack.c.h.b16 %v1877
    %v1964 = vunpack.c.l.b16 %v1878
    %v1965 = vunpack.c.h.b16 %v1878
    %v1966 = vunpack.c.l.b16 %v1879
    %v1967 = vunpack.c.h.b16 %v1879
    %v1968 = vunpack.c.l.b16 %v1880
    %v1969 = vunpack.c.h.b16 %v1880
    %v1970 = vunpack.c.l.b16 %v1881
    %v1971 = vunpack.c.h.b16 %v1881
    %v1972 = vunpack.c.l.b16 %v1882
    %v1973 = vunpack.c.h.b16 %v1882
    %v1974 = vunpack.c.l.b16 %v1883
    %v1975 = vunpack.c.h.b16 %v1883
    %v1976 = vunpack.c.l.b16 %v1884
    %v1977 = vunpack.c.h.b16 %v1884
    %v1978 = vunpack.c.l.b16 %v1885
    %v1979 = vunpack.c.h.b16 %v1885
    %v1980 = vunpack.c.l.b16 %v1886
    %v1981 = vunpack.c.h.b16 %v1886
    %v1982 = vunpack.c.l.b16 %v1887
    %v1983 = vunpack.c.h.b16 %v1887
    %v1984 = vpack.c.b16 %v1924, %v1920
    %v1985 = vpack.c.b16 %v1925, %v1921
    %v1986 = vpack.c.b16 %v1926, %v1922
    %v1987 = vpack.c.b16 %v1927, %v1923
    %v1988 = vpack.c.b16 %v1932, %v1928
    %v1989 = vpack.c.b16 %v1933, %v1929
    %v1990 = vpack.c.b16 %v1934, %v1930
    %v1991 = vpack.c.b16 %v1935, %v1931
    %v1992 = vpack.c.b16 %v1940, %v1936
    %v1993 = vpack.c.b16 %v1941, %v1937
    %v1994 = vpack.c.b16 %v1942, %v1938
    %v1995 = vpack.c.b16 %v1943, %v1939
    %v1996 = vpack.c.b16 %v1948, %v1944
    %v1997 = vpack.c.b16 %v1949, %v1945
    %v1998 = vpack.c.b16 %v1950, %v1946
    %v1999 = vpack.c.b16 %v1951, %v1947
    %v2000 = vpack.c.b16 %v1956, %v1952
    %v2001 = vpack.c.b16 %v1957, %v1953
    %v2002 = vpack.c.b16 %v1958, %v1954
    %v2003 = vpack.c.b16 %v1959, %v1955
    %v2004 = vpack.c.b16 %v1964, %v1960
    %v2005 = vpack.c.b16 %v1965, %v1961
    %v2006 = vpack.c.b16 %v1966, %v1962
    %v2007 = vpack.c.b16 %v1967, %v1963
    %v2008 = vpack.c.b16 %v1972, %v1968
    %v2009 = vpack.c.b16 %v1973, %v1969
    %v2010 = vpack.c.b16 %v1974, %v1970
    %v2011 = vpack.c.b16 %v1975, %v1971
    %v2012 = vpack.c.b16 %v1980, %v1976
    %v2013 = vpack.c.b16 %v1981, %v1977
    %v2014 = vpack.c.b16 %v1982, %v1978
    %v2015 = vpack.c.b16 %v1983, %v1979
    %2048 = vmatprep.subr.bf16.mxu0 %v2013
    %2049 = vmatpush1.bf16.msra.mxu0 %v2012
    %2050 = vmatprep.subr.bf16.mxu0 %v2009
    %2051 = vmatpush1.bf16.msra.mxu0 %v2008
    %2052 = vmatprep.subr.bf16.mxu0 %v2005
    %2053 = vmatpush1.bf16.msra.mxu0 %v2004
    %2054 = vmatprep.subr.bf16.mxu0 %v2001
    %2055 = vmatpush1.bf16.msra.mxu0 %v2000
    %2056 = vmatprep.subr.bf16.mxu0 %v1997
    %2057 = vmatpush1.bf16.msra.mxu0 %v1996
    %2058 = vmatprep.subr.bf16.mxu0 %v1993
    %2059 = vmatpush1.bf16.msra.mxu0 %v1992
    %2060 = vmatprep.subr.bf16.mxu0 %v1989
    %2061 = vmatpush1.bf16.msra.mxu0 %v1988
    %2062 = vmatprep.subr.bf16.mxu0 %v1985
    %2063 = vmatpush1.bf16.msra.mxu0 %v1984
    %2064 = vmatprep.subr.bf16.mxu0 0
    %2065 = vmatpush2.bf16.msra.mxu0 0
    %2066 = vmatprep.subr.bf16.mxu0 0
    %2067 = vmatpush2.bf16.msra.mxu0 0
    %2068 = vmatprep.subr.bf16.mxu0 0
    %2069 = vmatpush2.bf16.msra.mxu0 0
    %2070 = vmatprep.subr.bf16.mxu0 0
    %2071 = vmatpush2.bf16.msra.mxu0 0
    %2072 = vmatprep.subr.bf16.mxu0 0
    %2073 = vmatpush2.bf16.msra.mxu0 0
    %2074 = vmatprep.subr.bf16.mxu0 0
    %2075 = vmatpush2.bf16.msra.mxu0 0
    %2076 = vmatprep.subr.bf16.mxu0 0
    %2077 = vmatpush2.bf16.msra.mxu0 0
    %2078 = vmatprep.subr.bf16.mxu0 0
    %2079 = vmatpush2.bf16.msra.mxu0 0
    %2080 = vmatprep.mubr.bf16.mxu0 0
    %2081 = vmatmul.mubr.bf16.gmra.mxu0 %v1846
    %v2082 = vpop.f32.mrf.mxu0
    %v2083 = vadd.f32 0.0, %v2082
    %v2084 = vpop.f32.mrf.mxu0
    %v2085 = vadd.f32 0.0, %v2084
    %v2086 = vpop.f32.mrf.mxu0
    %v2087 = vpop.f32.mrf.mxu0
    %2088 = vdwg.mxu0
    %2089 = vmatprep.subr.bf16.mxu0 %v2015
    %2090 = vmatpush1.bf16.msra.mxu0 %v2014
    %2091 = vmatprep.subr.bf16.mxu0 %v2011
    %2092 = vmatpush1.bf16.msra.mxu0 %v2010
    %2093 = vmatprep.subr.bf16.mxu0 %v2007
    %2094 = vmatpush1.bf16.msra.mxu0 %v2006
    %2095 = vmatprep.subr.bf16.mxu0 %v2003
    %2096 = vmatpush1.bf16.msra.mxu0 %v2002
    %2097 = vmatprep.subr.bf16.mxu0 %v1999
    %2098 = vmatpush1.bf16.msra.mxu0 %v1998
    %2099 = vmatprep.subr.bf16.mxu0 %v1995
    %2100 = vmatpush1.bf16.msra.mxu0 %v1994
    %2101 = vmatprep.subr.bf16.mxu0 %v1991
    %2102 = vmatpush1.bf16.msra.mxu0 %v1990
    %2103 = vmatprep.subr.bf16.mxu0 %v1987
    %2104 = vmatpush1.bf16.msra.mxu0 %v1986
    %2105 = vmatprep.subr.bf16.mxu0 0
    %2106 = vmatpush2.bf16.msra.mxu0 0
    %2107 = vmatprep.subr.bf16.mxu0 0
    %2108 = vmatpush2.bf16.msra.mxu0 0
    %2109 = vmatprep.subr.bf16.mxu0 0
    %2110 = vmatpush2.bf16.msra.mxu0 0
    %2111 = vmatprep.subr.bf16.mxu0 0
    %2112 = vmatpush2.bf16.msra.mxu0 0
    %2113 = vmatprep.subr.bf16.mxu0 0
    %2114 = vmatpush2.bf16.msra.mxu0 0
    %2115 = vmatprep.subr.bf16.mxu0 0
    %2116 = vmatpush2.bf16.msra.mxu0 0
    %2117 = vmatprep.subr.bf16.mxu0 0
    %2118 = vmatpush2.bf16.msra.mxu0 0
    %2119 = vmatprep.subr.bf16.mxu0 0
    %2120 = vmatpush2.bf16.msra.mxu0 0
    %2121 = vmatprep.mubr.bf16.mxu0 0
    %2122 = vmatmul.mubr.bf16.gmra.mxu0 %v1846
    %v2123 = vpop.f32.mrf.mxu0
    %v2124 = vadd.f32 0.0, %v2123
    %v2125 = vpop.f32.mrf.mxu0
    %v2126 = vadd.f32 0.0, %v2125
    %v2127 = vpop.f32.mrf.mxu0
    %v2128 = vpop.f32.mrf.mxu0
    %2129 = vdwg.mxu0
    %v2130 = vadd.f32 %v1852, %v2083
    %v2131 = vadd.f32 %v1853, %v2085
    %v2132 = vadd.f32 %v1854, %v2124
    %v2133 = vadd.f32 %v1855, %v2126
    %v2134 = vxor.u32 %v2130, 2147483648
    %v2135 = vmul.f32 %v2134, 1.442695
    %v2136 = vpow.pop %v2135
    %v2137 = vadd.f32 %v2136, 1.0
    %v2138 = vrcp.pop %v2137
    %v2139 = vmul.f32 1.0, %v2138
    %v2140 = vxor.u32 %v2131, 2147483648
    %v2141 = vmul.f32 %v2140, 1.442695
    %v2142 = vpow.pop %v2141
    %v2143 = vadd.f32 %v2142, 1.0
    %v2144 = vrcp.pop %v2143
    %v2145 = vmul.f32 1.0, %v2144
    %v2146 = vtanh.pop %v2132
    %v2147 = vxor.u32 %v2133, 2147483648
    %v2148 = vmul.f32 %v2147, 1.442695
    %v2149 = vpow.pop %v2148
    %v2150 = vadd.f32 %v2149, 1.0
    %v2151 = vrcp.pop %v2150
    %v2152 = vmul.f32 1.0, %v2151
    %v2153 = vmul.f32 %v2145, %v1843
    %v2154 = vmul.f32 %v2139, %v2146
    %v2155 = vadd.f32 %v2153, %v2154
    %v2156 = vtanh.pop %v2155
    %v2157 = vmul.f32 %v2152, %v2156
    %v2158 = vpack.c.bf16 %v2157, %v2157
    %s2159 = scalar_lea.vmem [#allocation3], 16
    %2160 = vst [vmem:[%s2159] sm:$0xf] %v2158
    %s2161 = smul.u32 5, 4
    %s2162 = smul.addr %s2161, 8
    %s2163 = scalar_lea.vmem [#allocation2], %s2162
    %v2164 = vld [vmem:[%s2163] sm:$0xff]
    %v2165 = vld [vmem:[%s2163 + $0x8] sm:$0xff]
    %v2166 = vld [vmem:[%s2163 + $0x10] sm:$0xff]
    %v2167 = vld [vmem:[%s2163 + $0x18] sm:$0xff]
    %v2168 = vld [vmem:[#allocation12] sm:$0xff]
    %v2169 = vld [vmem:[#allocation12 + $0x8] sm:$0xff]
    %v2170 = vld [vmem:[#allocation12 + $0x10] sm:$0xff]
    %v2171 = vld [vmem:[#allocation12 + $0x18] sm:$0xff]
    %v2172 = vld [vmem:[#allocation12 + $0x20] sm:$0xff]
    %v2173 = vld [vmem:[#allocation12 + $0x28] sm:$0xff]
    %v2174 = vld [vmem:[#allocation12 + $0x30] sm:$0xff]
    %v2175 = vld [vmem:[#allocation12 + $0x38] sm:$0xff]
    %v2176 = vld [vmem:[#allocation12 + $0x40] sm:$0xff]
    %v2177 = vld [vmem:[#allocation12 + $0x48] sm:$0xff]
    %v2178 = vld [vmem:[#allocation12 + $0x50] sm:$0xff]
    %v2179 = vld [vmem:[#allocation12 + $0x58] sm:$0xff]
    %v2180 = vld [vmem:[#allocation12 + $0x60] sm:$0xff]
    %v2181 = vld [vmem:[#allocation12 + $0x68] sm:$0xff]
    %v2182 = vld [vmem:[#allocation12 + $0x70] sm:$0xff]
    %v2183 = vld [vmem:[#allocation12 + $0x78] sm:$0xff]
    %v2184 = vld [vmem:[#allocation12 + $0x80] sm:$0xff]
    %v2185 = vld [vmem:[#allocation12 + $0x88] sm:$0xff]
    %v2186 = vld [vmem:[#allocation12 + $0x90] sm:$0xff]
    %v2187 = vld [vmem:[#allocation12 + $0x98] sm:$0xff]
    %v2188 = vld [vmem:[#allocation12 + $0xa0] sm:$0xff]
    %v2189 = vld [vmem:[#allocation12 + $0xa8] sm:$0xff]
    %v2190 = vld [vmem:[#allocation12 + $0xb0] sm:$0xff]
    %v2191 = vld [vmem:[#allocation12 + $0xb8] sm:$0xff]
    %v2192 = vld [vmem:[#allocation12 + $0xc0] sm:$0xff]
    %v2193 = vld [vmem:[#allocation12 + $0xc8] sm:$0xff]
    %v2194 = vld [vmem:[#allocation12 + $0xd0] sm:$0xff]
    %v2195 = vld [vmem:[#allocation12 + $0xd8] sm:$0xff]
    %v2196 = vld [vmem:[#allocation12 + $0xe0] sm:$0xff]
    %v2197 = vld [vmem:[#allocation12 + $0xe8] sm:$0xff]
    %v2198 = vld [vmem:[#allocation12 + $0xf0] sm:$0xff]
    %v2199 = vld [vmem:[#allocation12 + $0xf8] sm:$0xff]
    %v2232 = vunpack.c.l.b16 %v2168
    %v2233 = vunpack.c.h.b16 %v2168
    %v2234 = vunpack.c.l.b16 %v2169
    %v2235 = vunpack.c.h.b16 %v2169
    %v2236 = vunpack.c.l.b16 %v2170
    %v2237 = vunpack.c.h.b16 %v2170
    %v2238 = vunpack.c.l.b16 %v2171
    %v2239 = vunpack.c.h.b16 %v2171
    %v2240 = vunpack.c.l.b16 %v2172
    %v2241 = vunpack.c.h.b16 %v2172
    %v2242 = vunpack.c.l.b16 %v2173
    %v2243 = vunpack.c.h.b16 %v2173
    %v2244 = vunpack.c.l.b16 %v2174
    %v2245 = vunpack.c.h.b16 %v2174
    %v2246 = vunpack.c.l.b16 %v2175
    %v2247 = vunpack.c.h.b16 %v2175
    %v2248 = vunpack.c.l.b16 %v2176
    %v2249 = vunpack.c.h.b16 %v2176
    %v2250 = vunpack.c.l.b16 %v2177
    %v2251 = vunpack.c.h.b16 %v2177
    %v2252 = vunpack.c.l.b16 %v2178
    %v2253 = vunpack.c.h.b16 %v2178
    %v2254 = vunpack.c.l.b16 %v2179
    %v2255 = vunpack.c.h.b16 %v2179
    %v2256 = vunpack.c.l.b16 %v2180
    %v2257 = vunpack.c.h.b16 %v2180
    %v2258 = vunpack.c.l.b16 %v2181
    %v2259 = vunpack.c.h.b16 %v2181
    %v2260 = vunpack.c.l.b16 %v2182
    %v2261 = vunpack.c.h.b16 %v2182
    %v2262 = vunpack.c.l.b16 %v2183
    %v2263 = vunpack.c.h.b16 %v2183
    %v2264 = vunpack.c.l.b16 %v2184
    %v2265 = vunpack.c.h.b16 %v2184
    %v2266 = vunpack.c.l.b16 %v2185
    %v2267 = vunpack.c.h.b16 %v2185
    %v2268 = vunpack.c.l.b16 %v2186
    %v2269 = vunpack.c.h.b16 %v2186
    %v2270 = vunpack.c.l.b16 %v2187
    %v2271 = vunpack.c.h.b16 %v2187
    %v2272 = vunpack.c.l.b16 %v2188
    %v2273 = vunpack.c.h.b16 %v2188
    %v2274 = vunpack.c.l.b16 %v2189
    %v2275 = vunpack.c.h.b16 %v2189
    %v2276 = vunpack.c.l.b16 %v2190
    %v2277 = vunpack.c.h.b16 %v2190
    %v2278 = vunpack.c.l.b16 %v2191
    %v2279 = vunpack.c.h.b16 %v2191
    %v2280 = vunpack.c.l.b16 %v2192
    %v2281 = vunpack.c.h.b16 %v2192
    %v2282 = vunpack.c.l.b16 %v2193
    %v2283 = vunpack.c.h.b16 %v2193
    %v2284 = vunpack.c.l.b16 %v2194
    %v2285 = vunpack.c.h.b16 %v2194
    %v2286 = vunpack.c.l.b16 %v2195
    %v2287 = vunpack.c.h.b16 %v2195
    %v2288 = vunpack.c.l.b16 %v2196
    %v2289 = vunpack.c.h.b16 %v2196
    %v2290 = vunpack.c.l.b16 %v2197
    %v2291 = vunpack.c.h.b16 %v2197
    %v2292 = vunpack.c.l.b16 %v2198
    %v2293 = vunpack.c.h.b16 %v2198
    %v2294 = vunpack.c.l.b16 %v2199
    %v2295 = vunpack.c.h.b16 %v2199
    %v2296 = vpack.c.b16 %v2236, %v2232
    %v2297 = vpack.c.b16 %v2237, %v2233
    %v2298 = vpack.c.b16 %v2238, %v2234
    %v2299 = vpack.c.b16 %v2239, %v2235
    %v2300 = vpack.c.b16 %v2244, %v2240
    %v2301 = vpack.c.b16 %v2245, %v2241
    %v2302 = vpack.c.b16 %v2246, %v2242
    %v2303 = vpack.c.b16 %v2247, %v2243
    %v2304 = vpack.c.b16 %v2252, %v2248
    %v2305 = vpack.c.b16 %v2253, %v2249
    %v2306 = vpack.c.b16 %v2254, %v2250
    %v2307 = vpack.c.b16 %v2255, %v2251
    %v2308 = vpack.c.b16 %v2260, %v2256
    %v2309 = vpack.c.b16 %v2261, %v2257
    %v2310 = vpack.c.b16 %v2262, %v2258
    %v2311 = vpack.c.b16 %v2263, %v2259
    %v2312 = vpack.c.b16 %v2268, %v2264
    %v2313 = vpack.c.b16 %v2269, %v2265
    %v2314 = vpack.c.b16 %v2270, %v2266
    %v2315 = vpack.c.b16 %v2271, %v2267
    %v2316 = vpack.c.b16 %v2276, %v2272
    %v2317 = vpack.c.b16 %v2277, %v2273
    %v2318 = vpack.c.b16 %v2278, %v2274
    %v2319 = vpack.c.b16 %v2279, %v2275
    %v2320 = vpack.c.b16 %v2284, %v2280
    %v2321 = vpack.c.b16 %v2285, %v2281
    %v2322 = vpack.c.b16 %v2286, %v2282
    %v2323 = vpack.c.b16 %v2287, %v2283
    %v2324 = vpack.c.b16 %v2292, %v2288
    %v2325 = vpack.c.b16 %v2293, %v2289
    %v2326 = vpack.c.b16 %v2294, %v2290
    %v2327 = vpack.c.b16 %v2295, %v2291
    %2360 = vmatprep.subr.bf16.mxu0 %v2325
    %2361 = vmatpush1.bf16.msra.mxu0 %v2324
    %2362 = vmatprep.subr.bf16.mxu0 %v2321
    %2363 = vmatpush1.bf16.msra.mxu0 %v2320
    %2364 = vmatprep.subr.bf16.mxu0 %v2317
    %2365 = vmatpush1.bf16.msra.mxu0 %v2316
    %2366 = vmatprep.subr.bf16.mxu0 %v2313
    %2367 = vmatpush1.bf16.msra.mxu0 %v2312
    %2368 = vmatprep.subr.bf16.mxu0 %v2309
    %2369 = vmatpush1.bf16.msra.mxu0 %v2308
    %2370 = vmatprep.subr.bf16.mxu0 %v2305
    %2371 = vmatpush1.bf16.msra.mxu0 %v2304
    %2372 = vmatprep.subr.bf16.mxu0 %v2301
    %2373 = vmatpush1.bf16.msra.mxu0 %v2300
    %2374 = vmatprep.subr.bf16.mxu0 %v2297
    %2375 = vmatpush1.bf16.msra.mxu0 %v2296
    %2376 = vmatprep.subr.bf16.mxu0 0
    %2377 = vmatpush2.bf16.msra.mxu0 0
    %2378 = vmatprep.subr.bf16.mxu0 0
    %2379 = vmatpush2.bf16.msra.mxu0 0
    %2380 = vmatprep.subr.bf16.mxu0 0
    %2381 = vmatpush2.bf16.msra.mxu0 0
    %2382 = vmatprep.subr.bf16.mxu0 0
    %2383 = vmatpush2.bf16.msra.mxu0 0
    %2384 = vmatprep.subr.bf16.mxu0 0
    %2385 = vmatpush2.bf16.msra.mxu0 0
    %2386 = vmatprep.subr.bf16.mxu0 0
    %2387 = vmatpush2.bf16.msra.mxu0 0
    %2388 = vmatprep.subr.bf16.mxu0 0
    %2389 = vmatpush2.bf16.msra.mxu0 0
    %2390 = vmatprep.subr.bf16.mxu0 0
    %2391 = vmatpush2.bf16.msra.mxu0 0
    %2392 = vmatprep.mubr.bf16.mxu0 0
    %2393 = vmatmul.mubr.bf16.gmra.mxu0 %v2158
    %v2394 = vpop.f32.mrf.mxu0
    %v2395 = vadd.f32 0.0, %v2394
    %v2396 = vpop.f32.mrf.mxu0
    %v2397 = vadd.f32 0.0, %v2396
    %v2398 = vpop.f32.mrf.mxu0
    %v2399 = vpop.f32.mrf.mxu0
    %2400 = vdwg.mxu0
    %2401 = vmatprep.subr.bf16.mxu0 %v2327
    %2402 = vmatpush1.bf16.msra.mxu0 %v2326
    %2403 = vmatprep.subr.bf16.mxu0 %v2323
    %2404 = vmatpush1.bf16.msra.mxu0 %v2322
    %2405 = vmatprep.subr.bf16.mxu0 %v2319
    %2406 = vmatpush1.bf16.msra.mxu0 %v2318
    %2407 = vmatprep.subr.bf16.mxu0 %v2315
    %2408 = vmatpush1.bf16.msra.mxu0 %v2314
    %2409 = vmatprep.subr.bf16.mxu0 %v2311
    %2410 = vmatpush1.bf16.msra.mxu0 %v2310
    %2411 = vmatprep.subr.bf16.mxu0 %v2307
    %2412 = vmatpush1.bf16.msra.mxu0 %v2306
    %2413 = vmatprep.subr.bf16.mxu0 %v2303
    %2414 = vmatpush1.bf16.msra.mxu0 %v2302
    %2415 = vmatprep.subr.bf16.mxu0 %v2299
    %2416 = vmatpush1.bf16.msra.mxu0 %v2298
    %2417 = vmatprep.subr.bf16.mxu0 0
    %2418 = vmatpush2.bf16.msra.mxu0 0
    %2419 = vmatprep.subr.bf16.mxu0 0
    %2420 = vmatpush2.bf16.msra.mxu0 0
    %2421 = vmatprep.subr.bf16.mxu0 0
    %2422 = vmatpush2.bf16.msra.mxu0 0
    %2423 = vmatprep.subr.bf16.mxu0 0
    %2424 = vmatpush2.bf16.msra.mxu0 0
    %2425 = vmatprep.subr.bf16.mxu0 0
    %2426 = vmatpush2.bf16.msra.mxu0 0
    %2427 = vmatprep.subr.bf16.mxu0 0
    %2428 = vmatpush2.bf16.msra.mxu0 0
    %2429 = vmatprep.subr.bf16.mxu0 0
    %2430 = vmatpush2.bf16.msra.mxu0 0
    %2431 = vmatprep.subr.bf16.mxu0 0
    %2432 = vmatpush2.bf16.msra.mxu0 0
    %2433 = vmatprep.mubr.bf16.mxu0 0
    %2434 = vmatmul.mubr.bf16.gmra.mxu0 %v2158
    %v2435 = vpop.f32.mrf.mxu0
    %v2436 = vadd.f32 0.0, %v2435
    %v2437 = vpop.f32.mrf.mxu0
    %v2438 = vadd.f32 0.0, %v2437
    %v2439 = vpop.f32.mrf.mxu0
    %v2440 = vpop.f32.mrf.mxu0
    %2441 = vdwg.mxu0
    %v2442 = vadd.f32 %v2164, %v2395
    %v2443 = vadd.f32 %v2165, %v2397
    %v2444 = vadd.f32 %v2166, %v2436
    %v2445 = vadd.f32 %v2167, %v2438
    %v2446 = vxor.u32 %v2442, 2147483648
    %v2447 = vmul.f32 %v2446, 1.442695
    %v2448 = vpow.pop %v2447
    %v2449 = vadd.f32 %v2448, 1.0
    %v2450 = vrcp.pop %v2449
    %v2451 = vmul.f32 1.0, %v2450
    %v2452 = vxor.u32 %v2443, 2147483648
    %v2453 = vmul.f32 %v2452, 1.442695
    %v2454 = vpow.pop %v2453
    %v2455 = vadd.f32 %v2454, 1.0
    %v2456 = vrcp.pop %v2455
    %v2457 = vmul.f32 1.0, %v2456
    %v2458 = vtanh.pop %v2444
    %v2459 = vxor.u32 %v2445, 2147483648
    %v2460 = vmul.f32 %v2459, 1.442695
    %v2461 = vpow.pop %v2460
    %v2462 = vadd.f32 %v2461, 1.0
    %v2463 = vrcp.pop %v2462
    %v2464 = vmul.f32 1.0, %v2463
    %v2465 = vmul.f32 %v2457, %v2155
    %v2466 = vmul.f32 %v2451, %v2458
    %v2467 = vadd.f32 %v2465, %v2466
    %v2468 = vtanh.pop %v2467
    %v2469 = vmul.f32 %v2464, %v2468
    %v2470 = vpack.c.bf16 %v2469, %v2469
    %s2471 = scalar_lea.vmem [#allocation3], 20
    %2472 = vst [vmem:[%s2471] sm:$0xf] %v2470
    %s2473 = smul.u32 6, 4
    %s2474 = smul.addr %s2473, 8
    %s2475 = scalar_lea.vmem [#allocation2], %s2474
    %v2476 = vld [vmem:[%s2475] sm:$0xff]
    %v2477 = vld [vmem:[%s2475 + $0x8] sm:$0xff]
    %v2478 = vld [vmem:[%s2475 + $0x10] sm:$0xff]
    %v2479 = vld [vmem:[%s2475 + $0x18] sm:$0xff]
    %v2480 = vld [vmem:[#allocation12] sm:$0xff]
    %v2481 = vld [vmem:[#allocation12 + $0x8] sm:$0xff]
    %v2482 = vld [vmem:[#allocation12 + $0x10] sm:$0xff]
    %v2483 = vld [vmem:[#allocation12 + $0x18] sm:$0xff]
    %v2484 = vld [vmem:[#allocation12 + $0x20] sm:$0xff]
    %v2485 = vld [vmem:[#allocation12 + $0x28] sm:$0xff]
    %v2486 = vld [vmem:[#allocation12 + $0x30] sm:$0xff]
    %v2487 = vld [vmem:[#allocation12 + $0x38] sm:$0xff]
    %v2488 = vld [vmem:[#allocation12 + $0x40] sm:$0xff]
    %v2489 = vld [vmem:[#allocation12 + $0x48] sm:$0xff]
    %v2490 = vld [vmem:[#allocation12 + $0x50] sm:$0xff]
    %v2491 = vld [vmem:[#allocation12 + $0x58] sm:$0xff]
    %v2492 = vld [vmem:[#allocation12 + $0x60] sm:$0xff]
    %v2493 = vld [vmem:[#allocation12 + $0x68] sm:$0xff]
    %v2494 = vld [vmem:[#allocation12 + $0x70] sm:$0xff]
    %v2495 = vld [vmem:[#allocation12 + $0x78] sm:$0xff]
    %v2496 = vld [vmem:[#allocation12 + $0x80] sm:$0xff]
    %v2497 = vld [vmem:[#allocation12 + $0x88] sm:$0xff]
    %v2498 = vld [vmem:[#allocation12 + $0x90] sm:$0xff]
    %v2499 = vld [vmem:[#allocation12 + $0x98] sm:$0xff]
    %v2500 = vld [vmem:[#allocation12 + $0xa0] sm:$0xff]
    %v2501 = vld [vmem:[#allocation12 + $0xa8] sm:$0xff]
    %v2502 = vld [vmem:[#allocation12 + $0xb0] sm:$0xff]
    %v2503 = vld [vmem:[#allocation12 + $0xb8] sm:$0xff]
    %v2504 = vld [vmem:[#allocation12 + $0xc0] sm:$0xff]
    %v2505 = vld [vmem:[#allocation12 + $0xc8] sm:$0xff]
    %v2506 = vld [vmem:[#allocation12 + $0xd0] sm:$0xff]
    %v2507 = vld [vmem:[#allocation12 + $0xd8] sm:$0xff]
    %v2508 = vld [vmem:[#allocation12 + $0xe0] sm:$0xff]
    %v2509 = vld [vmem:[#allocation12 + $0xe8] sm:$0xff]
    %v2510 = vld [vmem:[#allocation12 + $0xf0] sm:$0xff]
    %v2511 = vld [vmem:[#allocation12 + $0xf8] sm:$0xff]
    %v2544 = vunpack.c.l.b16 %v2480
    %v2545 = vunpack.c.h.b16 %v2480
    %v2546 = vunpack.c.l.b16 %v2481
    %v2547 = vunpack.c.h.b16 %v2481
    %v2548 = vunpack.c.l.b16 %v2482
    %v2549 = vunpack.c.h.b16 %v2482
    %v2550 = vunpack.c.l.b16 %v2483
    %v2551 = vunpack.c.h.b16 %v2483
    %v2552 = vunpack.c.l.b16 %v2484
    %v2553 = vunpack.c.h.b16 %v2484
    %v2554 = vunpack.c.l.b16 %v2485
    %v2555 = vunpack.c.h.b16 %v2485
    %v2556 = vunpack.c.l.b16 %v2486
    %v2557 = vunpack.c.h.b16 %v2486
    %v2558 = vunpack.c.l.b16 %v2487
    %v2559 = vunpack.c.h.b16 %v2487
    %v2560 = vunpack.c.l.b16 %v2488
    %v2561 = vunpack.c.h.b16 %v2488
    %v2562 = vunpack.c.l.b16 %v2489
    %v2563 = vunpack.c.h.b16 %v2489
    %v2564 = vunpack.c.l.b16 %v2490
    %v2565 = vunpack.c.h.b16 %v2490
    %v2566 = vunpack.c.l.b16 %v2491
    %v2567 = vunpack.c.h.b16 %v2491
    %v2568 = vunpack.c.l.b16 %v2492
    %v2569 = vunpack.c.h.b16 %v2492
    %v2570 = vunpack.c.l.b16 %v2493
    %v2571 = vunpack.c.h.b16 %v2493
    %v2572 = vunpack.c.l.b16 %v2494
    %v2573 = vunpack.c.h.b16 %v2494
    %v2574 = vunpack.c.l.b16 %v2495
    %v2575 = vunpack.c.h.b16 %v2495
    %v2576 = vunpack.c.l.b16 %v2496
    %v2577 = vunpack.c.h.b16 %v2496
    %v2578 = vunpack.c.l.b16 %v2497
    %v2579 = vunpack.c.h.b16 %v2497
    %v2580 = vunpack.c.l.b16 %v2498
    %v2581 = vunpack.c.h.b16 %v2498
    %v2582 = vunpack.c.l.b16 %v2499
    %v2583 = vunpack.c.h.b16 %v2499
    %v2584 = vunpack.c.l.b16 %v2500
    %v2585 = vunpack.c.h.b16 %v2500
    %v2586 = vunpack.c.l.b16 %v2501
    %v2587 = vunpack.c.h.b16 %v2501
    %v2588 = vunpack.c.l.b16 %v2502
    %v2589 = vunpack.c.h.b16 %v2502
    %v2590 = vunpack.c.l.b16 %v2503
    %v2591 = vunpack.c.h.b16 %v2503
    %v2592 = vunpack.c.l.b16 %v2504
    %v2593 = vunpack.c.h.b16 %v2504
    %v2594 = vunpack.c.l.b16 %v2505
    %v2595 = vunpack.c.h.b16 %v2505
    %v2596 = vunpack.c.l.b16 %v2506
    %v2597 = vunpack.c.h.b16 %v2506
    %v2598 = vunpack.c.l.b16 %v2507
    %v2599 = vunpack.c.h.b16 %v2507
    %v2600 = vunpack.c.l.b16 %v2508
    %v2601 = vunpack.c.h.b16 %v2508
    %v2602 = vunpack.c.l.b16 %v2509
    %v2603 = vunpack.c.h.b16 %v2509
    %v2604 = vunpack.c.l.b16 %v2510
    %v2605 = vunpack.c.h.b16 %v2510
    %v2606 = vunpack.c.l.b16 %v2511
    %v2607 = vunpack.c.h.b16 %v2511
    %v2608 = vpack.c.b16 %v2548, %v2544
    %v2609 = vpack.c.b16 %v2549, %v2545
    %v2610 = vpack.c.b16 %v2550, %v2546
    %v2611 = vpack.c.b16 %v2551, %v2547
    %v2612 = vpack.c.b16 %v2556, %v2552
    %v2613 = vpack.c.b16 %v2557, %v2553
    %v2614 = vpack.c.b16 %v2558, %v2554
    %v2615 = vpack.c.b16 %v2559, %v2555
    %v2616 = vpack.c.b16 %v2564, %v2560
    %v2617 = vpack.c.b16 %v2565, %v2561
    %v2618 = vpack.c.b16 %v2566, %v2562
    %v2619 = vpack.c.b16 %v2567, %v2563
    %v2620 = vpack.c.b16 %v2572, %v2568
    %v2621 = vpack.c.b16 %v2573, %v2569
    %v2622 = vpack.c.b16 %v2574, %v2570
    %v2623 = vpack.c.b16 %v2575, %v2571
    %v2624 = vpack.c.b16 %v2580, %v2576
    %v2625 = vpack.c.b16 %v2581, %v2577
    %v2626 = vpack.c.b16 %v2582, %v2578
    %v2627 = vpack.c.b16 %v2583, %v2579
    %v2628 = vpack.c.b16 %v2588, %v2584
    %v2629 = vpack.c.b16 %v2589, %v2585
    %v2630 = vpack.c.b16 %v2590, %v2586
    %v2631 = vpack.c.b16 %v2591, %v2587
    %v2632 = vpack.c.b16 %v2596, %v2592
    %v2633 = vpack.c.b16 %v2597, %v2593
    %v2634 = vpack.c.b16 %v2598, %v2594
    %v2635 = vpack.c.b16 %v2599, %v2595
    %v2636 = vpack.c.b16 %v2604, %v2600
    %v2637 = vpack.c.b16 %v2605, %v2601
    %v2638 = vpack.c.b16 %v2606, %v2602
    %v2639 = vpack.c.b16 %v2607, %v2603
    %2672 = vmatprep.subr.bf16.mxu0 %v2637
    %2673 = vmatpush1.bf16.msra.mxu0 %v2636
    %2674 = vmatprep.subr.bf16.mxu0 %v2633
    %2675 = vmatpush1.bf16.msra.mxu0 %v2632
    %2676 = vmatprep.subr.bf16.mxu0 %v2629
    %2677 = vmatpush1.bf16.msra.mxu0 %v2628
    %2678 = vmatprep.subr.bf16.mxu0 %v2625
    %2679 = vmatpush1.bf16.msra.mxu0 %v2624
    %2680 = vmatprep.subr.bf16.mxu0 %v2621
    %2681 = vmatpush1.bf16.msra.mxu0 %v2620
    %2682 = vmatprep.subr.bf16.mxu0 %v2617
    %2683 = vmatpush1.bf16.msra.mxu0 %v2616
    %2684 = vmatprep.subr.bf16.mxu0 %v2613
    %2685 = vmatpush1.bf16.msra.mxu0 %v2612
    %2686 = vmatprep.subr.bf16.mxu0 %v2609
    %2687 = vmatpush1.bf16.msra.mxu0 %v2608
    %2688 = vmatprep.subr.bf16.mxu0 0
    %2689 = vmatpush2.bf16.msra.mxu0 0
    %2690 = vmatprep.subr.bf16.mxu0 0
    %2691 = vmatpush2.bf16.msra.mxu0 0
    %2692 = vmatprep.subr.bf16.mxu0 0
    %2693 = vmatpush2.bf16.msra.mxu0 0
    %2694 = vmatprep.subr.bf16.mxu0 0
    %2695 = vmatpush2.bf16.msra.mxu0 0
    %2696 = vmatprep.subr.bf16.mxu0 0
    %2697 = vmatpush2.bf16.msra.mxu0 0
    %2698 = vmatprep.subr.bf16.mxu0 0
    %2699 = vmatpush2.bf16.msra.mxu0 0
    %2700 = vmatprep.subr.bf16.mxu0 0
    %2701 = vmatpush2.bf16.msra.mxu0 0
    %2702 = vmatprep.subr.bf16.mxu0 0
    %2703 = vmatpush2.bf16.msra.mxu0 0
    %2704 = vmatprep.mubr.bf16.mxu0 0
    %2705 = vmatmul.mubr.bf16.gmra.mxu0 %v2470
    %v2706 = vpop.f32.mrf.mxu0
    %v2707 = vadd.f32 0.0, %v2706
    %v2708 = vpop.f32.mrf.mxu0
    %v2709 = vadd.f32 0.0, %v2708
    %v2710 = vpop.f32.mrf.mxu0
    %v2711 = vpop.f32.mrf.mxu0
    %2712 = vdwg.mxu0
    %2713 = vmatprep.subr.bf16.mxu0 %v2639
    %2714 = vmatpush1.bf16.msra.mxu0 %v2638
    %2715 = vmatprep.subr.bf16.mxu0 %v2635
    %2716 = vmatpush1.bf16.msra.mxu0 %v2634
    %2717 = vmatprep.subr.bf16.mxu0 %v2631
    %2718 = vmatpush1.bf16.msra.mxu0 %v2630
    %2719 = vmatprep.subr.bf16.mxu0 %v2627
    %2720 = vmatpush1.bf16.msra.mxu0 %v2626
    %2721 = vmatprep.subr.bf16.mxu0 %v2623
    %2722 = vmatpush1.bf16.msra.mxu0 %v2622
    %2723 = vmatprep.subr.bf16.mxu0 %v2619
    %2724 = vmatpush1.bf16.msra.mxu0 %v2618
    %2725 = vmatprep.subr.bf16.mxu0 %v2615
    %2726 = vmatpush1.bf16.msra.mxu0 %v2614
    %2727 = vmatprep.subr.bf16.mxu0 %v2611
    %2728 = vmatpush1.bf16.msra.mxu0 %v2610
    %2729 = vmatprep.subr.bf16.mxu0 0
    %2730 = vmatpush2.bf16.msra.mxu0 0
    %2731 = vmatprep.subr.bf16.mxu0 0
    %2732 = vmatpush2.bf16.msra.mxu0 0
    %2733 = vmatprep.subr.bf16.mxu0 0
    %2734 = vmatpush2.bf16.msra.mxu0 0
    %2735 = vmatprep.subr.bf16.mxu0 0
    %2736 = vmatpush2.bf16.msra.mxu0 0
    %2737 = vmatprep.subr.bf16.mxu0 0
    %2738 = vmatpush2.bf16.msra.mxu0 0
    %2739 = vmatprep.subr.bf16.mxu0 0
    %2740 = vmatpush2.bf16.msra.mxu0 0
    %2741 = vmatprep.subr.bf16.mxu0 0
    %2742 = vmatpush2.bf16.msra.mxu0 0
    %2743 = vmatprep.subr.bf16.mxu0 0
    %2744 = vmatpush2.bf16.msra.mxu0 0
    %2745 = vmatprep.mubr.bf16.mxu0 0
    %2746 = vmatmul.mubr.bf16.gmra.mxu0 %v2470
    %v2747 = vpop.f32.mrf.mxu0
    %v2748 = vadd.f32 0.0, %v2747
    %v2749 = vpop.f32.mrf.mxu0
    %v2750 = vadd.f32 0.0, %v2749
    %v2751 = vpop.f32.mrf.mxu0
    %v2752 = vpop.f32.mrf.mxu0
    %2753 = vdwg.mxu0
    %v2754 = vadd.f32 %v2476, %v2707
    %v2755 = vadd.f32 %v2477, %v2709
    %v2756 = vadd.f32 %v2478, %v2748
    %v2757 = vadd.f32 %v2479, %v2750
    %v2758 = vxor.u32 %v2754, 2147483648
    %v2759 = vmul.f32 %v2758, 1.442695
    %v2760 = vpow.pop %v2759
    %v2761 = vadd.f32 %v2760, 1.0
    %v2762 = vrcp.pop %v2761
    %v2763 = vmul.f32 1.0, %v2762
    %v2764 = vxor.u32 %v2755, 2147483648
    %v2765 = vmul.f32 %v2764, 1.442695
    %v2766 = vpow.pop %v2765
    %v2767 = vadd.f32 %v2766, 1.0
    %v2768 = vrcp.pop %v2767
    %v2769 = vmul.f32 1.0, %v2768
    %v2770 = vtanh.pop %v2756
    %v2771 = vxor.u32 %v2757, 2147483648
    %v2772 = vmul.f32 %v2771, 1.442695
    %v2773 = vpow.pop %v2772
    %v2774 = vadd.f32 %v2773, 1.0
    %v2775 = vrcp.pop %v2774
    %v2776 = vmul.f32 1.0, %v2775
    %v2777 = vmul.f32 %v2769, %v2467
    %v2778 = vmul.f32 %v2763, %v2770
    %v2779 = vadd.f32 %v2777, %v2778
    %v2780 = vtanh.pop %v2779
    %v2781 = vmul.f32 %v2776, %v2780
    %v2782 = vpack.c.bf16 %v2781, %v2781
    %s2783 = scalar_lea.vmem [#allocation3], 24
    %2784 = vst [vmem:[%s2783] sm:$0xf] %v2782
    %s2785 = smul.u32 7, 4
    %s2786 = smul.addr %s2785, 8
    %s2787 = scalar_lea.vmem [#allocation2], %s2786
    %v2788 = vld [vmem:[%s2787] sm:$0xff]
    %v2789 = vld [vmem:[%s2787 + $0x8] sm:$0xff]
    %v2790 = vld [vmem:[%s2787 + $0x10] sm:$0xff]
    %v2791 = vld [vmem:[%s2787 + $0x18] sm:$0xff]
    %v2792 = vld [vmem:[#allocation12] sm:$0xff]
    %v2793 = vld [vmem:[#allocation12 + $0x8] sm:$0xff]
    %v2794 = vld [vmem:[#allocation12 + $0x10] sm:$0xff]
    %v2795 = vld [vmem:[#allocation12 + $0x18] sm:$0xff]
    %v2796 = vld [vmem:[#allocation12 + $0x20] sm:$0xff]
    %v2797 = vld [vmem:[#allocation12 + $0x28] sm:$0xff]
    %v2798 = vld [vmem:[#allocation12 + $0x30] sm:$0xff]
    %v2799 = vld [vmem:[#allocation12 + $0x38] sm:$0xff]
    %v2800 = vld [vmem:[#allocation12 + $0x40] sm:$0xff]
    %v2801 = vld [vmem:[#allocation12 + $0x48] sm:$0xff]
    %v2802 = vld [vmem:[#allocation12 + $0x50] sm:$0xff]
    %v2803 = vld [vmem:[#allocation12 + $0x58] sm:$0xff]
    %v2804 = vld [vmem:[#allocation12 + $0x60] sm:$0xff]
    %v2805 = vld [vmem:[#allocation12 + $0x68] sm:$0xff]
    %v2806 = vld [vmem:[#allocation12 + $0x70] sm:$0xff]
    %v2807 = vld [vmem:[#allocation12 + $0x78] sm:$0xff]
    %v2808 = vld [vmem:[#allocation12 + $0x80] sm:$0xff]
    %v2809 = vld [vmem:[#allocation12 + $0x88] sm:$0xff]
    %v2810 = vld [vmem:[#allocation12 + $0x90] sm:$0xff]
    %v2811 = vld [vmem:[#allocation12 + $0x98] sm:$0xff]
    %v2812 = vld [vmem:[#allocation12 + $0xa0] sm:$0xff]
    %v2813 = vld [vmem:[#allocation12 + $0xa8] sm:$0xff]
    %v2814 = vld [vmem:[#allocation12 + $0xb0] sm:$0xff]
    %v2815 = vld [vmem:[#allocation12 + $0xb8] sm:$0xff]
    %v2816 = vld [vmem:[#allocation12 + $0xc0] sm:$0xff]
    %v2817 = vld [vmem:[#allocation12 + $0xc8] sm:$0xff]
    %v2818 = vld [vmem:[#allocation12 + $0xd0] sm:$0xff]
    %v2819 = vld [vmem:[#allocation12 + $0xd8] sm:$0xff]
    %v2820 = vld [vmem:[#allocation12 + $0xe0] sm:$0xff]
    %v2821 = vld [vmem:[#allocation12 + $0xe8] sm:$0xff]
    %v2822 = vld [vmem:[#allocation12 + $0xf0] sm:$0xff]
    %v2823 = vld [vmem:[#allocation12 + $0xf8] sm:$0xff]
    %v2856 = vunpack.c.l.b16 %v2792
    %v2857 = vunpack.c.h.b16 %v2792
    %v2858 = vunpack.c.l.b16 %v2793
    %v2859 = vunpack.c.h.b16 %v2793
    %v2860 = vunpack.c.l.b16 %v2794
    %v2861 = vunpack.c.h.b16 %v2794
    %v2862 = vunpack.c.l.b16 %v2795
    %v2863 = vunpack.c.h.b16 %v2795
    %v2864 = vunpack.c.l.b16 %v2796
    %v2865 = vunpack.c.h.b16 %v2796
    %v2866 = vunpack.c.l.b16 %v2797
    %v2867 = vunpack.c.h.b16 %v2797
    %v2868 = vunpack.c.l.b16 %v2798
    %v2869 = vunpack.c.h.b16 %v2798
    %v2870 = vunpack.c.l.b16 %v2799
    %v2871 = vunpack.c.h.b16 %v2799
    %v2872 = vunpack.c.l.b16 %v2800
    %v2873 = vunpack.c.h.b16 %v2800
    %v2874 = vunpack.c.l.b16 %v2801
    %v2875 = vunpack.c.h.b16 %v2801
    %v2876 = vunpack.c.l.b16 %v2802
    %v2877 = vunpack.c.h.b16 %v2802
    %v2878 = vunpack.c.l.b16 %v2803
    %v2879 = vunpack.c.h.b16 %v2803
    %v2880 = vunpack.c.l.b16 %v2804
    %v2881 = vunpack.c.h.b16 %v2804
    %v2882 = vunpack.c.l.b16 %v2805
    %v2883 = vunpack.c.h.b16 %v2805
    %v2884 = vunpack.c.l.b16 %v2806
    %v2885 = vunpack.c.h.b16 %v2806
    %v2886 = vunpack.c.l.b16 %v2807
    %v2887 = vunpack.c.h.b16 %v2807
    %v2888 = vunpack.c.l.b16 %v2808
    %v2889 = vunpack.c.h.b16 %v2808
    %v2890 = vunpack.c.l.b16 %v2809
    %v2891 = vunpack.c.h.b16 %v2809
    %v2892 = vunpack.c.l.b16 %v2810
    %v2893 = vunpack.c.h.b16 %v2810
    %v2894 = vunpack.c.l.b16 %v2811
    %v2895 = vunpack.c.h.b16 %v2811
    %v2896 = vunpack.c.l.b16 %v2812
    %v2897 = vunpack.c.h.b16 %v2812
    %v2898 = vunpack.c.l.b16 %v2813
    %v2899 = vunpack.c.h.b16 %v2813
    %v2900 = vunpack.c.l.b16 %v2814
    %v2901 = vunpack.c.h.b16 %v2814
    %v2902 = vunpack.c.l.b16 %v2815
    %v2903 = vunpack.c.h.b16 %v2815
    %v2904 = vunpack.c.l.b16 %v2816
    %v2905 = vunpack.c.h.b16 %v2816
    %v2906 = vunpack.c.l.b16 %v2817
    %v2907 = vunpack.c.h.b16 %v2817
    %v2908 = vunpack.c.l.b16 %v2818
    %v2909 = vunpack.c.h.b16 %v2818
    %v2910 = vunpack.c.l.b16 %v2819
    %v2911 = vunpack.c.h.b16 %v2819
    %v2912 = vunpack.c.l.b16 %v2820
    %v2913 = vunpack.c.h.b16 %v2820
    %v2914 = vunpack.c.l.b16 %v2821
    %v2915 = vunpack.c.h.b16 %v2821
    %v2916 = vunpack.c.l.b16 %v2822
    %v2917 = vunpack.c.h.b16 %v2822
    %v2918 = vunpack.c.l.b16 %v2823
    %v2919 = vunpack.c.h.b16 %v2823
    %v2920 = vpack.c.b16 %v2860, %v2856
    %v2921 = vpack.c.b16 %v2861, %v2857
    %v2922 = vpack.c.b16 %v2862, %v2858
    %v2923 = vpack.c.b16 %v2863, %v2859
    %v2924 = vpack.c.b16 %v2868, %v2864
    %v2925 = vpack.c.b16 %v2869, %v2865
    %v2926 = vpack.c.b16 %v2870, %v2866
    %v2927 = vpack.c.b16 %v2871, %v2867
    %v2928 = vpack.c.b16 %v2876, %v2872
    %v2929 = vpack.c.b16 %v2877, %v2873
    %v2930 = vpack.c.b16 %v2878, %v2874
    %v2931 = vpack.c.b16 %v2879, %v2875
    %v2932 = vpack.c.b16 %v2884, %v2880
    %v2933 = vpack.c.b16 %v2885, %v2881
    %v2934 = vpack.c.b16 %v2886, %v2882
    %v2935 = vpack.c.b16 %v2887, %v2883
    %v2936 = vpack.c.b16 %v2892, %v2888
    %v2937 = vpack.c.b16 %v2893, %v2889
    %v2938 = vpack.c.b16 %v2894, %v2890
    %v2939 = vpack.c.b16 %v2895, %v2891
    %v2940 = vpack.c.b16 %v2900, %v2896
    %v2941 = vpack.c.b16 %v2901, %v2897
    %v2942 = vpack.c.b16 %v2902, %v2898
    %v2943 = vpack.c.b16 %v2903, %v2899
    %v2944 = vpack.c.b16 %v2908, %v2904
    %v2945 = vpack.c.b16 %v2909, %v2905
    %v2946 = vpack.c.b16 %v2910, %v2906
    %v2947 = vpack.c.b16 %v2911, %v2907
    %v2948 = vpack.c.b16 %v2916, %v2912
    %v2949 = vpack.c.b16 %v2917, %v2913
    %v2950 = vpack.c.b16 %v2918, %v2914
    %v2951 = vpack.c.b16 %v2919, %v2915
    %2984 = vmatprep.subr.bf16.mxu0 %v2949
    %2985 = vmatpush1.bf16.msra.mxu0 %v2948
    %2986 = vmatprep.subr.bf16.mxu0 %v2945
    %2987 = vmatpush1.bf16.msra.mxu0 %v2944
    %2988 = vmatprep.subr.bf16.mxu0 %v2941
    %2989 = vmatpush1.bf16.msra.mxu0 %v2940
    %2990 = vmatprep.subr.bf16.mxu0 %v2937
    %2991 = vmatpush1.bf16.msra.mxu0 %v2936
    %2992 = vmatprep.subr.bf16.mxu0 %v2933
    %2993 = vmatpush1.bf16.msra.mxu0 %v2932
    %2994 = vmatprep.subr.bf16.mxu0 %v2929
    %2995 = vmatpush1.bf16.msra.mxu0 %v2928
    %2996 = vmatprep.subr.bf16.mxu0 %v2925
    %2997 = vmatpush1.bf16.msra.mxu0 %v2924
    %2998 = vmatprep.subr.bf16.mxu0 %v2921
    %2999 = vmatpush1.bf16.msra.mxu0 %v2920
    %3000 = vmatprep.subr.bf16.mxu0 0
    %3001 = vmatpush2.bf16.msra.mxu0 0
    %3002 = vmatprep.subr.bf16.mxu0 0
    %3003 = vmatpush2.bf16.msra.mxu0 0
    %3004 = vmatprep.subr.bf16.mxu0 0
    %3005 = vmatpush2.bf16.msra.mxu0 0
    %3006 = vmatprep.subr.bf16.mxu0 0
    %3007 = vmatpush2.bf16.msra.mxu0 0
    %3008 = vmatprep.subr.bf16.mxu0 0
    %3009 = vmatpush2.bf16.msra.mxu0 0
    %3010 = vmatprep.subr.bf16.mxu0 0
    %3011 = vmatpush2.bf16.msra.mxu0 0
    %3012 = vmatprep.subr.bf16.mxu0 0
    %3013 = vmatpush2.bf16.msra.mxu0 0
    %3014 = vmatprep.subr.bf16.mxu0 0
    %3015 = vmatpush2.bf16.msra.mxu0 0
    %3016 = vmatprep.mubr.bf16.mxu0 0
    %3017 = vmatmul.mubr.bf16.gmra.mxu0 %v2782
    %v3018 = vpop.f32.mrf.mxu0
    %v3019 = vadd.f32 0.0, %v3018
    %v3020 = vpop.f32.mrf.mxu0
    %v3021 = vadd.f32 0.0, %v3020
    %v3022 = vpop.f32.mrf.mxu0
    %v3023 = vpop.f32.mrf.mxu0
    %3024 = vdwg.mxu0
    %3025 = vmatprep.subr.bf16.mxu0 %v2951
    %3026 = vmatpush1.bf16.msra.mxu0 %v2950
    %3027 = vmatprep.subr.bf16.mxu0 %v2947
    %3028 = vmatpush1.bf16.msra.mxu0 %v2946
    %3029 = vmatprep.subr.bf16.mxu0 %v2943
    %3030 = vmatpush1.bf16.msra.mxu0 %v2942
    %3031 = vmatprep.subr.bf16.mxu0 %v2939
    %3032 = vmatpush1.bf16.msra.mxu0 %v2938
    %3033 = vmatprep.subr.bf16.mxu0 %v2935
    %3034 = vmatpush1.bf16.msra.mxu0 %v2934
    %3035 = vmatprep.subr.bf16.mxu0 %v2931
    %3036 = vmatpush1.bf16.msra.mxu0 %v2930
    %3037 = vmatprep.subr.bf16.mxu0 %v2927
    %3038 = vmatpush1.bf16.msra.mxu0 %v2926
    %3039 = vmatprep.subr.bf16.mxu0 %v2923
    %3040 = vmatpush1.bf16.msra.mxu0 %v2922
    %3041 = vmatprep.subr.bf16.mxu0 0
    %3042 = vmatpush2.bf16.msra.mxu0 0
    %3043 = vmatprep.subr.bf16.mxu0 0
    %3044 = vmatpush2.bf16.msra.mxu0 0
    %3045 = vmatprep.subr.bf16.mxu0 0
    %3046 = vmatpush2.bf16.msra.mxu0 0
    %3047 = vmatprep.subr.bf16.mxu0 0
    %3048 = vmatpush2.bf16.msra.mxu0 0
    %3049 = vmatprep.subr.bf16.mxu0 0
    %3050 = vmatpush2.bf16.msra.mxu0 0
    %3051 = vmatprep.subr.bf16.mxu0 0
    %3052 = vmatpush2.bf16.msra.mxu0 0
    %3053 = vmatprep.subr.bf16.mxu0 0
    %3054 = vmatpush2.bf16.msra.mxu0 0
    %3055 = vmatprep.subr.bf16.mxu0 0
    %3056 = vmatpush2.bf16.msra.mxu0 0
    %3057 = vmatprep.mubr.bf16.mxu0 0
    %3058 = vmatmul.mubr.bf16.gmra.mxu0 %v2782
    %v3059 = vpop.f32.mrf.mxu0
    %v3060 = vadd.f32 0.0, %v3059
    %v3061 = vpop.f32.mrf.mxu0
    %v3062 = vadd.f32 0.0, %v3061
    %v3063 = vpop.f32.mrf.mxu0
    %v3064 = vpop.f32.mrf.mxu0
    %3065 = vdwg.mxu0
    %v3066 = vadd.f32 %v2788, %v3019
    %v3067 = vadd.f32 %v2789, %v3021
    %v3068 = vadd.f32 %v2790, %v3060
    %v3069 = vadd.f32 %v2791, %v3062
    %v3070 = vxor.u32 %v3066, 2147483648
    %v3071 = vmul.f32 %v3070, 1.442695
    %v3072 = vpow.pop %v3071
    %v3073 = vadd.f32 %v3072, 1.0
    %v3074 = vrcp.pop %v3073
    %v3075 = vmul.f32 1.0, %v3074
    %v3076 = vxor.u32 %v3067, 2147483648
    %v3077 = vmul.f32 %v3076, 1.442695
    %v3078 = vpow.pop %v3077
    %v3079 = vadd.f32 %v3078, 1.0
    %v3080 = vrcp.pop %v3079
    %v3081 = vmul.f32 1.0, %v3080
    %v3082 = vtanh.pop %v3068
    %v3083 = vxor.u32 %v3069, 2147483648
    %v3084 = vmul.f32 %v3083, 1.442695
    %v3085 = vpow.pop %v3084
    %v3086 = vadd.f32 %v3085, 1.0
    %v3087 = vrcp.pop %v3086
    %v3088 = vmul.f32 1.0, %v3087
    %v3089 = vmul.f32 %v3081, %v2779
    %v3090 = vmul.f32 %v3075, %v3082
    %v3091 = vadd.f32 %v3089, %v3090
    %v3092 = vtanh.pop %v3091
    %v3093 = vmul.f32 %v3088, %v3092
    %v3094 = vpack.c.bf16 %v3093, %v3093
    %s3095 = scalar_lea.vmem [#allocation3], 28
    %3096 = vst [vmem:[%s3095] sm:$0xf] %v3094
    %s3097 = smul.u32 4, 2
    %s3098 = smul.u32 %s3097, 16
    %s3099 = smul.u32 %s3098, 4
    %s3100 = sshll.u32 %s3099, 4
    %3101 = dma.done [#allocation9], %s3100
    %s3102 = sshll.u32 %s3099, 4
    %3103 = dma.done %s68, %s3102
    %v3104 = vld [vmem:[#allocation3] sm:$0xf]
    %v3105 = vld [vmem:[#allocation3 + $0x4] sm:$0xf]
    %v3106 = vld [vmem:[#allocation3 + $0x8] sm:$0xf]
    %v3107 = vld [vmem:[#allocation3 + $0xc] sm:$0xf]
    %v3108 = vld [vmem:[#allocation3 + $0x10] sm:$0xf]
    %v3109 = vld [vmem:[#allocation3 + $0x14] sm:$0xf]
    %v3110 = vld [vmem:[#allocation3 + $0x18] sm:$0xf]
    %v3111 = vld [vmem:[#allocation3 + $0x1c] sm:$0xf]
    %v3112 = vld [vmem:[#allocation4] sm:$0xff]
    %v3113 = vld [vmem:[#allocation4 + $0x8] sm:$0xff]
    %v3114 = vld [vmem:[#allocation4 + $0x10] sm:$0xff]
    %v3115 = vld [vmem:[#allocation4 + $0x18] sm:$0xff]
    %v3116 = vld [vmem:[#allocation4 + $0x20] sm:$0xff]
    %v3117 = vld [vmem:[#allocation4 + $0x28] sm:$0xff]
    %v3118 = vld [vmem:[#allocation4 + $0x30] sm:$0xff]
    %v3119 = vld [vmem:[#allocation4 + $0x38] sm:$0xff]
    %v3120 = vld [vmem:[#allocation4 + $0x40] sm:$0xff]
    %v3121 = vld [vmem:[#allocation4 + $0x48] sm:$0xff]
    %v3122 = vld [vmem:[#allocation4 + $0x50] sm:$0xff]
    %v3123 = vld [vmem:[#allocation4 + $0x58] sm:$0xff]
    %v3124 = vld [vmem:[#allocation4 + $0x60] sm:$0xff]
    %v3125 = vld [vmem:[#allocation4 + $0x68] sm:$0xff]
    %v3126 = vld [vmem:[#allocation4 + $0x70] sm:$0xff]
    %v3127 = vld [vmem:[#allocation4 + $0x78] sm:$0xff]
    %v3128 = vld [vmem:[#allocation4 + $0x80] sm:$0xff]
    %v3129 = vld [vmem:[#allocation4 + $0x88] sm:$0xff]
    %v3130 = vld [vmem:[#allocation4 + $0x90] sm:$0xff]
    %v3131 = vld [vmem:[#allocation4 + $0x98] sm:$0xff]
    %v3132 = vld [vmem:[#allocation4 + $0xa0] sm:$0xff]
    %v3133 = vld [vmem:[#allocation4 + $0xa8] sm:$0xff]
    %v3134 = vld [vmem:[#allocation4 + $0xb0] sm:$0xff]
    %v3135 = vld [vmem:[#allocation4 + $0xb8] sm:$0xff]
    %v3136 = vld [vmem:[#allocation4 + $0xc0] sm:$0xff]
    %v3137 = vld [vmem:[#allocation4 + $0xc8] sm:$0xff]
    %v3138 = vld [vmem:[#allocation4 + $0xd0] sm:$0xff]
    %v3139 = vld [vmem:[#allocation4 + $0xd8] sm:$0xff]
    %v3140 = vld [vmem:[#allocation4 + $0xe0] sm:$0xff]
    %v3141 = vld [vmem:[#allocation4 + $0xe8] sm:$0xff]
    %v3142 = vld [vmem:[#allocation4 + $0xf0] sm:$0xff]
    %v3143 = vld [vmem:[#allocation4 + $0xf8] sm:$0xff]
    %s3144 = scalar_lea.vmem %s3, 1
    %v3145 = vld [vmem:[%s3144] ss:$4 sm:$0xf]
    %v3147 = vlaneseq
    %v3148 = vshrl.u32 %v3147, 7
    %v3149 = vsub.s32 0, %v3148
    %v3150 = vrot.slane %v3145, %v3149
    %v3151 = vlaneseq
    %v3152 = vshrl.u32 %v3151, 7
    %v3153 = vsub.s32 1, %v3152
    %v3154 = vrot.slane %v3145, %v3153
    %v3155 = vlaneseq
    %v3156 = vshrl.u32 %v3155, 7
    %v3157 = vsub.s32 2, %v3156
    %v3158 = vrot.slane %v3145, %v3157
    %v3159 = vlaneseq
    %v3160 = vshrl.u32 %v3159, 7
    %v3161 = vsub.s32 3, %v3160
    %v3162 = vrot.slane %v3145, %v3161
    %v3175 = vunpack.c.l.b16 %v3104
    %v3176 = vunpack.c.l.b16 %v3105
    %v3177 = vunpack.c.l.b16 %v3106
    %v3178 = vunpack.c.l.b16 %v3107
    %v3179 = vunpack.c.l.b16 %v3108
    %v3180 = vunpack.c.l.b16 %v3109
    %v3181 = vunpack.c.l.b16 %v3110
    %v3182 = vunpack.c.l.b16 %v3111
    %v3183 = vpack.c.b16 %v3176, %v3175
    %v3184 = vpack.c.b16 %v3178, %v3177
    %v3185 = vpack.c.b16 %v3180, %v3179
    %v3186 = vpack.c.b16 %v3182, %v3181
    %v3223 = vunpack.c.l.b16 %v3112
    %v3224 = vunpack.c.h.b16 %v3112
    %v3225 = vunpack.c.l.b16 %v3113
    %v3226 = vunpack.c.h.b16 %v3113
    %v3227 = vunpack.c.l.b16 %v3114
    %v3228 = vunpack.c.h.b16 %v3114
    %v3229 = vunpack.c.l.b16 %v3115
    %v3230 = vunpack.c.h.b16 %v3115
    %v3231 = vunpack.c.l.b16 %v3116
    %v3232 = vunpack.c.h.b16 %v3116
    %v3233 = vunpack.c.l.b16 %v3117
    %v3234 = vunpack.c.h.b16 %v3117
    %v3235 = vunpack.c.l.b16 %v3118
    %v3236 = vunpack.c.h.b16 %v3118
    %v3237 = vunpack.c.l.b16 %v3119
    %v3238 = vunpack.c.h.b16 %v3119
    %v3239 = vunpack.c.l.b16 %v3120
    %v3240 = vunpack.c.h.b16 %v3120
    %v3241 = vunpack.c.l.b16 %v3121
    %v3242 = vunpack.c.h.b16 %v3121
    %v3243 = vunpack.c.l.b16 %v3122
    %v3244 = vunpack.c.h.b16 %v3122
    %v3245 = vunpack.c.l.b16 %v3123
    %v3246 = vunpack.c.h.b16 %v3123
    %v3247 = vunpack.c.l.b16 %v3124
    %v3248 = vunpack.c.h.b16 %v3124
    %v3249 = vunpack.c.l.b16 %v3125
    %v3250 = vunpack.c.h.b16 %v3125
    %v3251 = vunpack.c.l.b16 %v3126
    %v3252 = vunpack.c.h.b16 %v3126
    %v3253 = vunpack.c.l.b16 %v3127
    %v3254 = vunpack.c.h.b16 %v3127
    %v3255 = vunpack.c.l.b16 %v3128
    %v3256 = vunpack.c.h.b16 %v3128
    %v3257 = vunpack.c.l.b16 %v3129
    %v3258 = vunpack.c.h.b16 %v3129
    %v3259 = vunpack.c.l.b16 %v3130
    %v3260 = vunpack.c.h.b16 %v3130
    %v3261 = vunpack.c.l.b16 %v3131
    %v3262 = vunpack.c.h.b16 %v3131
    %v3263 = vunpack.c.l.b16 %v3132
    %v3264 = vunpack.c.h.b16 %v3132
    %v3265 = vunpack.c.l.b16 %v3133
    %v3266 = vunpack.c.h.b16 %v3133
    %v3267 = vunpack.c.l.b16 %v3134
    %v3268 = vunpack.c.h.b16 %v3134
    %v3269 = vunpack.c.l.b16 %v3135
    %v3270 = vunpack.c.h.b16 %v3135
    %v3271 = vunpack.c.l.b16 %v3136
    %v3272 = vunpack.c.h.b16 %v3136
    %v3273 = vunpack.c.l.b16 %v3137
    %v3274 = vunpack.c.h.b16 %v3137
    %v3275 = vunpack.c.l.b16 %v3138
    %v3276 = vunpack.c.h.b16 %v3138
    %v3277 = vunpack.c.l.b16 %v3139
    %v3278 = vunpack.c.h.b16 %v3139
    %v3279 = vunpack.c.l.b16 %v3140
    %v3280 = vunpack.c.h.b16 %v3140
    %v3281 = vunpack.c.l.b16 %v3141
    %v3282 = vunpack.c.h.b16 %v3141
    %v3283 = vunpack.c.l.b16 %v3142
    %v3284 = vunpack.c.h.b16 %v3142
    %v3285 = vunpack.c.l.b16 %v3143
    %v3286 = vunpack.c.h.b16 %v3143
    %v3287 = vpack.c.b16 %v3227, %v3223
    %v3288 = vpack.c.b16 %v3228, %v3224
    %v3289 = vpack.c.b16 %v3229, %v3225
    %v3290 = vpack.c.b16 %v3230, %v3226
    %v3291 = vpack.c.b16 %v3235, %v3231
    %v3292 = vpack.c.b16 %v3236, %v3232
    %v3293 = vpack.c.b16 %v3237, %v3233
    %v3294 = vpack.c.b16 %v3238, %v3234
    %v3295 = vpack.c.b16 %v3243, %v3239
    %v3296 = vpack.c.b16 %v3244, %v3240
    %v3297 = vpack.c.b16 %v3245, %v3241
    %v3298 = vpack.c.b16 %v3246, %v3242
    %v3299 = vpack.c.b16 %v3251, %v3247
    %v3300 = vpack.c.b16 %v3252, %v3248
    %v3301 = vpack.c.b16 %v3253, %v3249
    %v3302 = vpack.c.b16 %v3254, %v3250
    %v3303 = vpack.c.b16 %v3259, %v3255
    %v3304 = vpack.c.b16 %v3260, %v3256
    %v3305 = vpack.c.b16 %v3261, %v3257
    %v3306 = vpack.c.b16 %v3262, %v3258
    %v3307 = vpack.c.b16 %v3267, %v3263
    %v3308 = vpack.c.b16 %v3268, %v3264
    %v3309 = vpack.c.b16 %v3269, %v3265
    %v3310 = vpack.c.b16 %v3270, %v3266
    %v3311 = vpack.c.b16 %v3275, %v3271
    %v3312 = vpack.c.b16 %v3276, %v3272
    %v3313 = vpack.c.b16 %v3277, %v3273
    %v3314 = vpack.c.b16 %v3278, %v3274
    %v3315 = vpack.c.b16 %v3283, %v3279
    %v3316 = vpack.c.b16 %v3284, %v3280
    %v3317 = vpack.c.b16 %v3285, %v3281
    %v3318 = vpack.c.b16 %v3286, %v3282
    %3351 = vmatprep.subr.bf16.mxu0 %v3316
    %3352 = vmatpush1.bf16.msra.mxu0 %v3315
    %3353 = vmatprep.subr.bf16.mxu0 %v3312
    %3354 = vmatpush1.bf16.msra.mxu0 %v3311
    %3355 = vmatprep.subr.bf16.mxu0 %v3308
    %3356 = vmatpush1.bf16.msra.mxu0 %v3307
    %3357 = vmatprep.subr.bf16.mxu0 %v3304
    %3358 = vmatpush1.bf16.msra.mxu0 %v3303
    %3359 = vmatprep.subr.bf16.mxu0 %v3300
    %3360 = vmatpush1.bf16.msra.mxu0 %v3299
    %3361 = vmatprep.subr.bf16.mxu0 %v3296
    %3362 = vmatpush1.bf16.msra.mxu0 %v3295
    %3363 = vmatprep.subr.bf16.mxu0 %v3292
    %3364 = vmatpush1.bf16.msra.mxu0 %v3291
    %3365 = vmatprep.subr.bf16.mxu0 %v3288
    %3366 = vmatpush1.bf16.msra.mxu0 %v3287
    %3367 = vmatprep.subr.bf16.mxu0 0
    %3368 = vmatpush2.bf16.msra.mxu0 0
    %3369 = vmatprep.subr.bf16.mxu0 0
    %3370 = vmatpush2.bf16.msra.mxu0 0
    %3371 = vmatprep.subr.bf16.mxu0 0
    %3372 = vmatpush2.bf16.msra.mxu0 0
    %3373 = vmatprep.subr.bf16.mxu0 0
    %3374 = vmatpush2.bf16.msra.mxu0 0
    %3375 = vmatprep.subr.bf16.mxu0 0
    %3376 = vmatpush2.bf16.msra.mxu0 0
    %3377 = vmatprep.subr.bf16.mxu0 0
    %3378 = vmatpush2.bf16.msra.mxu0 0
    %3379 = vmatprep.subr.bf16.mxu0 0
    %3380 = vmatpush2.bf16.msra.mxu0 0
    %3381 = vmatprep.subr.bf16.mxu0 0
    %3382 = vmatpush2.bf16.msra.mxu0 0
    %3383 = vmatprep.mubr.bf16.mxu0 0
    %3384 = vmatmul.mubr.bf16.gmra.mxu0 %v3183
    %v3385 = vpop.f32.mrf.mxu0
    %v3386 = vadd.f32 %v3150, %v3385
    %v3387 = vpop.f32.mrf.mxu0
    %v3388 = vadd.f32 %v3154, %v3387
    %v3389 = vpop.f32.mrf.mxu0
    %v3390 = vadd.f32 %v3150, %v3389
    %v3391 = vpop.f32.mrf.mxu0
    %v3392 = vadd.f32 %v3154, %v3391
    %3393 = vmatprep.mubr.bf16.mxu0 0
    %3394 = vmatmul.mubr.bf16.gmra.mxu0 %v3184
    %v3395 = vpop.f32.mrf.mxu0
    %v3396 = vadd.f32 %v3150, %v3395
    %v3397 = vpop.f32.mrf.mxu0
    %v3398 = vadd.f32 %v3154, %v3397
    %v3399 = vpop.f32.mrf.mxu0
    %v3400 = vadd.f32 %v3150, %v3399
    %v3401 = vpop.f32.mrf.mxu0
    %v3402 = vadd.f32 %v3154, %v3401
    %3403 = vmatprep.mubr.bf16.mxu0 0
    %3404 = vmatmul.mubr.bf16.gmra.mxu0 %v3185
    %v3405 = vpop.f32.mrf.mxu0
    %v3406 = vadd.f32 %v3150, %v3405
    %v3407 = vpop.f32.mrf.mxu0
    %v3408 = vadd.f32 %v3154, %v3407
    %v3409 = vpop.f32.mrf.mxu0
    %v3410 = vadd.f32 %v3150, %v3409
    %v3411 = vpop.f32.mrf.mxu0
    %v3412 = vadd.f32 %v3154, %v3411
    %3413 = vmatprep.mubr.bf16.mxu0 0
    %3414 = vmatmul.mubr.bf16.gmra.mxu0 %v3186
    %v3415 = vpop.f32.mrf.mxu0
    %v3416 = vadd.f32 %v3150, %v3415
    %v3417 = vpop.f32.mrf.mxu0
    %v3418 = vadd.f32 %v3154, %v3417
    %v3419 = vpop.f32.mrf.mxu0
    %v3420 = vadd.f32 %v3150, %v3419
    %v3421 = vpop.f32.mrf.mxu0
    %v3422 = vadd.f32 %v3154, %v3421
    %3423 = vdwg.mxu0
    %3424 = vmatprep.subr.bf16.mxu0 %v3318
    %3425 = vmatpush1.bf16.msra.mxu0 %v3317
    %3426 = vmatprep.subr.bf16.mxu0 %v3314
    %3427 = vmatpush1.bf16.msra.mxu0 %v3313
    %3428 = vmatprep.subr.bf16.mxu0 %v3310
    %3429 = vmatpush1.bf16.msra.mxu0 %v3309
    %3430 = vmatprep.subr.bf16.mxu0 %v3306
    %3431 = vmatpush1.bf16.msra.mxu0 %v3305
    %3432 = vmatprep.subr.bf16.mxu0 %v3302
    %3433 = vmatpush1.bf16.msra.mxu0 %v3301
    %3434 = vmatprep.subr.bf16.mxu0 %v3298
    %3435 = vmatpush1.bf16.msra.mxu0 %v3297
    %3436 = vmatprep.subr.bf16.mxu0 %v3294
    %3437 = vmatpush1.bf16.msra.mxu0 %v3293
    %3438 = vmatprep.subr.bf16.mxu0 %v3290
    %3439 = vmatpush1.bf16.msra.mxu0 %v3289
    %3440 = vmatprep.subr.bf16.mxu0 0
    %3441 = vmatpush2.bf16.msra.mxu0 0
    %3442 = vmatprep.subr.bf16.mxu0 0
    %3443 = vmatpush2.bf16.msra.mxu0 0
    %3444 = vmatprep.subr.bf16.mxu0 0
    %3445 = vmatpush2.bf16.msra.mxu0 0
    %3446 = vmatprep.subr.bf16.mxu0 0
    %3447 = vmatpush2.bf16.msra.mxu0 0
    %3448 = vmatprep.subr.bf16.mxu0 0
    %3449 = vmatpush2.bf16.msra.mxu0 0
    %3450 = vmatprep.subr.bf16.mxu0 0
    %3451 = vmatpush2.bf16.msra.mxu0 0
    %3452 = vmatprep.subr.bf16.mxu0 0
    %3453 = vmatpush2.bf16.msra.mxu0 0
    %3454 = vmatprep.subr.bf16.mxu0 0
    %3455 = vmatpush2.bf16.msra.mxu0 0
    %3456 = vmatprep.mubr.bf16.mxu0 0
    %3457 = vmatmul.mubr.bf16.gmra.mxu0 %v3183
    %v3458 = vpop.f32.mrf.mxu0
    %v3459 = vadd.f32 %v3158, %v3458
    %v3460 = vpop.f32.mrf.mxu0
    %v3461 = vadd.f32 %v3162, %v3460
    %v3462 = vpop.f32.mrf.mxu0
    %v3463 = vadd.f32 %v3158, %v3462
    %v3464 = vpop.f32.mrf.mxu0
    %v3465 = vadd.f32 %v3162, %v3464
    %3466 = vmatprep.mubr.bf16.mxu0 0
    %3467 = vmatmul.mubr.bf16.gmra.mxu0 %v3184
    %v3468 = vpop.f32.mrf.mxu0
    %v3469 = vadd.f32 %v3158, %v3468
    %v3470 = vpop.f32.mrf.mxu0
    %v3471 = vadd.f32 %v3162, %v3470
    %v3472 = vpop.f32.mrf.mxu0
    %v3473 = vadd.f32 %v3158, %v3472
    %v3474 = vpop.f32.mrf.mxu0
    %v3475 = vadd.f32 %v3162, %v3474
    %3476 = vmatprep.mubr.bf16.mxu0 0
    %3477 = vmatmul.mubr.bf16.gmra.mxu0 %v3185
    %v3478 = vpop.f32.mrf.mxu0
    %v3479 = vadd.f32 %v3158, %v3478
    %v3480 = vpop.f32.mrf.mxu0
    %v3481 = vadd.f32 %v3162, %v3480
    %v3482 = vpop.f32.mrf.mxu0
    %v3483 = vadd.f32 %v3158, %v3482
    %v3484 = vpop.f32.mrf.mxu0
    %v3485 = vadd.f32 %v3162, %v3484
    %3486 = vmatprep.mubr.bf16.mxu0 0
    %3487 = vmatmul.mubr.bf16.gmra.mxu0 %v3186
    %v3488 = vpop.f32.mrf.mxu0
    %v3489 = vadd.f32 %v3158, %v3488
    %v3490 = vpop.f32.mrf.mxu0
    %v3491 = vadd.f32 %v3162, %v3490
    %v3492 = vpop.f32.mrf.mxu0
    %v3493 = vadd.f32 %v3158, %v3492
    %v3494 = vpop.f32.mrf.mxu0
    %v3495 = vadd.f32 %v3162, %v3494
    %3496 = vdwg.mxu0
    %3497 = vst [vmem:[#allocation2] sm:$0xff] %v3386
    %3498 = vst [vmem:[#allocation2 + $0x8] sm:$0xff] %v3388
    %3499 = vst [vmem:[#allocation2 + $0x10] sm:$0xff] %v3459
    %3500 = vst [vmem:[#allocation2 + $0x18] sm:$0xff] %v3461
    %3501 = vst [vmem:[#allocation2 + $0x20] sm:$0xff] %v3390
    %3502 = vst [vmem:[#allocation2 + $0x28] sm:$0xff] %v3392
    %3503 = vst [vmem:[#allocation2 + $0x30] sm:$0xff] %v3463
    %3504 = vst [vmem:[#allocation2 + $0x38] sm:$0xff] %v3465
    %3505 = vst [vmem:[#allocation2 + $0x40] sm:$0xff] %v3396
    %3506 = vst [vmem:[#allocation2 + $0x48] sm:$0xff] %v3398
    %3507 = vst [vmem:[#allocation2 + $0x50] sm:$0xff] %v3469
    %3508 = vst [vmem:[#allocation2 + $0x58] sm:$0xff] %v3471
    %3509 = vst [vmem:[#allocation2 + $0x60] sm:$0xff] %v3400
    %3510 = vst [vmem:[#allocation2 + $0x68] sm:$0xff] %v3402
    %3511 = vst [vmem:[#allocation2 + $0x70] sm:$0xff] %v3473
    %3512 = vst [vmem:[#allocation2 + $0x78] sm:$0xff] %v3475
    %3513 = vst [vmem:[#allocation2 + $0x80] sm:$0xff] %v3406
    %3514 = vst [vmem:[#allocation2 + $0x88] sm:$0xff] %v3408
    %3515 = vst [vmem:[#allocation2 + $0x90] sm:$0xff] %v3479
    %3516 = vst [vmem:[#allocation2 + $0x98] sm:$0xff] %v3481
    %3517 = vst [vmem:[#allocation2 + $0xa0] sm:$0xff] %v3410
    %3518 = vst [vmem:[#allocation2 + $0xa8] sm:$0xff] %v3412
    %3519 = vst [vmem:[#allocation2 + $0xb0] sm:$0xff] %v3483
    %3520 = vst [vmem:[#allocation2 + $0xb8] sm:$0xff] %v3485
    %3521 = vst [vmem:[#allocation2 + $0xc0] sm:$0xff] %v3416
    %3522 = vst [vmem:[#allocation2 + $0xc8] sm:$0xff] %v3418
    %3523 = vst [vmem:[#allocation2 + $0xd0] sm:$0xff] %v3489
    %3524 = vst [vmem:[#allocation2 + $0xd8] sm:$0xff] %v3491
    %3525 = vst [vmem:[#allocation2 + $0xe0] sm:$0xff] %v3420
    %3526 = vst [vmem:[#allocation2 + $0xe8] sm:$0xff] %v3422
    %3527 = vst [vmem:[#allocation2 + $0xf0] sm:$0xff] %v3493
    %3528 = vst [vmem:[#allocation2 + $0xf8] sm:$0xff] %v3495
    %v3529 = vld [vmem:[%s604] sm:$0xff]
    %v3530 = vld [vmem:[%s604 + $0x8] sm:$0xff]
    %v3531 = vld [vmem:[%s604 + $0x10] sm:$0xff]
    %v3532 = vld [vmem:[%s604 + $0x18] sm:$0xff]
    %v3533 = vld [vmem:[#allocation5] sm:$0xff]
    %v3534 = vld [vmem:[#allocation5 + $0x8] sm:$0xff]
    %v3535 = vld [vmem:[#allocation5 + $0x10] sm:$0xff]
    %v3536 = vld [vmem:[#allocation5 + $0x18] sm:$0xff]
    %v3537 = vld [vmem:[#allocation5 + $0x20] sm:$0xff]
    %v3538 = vld [vmem:[#allocation5 + $0x28] sm:$0xff]
    %v3539 = vld [vmem:[#allocation5 + $0x30] sm:$0xff]
    %v3540 = vld [vmem:[#allocation5 + $0x38] sm:$0xff]
    %v3541 = vld [vmem:[#allocation5 + $0x40] sm:$0xff]
    %v3542 = vld [vmem:[#allocation5 + $0x48] sm:$0xff]
    %v3543 = vld [vmem:[#allocation5 + $0x50] sm:$0xff]
    %v3544 = vld [vmem:[#allocation5 + $0x58] sm:$0xff]
    %v3545 = vld [vmem:[#allocation5 + $0x60] sm:$0xff]
    %v3546 = vld [vmem:[#allocation5 + $0x68] sm:$0xff]
    %v3547 = vld [vmem:[#allocation5 + $0x70] sm:$0xff]
    %v3548 = vld [vmem:[#allocation5 + $0x78] sm:$0xff]
    %v3549 = vld [vmem:[#allocation5 + $0x80] sm:$0xff]
    %v3550 = vld [vmem:[#allocation5 + $0x88] sm:$0xff]
    %v3551 = vld [vmem:[#allocation5 + $0x90] sm:$0xff]
    %v3552 = vld [vmem:[#allocation5 + $0x98] sm:$0xff]
    %v3553 = vld [vmem:[#allocation5 + $0xa0] sm:$0xff]
    %v3554 = vld [vmem:[#allocation5 + $0xa8] sm:$0xff]
    %v3555 = vld [vmem:[#allocation5 + $0xb0] sm:$0xff]
    %v3556 = vld [vmem:[#allocation5 + $0xb8] sm:$0xff]
    %v3557 = vld [vmem:[#allocation5 + $0xc0] sm:$0xff]
    %v3558 = vld [vmem:[#allocation5 + $0xc8] sm:$0xff]
    %v3559 = vld [vmem:[#allocation5 + $0xd0] sm:$0xff]
    %v3560 = vld [vmem:[#allocation5 + $0xd8] sm:$0xff]
    %v3561 = vld [vmem:[#allocation5 + $0xe0] sm:$0xff]
    %v3562 = vld [vmem:[#allocation5 + $0xe8] sm:$0xff]
    %v3563 = vld [vmem:[#allocation5 + $0xf0] sm:$0xff]
    %v3564 = vld [vmem:[#allocation5 + $0xf8] sm:$0xff]
    %v3597 = vunpack.c.l.b16 %v3533
    %v3598 = vunpack.c.h.b16 %v3533
    %v3599 = vunpack.c.l.b16 %v3534
    %v3600 = vunpack.c.h.b16 %v3534
    %v3601 = vunpack.c.l.b16 %v3535
    %v3602 = vunpack.c.h.b16 %v3535
    %v3603 = vunpack.c.l.b16 %v3536
    %v3604 = vunpack.c.h.b16 %v3536
    %v3605 = vunpack.c.l.b16 %v3537
    %v3606 = vunpack.c.h.b16 %v3537
    %v3607 = vunpack.c.l.b16 %v3538
    %v3608 = vunpack.c.h.b16 %v3538
    %v3609 = vunpack.c.l.b16 %v3539
    %v3610 = vunpack.c.h.b16 %v3539
    %v3611 = vunpack.c.l.b16 %v3540
    %v3612 = vunpack.c.h.b16 %v3540
    %v3613 = vunpack.c.l.b16 %v3541
    %v3614 = vunpack.c.h.b16 %v3541
    %v3615 = vunpack.c.l.b16 %v3542
    %v3616 = vunpack.c.h.b16 %v3542
    %v3617 = vunpack.c.l.b16 %v3543
    %v3618 = vunpack.c.h.b16 %v3543
    %v3619 = vunpack.c.l.b16 %v3544
    %v3620 = vunpack.c.h.b16 %v3544
    %v3621 = vunpack.c.l.b16 %v3545
    %v3622 = vunpack.c.h.b16 %v3545
    %v3623 = vunpack.c.l.b16 %v3546
    %v3624 = vunpack.c.h.b16 %v3546
    %v3625 = vunpack.c.l.b16 %v3547
    %v3626 = vunpack.c.h.b16 %v3547
    %v3627 = vunpack.c.l.b16 %v3548
    %v3628 = vunpack.c.h.b16 %v3548
    %v3629 = vunpack.c.l.b16 %v3549
    %v3630 = vunpack.c.h.b16 %v3549
    %v3631 = vunpack.c.l.b16 %v3550
    %v3632 = vunpack.c.h.b16 %v3550
    %v3633 = vunpack.c.l.b16 %v3551
    %v3634 = vunpack.c.h.b16 %v3551
    %v3635 = vunpack.c.l.b16 %v3552
    %v3636 = vunpack.c.h.b16 %v3552
    %v3637 = vunpack.c.l.b16 %v3553
    %v3638 = vunpack.c.h.b16 %v3553
    %v3639 = vunpack.c.l.b16 %v3554
    %v3640 = vunpack.c.h.b16 %v3554
    %v3641 = vunpack.c.l.b16 %v3555
    %v3642 = vunpack.c.h.b16 %v3555
    %v3643 = vunpack.c.l.b16 %v3556
    %v3644 = vunpack.c.h.b16 %v3556
    %v3645 = vunpack.c.l.b16 %v3557
    %v3646 = vunpack.c.h.b16 %v3557
    %v3647 = vunpack.c.l.b16 %v3558
    %v3648 = vunpack.c.h.b16 %v3558
    %v3649 = vunpack.c.l.b16 %v3559
    %v3650 = vunpack.c.h.b16 %v3559
    %v3651 = vunpack.c.l.b16 %v3560
    %v3652 = vunpack.c.h.b16 %v3560
    %v3653 = vunpack.c.l.b16 %v3561
    %v3654 = vunpack.c.h.b16 %v3561
    %v3655 = vunpack.c.l.b16 %v3562
    %v3656 = vunpack.c.h.b16 %v3562
    %v3657 = vunpack.c.l.b16 %v3563
    %v3658 = vunpack.c.h.b16 %v3563
    %v3659 = vunpack.c.l.b16 %v3564
    %v3660 = vunpack.c.h.b16 %v3564
    %v3661 = vpack.c.b16 %v3601, %v3597
    %v3662 = vpack.c.b16 %v3602, %v3598
    %v3663 = vpack.c.b16 %v3603, %v3599
    %v3664 = vpack.c.b16 %v3604, %v3600
    %v3665 = vpack.c.b16 %v3609, %v3605
    %v3666 = vpack.c.b16 %v3610, %v3606
    %v3667 = vpack.c.b16 %v3611, %v3607
    %v3668 = vpack.c.b16 %v3612, %v3608
    %v3669 = vpack.c.b16 %v3617, %v3613
    %v3670 = vpack.c.b16 %v3618, %v3614
    %v3671 = vpack.c.b16 %v3619, %v3615
    %v3672 = vpack.c.b16 %v3620, %v3616
    %v3673 = vpack.c.b16 %v3625, %v3621
    %v3674 = vpack.c.b16 %v3626, %v3622
    %v3675 = vpack.c.b16 %v3627, %v3623
    %v3676 = vpack.c.b16 %v3628, %v3624
    %v3677 = vpack.c.b16 %v3633, %v3629
    %v3678 = vpack.c.b16 %v3634, %v3630
    %v3679 = vpack.c.b16 %v3635, %v3631
    %v3680 = vpack.c.b16 %v3636, %v3632
    %v3681 = vpack.c.b16 %v3641, %v3637
    %v3682 = vpack.c.b16 %v3642, %v3638
    %v3683 = vpack.c.b16 %v3643, %v3639
    %v3684 = vpack.c.b16 %v3644, %v3640
    %v3685 = vpack.c.b16 %v3649, %v3645
    %v3686 = vpack.c.b16 %v3650, %v3646
    %v3687 = vpack.c.b16 %v3651, %v3647
    %v3688 = vpack.c.b16 %v3652, %v3648
    %v3689 = vpack.c.b16 %v3657, %v3653
    %v3690 = vpack.c.b16 %v3658, %v3654
    %v3691 = vpack.c.b16 %v3659, %v3655
    %v3692 = vpack.c.b16 %v3660, %v3656
    %3725 = vmatprep.subr.bf16.mxu0 %v3690
    %3726 = vmatpush1.bf16.msra.mxu0 %v3689
    %3727 = vmatprep.subr.bf16.mxu0 %v3686
    %3728 = vmatpush1.bf16.msra.mxu0 %v3685
    %3729 = vmatprep.subr.bf16.mxu0 %v3682
    %3730 = vmatpush1.bf16.msra.mxu0 %v3681
    %3731 = vmatprep.subr.bf16.mxu0 %v3678
    %3732 = vmatpush1.bf16.msra.mxu0 %v3677
    %3733 = vmatprep.subr.bf16.mxu0 %v3674
    %3734 = vmatpush1.bf16.msra.mxu0 %v3673
    %3735 = vmatprep.subr.bf16.mxu0 %v3670
    %3736 = vmatpush1.bf16.msra.mxu0 %v3669
    %3737 = vmatprep.subr.bf16.mxu0 %v3666
    %3738 = vmatpush1.bf16.msra.mxu0 %v3665
    %3739 = vmatprep.subr.bf16.mxu0 %v3662
    %3740 = vmatpush1.bf16.msra.mxu0 %v3661
    %3741 = vmatprep.subr.bf16.mxu0 0
    %3742 = vmatpush2.bf16.msra.mxu0 0
    %3743 = vmatprep.subr.bf16.mxu0 0
    %3744 = vmatpush2.bf16.msra.mxu0 0
    %3745 = vmatprep.subr.bf16.mxu0 0
    %3746 = vmatpush2.bf16.msra.mxu0 0
    %3747 = vmatprep.subr.bf16.mxu0 0
    %3748 = vmatpush2.bf16.msra.mxu0 0
    %3749 = vmatprep.subr.bf16.mxu0 0
    %3750 = vmatpush2.bf16.msra.mxu0 0
    %3751 = vmatprep.subr.bf16.mxu0 0
    %3752 = vmatpush2.bf16.msra.mxu0 0
    %3753 = vmatprep.subr.bf16.mxu0 0
    %3754 = vmatpush2.bf16.msra.mxu0 0
    %3755 = vmatprep.subr.bf16.mxu0 0
    %3756 = vmatpush2.bf16.msra.mxu0 0
    %3757 = vmatprep.mubr.bf16.mxu0 0
    %3758 = vmatmul.mubr.bf16.gmra.mxu0 0
    %v3759 = vpop.f32.mrf.mxu0
    %v3760 = vadd.f32 0.0, %v3759
    %v3761 = vpop.f32.mrf.mxu0
    %v3762 = vadd.f32 0.0, %v3761
    %v3763 = vpop.f32.mrf.mxu0
    %v3764 = vpop.f32.mrf.mxu0
    %3765 = vdwg.mxu0
    %3766 = vmatprep.subr.bf16.mxu0 %v3692
    %3767 = vmatpush1.bf16.msra.mxu0 %v3691
    %3768 = vmatprep.subr.bf16.mxu0 %v3688
    %3769 = vmatpush1.bf16.msra.mxu0 %v3687
    %3770 = vmatprep.subr.bf16.mxu0 %v3684
    %3771 = vmatpush1.bf16.msra.mxu0 %v3683
    %3772 = vmatprep.subr.bf16.mxu0 %v3680
    %3773 = vmatpush1.bf16.msra.mxu0 %v3679
    %3774 = vmatprep.subr.bf16.mxu0 %v3676
    %3775 = vmatpush1.bf16.msra.mxu0 %v3675
    %3776 = vmatprep.subr.bf16.mxu0 %v3672
    %3777 = vmatpush1.bf16.msra.mxu0 %v3671
    %3778 = vmatprep.subr.bf16.mxu0 %v3668
    %3779 = vmatpush1.bf16.msra.mxu0 %v3667
    %3780 = vmatprep.subr.bf16.mxu0 %v3664
    %3781 = vmatpush1.bf16.msra.mxu0 %v3663
    %3782 = vmatprep.subr.bf16.mxu0 0
    %3783 = vmatpush2.bf16.msra.mxu0 0
    %3784 = vmatprep.subr.bf16.mxu0 0
    %3785 = vmatpush2.bf16.msra.mxu0 0
    %3786 = vmatprep.subr.bf16.mxu0 0
    %3787 = vmatpush2.bf16.msra.mxu0 0
    %3788 = vmatprep.subr.bf16.mxu0 0
    %3789 = vmatpush2.bf16.msra.mxu0 0
    %3790 = vmatprep.subr.bf16.mxu0 0
    %3791 = vmatpush2.bf16.msra.mxu0 0
    %3792 = vmatprep.subr.bf16.mxu0 0
    %3793 = vmatpush2.bf16.msra.mxu0 0
    %3794 = vmatprep.subr.bf16.mxu0 0
    %3795 = vmatpush2.bf16.msra.mxu0 0
    %3796 = vmatprep.subr.bf16.mxu0 0
    %3797 = vmatpush2.bf16.msra.mxu0 0
    %3798 = vmatprep.mubr.bf16.mxu0 0
    %3799 = vmatmul.mubr.bf16.gmra.mxu0 0
    %v3800 = vpop.f32.mrf.mxu0
    %v3801 = vadd.f32 0.0, %v3800
    %v3802 = vpop.f32.mrf.mxu0
    %v3803 = vadd.f32 0.0, %v3802
    %v3804 = vpop.f32.mrf.mxu0
    %v3805 = vpop.f32.mrf.mxu0
    %3806 = vdwg.mxu0
    %v3807 = vadd.f32 %v3529, %v3760
    %v3808 = vadd.f32 %v3530, %v3762
    %v3809 = vadd.f32 %v3531, %v3801
    %v3810 = vadd.f32 %v3532, %v3803
    %v3811 = vxor.u32 %v3807, 2147483648
    %v3812 = vmul.f32 %v3811, 1.442695
    %v3813 = vpow.pop %v3812
    %v3814 = vadd.f32 %v3813, 1.0
    %v3815 = vrcp.pop %v3814
    %v3816 = vmul.f32 1.0, %v3815
    %v3817 = vxor.u32 %v3808, 2147483648
    %v3818 = vmul.f32 %v3817, 1.442695
    %v3819 = vpow.pop %v3818
    %v3820 = vadd.f32 %v3819, 1.0
    %v3821 = vrcp.pop %v3820
    %v3822 = vmul.f32 1.0, %v3821
    %v3823 = vtanh.pop %v3809
    %v3824 = vxor.u32 %v3810, 2147483648
    %v3825 = vmul.f32 %v3824, 1.442695
    %v3826 = vpow.pop %v3825
    %v3827 = vadd.f32 %v3826, 1.0
    %v3828 = vrcp.pop %v3827
    %v3829 = vmul.f32 1.0, %v3828
    %v3830 = vmul.f32 %v3822, 0.0
    %v3831 = vmul.f32 %v3816, %v3823
    %v3832 = vadd.f32 %v3830, %v3831
    %v3833 = vtanh.pop %v3832
    %v3834 = vmul.f32 %v3829, %v3833
    %v3835 = vpack.c.bf16 %v3834, %v3834
    %3836 = vst [vmem:[#allocation3] sm:$0xf] %v3835
    %v3837 = vld [vmem:[%s915] sm:$0xff]
    %v3838 = vld [vmem:[%s915 + $0x8] sm:$0xff]
    %v3839 = vld [vmem:[%s915 + $0x10] sm:$0xff]
    %v3840 = vld [vmem:[%s915 + $0x18] sm:$0xff]
    %v3841 = vld [vmem:[#allocation5] sm:$0xff]
    %v3842 = vld [vmem:[#allocation5 + $0x8] sm:$0xff]
    %v3843 = vld [vmem:[#allocation5 + $0x10] sm:$0xff]
    %v3844 = vld [vmem:[#allocation5 + $0x18] sm:$0xff]
    %v3845 = vld [vmem:[#allocation5 + $0x20] sm:$0xff]
    %v3846 = vld [vmem:[#allocation5 + $0x28] sm:$0xff]
    %v3847 = vld [vmem:[#allocation5 + $0x30] sm:$0xff]
    %v3848 = vld [vmem:[#allocation5 + $0x38] sm:$0xff]
    %v3849 = vld [vmem:[#allocation5 + $0x40] sm:$0xff]
    %v3850 = vld [vmem:[#allocation5 + $0x48] sm:$0xff]
    %v3851 = vld [vmem:[#allocation5 + $0x50] sm:$0xff]
    %v3852 = vld [vmem:[#allocation5 + $0x58] sm:$0xff]
    %v3853 = vld [vmem:[#allocation5 + $0x60] sm:$0xff]
    %v3854 = vld [vmem:[#allocation5 + $0x68] sm:$0xff]
    %v3855 = vld [vmem:[#allocation5 + $0x70] sm:$0xff]
    %v3856 = vld [vmem:[#allocation5 + $0x78] sm:$0xff]
    %v3857 = vld [vmem:[#allocation5 + $0x80] sm:$0xff]
    %v3858 = vld [vmem:[#allocation5 + $0x88] sm:$0xff]
    %v3859 = vld [vmem:[#allocation5 + $0x90] sm:$0xff]
    %v3860 = vld [vmem:[#allocation5 + $0x98] sm:$0xff]
    %v3861 = vld [vmem:[#allocation5 + $0xa0] sm:$0xff]
    %v3862 = vld [vmem:[#allocation5 + $0xa8] sm:$0xff]
    %v3863 = vld [vmem:[#allocation5 + $0xb0] sm:$0xff]
    %v3864 = vld [vmem:[#allocation5 + $0xb8] sm:$0xff]
    %v3865 = vld [vmem:[#allocation5 + $0xc0] sm:$0xff]
    %v3866 = vld [vmem:[#allocation5 + $0xc8] sm:$0xff]
    %v3867 = vld [vmem:[#allocation5 + $0xd0] sm:$0xff]
    %v3868 = vld [vmem:[#allocation5 + $0xd8] sm:$0xff]
    %v3869 = vld [vmem:[#allocation5 + $0xe0] sm:$0xff]
    %v3870 = vld [vmem:[#allocation5 + $0xe8] sm:$0xff]
    %v3871 = vld [vmem:[#allocation5 + $0xf0] sm:$0xff]
    %v3872 = vld [vmem:[#allocation5 + $0xf8] sm:$0xff]
    %v3905 = vunpack.c.l.b16 %v3841
    %v3906 = vunpack.c.h.b16 %v3841
    %v3907 = vunpack.c.l.b16 %v3842
    %v3908 = vunpack.c.h.b16 %v3842
    %v3909 = vunpack.c.l.b16 %v3843
    %v3910 = vunpack.c.h.b16 %v3843
    %v3911 = vunpack.c.l.b16 %v3844
    %v3912 = vunpack.c.h.b16 %v3844
    %v3913 = vunpack.c.l.b16 %v3845
    %v3914 = vunpack.c.h.b16 %v3845
    %v3915 = vunpack.c.l.b16 %v3846
    %v3916 = vunpack.c.h.b16 %v3846
    %v3917 = vunpack.c.l.b16 %v3847
    %v3918 = vunpack.c.h.b16 %v3847
    %v3919 = vunpack.c.l.b16 %v3848
    %v3920 = vunpack.c.h.b16 %v3848
    %v3921 = vunpack.c.l.b16 %v3849
    %v3922 = vunpack.c.h.b16 %v3849
    %v3923 = vunpack.c.l.b16 %v3850
    %v3924 = vunpack.c.h.b16 %v3850
    %v3925 = vunpack.c.l.b16 %v3851
    %v3926 = vunpack.c.h.b16 %v3851
    %v3927 = vunpack.c.l.b16 %v3852
    %v3928 = vunpack.c.h.b16 %v3852
    %v3929 = vunpack.c.l.b16 %v3853
    %v3930 = vunpack.c.h.b16 %v3853
    %v3931 = vunpack.c.l.b16 %v3854
    %v3932 = vunpack.c.h.b16 %v3854
    %v3933 = vunpack.c.l.b16 %v3855
    %v3934 = vunpack.c.h.b16 %v3855
    %v3935 = vunpack.c.l.b16 %v3856
    %v3936 = vunpack.c.h.b16 %v3856
    %v3937 = vunpack.c.l.b16 %v3857
    %v3938 = vunpack.c.h.b16 %v3857
    %v3939 = vunpack.c.l.b16 %v3858
    %v3940 = vunpack.c.h.b16 %v3858
    %v3941 = vunpack.c.l.b16 %v3859
    %v3942 = vunpack.c.h.b16 %v3859
    %v3943 = vunpack.c.l.b16 %v3860
    %v3944 = vunpack.c.h.b16 %v3860
    %v3945 = vunpack.c.l.b16 %v3861
    %v3946 = vunpack.c.h.b16 %v3861
    %v3947 = vunpack.c.l.b16 %v3862
    %v3948 = vunpack.c.h.b16 %v3862
    %v3949 = vunpack.c.l.b16 %v3863
    %v3950 = vunpack.c.h.b16 %v3863
    %v3951 = vunpack.c.l.b16 %v3864
    %v3952 = vunpack.c.h.b16 %v3864
    %v3953 = vunpack.c.l.b16 %v3865
    %v3954 = vunpack.c.h.b16 %v3865
    %v3955 = vunpack.c.l.b16 %v3866
    %v3956 = vunpack.c.h.b16 %v3866
    %v3957 = vunpack.c.l.b16 %v3867
    %v3958 = vunpack.c.h.b16 %v3867
    %v3959 = vunpack.c.l.b16 %v3868
    %v3960 = vunpack.c.h.b16 %v3868
    %v3961 = vunpack.c.l.b16 %v3869
    %v3962 = vunpack.c.h.b16 %v3869
    %v3963 = vunpack.c.l.b16 %v3870
    %v3964 = vunpack.c.h.b16 %v3870
    %v3965 = vunpack.c.l.b16 %v3871
    %v3966 = vunpack.c.h.b16 %v3871
    %v3967 = vunpack.c.l.b16 %v3872
    %v3968 = vunpack.c.h.b16 %v3872
    %v3969 = vpack.c.b16 %v3909, %v3905
    %v3970 = vpack.c.b16 %v3910, %v3906
    %v3971 = vpack.c.b16 %v3911, %v3907
    %v3972 = vpack.c.b16 %v3912, %v3908
    %v3973 = vpack.c.b16 %v3917, %v3913
    %v3974 = vpack.c.b16 %v3918, %v3914
    %v3975 = vpack.c.b16 %v3919, %v3915
    %v3976 = vpack.c.b16 %v3920, %v3916
    %v3977 = vpack.c.b16 %v3925, %v3921
    %v3978 = vpack.c.b16 %v3926, %v3922
    %v3979 = vpack.c.b16 %v3927, %v3923
    %v3980 = vpack.c.b16 %v3928, %v3924
    %v3981 = vpack.c.b16 %v3933, %v3929
    %v3982 = vpack.c.b16 %v3934, %v3930
    %v3983 = vpack.c.b16 %v3935, %v3931
    %v3984 = vpack.c.b16 %v3936, %v3932
    %v3985 = vpack.c.b16 %v3941, %v3937
    %v3986 = vpack.c.b16 %v3942, %v3938
    %v3987 = vpack.c.b16 %v3943, %v3939
    %v3988 = vpack.c.b16 %v3944, %v3940
    %v3989 = vpack.c.b16 %v3949, %v3945
    %v3990 = vpack.c.b16 %v3950, %v3946
    %v3991 = vpack.c.b16 %v3951, %v3947
    %v3992 = vpack.c.b16 %v3952, %v3948
    %v3993 = vpack.c.b16 %v3957, %v3953
    %v3994 = vpack.c.b16 %v3958, %v3954
    %v3995 = vpack.c.b16 %v3959, %v3955
    %v3996 = vpack.c.b16 %v3960, %v3956
    %v3997 = vpack.c.b16 %v3965, %v3961
    %v3998 = vpack.c.b16 %v3966, %v3962
    %v3999 = vpack.c.b16 %v3967, %v3963
    %v4000 = vpack.c.b16 %v3968, %v3964
    %4033 = vmatprep.subr.bf16.mxu0 %v3998
    %4034 = vmatpush1.bf16.msra.mxu0 %v3997
    %4035 = vmatprep.subr.bf16.mxu0 %v3994
    %4036 = vmatpush1.bf16.msra.mxu0 %v3993
    %4037 = vmatprep.subr.bf16.mxu0 %v3990
    %4038 = vmatpush1.bf16.msra.mxu0 %v3989
    %4039 = vmatprep.subr.bf16.mxu0 %v3986
    %4040 = vmatpush1.bf16.msra.mxu0 %v3985
    %4041 = vmatprep.subr.bf16.mxu0 %v3982
    %4042 = vmatpush1.bf16.msra.mxu0 %v3981
    %4043 = vmatprep.subr.bf16.mxu0 %v3978
    %4044 = vmatpush1.bf16.msra.mxu0 %v3977
    %4045 = vmatprep.subr.bf16.mxu0 %v3974
    %4046 = vmatpush1.bf16.msra.mxu0 %v3973
    %4047 = vmatprep.subr.bf16.mxu0 %v3970
    %4048 = vmatpush1.bf16.msra.mxu0 %v3969
    %4049 = vmatprep.subr.bf16.mxu0 0
    %4050 = vmatpush2.bf16.msra.mxu0 0
    %4051 = vmatprep.subr.bf16.mxu0 0
    %4052 = vmatpush2.bf16.msra.mxu0 0
    %4053 = vmatprep.subr.bf16.mxu0 0
    %4054 = vmatpush2.bf16.msra.mxu0 0
    %4055 = vmatprep.subr.bf16.mxu0 0
    %4056 = vmatpush2.bf16.msra.mxu0 0
    %4057 = vmatprep.subr.bf16.mxu0 0
    %4058 = vmatpush2.bf16.msra.mxu0 0
    %4059 = vmatprep.subr.bf16.mxu0 0
    %4060 = vmatpush2.bf16.msra.mxu0 0
    %4061 = vmatprep.subr.bf16.mxu0 0
    %4062 = vmatpush2.bf16.msra.mxu0 0
    %4063 = vmatprep.subr.bf16.mxu0 0
    %4064 = vmatpush2.bf16.msra.mxu0 0
    %4065 = vmatprep.mubr.bf16.mxu0 0
    %4066 = vmatmul.mubr.bf16.gmra.mxu0 %v3835
    %v4067 = vpop.f32.mrf.mxu0
    %v4068 = vadd.f32 0.0, %v4067
    %v4069 = vpop.f32.mrf.mxu0
    %v4070 = vadd.f32 0.0, %v4069
    %v4071 = vpop.f32.mrf.mxu0
    %v4072 = vpop.f32.mrf.mxu0
    %4073 = vdwg.mxu0
    %4074 = vmatprep.subr.bf16.mxu0 %v4000
    %4075 = vmatpush1.bf16.msra.mxu0 %v3999
    %4076 = vmatprep.subr.bf16.mxu0 %v3996
    %4077 = vmatpush1.bf16.msra.mxu0 %v3995
    %4078 = vmatprep.subr.bf16.mxu0 %v3992
    %4079 = vmatpush1.bf16.msra.mxu0 %v3991
    %4080 = vmatprep.subr.bf16.mxu0 %v3988
    %4081 = vmatpush1.bf16.msra.mxu0 %v3987
    %4082 = vmatprep.subr.bf16.mxu0 %v3984
    %4083 = vmatpush1.bf16.msra.mxu0 %v3983
    %4084 = vmatprep.subr.bf16.mxu0 %v3980
    %4085 = vmatpush1.bf16.msra.mxu0 %v3979
    %4086 = vmatprep.subr.bf16.mxu0 %v3976
    %4087 = vmatpush1.bf16.msra.mxu0 %v3975
    %4088 = vmatprep.subr.bf16.mxu0 %v3972
    %4089 = vmatpush1.bf16.msra.mxu0 %v3971
    %4090 = vmatprep.subr.bf16.mxu0 0
    %4091 = vmatpush2.bf16.msra.mxu0 0
    %4092 = vmatprep.subr.bf16.mxu0 0
    %4093 = vmatpush2.bf16.msra.mxu0 0
    %4094 = vmatprep.subr.bf16.mxu0 0
    %4095 = vmatpush2.bf16.msra.mxu0 0
    %4096 = vmatprep.subr.bf16.mxu0 0
    %4097 = vmatpush2.bf16.msra.mxu0 0
    %4098 = vmatprep.subr.bf16.mxu0 0
    %4099 = vmatpush2.bf16.msra.mxu0 0
    %4100 = vmatprep.subr.bf16.mxu0 0
    %4101 = vmatpush2.bf16.msra.mxu0 0
    %4102 = vmatprep.subr.bf16.mxu0 0
    %4103 = vmatpush2.bf16.msra.mxu0 0
    %4104 = vmatprep.subr.bf16.mxu0 0
    %4105 = vmatpush2.bf16.msra.mxu0 0
    %4106 = vmatprep.mubr.bf16.mxu0 0
    %4107 = vmatmul.mubr.bf16.gmra.mxu0 %v3835
    %v4108 = vpop.f32.mrf.mxu0
    %v4109 = vadd.f32 0.0, %v4108
    %v4110 = vpop.f32.mrf.mxu0
    %v4111 = vadd.f32 0.0, %v4110
    %v4112 = vpop.f32.mrf.mxu0
    %v4113 = vpop.f32.mrf.mxu0
    %4114 = vdwg.mxu0
    %v4115 = vadd.f32 %v3837, %v4068
    %v4116 = vadd.f32 %v3838, %v4070
    %v4117 = vadd.f32 %v3839, %v4109
    %v4118 = vadd.f32 %v3840, %v4111
    %v4119 = vxor.u32 %v4115, 2147483648
    %v4120 = vmul.f32 %v4119, 1.442695
    %v4121 = vpow.pop %v4120
    %v4122 = vadd.f32 %v4121, 1.0
    %v4123 = vrcp.pop %v4122
    %v4124 = vmul.f32 1.0, %v4123
    %v4125 = vxor.u32 %v4116, 2147483648
    %v4126 = vmul.f32 %v4125, 1.442695
    %v4127 = vpow.pop %v4126
    %v4128 = vadd.f32 %v4127, 1.0
    %v4129 = vrcp.pop %v4128
    %v4130 = vmul.f32 1.0, %v4129
    %v4131 = vtanh.pop %v4117
    %v4132 = vxor.u32 %v4118, 2147483648
    %v4133 = vmul.f32 %v4132, 1.442695
    %v4134 = vpow.pop %v4133
    %v4135 = vadd.f32 %v4134, 1.0
    %v4136 = vrcp.pop %v4135
    %v4137 = vmul.f32 1.0, %v4136
    %v4138 = vmul.f32 %v4130, %v3832
    %v4139 = vmul.f32 %v4124, %v4131
    %v4140 = vadd.f32 %v4138, %v4139
    %v4141 = vtanh.pop %v4140
    %v4142 = vmul.f32 %v4137, %v4141
    %v4143 = vpack.c.bf16 %v4142, %v4142
    %4144 = vst [vmem:[%s1223] sm:$0xf] %v4143
    %v4145 = vld [vmem:[%s1227] sm:$0xff]
    %v4146 = vld [vmem:[%s1227 + $0x8] sm:$0xff]
    %v4147 = vld [vmem:[%s1227 + $0x10] sm:$0xff]
    %v4148 = vld [vmem:[%s1227 + $0x18] sm:$0xff]
    %v4149 = vld [vmem:[#allocation5] sm:$0xff]
    %v4150 = vld [vmem:[#allocation5 + $0x8] sm:$0xff]
    %v4151 = vld [vmem:[#allocation5 + $0x10] sm:$0xff]
    %v4152 = vld [vmem:[#allocation5 + $0x18] sm:$0xff]
    %v4153 = vld [vmem:[#allocation5 + $0x20] sm:$0xff]
    %v4154 = vld [vmem:[#allocation5 + $0x28] sm:$0xff]
    %v4155 = vld [vmem:[#allocation5 + $0x30] sm:$0xff]
    %v4156 = vld [vmem:[#allocation5 + $0x38] sm:$0xff]
    %v4157 = vld [vmem:[#allocation5 + $0x40] sm:$0xff]
    %v4158 = vld [vmem:[#allocation5 + $0x48] sm:$0xff]
    %v4159 = vld [vmem:[#allocation5 + $0x50] sm:$0xff]
    %v4160 = vld [vmem:[#allocation5 + $0x58] sm:$0xff]
    %v4161 = vld [vmem:[#allocation5 + $0x60] sm:$0xff]
    %v4162 = vld [vmem:[#allocation5 + $0x68] sm:$0xff]
    %v4163 = vld [vmem:[#allocation5 + $0x70] sm:$0xff]
    %v4164 = vld [vmem:[#allocation5 + $0x78] sm:$0xff]
    %v4165 = vld [vmem:[#allocation5 + $0x80] sm:$0xff]
    %v4166 = vld [vmem:[#allocation5 + $0x88] sm:$0xff]
    %v4167 = vld [vmem:[#allocation5 + $0x90] sm:$0xff]
    %v4168 = vld [vmem:[#allocation5 + $0x98] sm:$0xff]
    %v4169 = vld [vmem:[#allocation5 + $0xa0] sm:$0xff]
    %v4170 = vld [vmem:[#allocation5 + $0xa8] sm:$0xff]
    %v4171 = vld [vmem:[#allocation5 + $0xb0] sm:$0xff]
    %v4172 = vld [vmem:[#allocation5 + $0xb8] sm:$0xff]
    %v4173 = vld [vmem:[#allocation5 + $0xc0] sm:$0xff]
    %v4174 = vld [vmem:[#allocation5 + $0xc8] sm:$0xff]
    %v4175 = vld [vmem:[#allocation5 + $0xd0] sm:$0xff]
    %v4176 = vld [vmem:[#allocation5 + $0xd8] sm:$0xff]
    %v4177 = vld [vmem:[#allocation5 + $0xe0] sm:$0xff]
    %v4178 = vld [vmem:[#allocation5 + $0xe8] sm:$0xff]
    %v4179 = vld [vmem:[#allocation5 + $0xf0] sm:$0xff]
    %v4180 = vld [vmem:[#allocation5 + $0xf8] sm:$0xff]
    %v4213 = vunpack.c.l.b16 %v4149
    %v4214 = vunpack.c.h.b16 %v4149
    %v4215 = vunpack.c.l.b16 %v4150
    %v4216 = vunpack.c.h.b16 %v4150
    %v4217 = vunpack.c.l.b16 %v4151
    %v4218 = vunpack.c.h.b16 %v4151
    %v4219 = vunpack.c.l.b16 %v4152
    %v4220 = vunpack.c.h.b16 %v4152
    %v4221 = vunpack.c.l.b16 %v4153
    %v4222 = vunpack.c.h.b16 %v4153
    %v4223 = vunpack.c.l.b16 %v4154
    %v4224 = vunpack.c.h.b16 %v4154
    %v4225 = vunpack.c.l.b16 %v4155
    %v4226 = vunpack.c.h.b16 %v4155
    %v4227 = vunpack.c.l.b16 %v4156
    %v4228 = vunpack.c.h.b16 %v4156
    %v4229 = vunpack.c.l.b16 %v4157
    %v4230 = vunpack.c.h.b16 %v4157
    %v4231 = vunpack.c.l.b16 %v4158
    %v4232 = vunpack.c.h.b16 %v4158
    %v4233 = vunpack.c.l.b16 %v4159
    %v4234 = vunpack.c.h.b16 %v4159
    %v4235 = vunpack.c.l.b16 %v4160
    %v4236 = vunpack.c.h.b16 %v4160
    %v4237 = vunpack.c.l.b16 %v4161
    %v4238 = vunpack.c.h.b16 %v4161
    %v4239 = vunpack.c.l.b16 %v4162
    %v4240 = vunpack.c.h.b16 %v4162
    %v4241 = vunpack.c.l.b16 %v4163
    %v4242 = vunpack.c.h.b16 %v4163
    %v4243 = vunpack.c.l.b16 %v4164
    %v4244 = vunpack.c.h.b16 %v4164
    %v4245 = vunpack.c.l.b16 %v4165
    %v4246 = vunpack.c.h.b16 %v4165
    %v4247 = vunpack.c.l.b16 %v4166
    %v4248 = vunpack.c.h.b16 %v4166
    %v4249 = vunpack.c.l.b16 %v4167
    %v4250 = vunpack.c.h.b16 %v4167
    %v4251 = vunpack.c.l.b16 %v4168
    %v4252 = vunpack.c.h.b16 %v4168
    %v4253 = vunpack.c.l.b16 %v4169
    %v4254 = vunpack.c.h.b16 %v4169
    %v4255 = vunpack.c.l.b16 %v4170
    %v4256 = vunpack.c.h.b16 %v4170
    %v4257 = vunpack.c.l.b16 %v4171
    %v4258 = vunpack.c.h.b16 %v4171
    %v4259 = vunpack.c.l.b16 %v4172
    %v4260 = vunpack.c.h.b16 %v4172
    %v4261 = vunpack.c.l.b16 %v4173
    %v4262 = vunpack.c.h.b16 %v4173
    %v4263 = vunpack.c.l.b16 %v4174
    %v4264 = vunpack.c.h.b16 %v4174
    %v4265 = vunpack.c.l.b16 %v4175
    %v4266 = vunpack.c.h.b16 %v4175
    %v4267 = vunpack.c.l.b16 %v4176
    %v4268 = vunpack.c.h.b16 %v4176
    %v4269 = vunpack.c.l.b16 %v4177
    %v4270 = vunpack.c.h.b16 %v4177
    %v4271 = vunpack.c.l.b16 %v4178
    %v4272 = vunpack.c.h.b16 %v4178
    %v4273 = vunpack.c.l.b16 %v4179
    %v4274 = vunpack.c.h.b16 %v4179
    %v4275 = vunpack.c.l.b16 %v4180
    %v4276 = vunpack.c.h.b16 %v4180
    %v4277 = vpack.c.b16 %v4217, %v4213
    %v4278 = vpack.c.b16 %v4218, %v4214
    %v4279 = vpack.c.b16 %v4219, %v4215
    %v4280 = vpack.c.b16 %v4220, %v4216
    %v4281 = vpack.c.b16 %v4225, %v4221
    %v4282 = vpack.c.b16 %v4226, %v4222
    %v4283 = vpack.c.b16 %v4227, %v4223
    %v4284 = vpack.c.b16 %v4228, %v4224
    %v4285 = vpack.c.b16 %v4233, %v4229
    %v4286 = vpack.c.b16 %v4234, %v4230
    %v4287 = vpack.c.b16 %v4235, %v4231
    %v4288 = vpack.c.b16 %v4236, %v4232
    %v4289 = vpack.c.b16 %v4241, %v4237
    %v4290 = vpack.c.b16 %v4242, %v4238
    %v4291 = vpack.c.b16 %v4243, %v4239
    %v4292 = vpack.c.b16 %v4244, %v4240
    %v4293 = vpack.c.b16 %v4249, %v4245
    %v4294 = vpack.c.b16 %v4250, %v4246
    %v4295 = vpack.c.b16 %v4251, %v4247
    %v4296 = vpack.c.b16 %v4252, %v4248
    %v4297 = vpack.c.b16 %v4257, %v4253
    %v4298 = vpack.c.b16 %v4258, %v4254
    %v4299 = vpack.c.b16 %v4259, %v4255
    %v4300 = vpack.c.b16 %v4260, %v4256
    %v4301 = vpack.c.b16 %v4265, %v4261
    %v4302 = vpack.c.b16 %v4266, %v4262
    %v4303 = vpack.c.b16 %v4267, %v4263
    %v4304 = vpack.c.b16 %v4268, %v4264
    %v4305 = vpack.c.b16 %v4273, %v4269
    %v4306 = vpack.c.b16 %v4274, %v4270
    %v4307 = vpack.c.b16 %v4275, %v4271
    %v4308 = vpack.c.b16 %v4276, %v4272
    %4341 = vmatprep.subr.bf16.mxu0 %v4306
    %4342 = vmatpush1.bf16.msra.mxu0 %v4305
    %4343 = vmatprep.subr.bf16.mxu0 %v4302
    %4344 = vmatpush1.bf16.msra.mxu0 %v4301
    %4345 = vmatprep.subr.bf16.mxu0 %v4298
    %4346 = vmatpush1.bf16.msra.mxu0 %v4297
    %4347 = vmatprep.subr.bf16.mxu0 %v4294
    %4348 = vmatpush1.bf16.msra.mxu0 %v4293
    %4349 = vmatprep.subr.bf16.mxu0 %v4290
    %4350 = vmatpush1.bf16.msra.mxu0 %v4289
    %4351 = vmatprep.subr.bf16.mxu0 %v4286
    %4352 = vmatpush1.bf16.msra.mxu0 %v4285
    %4353 = vmatprep.subr.bf16.mxu0 %v4282
    %4354 = vmatpush1.bf16.msra.mxu0 %v4281
    %4355 = vmatprep.subr.bf16.mxu0 %v4278
    %4356 = vmatpush1.bf16.msra.mxu0 %v4277
    %4357 = vmatprep.subr.bf16.mxu0 0
    %4358 = vmatpush2.bf16.msra.mxu0 0
    %4359 = vmatprep.subr.bf16.mxu0 0
    %4360 = vmatpush2.bf16.msra.mxu0 0
    %4361 = vmatprep.subr.bf16.mxu0 0
    %4362 = vmatpush2.bf16.msra.mxu0 0
    %4363 = vmatprep.subr.bf16.mxu0 0
    %4364 = vmatpush2.bf16.msra.mxu0 0
    %4365 = vmatprep.subr.bf16.mxu0 0
    %4366 = vmatpush2.bf16.msra.mxu0 0
    %4367 = vmatprep.subr.bf16.mxu0 0
    %4368 = vmatpush2.bf16.msra.mxu0 0
    %4369 = vmatprep.subr.bf16.mxu0 0
    %4370 = vmatpush2.bf16.msra.mxu0 0
    %4371 = vmatprep.subr.bf16.mxu0 0
    %4372 = vmatpush2.bf16.msra.mxu0 0
    %4373 = vmatprep.mubr.bf16.mxu0 0
    %4374 = vmatmul.mubr.bf16.gmra.mxu0 %v4143
    %v4375 = vpop.f32.mrf.mxu0
    %v4376 = vadd.f32 0.0, %v4375
    %v4377 = vpop.f32.mrf.mxu0
    %v4378 = vadd.f32 0.0, %v4377
    %v4379 = vpop.f32.mrf.mxu0
    %v4380 = vpop.f32.mrf.mxu0
    %4381 = vdwg.mxu0
    %4382 = vmatprep.subr.bf16.mxu0 %v4308
    %4383 = vmatpush1.bf16.msra.mxu0 %v4307
    %4384 = vmatprep.subr.bf16.mxu0 %v4304
    %4385 = vmatpush1.bf16.msra.mxu0 %v4303
    %4386 = vmatprep.subr.bf16.mxu0 %v4300
    %4387 = vmatpush1.bf16.msra.mxu0 %v4299
    %4388 = vmatprep.subr.bf16.mxu0 %v4296
    %4389 = vmatpush1.bf16.msra.mxu0 %v4295
    %4390 = vmatprep.subr.bf16.mxu0 %v4292
    %4391 = vmatpush1.bf16.msra.mxu0 %v4291
    %4392 = vmatprep.subr.bf16.mxu0 %v4288
    %4393 = vmatpush1.bf16.msra.mxu0 %v4287
    %4394 = vmatprep.subr.bf16.mxu0 %v4284
    %4395 = vmatpush1.bf16.msra.mxu0 %v4283
    %4396 = vmatprep.subr.bf16.mxu0 %v4280
    %4397 = vmatpush1.bf16.msra.mxu0 %v4279
    %4398 = vmatprep.subr.bf16.mxu0 0
    %4399 = vmatpush2.bf16.msra.mxu0 0
    %4400 = vmatprep.subr.bf16.mxu0 0
    %4401 = vmatpush2.bf16.msra.mxu0 0
    %4402 = vmatprep.subr.bf16.mxu0 0
    %4403 = vmatpush2.bf16.msra.mxu0 0
    %4404 = vmatprep.subr.bf16.mxu0 0
    %4405 = vmatpush2.bf16.msra.mxu0 0
    %4406 = vmatprep.subr.bf16.mxu0 0
    %4407 = vmatpush2.bf16.msra.mxu0 0
    %4408 = vmatprep.subr.bf16.mxu0 0
    %4409 = vmatpush2.bf16.msra.mxu0 0
    %4410 = vmatprep.subr.bf16.mxu0 0
    %4411 = vmatpush2.bf16.msra.mxu0 0
    %4412 = vmatprep.subr.bf16.mxu0 0
    %4413 = vmatpush2.bf16.msra.mxu0 0
    %4414 = vmatprep.mubr.bf16.mxu0 0
    %4415 = vmatmul.mubr.bf16.gmra.mxu0 %v4143
    %v4416 = vpop.f32.mrf.mxu0
    %v4417 = vadd.f32 0.0, %v4416
    %v4418 = vpop.f32.mrf.mxu0
    %v4419 = vadd.f32 0.0, %v4418
    %v4420 = vpop.f32.mrf.mxu0
    %v4421 = vpop.f32.mrf.mxu0
    %4422 = vdwg.mxu0
    %v4423 = vadd.f32 %v4145, %v4376
    %v4424 = vadd.f32 %v4146, %v4378
    %v4425 = vadd.f32 %v4147, %v4417
    %v4426 = vadd.f32 %v4148, %v4419
    %v4427 = vxor.u32 %v4423, 2147483648
    %v4428 = vmul.f32 %v4427, 1.442695
    %v4429 = vpow.pop %v4428
    %v4430 = vadd.f32 %v4429, 1.0
    %v4431 = vrcp.pop %v4430
    %v4432 = vmul.f32 1.0, %v4431
    %v4433 = vxor.u32 %v4424, 2147483648
    %v4434 = vmul.f32 %v4433, 1.442695
    %v4435 = vpow.pop %v4434
    %v4436 = vadd.f32 %v4435, 1.0
    %v4437 = vrcp.pop %v4436
    %v4438 = vmul.f32 1.0, %v4437
    %v4439 = vtanh.pop %v4425
    %v4440 = vxor.u32 %v4426, 2147483648
    %v4441 = vmul.f32 %v4440, 1.442695
    %v4442 = vpow.pop %v4441
    %v4443 = vadd.f32 %v4442, 1.0
    %v4444 = vrcp.pop %v4443
    %v4445 = vmul.f32 1.0, %v4444
    %v4446 = vmul.f32 %v4438, %v4140
    %v4447 = vmul.f32 %v4432, %v4439
    %v4448 = vadd.f32 %v4446, %v4447
    %v4449 = vtanh.pop %v4448
    %v4450 = vmul.f32 %v4445, %v4449
    %v4451 = vpack.c.bf16 %v4450, %v4450
    %4452 = vst [vmem:[%s1535] sm:$0xf] %v4451
    %v4453 = vld [vmem:[%s1539] sm:$0xff]
    %v4454 = vld [vmem:[%s1539 + $0x8] sm:$0xff]
    %v4455 = vld [vmem:[%s1539 + $0x10] sm:$0xff]
    %v4456 = vld [vmem:[%s1539 + $0x18] sm:$0xff]
    %v4457 = vld [vmem:[#allocation5] sm:$0xff]
    %v4458 = vld [vmem:[#allocation5 + $0x8] sm:$0xff]
    %v4459 = vld [vmem:[#allocation5 + $0x10] sm:$0xff]
    %v4460 = vld [vmem:[#allocation5 + $0x18] sm:$0xff]
    %v4461 = vld [vmem:[#allocation5 + $0x20] sm:$0xff]
    %v4462 = vld [vmem:[#allocation5 + $0x28] sm:$0xff]
    %v4463 = vld [vmem:[#allocation5 + $0x30] sm:$0xff]
    %v4464 = vld [vmem:[#allocation5 + $0x38] sm:$0xff]
    %v4465 = vld [vmem:[#allocation5 + $0x40] sm:$0xff]
    %v4466 = vld [vmem:[#allocation5 + $0x48] sm:$0xff]
    %v4467 = vld [vmem:[#allocation5 + $0x50] sm:$0xff]
    %v4468 = vld [vmem:[#allocation5 + $0x58] sm:$0xff]
    %v4469 = vld [vmem:[#allocation5 + $0x60] sm:$0xff]
    %v4470 = vld [vmem:[#allocation5 + $0x68] sm:$0xff]
    %v4471 = vld [vmem:[#allocation5 + $0x70] sm:$0xff]
    %v4472 = vld [vmem:[#allocation5 + $0x78] sm:$0xff]
    %v4473 = vld [vmem:[#allocation5 + $0x80] sm:$0xff]
    %v4474 = vld [vmem:[#allocation5 + $0x88] sm:$0xff]
    %v4475 = vld [vmem:[#allocation5 + $0x90] sm:$0xff]
    %v4476 = vld [vmem:[#allocation5 + $0x98] sm:$0xff]
    %v4477 = vld [vmem:[#allocation5 + $0xa0] sm:$0xff]
    %v4478 = vld [vmem:[#allocation5 + $0xa8] sm:$0xff]
    %v4479 = vld [vmem:[#allocation5 + $0xb0] sm:$0xff]
    %v4480 = vld [vmem:[#allocation5 + $0xb8] sm:$0xff]
    %v4481 = vld [vmem:[#allocation5 + $0xc0] sm:$0xff]
    %v4482 = vld [vmem:[#allocation5 + $0xc8] sm:$0xff]
    %v4483 = vld [vmem:[#allocation5 + $0xd0] sm:$0xff]
    %v4484 = vld [vmem:[#allocation5 + $0xd8] sm:$0xff]
    %v4485 = vld [vmem:[#allocation5 + $0xe0] sm:$0xff]
    %v4486 = vld [vmem:[#allocation5 + $0xe8] sm:$0xff]
    %v4487 = vld [vmem:[#allocation5 + $0xf0] sm:$0xff]
    %v4488 = vld [vmem:[#allocation5 + $0xf8] sm:$0xff]
    %v4521 = vunpack.c.l.b16 %v4457
    %v4522 = vunpack.c.h.b16 %v4457
    %v4523 = vunpack.c.l.b16 %v4458
    %v4524 = vunpack.c.h.b16 %v4458
    %v4525 = vunpack.c.l.b16 %v4459
    %v4526 = vunpack.c.h.b16 %v4459
    %v4527 = vunpack.c.l.b16 %v4460
    %v4528 = vunpack.c.h.b16 %v4460
    %v4529 = vunpack.c.l.b16 %v4461
    %v4530 = vunpack.c.h.b16 %v4461
    %v4531 = vunpack.c.l.b16 %v4462
    %v4532 = vunpack.c.h.b16 %v4462
    %v4533 = vunpack.c.l.b16 %v4463
    %v4534 = vunpack.c.h.b16 %v4463
    %v4535 = vunpack.c.l.b16 %v4464
    %v4536 = vunpack.c.h.b16 %v4464
    %v4537 = vunpack.c.l.b16 %v4465
    %v4538 = vunpack.c.h.b16 %v4465
    %v4539 = vunpack.c.l.b16 %v4466
    %v4540 = vunpack.c.h.b16 %v4466
    %v4541 = vunpack.c.l.b16 %v4467
    %v4542 = vunpack.c.h.b16 %v4467
    %v4543 = vunpack.c.l.b16 %v4468
    %v4544 = vunpack.c.h.b16 %v4468
    %v4545 = vunpack.c.l.b16 %v4469
    %v4546 = vunpack.c.h.b16 %v4469
    %v4547 = vunpack.c.l.b16 %v4470
    %v4548 = vunpack.c.h.b16 %v4470
    %v4549 = vunpack.c.l.b16 %v4471
    %v4550 = vunpack.c.h.b16 %v4471
    %v4551 = vunpack.c.l.b16 %v4472
    %v4552 = vunpack.c.h.b16 %v4472
    %v4553 = vunpack.c.l.b16 %v4473
    %v4554 = vunpack.c.h.b16 %v4473
    %v4555 = vunpack.c.l.b16 %v4474
    %v4556 = vunpack.c.h.b16 %v4474
    %v4557 = vunpack.c.l.b16 %v4475
    %v4558 = vunpack.c.h.b16 %v4475
    %v4559 = vunpack.c.l.b16 %v4476
    %v4560 = vunpack.c.h.b16 %v4476
    %v4561 = vunpack.c.l.b16 %v4477
    %v4562 = vunpack.c.h.b16 %v4477
    %v4563 = vunpack.c.l.b16 %v4478
    %v4564 = vunpack.c.h.b16 %v4478
    %v4565 = vunpack.c.l.b16 %v4479
    %v4566 = vunpack.c.h.b16 %v4479
    %v4567 = vunpack.c.l.b16 %v4480
    %v4568 = vunpack.c.h.b16 %v4480
    %v4569 = vunpack.c.l.b16 %v4481
    %v4570 = vunpack.c.h.b16 %v4481
    %v4571 = vunpack.c.l.b16 %v4482
    %v4572 = vunpack.c.h.b16 %v4482
    %v4573 = vunpack.c.l.b16 %v4483
    %v4574 = vunpack.c.h.b16 %v4483
    %v4575 = vunpack.c.l.b16 %v4484
    %v4576 = vunpack.c.h.b16 %v4484
    %v4577 = vunpack.c.l.b16 %v4485
    %v4578 = vunpack.c.h.b16 %v4485
    %v4579 = vunpack.c.l.b16 %v4486
    %v4580 = vunpack.c.h.b16 %v4486
    %v4581 = vunpack.c.l.b16 %v4487
    %v4582 = vunpack.c.h.b16 %v4487
    %v4583 = vunpack.c.l.b16 %v4488
    %v4584 = vunpack.c.h.b16 %v4488
    %v4585 = vpack.c.b16 %v4525, %v4521
    %v4586 = vpack.c.b16 %v4526, %v4522
    %v4587 = vpack.c.b16 %v4527, %v4523
    %v4588 = vpack.c.b16 %v4528, %v4524
    %v4589 = vpack.c.b16 %v4533, %v4529
    %v4590 = vpack.c.b16 %v4534, %v4530
    %v4591 = vpack.c.b16 %v4535, %v4531
    %v4592 = vpack.c.b16 %v4536, %v4532
    %v4593 = vpack.c.b16 %v4541, %v4537
    %v4594 = vpack.c.b16 %v4542, %v4538
    %v4595 = vpack.c.b16 %v4543, %v4539
    %v4596 = vpack.c.b16 %v4544, %v4540
    %v4597 = vpack.c.b16 %v4549, %v4545
    %v4598 = vpack.c.b16 %v4550, %v4546
    %v4599 = vpack.c.b16 %v4551, %v4547
    %v4600 = vpack.c.b16 %v4552, %v4548
    %v4601 = vpack.c.b16 %v4557, %v4553
    %v4602 = vpack.c.b16 %v4558, %v4554
    %v4603 = vpack.c.b16 %v4559, %v4555
    %v4604 = vpack.c.b16 %v4560, %v4556
    %v4605 = vpack.c.b16 %v4565, %v4561
    %v4606 = vpack.c.b16 %v4566, %v4562
    %v4607 = vpack.c.b16 %v4567, %v4563
    %v4608 = vpack.c.b16 %v4568, %v4564
    %v4609 = vpack.c.b16 %v4573, %v4569
    %v4610 = vpack.c.b16 %v4574, %v4570
    %v4611 = vpack.c.b16 %v4575, %v4571
    %v4612 = vpack.c.b16 %v4576, %v4572
    %v4613 = vpack.c.b16 %v4581, %v4577
    %v4614 = vpack.c.b16 %v4582, %v4578
    %v4615 = vpack.c.b16 %v4583, %v4579
    %v4616 = vpack.c.b16 %v4584, %v4580
    %4649 = vmatprep.subr.bf16.mxu0 %v4614
    %4650 = vmatpush1.bf16.msra.mxu0 %v4613
    %4651 = vmatprep.subr.bf16.mxu0 %v4610
    %4652 = vmatpush1.bf16.msra.mxu0 %v4609
    %4653 = vmatprep.subr.bf16.mxu0 %v4606
    %4654 = vmatpush1.bf16.msra.mxu0 %v4605
    %4655 = vmatprep.subr.bf16.mxu0 %v4602
    %4656 = vmatpush1.bf16.msra.mxu0 %v4601
    %4657 = vmatprep.subr.bf16.mxu0 %v4598
    %4658 = vmatpush1.bf16.msra.mxu0 %v4597
    %4659 = vmatprep.subr.bf16.mxu0 %v4594
    %4660 = vmatpush1.bf16.msra.mxu0 %v4593
    %4661 = vmatprep.subr.bf16.mxu0 %v4590
    %4662 = vmatpush1.bf16.msra.mxu0 %v4589
    %4663 = vmatprep.subr.bf16.mxu0 %v4586
    %4664 = vmatpush1.bf16.msra.mxu0 %v4585
    %4665 = vmatprep.subr.bf16.mxu0 0
    %4666 = vmatpush2.bf16.msra.mxu0 0
    %4667 = vmatprep.subr.bf16.mxu0 0
    %4668 = vmatpush2.bf16.msra.mxu0 0
    %4669 = vmatprep.subr.bf16.mxu0 0
    %4670 = vmatpush2.bf16.msra.mxu0 0
    %4671 = vmatprep.subr.bf16.mxu0 0
    %4672 = vmatpush2.bf16.msra.mxu0 0
    %4673 = vmatprep.subr.bf16.mxu0 0
    %4674 = vmatpush2.bf16.msra.mxu0 0
    %4675 = vmatprep.subr.bf16.mxu0 0
    %4676 = vmatpush2.bf16.msra.mxu0 0
    %4677 = vmatprep.subr.bf16.mxu0 0
    %4678 = vmatpush2.bf16.msra.mxu0 0
    %4679 = vmatprep.subr.bf16.mxu0 0
    %4680 = vmatpush2.bf16.msra.mxu0 0
    %4681 = vmatprep.mubr.bf16.mxu0 0
    %4682 = vmatmul.mubr.bf16.gmra.mxu0 %v4451
    %v4683 = vpop.f32.mrf.mxu0
    %v4684 = vadd.f32 0.0, %v4683
    %v4685 = vpop.f32.mrf.mxu0
    %v4686 = vadd.f32 0.0, %v4685
    %v4687 = vpop.f32.mrf.mxu0
    %v4688 = vpop.f32.mrf.mxu0
    %4689 = vdwg.mxu0
    %4690 = vmatprep.subr.bf16.mxu0 %v4616
    %4691 = vmatpush1.bf16.msra.mxu0 %v4615
    %4692 = vmatprep.subr.bf16.mxu0 %v4612
    %4693 = vmatpush1.bf16.msra.mxu0 %v4611
    %4694 = vmatprep.subr.bf16.mxu0 %v4608
    %4695 = vmatpush1.bf16.msra.mxu0 %v4607
    %4696 = vmatprep.subr.bf16.mxu0 %v4604
    %4697 = vmatpush1.bf16.msra.mxu0 %v4603
    %4698 = vmatprep.subr.bf16.mxu0 %v4600
    %4699 = vmatpush1.bf16.msra.mxu0 %v4599
    %4700 = vmatprep.subr.bf16.mxu0 %v4596
    %4701 = vmatpush1.bf16.msra.mxu0 %v4595
    %4702 = vmatprep.subr.bf16.mxu0 %v4592
    %4703 = vmatpush1.bf16.msra.mxu0 %v4591
    %4704 = vmatprep.subr.bf16.mxu0 %v4588
    %4705 = vmatpush1.bf16.msra.mxu0 %v4587
    %4706 = vmatprep.subr.bf16.mxu0 0
    %4707 = vmatpush2.bf16.msra.mxu0 0
    %4708 = vmatprep.subr.bf16.mxu0 0
    %4709 = vmatpush2.bf16.msra.mxu0 0
    %4710 = vmatprep.subr.bf16.mxu0 0
    %4711 = vmatpush2.bf16.msra.mxu0 0
    %4712 = vmatprep.subr.bf16.mxu0 0
    %4713 = vmatpush2.bf16.msra.mxu0 0
    %4714 = vmatprep.subr.bf16.mxu0 0
    %4715 = vmatpush2.bf16.msra.mxu0 0
    %4716 = vmatprep.subr.bf16.mxu0 0
    %4717 = vmatpush2.bf16.msra.mxu0 0
    %4718 = vmatprep.subr.bf16.mxu0 0
    %4719 = vmatpush2.bf16.msra.mxu0 0
    %4720 = vmatprep.subr.bf16.mxu0 0
    %4721 = vmatpush2.bf16.msra.mxu0 0
    %4722 = vmatprep.mubr.bf16.mxu0 0
    %4723 = vmatmul.mubr.bf16.gmra.mxu0 %v4451
    %v4724 = vpop.f32.mrf.mxu0
    %v4725 = vadd.f32 0.0, %v4724
    %v4726 = vpop.f32.mrf.mxu0
    %v4727 = vadd.f32 0.0, %v4726
    %v4728 = vpop.f32.mrf.mxu0
    %v4729 = vpop.f32.mrf.mxu0
    %4730 = vdwg.mxu0
    %v4731 = vadd.f32 %v4453, %v4684
    %v4732 = vadd.f32 %v4454, %v4686
    %v4733 = vadd.f32 %v4455, %v4725
    %v4734 = vadd.f32 %v4456, %v4727
    %v4735 = vxor.u32 %v4731, 2147483648
    %v4736 = vmul.f32 %v4735, 1.442695
    %v4737 = vpow.pop %v4736
    %v4738 = vadd.f32 %v4737, 1.0
    %v4739 = vrcp.pop %v4738
    %v4740 = vmul.f32 1.0, %v4739
    %v4741 = vxor.u32 %v4732, 2147483648
    %v4742 = vmul.f32 %v4741, 1.442695
    %v4743 = vpow.pop %v4742
    %v4744 = vadd.f32 %v4743, 1.0
    %v4745 = vrcp.pop %v4744
    %v4746 = vmul.f32 1.0, %v4745
    %v4747 = vtanh.pop %v4733
    %v4748 = vxor.u32 %v4734, 2147483648
    %v4749 = vmul.f32 %v4748, 1.442695
    %v4750 = vpow.pop %v4749
    %v4751 = vadd.f32 %v4750, 1.0
    %v4752 = vrcp.pop %v4751
    %v4753 = vmul.f32 1.0, %v4752
    %v4754 = vmul.f32 %v4746, %v4448
    %v4755 = vmul.f32 %v4740, %v4747
    %v4756 = vadd.f32 %v4754, %v4755
    %v4757 = vtanh.pop %v4756
    %v4758 = vmul.f32 %v4753, %v4757
    %v4759 = vpack.c.bf16 %v4758, %v4758
    %4760 = vst [vmem:[%s1847] sm:$0xf] %v4759
    %v4761 = vld [vmem:[%s1851] sm:$0xff]
    %v4762 = vld [vmem:[%s1851 + $0x8] sm:$0xff]
    %v4763 = vld [vmem:[%s1851 + $0x10] sm:$0xff]
    %v4764 = vld [vmem:[%s1851 + $0x18] sm:$0xff]
    %v4765 = vld [vmem:[#allocation5] sm:$0xff]
    %v4766 = vld [vmem:[#allocation5 + $0x8] sm:$0xff]
    %v4767 = vld [vmem:[#allocation5 + $0x10] sm:$0xff]
    %v4768 = vld [vmem:[#allocation5 + $0x18] sm:$0xff]
    %v4769 = vld [vmem:[#allocation5 + $0x20] sm:$0xff]
    %v4770 = vld [vmem:[#allocation5 + $0x28] sm:$0xff]
    %v4771 = vld [vmem:[#allocation5 + $0x30] sm:$0xff]
    %v4772 = vld [vmem:[#allocation5 + $0x38] sm:$0xff]
    %v4773 = vld [vmem:[#allocation5 + $0x40] sm:$0xff]
    %v4774 = vld [vmem:[#allocation5 + $0x48] sm:$0xff]
    %v4775 = vld [vmem:[#allocation5 + $0x50] sm:$0xff]
    %v4776 = vld [vmem:[#allocation5 + $0x58] sm:$0xff]
    %v4777 = vld [vmem:[#allocation5 + $0x60] sm:$0xff]
    %v4778 = vld [vmem:[#allocation5 + $0x68] sm:$0xff]
    %v4779 = vld [vmem:[#allocation5 + $0x70] sm:$0xff]
    %v4780 = vld [vmem:[#allocation5 + $0x78] sm:$0xff]
    %v4781 = vld [vmem:[#allocation5 + $0x80] sm:$0xff]
    %v4782 = vld [vmem:[#allocation5 + $0x88] sm:$0xff]
    %v4783 = vld [vmem:[#allocation5 + $0x90] sm:$0xff]
    %v4784 = vld [vmem:[#allocation5 + $0x98] sm:$0xff]
    %v4785 = vld [vmem:[#allocation5 + $0xa0] sm:$0xff]
    %v4786 = vld [vmem:[#allocation5 + $0xa8] sm:$0xff]
    %v4787 = vld [vmem:[#allocation5 + $0xb0] sm:$0xff]
    %v4788 = vld [vmem:[#allocation5 + $0xb8] sm:$0xff]
    %v4789 = vld [vmem:[#allocation5 + $0xc0] sm:$0xff]
    %v4790 = vld [vmem:[#allocation5 + $0xc8] sm:$0xff]
    %v4791 = vld [vmem:[#allocation5 + $0xd0] sm:$0xff]
    %v4792 = vld [vmem:[#allocation5 + $0xd8] sm:$0xff]
    %v4793 = vld [vmem:[#allocation5 + $0xe0] sm:$0xff]
    %v4794 = vld [vmem:[#allocation5 + $0xe8] sm:$0xff]
    %v4795 = vld [vmem:[#allocation5 + $0xf0] sm:$0xff]
    %v4796 = vld [vmem:[#allocation5 + $0xf8] sm:$0xff]
    %v4829 = vunpack.c.l.b16 %v4765
    %v4830 = vunpack.c.h.b16 %v4765
    %v4831 = vunpack.c.l.b16 %v4766
    %v4832 = vunpack.c.h.b16 %v4766
    %v4833 = vunpack.c.l.b16 %v4767
    %v4834 = vunpack.c.h.b16 %v4767
    %v4835 = vunpack.c.l.b16 %v4768
    %v4836 = vunpack.c.h.b16 %v4768
    %v4837 = vunpack.c.l.b16 %v4769
    %v4838 = vunpack.c.h.b16 %v4769
    %v4839 = vunpack.c.l.b16 %v4770
    %v4840 = vunpack.c.h.b16 %v4770
    %v4841 = vunpack.c.l.b16 %v4771
    %v4842 = vunpack.c.h.b16 %v4771
    %v4843 = vunpack.c.l.b16 %v4772
    %v4844 = vunpack.c.h.b16 %v4772
    %v4845 = vunpack.c.l.b16 %v4773
    %v4846 = vunpack.c.h.b16 %v4773
    %v4847 = vunpack.c.l.b16 %v4774
    %v4848 = vunpack.c.h.b16 %v4774
    %v4849 = vunpack.c.l.b16 %v4775
    %v4850 = vunpack.c.h.b16 %v4775
    %v4851 = vunpack.c.l.b16 %v4776
    %v4852 = vunpack.c.h.b16 %v4776
    %v4853 = vunpack.c.l.b16 %v4777
    %v4854 = vunpack.c.h.b16 %v4777
    %v4855 = vunpack.c.l.b16 %v4778
    %v4856 = vunpack.c.h.b16 %v4778
    %v4857 = vunpack.c.l.b16 %v4779
    %v4858 = vunpack.c.h.b16 %v4779
    %v4859 = vunpack.c.l.b16 %v4780
    %v4860 = vunpack.c.h.b16 %v4780
    %v4861 = vunpack.c.l.b16 %v4781
    %v4862 = vunpack.c.h.b16 %v4781
    %v4863 = vunpack.c.l.b16 %v4782
    %v4864 = vunpack.c.h.b16 %v4782
    %v4865 = vunpack.c.l.b16 %v4783
    %v4866 = vunpack.c.h.b16 %v4783
    %v4867 = vunpack.c.l.b16 %v4784
    %v4868 = vunpack.c.h.b16 %v4784
    %v4869 = vunpack.c.l.b16 %v4785
    %v4870 = vunpack.c.h.b16 %v4785
    %v4871 = vunpack.c.l.b16 %v4786
    %v4872 = vunpack.c.h.b16 %v4786
    %v4873 = vunpack.c.l.b16 %v4787
    %v4874 = vunpack.c.h.b16 %v4787
    %v4875 = vunpack.c.l.b16 %v4788
    %v4876 = vunpack.c.h.b16 %v4788
    %v4877 = vunpack.c.l.b16 %v4789
    %v4878 = vunpack.c.h.b16 %v4789
    %v4879 = vunpack.c.l.b16 %v4790
    %v4880 = vunpack.c.h.b16 %v4790
    %v4881 = vunpack.c.l.b16 %v4791
    %v4882 = vunpack.c.h.b16 %v4791
    %v4883 = vunpack.c.l.b16 %v4792
    %v4884 = vunpack.c.h.b16 %v4792
    %v4885 = vunpack.c.l.b16 %v4793
    %v4886 = vunpack.c.h.b16 %v4793
    %v4887 = vunpack.c.l.b16 %v4794
    %v4888 = vunpack.c.h.b16 %v4794
    %v4889 = vunpack.c.l.b16 %v4795
    %v4890 = vunpack.c.h.b16 %v4795
    %v4891 = vunpack.c.l.b16 %v4796
    %v4892 = vunpack.c.h.b16 %v4796
    %v4893 = vpack.c.b16 %v4833, %v4829
    %v4894 = vpack.c.b16 %v4834, %v4830
    %v4895 = vpack.c.b16 %v4835, %v4831
    %v4896 = vpack.c.b16 %v4836, %v4832
    %v4897 = vpack.c.b16 %v4841, %v4837
    %v4898 = vpack.c.b16 %v4842, %v4838
    %v4899 = vpack.c.b16 %v4843, %v4839
    %v4900 = vpack.c.b16 %v4844, %v4840
    %v4901 = vpack.c.b16 %v4849, %v4845
    %v4902 = vpack.c.b16 %v4850, %v4846
    %v4903 = vpack.c.b16 %v4851, %v4847
    %v4904 = vpack.c.b16 %v4852, %v4848
    %v4905 = vpack.c.b16 %v4857, %v4853
    %v4906 = vpack.c.b16 %v4858, %v4854
    %v4907 = vpack.c.b16 %v4859, %v4855
    %v4908 = vpack.c.b16 %v4860, %v4856
    %v4909 = vpack.c.b16 %v4865, %v4861
    %v4910 = vpack.c.b16 %v4866, %v4862
    %v4911 = vpack.c.b16 %v4867, %v4863
    %v4912 = vpack.c.b16 %v4868, %v4864
    %v4913 = vpack.c.b16 %v4873, %v4869
    %v4914 = vpack.c.b16 %v4874, %v4870
    %v4915 = vpack.c.b16 %v4875, %v4871
    %v4916 = vpack.c.b16 %v4876, %v4872
    %v4917 = vpack.c.b16 %v4881, %v4877
    %v4918 = vpack.c.b16 %v4882, %v4878
    %v4919 = vpack.c.b16 %v4883, %v4879
    %v4920 = vpack.c.b16 %v4884, %v4880
    %v4921 = vpack.c.b16 %v4889, %v4885
    %v4922 = vpack.c.b16 %v4890, %v4886
    %v4923 = vpack.c.b16 %v4891, %v4887
    %v4924 = vpack.c.b16 %v4892, %v4888
    %4957 = vmatprep.subr.bf16.mxu0 %v4922
    %4958 = vmatpush1.bf16.msra.mxu0 %v4921
    %4959 = vmatprep.subr.bf16.mxu0 %v4918
    %4960 = vmatpush1.bf16.msra.mxu0 %v4917
    %4961 = vmatprep.subr.bf16.mxu0 %v4914
    %4962 = vmatpush1.bf16.msra.mxu0 %v4913
    %4963 = vmatprep.subr.bf16.mxu0 %v4910
    %4964 = vmatpush1.bf16.msra.mxu0 %v4909
    %4965 = vmatprep.subr.bf16.mxu0 %v4906
    %4966 = vmatpush1.bf16.msra.mxu0 %v4905
    %4967 = vmatprep.subr.bf16.mxu0 %v4902
    %4968 = vmatpush1.bf16.msra.mxu0 %v4901
    %4969 = vmatprep.subr.bf16.mxu0 %v4898
    %4970 = vmatpush1.bf16.msra.mxu0 %v4897
    %4971 = vmatprep.subr.bf16.mxu0 %v4894
    %4972 = vmatpush1.bf16.msra.mxu0 %v4893
    %4973 = vmatprep.subr.bf16.mxu0 0
    %4974 = vmatpush2.bf16.msra.mxu0 0
    %4975 = vmatprep.subr.bf16.mxu0 0
    %4976 = vmatpush2.bf16.msra.mxu0 0
    %4977 = vmatprep.subr.bf16.mxu0 0
    %4978 = vmatpush2.bf16.msra.mxu0 0
    %4979 = vmatprep.subr.bf16.mxu0 0
    %4980 = vmatpush2.bf16.msra.mxu0 0
    %4981 = vmatprep.subr.bf16.mxu0 0
    %4982 = vmatpush2.bf16.msra.mxu0 0
    %4983 = vmatprep.subr.bf16.mxu0 0
    %4984 = vmatpush2.bf16.msra.mxu0 0
    %4985 = vmatprep.subr.bf16.mxu0 0
    %4986 = vmatpush2.bf16.msra.mxu0 0
    %4987 = vmatprep.subr.bf16.mxu0 0
    %4988 = vmatpush2.bf16.msra.mxu0 0
    %4989 = vmatprep.mubr.bf16.mxu0 0
    %4990 = vmatmul.mubr.bf16.gmra.mxu0 %v4759
    %v4991 = vpop.f32.mrf.mxu0
    %v4992 = vadd.f32 0.0, %v4991
    %v4993 = vpop.f32.mrf.mxu0
    %v4994 = vadd.f32 0.0, %v4993
    %v4995 = vpop.f32.mrf.mxu0
    %v4996 = vpop.f32.mrf.mxu0
    %4997 = vdwg.mxu0
    %4998 = vmatprep.subr.bf16.mxu0 %v4924
    %4999 = vmatpush1.bf16.msra.mxu0 %v4923
    %5000 = vmatprep.subr.bf16.mxu0 %v4920
    %5001 = vmatpush1.bf16.msra.mxu0 %v4919
    %5002 = vmatprep.subr.bf16.mxu0 %v4916
    %5003 = vmatpush1.bf16.msra.mxu0 %v4915
    %5004 = vmatprep.subr.bf16.mxu0 %v4912
    %5005 = vmatpush1.bf16.msra.mxu0 %v4911
    %5006 = vmatprep.subr.bf16.mxu0 %v4908
    %5007 = vmatpush1.bf16.msra.mxu0 %v4907
    %5008 = vmatprep.subr.bf16.mxu0 %v4904
    %5009 = vmatpush1.bf16.msra.mxu0 %v4903
    %5010 = vmatprep.subr.bf16.mxu0 %v4900
    %5011 = vmatpush1.bf16.msra.mxu0 %v4899
    %5012 = vmatprep.subr.bf16.mxu0 %v4896
    %5013 = vmatpush1.bf16.msra.mxu0 %v4895
    %5014 = vmatprep.subr.bf16.mxu0 0
    %5015 = vmatpush2.bf16.msra.mxu0 0
    %5016 = vmatprep.subr.bf16.mxu0 0
    %5017 = vmatpush2.bf16.msra.mxu0 0
    %5018 = vmatprep.subr.bf16.mxu0 0
    %5019 = vmatpush2.bf16.msra.mxu0 0
    %5020 = vmatprep.subr.bf16.mxu0 0
    %5021 = vmatpush2.bf16.msra.mxu0 0
    %5022 = vmatprep.subr.bf16.mxu0 0
    %5023 = vmatpush2.bf16.msra.mxu0 0
    %5024 = vmatprep.subr.bf16.mxu0 0
    %5025 = vmatpush2.bf16.msra.mxu0 0
    %5026 = vmatprep.subr.bf16.mxu0 0
    %5027 = vmatpush2.bf16.msra.mxu0 0
    %5028 = vmatprep.subr.bf16.mxu0 0
    %5029 = vmatpush2.bf16.msra.mxu0 0
    %5030 = vmatprep.mubr.bf16.mxu0 0
    %5031 = vmatmul.mubr.bf16.gmra.mxu0 %v4759
    %v5032 = vpop.f32.mrf.mxu0
    %v5033 = vadd.f32 0.0, %v5032
    %v5034 = vpop.f32.mrf.mxu0
    %v5035 = vadd.f32 0.0, %v5034
    %v5036 = vpop.f32.mrf.mxu0
    %v5037 = vpop.f32.mrf.mxu0
    %5038 = vdwg.mxu0
    %v5039 = vadd.f32 %v4761, %v4992
    %v5040 = vadd.f32 %v4762, %v4994
    %v5041 = vadd.f32 %v4763, %v5033
    %v5042 = vadd.f32 %v4764, %v5035
    %v5043 = vxor.u32 %v5039, 2147483648
    %v5044 = vmul.f32 %v5043, 1.442695
    %v5045 = vpow.pop %v5044
    %v5046 = vadd.f32 %v5045, 1.0
    %v5047 = vrcp.pop %v5046
    %v5048 = vmul.f32 1.0, %v5047
    %v5049 = vxor.u32 %v5040, 2147483648
    %v5050 = vmul.f32 %v5049, 1.442695
    %v5051 = vpow.pop %v5050
    %v5052 = vadd.f32 %v5051, 1.0
    %v5053 = vrcp.pop %v5052
    %v5054 = vmul.f32 1.0, %v5053
    %v5055 = vtanh.pop %v5041
    %v5056 = vxor.u32 %v5042, 2147483648
    %v5057 = vmul.f32 %v5056, 1.442695
    %v5058 = vpow.pop %v5057
    %v5059 = vadd.f32 %v5058, 1.0
    %v5060 = vrcp.pop %v5059
    %v5061 = vmul.f32 1.0, %v5060
    %v5062 = vmul.f32 %v5054, %v4756
    %v5063 = vmul.f32 %v5048, %v5055
    %v5064 = vadd.f32 %v5062, %v5063
    %v5065 = vtanh.pop %v5064
    %v5066 = vmul.f32 %v5061, %v5065
    %v5067 = vpack.c.bf16 %v5066, %v5066
    %5068 = vst [vmem:[%s2159] sm:$0xf] %v5067
    %v5069 = vld [vmem:[%s2163] sm:$0xff]
    %v5070 = vld [vmem:[%s2163 + $0x8] sm:$0xff]
    %v5071 = vld [vmem:[%s2163 + $0x10] sm:$0xff]
    %v5072 = vld [vmem:[%s2163 + $0x18] sm:$0xff]
    %v5073 = vld [vmem:[#allocation5] sm:$0xff]
    %v5074 = vld [vmem:[#allocation5 + $0x8] sm:$0xff]
    %v5075 = vld [vmem:[#allocation5 + $0x10] sm:$0xff]
    %v5076 = vld [vmem:[#allocation5 + $0x18] sm:$0xff]
    %v5077 = vld [vmem:[#allocation5 + $0x20] sm:$0xff]
    %v5078 = vld [vmem:[#allocation5 + $0x28] sm:$0xff]
    %v5079 = vld [vmem:[#allocation5 + $0x30] sm:$0xff]
    %v5080 = vld [vmem:[#allocation5 + $0x38] sm:$0xff]
    %v5081 = vld [vmem:[#allocation5 + $0x40] sm:$0xff]
    %v5082 = vld [vmem:[#allocation5 + $0x48] sm:$0xff]
    %v5083 = vld [vmem:[#allocation5 + $0x50] sm:$0xff]
    %v5084 = vld [vmem:[#allocation5 + $0x58] sm:$0xff]
    %v5085 = vld [vmem:[#allocation5 + $0x60] sm:$0xff]
    %v5086 = vld [vmem:[#allocation5 + $0x68] sm:$0xff]
    %v5087 = vld [vmem:[#allocation5 + $0x70] sm:$0xff]
    %v5088 = vld [vmem:[#allocation5 + $0x78] sm:$0xff]
    %v5089 = vld [vmem:[#allocation5 + $0x80] sm:$0xff]
    %v5090 = vld [vmem:[#allocation5 + $0x88] sm:$0xff]
    %v5091 = vld [vmem:[#allocation5 + $0x90] sm:$0xff]
    %v5092 = vld [vmem:[#allocation5 + $0x98] sm:$0xff]
    %v5093 = vld [vmem:[#allocation5 + $0xa0] sm:$0xff]
    %v5094 = vld [vmem:[#allocation5 + $0xa8] sm:$0xff]
    %v5095 = vld [vmem:[#allocation5 + $0xb0] sm:$0xff]
    %v5096 = vld [vmem:[#allocation5 + $0xb8] sm:$0xff]
    %v5097 = vld [vmem:[#allocation5 + $0xc0] sm:$0xff]
    %v5098 = vld [vmem:[#allocation5 + $0xc8] sm:$0xff]
    %v5099 = vld [vmem:[#allocation5 + $0xd0] sm:$0xff]
    %v5100 = vld [vmem:[#allocation5 + $0xd8] sm:$0xff]
    %v5101 = vld [vmem:[#allocation5 + $0xe0] sm:$0xff]
    %v5102 = vld [vmem:[#allocation5 + $0xe8] sm:$0xff]
    %v5103 = vld [vmem:[#allocation5 + $0xf0] sm:$0xff]
    %v5104 = vld [vmem:[#allocation5 + $0xf8] sm:$0xff]
    %v5137 = vunpack.c.l.b16 %v5073
    %v5138 = vunpack.c.h.b16 %v5073
    %v5139 = vunpack.c.l.b16 %v5074
    %v5140 = vunpack.c.h.b16 %v5074
    %v5141 = vunpack.c.l.b16 %v5075
    %v5142 = vunpack.c.h.b16 %v5075
    %v5143 = vunpack.c.l.b16 %v5076
    %v5144 = vunpack.c.h.b16 %v5076
    %v5145 = vunpack.c.l.b16 %v5077
    %v5146 = vunpack.c.h.b16 %v5077
    %v5147 = vunpack.c.l.b16 %v5078
    %v5148 = vunpack.c.h.b16 %v5078
    %v5149 = vunpack.c.l.b16 %v5079
    %v5150 = vunpack.c.h.b16 %v5079
    %v5151 = vunpack.c.l.b16 %v5080
    %v5152 = vunpack.c.h.b16 %v5080
    %v5153 = vunpack.c.l.b16 %v5081
    %v5154 = vunpack.c.h.b16 %v5081
    %v5155 = vunpack.c.l.b16 %v5082
    %v5156 = vunpack.c.h.b16 %v5082
    %v5157 = vunpack.c.l.b16 %v5083
    %v5158 = vunpack.c.h.b16 %v5083
    %v5159 = vunpack.c.l.b16 %v5084
    %v5160 = vunpack.c.h.b16 %v5084
    %v5161 = vunpack.c.l.b16 %v5085
    %v5162 = vunpack.c.h.b16 %v5085
    %v5163 = vunpack.c.l.b16 %v5086
    %v5164 = vunpack.c.h.b16 %v5086
    %v5165 = vunpack.c.l.b16 %v5087
    %v5166 = vunpack.c.h.b16 %v5087
    %v5167 = vunpack.c.l.b16 %v5088
    %v5168 = vunpack.c.h.b16 %v5088
    %v5169 = vunpack.c.l.b16 %v5089
    %v5170 = vunpack.c.h.b16 %v5089
    %v5171 = vunpack.c.l.b16 %v5090
    %v5172 = vunpack.c.h.b16 %v5090
    %v5173 = vunpack.c.l.b16 %v5091
    %v5174 = vunpack.c.h.b16 %v5091
    %v5175 = vunpack.c.l.b16 %v5092
    %v5176 = vunpack.c.h.b16 %v5092
    %v5177 = vunpack.c.l.b16 %v5093
    %v5178 = vunpack.c.h.b16 %v5093
    %v5179 = vunpack.c.l.b16 %v5094
    %v5180 = vunpack.c.h.b16 %v5094
    %v5181 = vunpack.c.l.b16 %v5095
    %v5182 = vunpack.c.h.b16 %v5095
    %v5183 = vunpack.c.l.b16 %v5096
    %v5184 = vunpack.c.h.b16 %v5096
    %v5185 = vunpack.c.l.b16 %v5097
    %v5186 = vunpack.c.h.b16 %v5097
    %v5187 = vunpack.c.l.b16 %v5098
    %v5188 = vunpack.c.h.b16 %v5098
    %v5189 = vunpack.c.l.b16 %v5099
    %v5190 = vunpack.c.h.b16 %v5099
    %v5191 = vunpack.c.l.b16 %v5100
    %v5192 = vunpack.c.h.b16 %v5100
    %v5193 = vunpack.c.l.b16 %v5101
    %v5194 = vunpack.c.h.b16 %v5101
    %v5195 = vunpack.c.l.b16 %v5102
    %v5196 = vunpack.c.h.b16 %v5102
    %v5197 = vunpack.c.l.b16 %v5103
    %v5198 = vunpack.c.h.b16 %v5103
    %v5199 = vunpack.c.l.b16 %v5104
    %v5200 = vunpack.c.h.b16 %v5104
    %v5201 = vpack.c.b16 %v5141, %v5137
    %v5202 = vpack.c.b16 %v5142, %v5138
    %v5203 = vpack.c.b16 %v5143, %v5139
    %v5204 = vpack.c.b16 %v5144, %v5140
    %v5205 = vpack.c.b16 %v5149, %v5145
    %v5206 = vpack.c.b16 %v5150, %v5146
    %v5207 = vpack.c.b16 %v5151, %v5147
    %v5208 = vpack.c.b16 %v5152, %v5148
    %v5209 = vpack.c.b16 %v5157, %v5153
    %v5210 = vpack.c.b16 %v5158, %v5154
    %v5211 = vpack.c.b16 %v5159, %v5155
    %v5212 = vpack.c.b16 %v5160, %v5156
    %v5213 = vpack.c.b16 %v5165, %v5161
    %v5214 = vpack.c.b16 %v5166, %v5162
    %v5215 = vpack.c.b16 %v5167, %v5163
    %v5216 = vpack.c.b16 %v5168, %v5164
    %v5217 = vpack.c.b16 %v5173, %v5169
    %v5218 = vpack.c.b16 %v5174, %v5170
    %v5219 = vpack.c.b16 %v5175, %v5171
    %v5220 = vpack.c.b16 %v5176, %v5172
    %v5221 = vpack.c.b16 %v5181, %v5177
    %v5222 = vpack.c.b16 %v5182, %v5178
    %v5223 = vpack.c.b16 %v5183, %v5179
    %v5224 = vpack.c.b16 %v5184, %v5180
    %v5225 = vpack.c.b16 %v5189, %v5185
    %v5226 = vpack.c.b16 %v5190, %v5186
    %v5227 = vpack.c.b16 %v5191, %v5187
    %v5228 = vpack.c.b16 %v5192, %v5188
    %v5229 = vpack.c.b16 %v5197, %v5193
    %v5230 = vpack.c.b16 %v5198, %v5194
    %v5231 = vpack.c.b16 %v5199, %v5195
    %v5232 = vpack.c.b16 %v5200, %v5196
    %5265 = vmatprep.subr.bf16.mxu0 %v5230
    %5266 = vmatpush1.bf16.msra.mxu0 %v5229
    %5267 = vmatprep.subr.bf16.mxu0 %v5226
    %5268 = vmatpush1.bf16.msra.mxu0 %v5225
    %5269 = vmatprep.subr.bf16.mxu0 %v5222
    %5270 = vmatpush1.bf16.msra.mxu0 %v5221
    %5271 = vmatprep.subr.bf16.mxu0 %v5218
    %5272 = vmatpush1.bf16.msra.mxu0 %v5217
    %5273 = vmatprep.subr.bf16.mxu0 %v5214
    %5274 = vmatpush1.bf16.msra.mxu0 %v5213
    %5275 = vmatprep.subr.bf16.mxu0 %v5210
    %5276 = vmatpush1.bf16.msra.mxu0 %v5209
    %5277 = vmatprep.subr.bf16.mxu0 %v5206
    %5278 = vmatpush1.bf16.msra.mxu0 %v5205
    %5279 = vmatprep.subr.bf16.mxu0 %v5202
    %5280 = vmatpush1.bf16.msra.mxu0 %v5201
    %5281 = vmatprep.subr.bf16.mxu0 0
    %5282 = vmatpush2.bf16.msra.mxu0 0
    %5283 = vmatprep.subr.bf16.mxu0 0
    %5284 = vmatpush2.bf16.msra.mxu0 0
    %5285 = vmatprep.subr.bf16.mxu0 0
    %5286 = vmatpush2.bf16.msra.mxu0 0
    %5287 = vmatprep.subr.bf16.mxu0 0
    %5288 = vmatpush2.bf16.msra.mxu0 0
    %5289 = vmatprep.subr.bf16.mxu0 0
    %5290 = vmatpush2.bf16.msra.mxu0 0
    %5291 = vmatprep.subr.bf16.mxu0 0
    %5292 = vmatpush2.bf16.msra.mxu0 0
    %5293 = vmatprep.subr.bf16.mxu0 0
    %5294 = vmatpush2.bf16.msra.mxu0 0
    %5295 = vmatprep.subr.bf16.mxu0 0
    %5296 = vmatpush2.bf16.msra.mxu0 0
    %5297 = vmatprep.mubr.bf16.mxu0 0
    %5298 = vmatmul.mubr.bf16.gmra.mxu0 %v5067
    %v5299 = vpop.f32.mrf.mxu0
    %v5300 = vadd.f32 0.0, %v5299
    %v5301 = vpop.f32.mrf.mxu0
    %v5302 = vadd.f32 0.0, %v5301
    %v5303 = vpop.f32.mrf.mxu0
    %v5304 = vpop.f32.mrf.mxu0
    %5305 = vdwg.mxu0
    %5306 = vmatprep.subr.bf16.mxu0 %v5232
    %5307 = vmatpush1.bf16.msra.mxu0 %v5231
    %5308 = vmatprep.subr.bf16.mxu0 %v5228
    %5309 = vmatpush1.bf16.msra.mxu0 %v5227
    %5310 = vmatprep.subr.bf16.mxu0 %v5224
    %5311 = vmatpush1.bf16.msra.mxu0 %v5223
    %5312 = vmatprep.subr.bf16.mxu0 %v5220
    %5313 = vmatpush1.bf16.msra.mxu0 %v5219
    %5314 = vmatprep.subr.bf16.mxu0 %v5216
    %5315 = vmatpush1.bf16.msra.mxu0 %v5215
    %5316 = vmatprep.subr.bf16.mxu0 %v5212
    %5317 = vmatpush1.bf16.msra.mxu0 %v5211
    %5318 = vmatprep.subr.bf16.mxu0 %v5208
    %5319 = vmatpush1.bf16.msra.mxu0 %v5207
    %5320 = vmatprep.subr.bf16.mxu0 %v5204
    %5321 = vmatpush1.bf16.msra.mxu0 %v5203
    %5322 = vmatprep.subr.bf16.mxu0 0
    %5323 = vmatpush2.bf16.msra.mxu0 0
    %5324 = vmatprep.subr.bf16.mxu0 0
    %5325 = vmatpush2.bf16.msra.mxu0 0
    %5326 = vmatprep.subr.bf16.mxu0 0
    %5327 = vmatpush2.bf16.msra.mxu0 0
    %5328 = vmatprep.subr.bf16.mxu0 0
    %5329 = vmatpush2.bf16.msra.mxu0 0
    %5330 = vmatprep.subr.bf16.mxu0 0
    %5331 = vmatpush2.bf16.msra.mxu0 0
    %5332 = vmatprep.subr.bf16.mxu0 0
    %5333 = vmatpush2.bf16.msra.mxu0 0
    %5334 = vmatprep.subr.bf16.mxu0 0
    %5335 = vmatpush2.bf16.msra.mxu0 0
    %5336 = vmatprep.subr.bf16.mxu0 0
    %5337 = vmatpush2.bf16.msra.mxu0 0
    %5338 = vmatprep.mubr.bf16.mxu0 0
    %5339 = vmatmul.mubr.bf16.gmra.mxu0 %v5067
    %v5340 = vpop.f32.mrf.mxu0
    %v5341 = vadd.f32 0.0, %v5340
    %v5342 = vpop.f32.mrf.mxu0
    %v5343 = vadd.f32 0.0, %v5342
    %v5344 = vpop.f32.mrf.mxu0
    %v5345 = vpop.f32.mrf.mxu0
    %5346 = vdwg.mxu0
    %v5347 = vadd.f32 %v5069, %v5300
    %v5348 = vadd.f32 %v5070, %v5302
    %v5349 = vadd.f32 %v5071, %v5341
    %v5350 = vadd.f32 %v5072, %v5343
    %v5351 = vxor.u32 %v5347, 2147483648
    %v5352 = vmul.f32 %v5351, 1.442695
    %v5353 = vpow.pop %v5352
    %v5354 = vadd.f32 %v5353, 1.0
    %v5355 = vrcp.pop %v5354
    %v5356 = vmul.f32 1.0, %v5355
    %v5357 = vxor.u32 %v5348, 2147483648
    %v5358 = vmul.f32 %v5357, 1.442695
    %v5359 = vpow.pop %v5358
    %v5360 = vadd.f32 %v5359, 1.0
    %v5361 = vrcp.pop %v5360
    %v5362 = vmul.f32 1.0, %v5361
    %v5363 = vtanh.pop %v5349
    %v5364 = vxor.u32 %v5350, 2147483648
    %v5365 = vmul.f32 %v5364, 1.442695
    %v5366 = vpow.pop %v5365
    %v5367 = vadd.f32 %v5366, 1.0
    %v5368 = vrcp.pop %v5367
    %v5369 = vmul.f32 1.0, %v5368
    %v5370 = vmul.f32 %v5362, %v5064
    %v5371 = vmul.f32 %v5356, %v5363
    %v5372 = vadd.f32 %v5370, %v5371
    %v5373 = vtanh.pop %v5372
    %v5374 = vmul.f32 %v5369, %v5373
    %v5375 = vpack.c.bf16 %v5374, %v5374
    %5376 = vst [vmem:[%s2471] sm:$0xf] %v5375
    %v5377 = vld [vmem:[%s2475] sm:$0xff]
    %v5378 = vld [vmem:[%s2475 + $0x8] sm:$0xff]
    %v5379 = vld [vmem:[%s2475 + $0x10] sm:$0xff]
    %v5380 = vld [vmem:[%s2475 + $0x18] sm:$0xff]
    %v5381 = vld [vmem:[#allocation5] sm:$0xff]
    %v5382 = vld [vmem:[#allocation5 + $0x8] sm:$0xff]
    %v5383 = vld [vmem:[#allocation5 + $0x10] sm:$0xff]
    %v5384 = vld [vmem:[#allocation5 + $0x18] sm:$0xff]
    %v5385 = vld [vmem:[#allocation5 + $0x20] sm:$0xff]
    %v5386 = vld [vmem:[#allocation5 + $0x28] sm:$0xff]
    %v5387 = vld [vmem:[#allocation5 + $0x30] sm:$0xff]
    %v5388 = vld [vmem:[#allocation5 + $0x38] sm:$0xff]
    %v5389 = vld [vmem:[#allocation5 + $0x40] sm:$0xff]
    %v5390 = vld [vmem:[#allocation5 + $0x48] sm:$0xff]
    %v5391 = vld [vmem:[#allocation5 + $0x50] sm:$0xff]
    %v5392 = vld [vmem:[#allocation5 + $0x58] sm:$0xff]
    %v5393 = vld [vmem:[#allocation5 + $0x60] sm:$0xff]
    %v5394 = vld [vmem:[#allocation5 + $0x68] sm:$0xff]
    %v5395 = vld [vmem:[#allocation5 + $0x70] sm:$0xff]
    %v5396 = vld [vmem:[#allocation5 + $0x78] sm:$0xff]
    %v5397 = vld [vmem:[#allocation5 + $0x80] sm:$0xff]
    %v5398 = vld [vmem:[#allocation5 + $0x88] sm:$0xff]
    %v5399 = vld [vmem:[#allocation5 + $0x90] sm:$0xff]
    %v5400 = vld [vmem:[#allocation5 + $0x98] sm:$0xff]
    %v5401 = vld [vmem:[#allocation5 + $0xa0] sm:$0xff]
    %v5402 = vld [vmem:[#allocation5 + $0xa8] sm:$0xff]
    %v5403 = vld [vmem:[#allocation5 + $0xb0] sm:$0xff]
    %v5404 = vld [vmem:[#allocation5 + $0xb8] sm:$0xff]
    %v5405 = vld [vmem:[#allocation5 + $0xc0] sm:$0xff]
    %v5406 = vld [vmem:[#allocation5 + $0xc8] sm:$0xff]
    %v5407 = vld [vmem:[#allocation5 + $0xd0] sm:$0xff]
    %v5408 = vld [vmem:[#allocation5 + $0xd8] sm:$0xff]
    %v5409 = vld [vmem:[#allocation5 + $0xe0] sm:$0xff]
    %v5410 = vld [vmem:[#allocation5 + $0xe8] sm:$0xff]
    %v5411 = vld [vmem:[#allocation5 + $0xf0] sm:$0xff]
    %v5412 = vld [vmem:[#allocation5 + $0xf8] sm:$0xff]
    %v5445 = vunpack.c.l.b16 %v5381
    %v5446 = vunpack.c.h.b16 %v5381
    %v5447 = vunpack.c.l.b16 %v5382
    %v5448 = vunpack.c.h.b16 %v5382
    %v5449 = vunpack.c.l.b16 %v5383
    %v5450 = vunpack.c.h.b16 %v5383
    %v5451 = vunpack.c.l.b16 %v5384
    %v5452 = vunpack.c.h.b16 %v5384
    %v5453 = vunpack.c.l.b16 %v5385
    %v5454 = vunpack.c.h.b16 %v5385
    %v5455 = vunpack.c.l.b16 %v5386
    %v5456 = vunpack.c.h.b16 %v5386
    %v5457 = vunpack.c.l.b16 %v5387
    %v5458 = vunpack.c.h.b16 %v5387
    %v5459 = vunpack.c.l.b16 %v5388
    %v5460 = vunpack.c.h.b16 %v5388
    %v5461 = vunpack.c.l.b16 %v5389
    %v5462 = vunpack.c.h.b16 %v5389
    %v5463 = vunpack.c.l.b16 %v5390
    %v5464 = vunpack.c.h.b16 %v5390
    %v5465 = vunpack.c.l.b16 %v5391
    %v5466 = vunpack.c.h.b16 %v5391
    %v5467 = vunpack.c.l.b16 %v5392
    %v5468 = vunpack.c.h.b16 %v5392
    %v5469 = vunpack.c.l.b16 %v5393
    %v5470 = vunpack.c.h.b16 %v5393
    %v5471 = vunpack.c.l.b16 %v5394
    %v5472 = vunpack.c.h.b16 %v5394
    %v5473 = vunpack.c.l.b16 %v5395
    %v5474 = vunpack.c.h.b16 %v5395
    %v5475 = vunpack.c.l.b16 %v5396
    %v5476 = vunpack.c.h.b16 %v5396
    %v5477 = vunpack.c.l.b16 %v5397
    %v5478 = vunpack.c.h.b16 %v5397
    %v5479 = vunpack.c.l.b16 %v5398
    %v5480 = vunpack.c.h.b16 %v5398
    %v5481 = vunpack.c.l.b16 %v5399
    %v5482 = vunpack.c.h.b16 %v5399
    %v5483 = vunpack.c.l.b16 %v5400
    %v5484 = vunpack.c.h.b16 %v5400
    %v5485 = vunpack.c.l.b16 %v5401
    %v5486 = vunpack.c.h.b16 %v5401
    %v5487 = vunpack.c.l.b16 %v5402
    %v5488 = vunpack.c.h.b16 %v5402
    %v5489 = vunpack.c.l.b16 %v5403
    %v5490 = vunpack.c.h.b16 %v5403
    %v5491 = vunpack.c.l.b16 %v5404
    %v5492 = vunpack.c.h.b16 %v5404
    %v5493 = vunpack.c.l.b16 %v5405
    %v5494 = vunpack.c.h.b16 %v5405
    %v5495 = vunpack.c.l.b16 %v5406
    %v5496 = vunpack.c.h.b16 %v5406
    %v5497 = vunpack.c.l.b16 %v5407
    %v5498 = vunpack.c.h.b16 %v5407
    %v5499 = vunpack.c.l.b16 %v5408
    %v5500 = vunpack.c.h.b16 %v5408
    %v5501 = vunpack.c.l.b16 %v5409
    %v5502 = vunpack.c.h.b16 %v5409
    %v5503 = vunpack.c.l.b16 %v5410
    %v5504 = vunpack.c.h.b16 %v5410
    %v5505 = vunpack.c.l.b16 %v5411
    %v5506 = vunpack.c.h.b16 %v5411
    %v5507 = vunpack.c.l.b16 %v5412
    %v5508 = vunpack.c.h.b16 %v5412
    %v5509 = vpack.c.b16 %v5449, %v5445
    %v5510 = vpack.c.b16 %v5450, %v5446
    %v5511 = vpack.c.b16 %v5451, %v5447
    %v5512 = vpack.c.b16 %v5452, %v5448
    %v5513 = vpack.c.b16 %v5457, %v5453
    %v5514 = vpack.c.b16 %v5458, %v5454
    %v5515 = vpack.c.b16 %v5459, %v5455
    %v5516 = vpack.c.b16 %v5460, %v5456
    %v5517 = vpack.c.b16 %v5465, %v5461
    %v5518 = vpack.c.b16 %v5466, %v5462
    %v5519 = vpack.c.b16 %v5467, %v5463
    %v5520 = vpack.c.b16 %v5468, %v5464
    %v5521 = vpack.c.b16 %v5473, %v5469
    %v5522 = vpack.c.b16 %v5474, %v5470
    %v5523 = vpack.c.b16 %v5475, %v5471
    %v5524 = vpack.c.b16 %v5476, %v5472
    %v5525 = vpack.c.b16 %v5481, %v5477
    %v5526 = vpack.c.b16 %v5482, %v5478
    %v5527 = vpack.c.b16 %v5483, %v5479
    %v5528 = vpack.c.b16 %v5484, %v5480
    %v5529 = vpack.c.b16 %v5489, %v5485
    %v5530 = vpack.c.b16 %v5490, %v5486
    %v5531 = vpack.c.b16 %v5491, %v5487
    %v5532 = vpack.c.b16 %v5492, %v5488
    %v5533 = vpack.c.b16 %v5497, %v5493
    %v5534 = vpack.c.b16 %v5498, %v5494
    %v5535 = vpack.c.b16 %v5499, %v5495
    %v5536 = vpack.c.b16 %v5500, %v5496
    %v5537 = vpack.c.b16 %v5505, %v5501
    %v5538 = vpack.c.b16 %v5506, %v5502
    %v5539 = vpack.c.b16 %v5507, %v5503
    %v5540 = vpack.c.b16 %v5508, %v5504
    %5573 = vmatprep.subr.bf16.mxu0 %v5538
    %5574 = vmatpush1.bf16.msra.mxu0 %v5537
    %5575 = vmatprep.subr.bf16.mxu0 %v5534
    %5576 = vmatpush1.bf16.msra.mxu0 %v5533
    %5577 = vmatprep.subr.bf16.mxu0 %v5530
    %5578 = vmatpush1.bf16.msra.mxu0 %v5529
    %5579 = vmatprep.subr.bf16.mxu0 %v5526
    %5580 = vmatpush1.bf16.msra.mxu0 %v5525
    %5581 = vmatprep.subr.bf16.mxu0 %v5522
    %5582 = vmatpush1.bf16.msra.mxu0 %v5521
    %5583 = vmatprep.subr.bf16.mxu0 %v5518
    %5584 = vmatpush1.bf16.msra.mxu0 %v5517
    %5585 = vmatprep.subr.bf16.mxu0 %v5514
    %5586 = vmatpush1.bf16.msra.mxu0 %v5513
    %5587 = vmatprep.subr.bf16.mxu0 %v5510
    %5588 = vmatpush1.bf16.msra.mxu0 %v5509
    %5589 = vmatprep.subr.bf16.mxu0 0
    %5590 = vmatpush2.bf16.msra.mxu0 0
    %5591 = vmatprep.subr.bf16.mxu0 0
    %5592 = vmatpush2.bf16.msra.mxu0 0
    %5593 = vmatprep.subr.bf16.mxu0 0
    %5594 = vmatpush2.bf16.msra.mxu0 0
    %5595 = vmatprep.subr.bf16.mxu0 0
    %5596 = vmatpush2.bf16.msra.mxu0 0
    %5597 = vmatprep.subr.bf16.mxu0 0
    %5598 = vmatpush2.bf16.msra.mxu0 0
    %5599 = vmatprep.subr.bf16.mxu0 0
    %5600 = vmatpush2.bf16.msra.mxu0 0
    %5601 = vmatprep.subr.bf16.mxu0 0
    %5602 = vmatpush2.bf16.msra.mxu0 0
    %5603 = vmatprep.subr.bf16.mxu0 0
    %5604 = vmatpush2.bf16.msra.mxu0 0
    %5605 = vmatprep.mubr.bf16.mxu0 0
    %5606 = vmatmul.mubr.bf16.gmra.mxu0 %v5375
    %v5607 = vpop.f32.mrf.mxu0
    %v5608 = vadd.f32 0.0, %v5607
    %v5609 = vpop.f32.mrf.mxu0
    %v5610 = vadd.f32 0.0, %v5609
    %v5611 = vpop.f32.mrf.mxu0
    %v5612 = vpop.f32.mrf.mxu0
    %5613 = vdwg.mxu0
    %5614 = vmatprep.subr.bf16.mxu0 %v5540
    %5615 = vmatpush1.bf16.msra.mxu0 %v5539
    %5616 = vmatprep.subr.bf16.mxu0 %v5536
    %5617 = vmatpush1.bf16.msra.mxu0 %v5535
    %5618 = vmatprep.subr.bf16.mxu0 %v5532
    %5619 = vmatpush1.bf16.msra.mxu0 %v5531
    %5620 = vmatprep.subr.bf16.mxu0 %v5528
    %5621 = vmatpush1.bf16.msra.mxu0 %v5527
    %5622 = vmatprep.subr.bf16.mxu0 %v5524
    %5623 = vmatpush1.bf16.msra.mxu0 %v5523
    %5624 = vmatprep.subr.bf16.mxu0 %v5520
    %5625 = vmatpush1.bf16.msra.mxu0 %v5519
    %5626 = vmatprep.subr.bf16.mxu0 %v5516
    %5627 = vmatpush1.bf16.msra.mxu0 %v5515
    %5628 = vmatprep.subr.bf16.mxu0 %v5512
    %5629 = vmatpush1.bf16.msra.mxu0 %v5511
    %5630 = vmatprep.subr.bf16.mxu0 0
    %5631 = vmatpush2.bf16.msra.mxu0 0
    %5632 = vmatprep.subr.bf16.mxu0 0
    %5633 = vmatpush2.bf16.msra.mxu0 0
    %5634 = vmatprep.subr.bf16.mxu0 0
    %5635 = vmatpush2.bf16.msra.mxu0 0
    %5636 = vmatprep.subr.bf16.mxu0 0
    %5637 = vmatpush2.bf16.msra.mxu0 0
    %5638 = vmatprep.subr.bf16.mxu0 0
    %5639 = vmatpush2.bf16.msra.mxu0 0
    %5640 = vmatprep.subr.bf16.mxu0 0
    %5641 = vmatpush2.bf16.msra.mxu0 0
    %5642 = vmatprep.subr.bf16.mxu0 0
    %5643 = vmatpush2.bf16.msra.mxu0 0
    %5644 = vmatprep.subr.bf16.mxu0 0
    %5645 = vmatpush2.bf16.msra.mxu0 0
    %5646 = vmatprep.mubr.bf16.mxu0 0
    %5647 = vmatmul.mubr.bf16.gmra.mxu0 %v5375
    %v5648 = vpop.f32.mrf.mxu0
    %v5649 = vadd.f32 0.0, %v5648
    %v5650 = vpop.f32.mrf.mxu0
    %v5651 = vadd.f32 0.0, %v5650
    %v5652 = vpop.f32.mrf.mxu0
    %v5653 = vpop.f32.mrf.mxu0
    %5654 = vdwg.mxu0
    %v5655 = vadd.f32 %v5377, %v5608
    %v5656 = vadd.f32 %v5378, %v5610
    %v5657 = vadd.f32 %v5379, %v5649
    %v5658 = vadd.f32 %v5380, %v5651
    %v5659 = vxor.u32 %v5655, 2147483648
    %v5660 = vmul.f32 %v5659, 1.442695
    %v5661 = vpow.pop %v5660
    %v5662 = vadd.f32 %v5661, 1.0
    %v5663 = vrcp.pop %v5662
    %v5664 = vmul.f32 1.0, %v5663
    %v5665 = vxor.u32 %v5656, 2147483648
    %v5666 = vmul.f32 %v5665, 1.442695
    %v5667 = vpow.pop %v5666
    %v5668 = vadd.f32 %v5667, 1.0
    %v5669 = vrcp.pop %v5668
    %v5670 = vmul.f32 1.0, %v5669
    %v5671 = vtanh.pop %v5657
    %v5672 = vxor.u32 %v5658, 2147483648
    %v5673 = vmul.f32 %v5672, 1.442695
    %v5674 = vpow.pop %v5673
    %v5675 = vadd.f32 %v5674, 1.0
    %v5676 = vrcp.pop %v5675
    %v5677 = vmul.f32 1.0, %v5676
    %v5678 = vmul.f32 %v5670, %v5372
    %v5679 = vmul.f32 %v5664, %v5671
    %v5680 = vadd.f32 %v5678, %v5679
    %v5681 = vtanh.pop %v5680
    %v5682 = vmul.f32 %v5677, %v5681
    %v5683 = vpack.c.bf16 %v5682, %v5682
    %5684 = vst [vmem:[%s2783] sm:$0xf] %v5683
    %v5685 = vld [vmem:[%s2787] sm:$0xff]
    %v5686 = vld [vmem:[%s2787 + $0x8] sm:$0xff]
    %v5687 = vld [vmem:[%s2787 + $0x10] sm:$0xff]
    %v5688 = vld [vmem:[%s2787 + $0x18] sm:$0xff]
    %v5689 = vld [vmem:[#allocation5] sm:$0xff]
    %v5690 = vld [vmem:[#allocation5 + $0x8] sm:$0xff]
    %v5691 = vld [vmem:[#allocation5 + $0x10] sm:$0xff]
    %v5692 = vld [vmem:[#allocation5 + $0x18] sm:$0xff]
    %v5693 = vld [vmem:[#allocation5 + $0x20] sm:$0xff]
    %v5694 = vld [vmem:[#allocation5 + $0x28] sm:$0xff]
    %v5695 = vld [vmem:[#allocation5 + $0x30] sm:$0xff]
    %v5696 = vld [vmem:[#allocation5 + $0x38] sm:$0xff]
    %v5697 = vld [vmem:[#allocation5 + $0x40] sm:$0xff]
    %v5698 = vld [vmem:[#allocation5 + $0x48] sm:$0xff]
    %v5699 = vld [vmem:[#allocation5 + $0x50] sm:$0xff]
    %v5700 = vld [vmem:[#allocation5 + $0x58] sm:$0xff]
    %v5701 = vld [vmem:[#allocation5 + $0x60] sm:$0xff]
    %v5702 = vld [vmem:[#allocation5 + $0x68] sm:$0xff]
    %v5703 = vld [vmem:[#allocation5 + $0x70] sm:$0xff]
    %v5704 = vld [vmem:[#allocation5 + $0x78] sm:$0xff]
    %v5705 = vld [vmem:[#allocation5 + $0x80] sm:$0xff]
    %v5706 = vld [vmem:[#allocation5 + $0x88] sm:$0xff]
    %v5707 = vld [vmem:[#allocation5 + $0x90] sm:$0xff]
    %v5708 = vld [vmem:[#allocation5 + $0x98] sm:$0xff]
    %v5709 = vld [vmem:[#allocation5 + $0xa0] sm:$0xff]
    %v5710 = vld [vmem:[#allocation5 + $0xa8] sm:$0xff]
    %v5711 = vld [vmem:[#allocation5 + $0xb0] sm:$0xff]
    %v5712 = vld [vmem:[#allocation5 + $0xb8] sm:$0xff]
    %v5713 = vld [vmem:[#allocation5 + $0xc0] sm:$0xff]
    %v5714 = vld [vmem:[#allocation5 + $0xc8] sm:$0xff]
    %v5715 = vld [vmem:[#allocation5 + $0xd0] sm:$0xff]
    %v5716 = vld [vmem:[#allocation5 + $0xd8] sm:$0xff]
    %v5717 = vld [vmem:[#allocation5 + $0xe0] sm:$0xff]
    %v5718 = vld [vmem:[#allocation5 + $0xe8] sm:$0xff]
    %v5719 = vld [vmem:[#allocation5 + $0xf0] sm:$0xff]
    %v5720 = vld [vmem:[#allocation5 + $0xf8] sm:$0xff]
    %v5753 = vunpack.c.l.b16 %v5689
    %v5754 = vunpack.c.h.b16 %v5689
    %v5755 = vunpack.c.l.b16 %v5690
    %v5756 = vunpack.c.h.b16 %v5690
    %v5757 = vunpack.c.l.b16 %v5691
    %v5758 = vunpack.c.h.b16 %v5691
    %v5759 = vunpack.c.l.b16 %v5692
    %v5760 = vunpack.c.h.b16 %v5692
    %v5761 = vunpack.c.l.b16 %v5693
    %v5762 = vunpack.c.h.b16 %v5693
    %v5763 = vunpack.c.l.b16 %v5694
    %v5764 = vunpack.c.h.b16 %v5694
    %v5765 = vunpack.c.l.b16 %v5695
    %v5766 = vunpack.c.h.b16 %v5695
    %v5767 = vunpack.c.l.b16 %v5696
    %v5768 = vunpack.c.h.b16 %v5696
    %v5769 = vunpack.c.l.b16 %v5697
    %v5770 = vunpack.c.h.b16 %v5697
    %v5771 = vunpack.c.l.b16 %v5698
    %v5772 = vunpack.c.h.b16 %v5698
    %v5773 = vunpack.c.l.b16 %v5699
    %v5774 = vunpack.c.h.b16 %v5699
    %v5775 = vunpack.c.l.b16 %v5700
    %v5776 = vunpack.c.h.b16 %v5700
    %v5777 = vunpack.c.l.b16 %v5701
    %v5778 = vunpack.c.h.b16 %v5701
    %v5779 = vunpack.c.l.b16 %v5702
    %v5780 = vunpack.c.h.b16 %v5702
    %v5781 = vunpack.c.l.b16 %v5703
    %v5782 = vunpack.c.h.b16 %v5703
    %v5783 = vunpack.c.l.b16 %v5704
    %v5784 = vunpack.c.h.b16 %v5704
    %v5785 = vunpack.c.l.b16 %v5705
    %v5786 = vunpack.c.h.b16 %v5705
    %v5787 = vunpack.c.l.b16 %v5706
    %v5788 = vunpack.c.h.b16 %v5706
    %v5789 = vunpack.c.l.b16 %v5707
    %v5790 = vunpack.c.h.b16 %v5707
    %v5791 = vunpack.c.l.b16 %v5708
    %v5792 = vunpack.c.h.b16 %v5708
    %v5793 = vunpack.c.l.b16 %v5709
    %v5794 = vunpack.c.h.b16 %v5709
    %v5795 = vunpack.c.l.b16 %v5710
    %v5796 = vunpack.c.h.b16 %v5710
    %v5797 = vunpack.c.l.b16 %v5711
    %v5798 = vunpack.c.h.b16 %v5711
    %v5799 = vunpack.c.l.b16 %v5712
    %v5800 = vunpack.c.h.b16 %v5712
    %v5801 = vunpack.c.l.b16 %v5713
    %v5802 = vunpack.c.h.b16 %v5713
    %v5803 = vunpack.c.l.b16 %v5714
    %v5804 = vunpack.c.h.b16 %v5714
    %v5805 = vunpack.c.l.b16 %v5715
    %v5806 = vunpack.c.h.b16 %v5715
    %v5807 = vunpack.c.l.b16 %v5716
    %v5808 = vunpack.c.h.b16 %v5716
    %v5809 = vunpack.c.l.b16 %v5717
    %v5810 = vunpack.c.h.b16 %v5717
    %v5811 = vunpack.c.l.b16 %v5718
    %v5812 = vunpack.c.h.b16 %v5718
    %v5813 = vunpack.c.l.b16 %v5719
    %v5814 = vunpack.c.h.b16 %v5719
    %v5815 = vunpack.c.l.b16 %v5720
    %v5816 = vunpack.c.h.b16 %v5720
    %v5817 = vpack.c.b16 %v5757, %v5753
    %v5818 = vpack.c.b16 %v5758, %v5754
    %v5819 = vpack.c.b16 %v5759, %v5755
    %v5820 = vpack.c.b16 %v5760, %v5756
    %v5821 = vpack.c.b16 %v5765, %v5761
    %v5822 = vpack.c.b16 %v5766, %v5762
    %v5823 = vpack.c.b16 %v5767, %v5763
    %v5824 = vpack.c.b16 %v5768, %v5764
    %v5825 = vpack.c.b16 %v5773, %v5769
    %v5826 = vpack.c.b16 %v5774, %v5770
    %v5827 = vpack.c.b16 %v5775, %v5771
    %v5828 = vpack.c.b16 %v5776, %v5772
    %v5829 = vpack.c.b16 %v5781, %v5777
    %v5830 = vpack.c.b16 %v5782, %v5778
    %v5831 = vpack.c.b16 %v5783, %v5779
    %v5832 = vpack.c.b16 %v5784, %v5780
    %v5833 = vpack.c.b16 %v5789, %v5785
    %v5834 = vpack.c.b16 %v5790, %v5786
    %v5835 = vpack.c.b16 %v5791, %v5787
    %v5836 = vpack.c.b16 %v5792, %v5788
    %v5837 = vpack.c.b16 %v5797, %v5793
    %v5838 = vpack.c.b16 %v5798, %v5794
    %v5839 = vpack.c.b16 %v5799, %v5795
    %v5840 = vpack.c.b16 %v5800, %v5796
    %v5841 = vpack.c.b16 %v5805, %v5801
    %v5842 = vpack.c.b16 %v5806, %v5802
    %v5843 = vpack.c.b16 %v5807, %v5803
    %v5844 = vpack.c.b16 %v5808, %v5804
    %v5845 = vpack.c.b16 %v5813, %v5809
    %v5846 = vpack.c.b16 %v5814, %v5810
    %v5847 = vpack.c.b16 %v5815, %v5811
    %v5848 = vpack.c.b16 %v5816, %v5812
    %5881 = vmatprep.subr.bf16.mxu0 %v5846
    %5882 = vmatpush1.bf16.msra.mxu0 %v5845
    %5883 = vmatprep.subr.bf16.mxu0 %v5842
    %5884 = vmatpush1.bf16.msra.mxu0 %v5841
    %5885 = vmatprep.subr.bf16.mxu0 %v5838
    %5886 = vmatpush1.bf16.msra.mxu0 %v5837
    %5887 = vmatprep.subr.bf16.mxu0 %v5834
    %5888 = vmatpush1.bf16.msra.mxu0 %v5833
    %5889 = vmatprep.subr.bf16.mxu0 %v5830
    %5890 = vmatpush1.bf16.msra.mxu0 %v5829
    %5891 = vmatprep.subr.bf16.mxu0 %v5826
    %5892 = vmatpush1.bf16.msra.mxu0 %v5825
    %5893 = vmatprep.subr.bf16.mxu0 %v5822
    %5894 = vmatpush1.bf16.msra.mxu0 %v5821
    %5895 = vmatprep.subr.bf16.mxu0 %v5818
    %5896 = vmatpush1.bf16.msra.mxu0 %v5817
    %5897 = vmatprep.subr.bf16.mxu0 0
    %5898 = vmatpush2.bf16.msra.mxu0 0
    %5899 = vmatprep.subr.bf16.mxu0 0
    %5900 = vmatpush2.bf16.msra.mxu0 0
    %5901 = vmatprep.subr.bf16.mxu0 0
    %5902 = vmatpush2.bf16.msra.mxu0 0
    %5903 = vmatprep.subr.bf16.mxu0 0
    %5904 = vmatpush2.bf16.msra.mxu0 0
    %5905 = vmatprep.subr.bf16.mxu0 0
    %5906 = vmatpush2.bf16.msra.mxu0 0
    %5907 = vmatprep.subr.bf16.mxu0 0
    %5908 = vmatpush2.bf16.msra.mxu0 0
    %5909 = vmatprep.subr.bf16.mxu0 0
    %5910 = vmatpush2.bf16.msra.mxu0 0
    %5911 = vmatprep.subr.bf16.mxu0 0
    %5912 = vmatpush2.bf16.msra.mxu0 0
    %5913 = vmatprep.mubr.bf16.mxu0 0
    %5914 = vmatmul.mubr.bf16.gmra.mxu0 %v5683
    %v5915 = vpop.f32.mrf.mxu0
    %v5916 = vadd.f32 0.0, %v5915
    %v5917 = vpop.f32.mrf.mxu0
    %v5918 = vadd.f32 0.0, %v5917
    %v5919 = vpop.f32.mrf.mxu0
    %v5920 = vpop.f32.mrf.mxu0
    %5921 = vdwg.mxu0
    %5922 = vmatprep.subr.bf16.mxu0 %v5848
    %5923 = vmatpush1.bf16.msra.mxu0 %v5847
    %5924 = vmatprep.subr.bf16.mxu0 %v5844
    %5925 = vmatpush1.bf16.msra.mxu0 %v5843
    %5926 = vmatprep.subr.bf16.mxu0 %v5840
    %5927 = vmatpush1.bf16.msra.mxu0 %v5839
    %5928 = vmatprep.subr.bf16.mxu0 %v5836
    %5929 = vmatpush1.bf16.msra.mxu0 %v5835
    %5930 = vmatprep.subr.bf16.mxu0 %v5832
    %5931 = vmatpush1.bf16.msra.mxu0 %v5831
    %5932 = vmatprep.subr.bf16.mxu0 %v5828
    %5933 = vmatpush1.bf16.msra.mxu0 %v5827
    %5934 = vmatprep.subr.bf16.mxu0 %v5824
    %5935 = vmatpush1.bf16.msra.mxu0 %v5823
    %5936 = vmatprep.subr.bf16.mxu0 %v5820
    %5937 = vmatpush1.bf16.msra.mxu0 %v5819
    %5938 = vmatprep.subr.bf16.mxu0 0
    %5939 = vmatpush2.bf16.msra.mxu0 0
    %5940 = vmatprep.subr.bf16.mxu0 0
    %5941 = vmatpush2.bf16.msra.mxu0 0
    %5942 = vmatprep.subr.bf16.mxu0 0
    %5943 = vmatpush2.bf16.msra.mxu0 0
    %5944 = vmatprep.subr.bf16.mxu0 0
    %5945 = vmatpush2.bf16.msra.mxu0 0
    %5946 = vmatprep.subr.bf16.mxu0 0
    %5947 = vmatpush2.bf16.msra.mxu0 0
    %5948 = vmatprep.subr.bf16.mxu0 0
    %5949 = vmatpush2.bf16.msra.mxu0 0
    %5950 = vmatprep.subr.bf16.mxu0 0
    %5951 = vmatpush2.bf16.msra.mxu0 0
    %5952 = vmatprep.subr.bf16.mxu0 0
    %5953 = vmatpush2.bf16.msra.mxu0 0
    %5954 = vmatprep.mubr.bf16.mxu0 0
    %5955 = vmatmul.mubr.bf16.gmra.mxu0 %v5683
    %v5956 = vpop.f32.mrf.mxu0
    %v5957 = vadd.f32 0.0, %v5956
    %v5958 = vpop.f32.mrf.mxu0
    %v5959 = vadd.f32 0.0, %v5958
    %v5960 = vpop.f32.mrf.mxu0
    %v5961 = vpop.f32.mrf.mxu0
    %5962 = vdwg.mxu0
    %v5963 = vadd.f32 %v5685, %v5916
    %v5964 = vadd.f32 %v5686, %v5918
    %v5965 = vadd.f32 %v5687, %v5957
    %v5966 = vadd.f32 %v5688, %v5959
    %v5967 = vxor.u32 %v5963, 2147483648
    %v5968 = vmul.f32 %v5967, 1.442695
    %v5969 = vpow.pop %v5968
    %v5970 = vadd.f32 %v5969, 1.0
    %v5971 = vrcp.pop %v5970
    %v5972 = vmul.f32 1.0, %v5971
    %v5973 = vxor.u32 %v5964, 2147483648
    %v5974 = vmul.f32 %v5973, 1.442695
    %v5975 = vpow.pop %v5974
    %v5976 = vadd.f32 %v5975, 1.0
    %v5977 = vrcp.pop %v5976
    %v5978 = vmul.f32 1.0, %v5977
    %v5979 = vtanh.pop %v5965
    %v5980 = vxor.u32 %v5966, 2147483648
    %v5981 = vmul.f32 %v5980, 1.442695
    %v5982 = vpow.pop %v5981
    %v5983 = vadd.f32 %v5982, 1.0
    %v5984 = vrcp.pop %v5983
    %v5985 = vmul.f32 1.0, %v5984
    %v5986 = vmul.f32 %v5978, %v5680
    %v5987 = vmul.f32 %v5972, %v5979
    %v5988 = vadd.f32 %v5986, %v5987
    %v5989 = vtanh.pop %v5988
    %v5990 = vmul.f32 %v5985, %v5989
    %v5991 = vpack.c.bf16 %v5990, %v5990
    %5992 = vst [vmem:[%s3095] sm:$0xf] %v5991
    %v5993 = vld [vmem:[#allocation3] sm:$0xf]
    %v5994 = vld [vmem:[#allocation3 + $0x4] sm:$0xf]
    %v5995 = vld [vmem:[#allocation3 + $0x8] sm:$0xf]
    %v5996 = vld [vmem:[#allocation3 + $0xc] sm:$0xf]
    %v5997 = vld [vmem:[#allocation3 + $0x10] sm:$0xf]
    %v5998 = vld [vmem:[#allocation3 + $0x14] sm:$0xf]
    %v5999 = vld [vmem:[#allocation3 + $0x18] sm:$0xf]
    %v6000 = vld [vmem:[#allocation3 + $0x1c] sm:$0xf]
    %s6001 = scalar_lea.vmem [#allocation4], 256
    %v6002 = vld [vmem:[%s6001] sm:$0xff]
    %v6003 = vld [vmem:[%s6001 + $0x8] sm:$0xff]
    %v6004 = vld [vmem:[%s6001 + $0x10] sm:$0xff]
    %v6005 = vld [vmem:[%s6001 + $0x18] sm:$0xff]
    %v6006 = vld [vmem:[%s6001 + $0x20] sm:$0xff]
    %v6007 = vld [vmem:[%s6001 + $0x28] sm:$0xff]
    %v6008 = vld [vmem:[%s6001 + $0x30] sm:$0xff]
    %v6009 = vld [vmem:[%s6001 + $0x38] sm:$0xff]
    %v6010 = vld [vmem:[%s6001 + $0x40] sm:$0xff]
    %v6011 = vld [vmem:[%s6001 + $0x48] sm:$0xff]
    %v6012 = vld [vmem:[%s6001 + $0x50] sm:$0xff]
    %v6013 = vld [vmem:[%s6001 + $0x58] sm:$0xff]
    %v6014 = vld [vmem:[%s6001 + $0x60] sm:$0xff]
    %v6015 = vld [vmem:[%s6001 + $0x68] sm:$0xff]
    %v6016 = vld [vmem:[%s6001 + $0x70] sm:$0xff]
    %v6017 = vld [vmem:[%s6001 + $0x78] sm:$0xff]
    %v6018 = vld [vmem:[%s6001 + $0x80] sm:$0xff]
    %v6019 = vld [vmem:[%s6001 + $0x88] sm:$0xff]
    %v6020 = vld [vmem:[%s6001 + $0x90] sm:$0xff]
    %v6021 = vld [vmem:[%s6001 + $0x98] sm:$0xff]
    %v6022 = vld [vmem:[%s6001 + $0xa0] sm:$0xff]
    %v6023 = vld [vmem:[%s6001 + $0xa8] sm:$0xff]
    %v6024 = vld [vmem:[%s6001 + $0xb0] sm:$0xff]
    %v6025 = vld [vmem:[%s6001 + $0xb8] sm:$0xff]
    %v6026 = vld [vmem:[%s6001 + $0xc0] sm:$0xff]
    %v6027 = vld [vmem:[%s6001 + $0xc8] sm:$0xff]
    %v6028 = vld [vmem:[%s6001 + $0xd0] sm:$0xff]
    %v6029 = vld [vmem:[%s6001 + $0xd8] sm:$0xff]
    %v6030 = vld [vmem:[%s6001 + $0xe0] sm:$0xff]
    %v6031 = vld [vmem:[%s6001 + $0xe8] sm:$0xff]
    %v6032 = vld [vmem:[%s6001 + $0xf0] sm:$0xff]
    %v6033 = vld [vmem:[%s6001 + $0xf8] sm:$0xff]
    %s6034 = scalar_lea.vmem %s3, 2
    %v6035 = vld [vmem:[%s6034] ss:$4 sm:$0xf]
    %v6037 = vlaneseq
    %v6038 = vshrl.u32 %v6037, 7
    %v6039 = vsub.s32 0, %v6038
    %v6040 = vrot.slane %v6035, %v6039
    %v6041 = vlaneseq
    %v6042 = vshrl.u32 %v6041, 7
    %v6043 = vsub.s32 1, %v6042
    %v6044 = vrot.slane %v6035, %v6043
    %v6045 = vlaneseq
    %v6046 = vshrl.u32 %v6045, 7
    %v6047 = vsub.s32 2, %v6046
    %v6048 = vrot.slane %v6035, %v6047
    %v6049 = vlaneseq
    %v6050 = vshrl.u32 %v6049, 7
    %v6051 = vsub.s32 3, %v6050
    %v6052 = vrot.slane %v6035, %v6051
    %v6065 = vunpack.c.l.b16 %v5993
    %v6066 = vunpack.c.l.b16 %v5994
    %v6067 = vunpack.c.l.b16 %v5995
    %v6068 = vunpack.c.l.b16 %v5996
    %v6069 = vunpack.c.l.b16 %v5997
    %v6070 = vunpack.c.l.b16 %v5998
    %v6071 = vunpack.c.l.b16 %v5999
    %v6072 = vunpack.c.l.b16 %v6000
    %v6073 = vpack.c.b16 %v6066, %v6065
    %v6074 = vpack.c.b16 %v6068, %v6067
    %v6075 = vpack.c.b16 %v6070, %v6069
    %v6076 = vpack.c.b16 %v6072, %v6071
    %v6113 = vunpack.c.l.b16 %v6002
    %v6114 = vunpack.c.h.b16 %v6002
    %v6115 = vunpack.c.l.b16 %v6003
    %v6116 = vunpack.c.h.b16 %v6003
    %v6117 = vunpack.c.l.b16 %v6004
    %v6118 = vunpack.c.h.b16 %v6004
    %v6119 = vunpack.c.l.b16 %v6005
    %v6120 = vunpack.c.h.b16 %v6005
    %v6121 = vunpack.c.l.b16 %v6006
    %v6122 = vunpack.c.h.b16 %v6006
    %v6123 = vunpack.c.l.b16 %v6007
    %v6124 = vunpack.c.h.b16 %v6007
    %v6125 = vunpack.c.l.b16 %v6008
    %v6126 = vunpack.c.h.b16 %v6008
    %v6127 = vunpack.c.l.b16 %v6009
    %v6128 = vunpack.c.h.b16 %v6009
    %v6129 = vunpack.c.l.b16 %v6010
    %v6130 = vunpack.c.h.b16 %v6010
    %v6131 = vunpack.c.l.b16 %v6011
    %v6132 = vunpack.c.h.b16 %v6011
    %v6133 = vunpack.c.l.b16 %v6012
    %v6134 = vunpack.c.h.b16 %v6012
    %v6135 = vunpack.c.l.b16 %v6013
    %v6136 = vunpack.c.h.b16 %v6013
    %v6137 = vunpack.c.l.b16 %v6014
    %v6138 = vunpack.c.h.b16 %v6014
    %v6139 = vunpack.c.l.b16 %v6015
    %v6140 = vunpack.c.h.b16 %v6015
    %v6141 = vunpack.c.l.b16 %v6016
    %v6142 = vunpack.c.h.b16 %v6016
    %v6143 = vunpack.c.l.b16 %v6017
    %v6144 = vunpack.c.h.b16 %v6017
    %v6145 = vunpack.c.l.b16 %v6018
    %v6146 = vunpack.c.h.b16 %v6018
    %v6147 = vunpack.c.l.b16 %v6019
    %v6148 = vunpack.c.h.b16 %v6019
    %v6149 = vunpack.c.l.b16 %v6020
    %v6150 = vunpack.c.h.b16 %v6020
    %v6151 = vunpack.c.l.b16 %v6021
    %v6152 = vunpack.c.h.b16 %v6021
    %v6153 = vunpack.c.l.b16 %v6022
    %v6154 = vunpack.c.h.b16 %v6022
    %v6155 = vunpack.c.l.b16 %v6023
    %v6156 = vunpack.c.h.b16 %v6023
    %v6157 = vunpack.c.l.b16 %v6024
    %v6158 = vunpack.c.h.b16 %v6024
    %v6159 = vunpack.c.l.b16 %v6025
    %v6160 = vunpack.c.h.b16 %v6025
    %v6161 = vunpack.c.l.b16 %v6026
    %v6162 = vunpack.c.h.b16 %v6026
    %v6163 = vunpack.c.l.b16 %v6027
    %v6164 = vunpack.c.h.b16 %v6027
    %v6165 = vunpack.c.l.b16 %v6028
    %v6166 = vunpack.c.h.b16 %v6028
    %v6167 = vunpack.c.l.b16 %v6029
    %v6168 = vunpack.c.h.b16 %v6029
    %v6169 = vunpack.c.l.b16 %v6030
    %v6170 = vunpack.c.h.b16 %v6030
    %v6171 = vunpack.c.l.b16 %v6031
    %v6172 = vunpack.c.h.b16 %v6031
    %v6173 = vunpack.c.l.b16 %v6032
    %v6174 = vunpack.c.h.b16 %v6032
    %v6175 = vunpack.c.l.b16 %v6033
    %v6176 = vunpack.c.h.b16 %v6033
    %v6177 = vpack.c.b16 %v6117, %v6113
    %v6178 = vpack.c.b16 %v6118, %v6114
    %v6179 = vpack.c.b16 %v6119, %v6115
    %v6180 = vpack.c.b16 %v6120, %v6116
    %v6181 = vpack.c.b16 %v6125, %v6121
    %v6182 = vpack.c.b16 %v6126, %v6122
    %v6183 = vpack.c.b16 %v6127, %v6123
    %v6184 = vpack.c.b16 %v6128, %v6124
    %v6185 = vpack.c.b16 %v6133, %v6129
    %v6186 = vpack.c.b16 %v6134, %v6130
    %v6187 = vpack.c.b16 %v6135, %v6131
    %v6188 = vpack.c.b16 %v6136, %v6132
    %v6189 = vpack.c.b16 %v6141, %v6137
    %v6190 = vpack.c.b16 %v6142, %v6138
    %v6191 = vpack.c.b16 %v6143, %v6139
    %v6192 = vpack.c.b16 %v6144, %v6140
    %v6193 = vpack.c.b16 %v6149, %v6145
    %v6194 = vpack.c.b16 %v6150, %v6146
    %v6195 = vpack.c.b16 %v6151, %v6147
    %v6196 = vpack.c.b16 %v6152, %v6148
    %v6197 = vpack.c.b16 %v6157, %v6153
    %v6198 = vpack.c.b16 %v6158, %v6154
    %v6199 = vpack.c.b16 %v6159, %v6155
    %v6200 = vpack.c.b16 %v6160, %v6156
    %v6201 = vpack.c.b16 %v6165, %v6161
    %v6202 = vpack.c.b16 %v6166, %v6162
    %v6203 = vpack.c.b16 %v6167, %v6163
    %v6204 = vpack.c.b16 %v6168, %v6164
    %v6205 = vpack.c.b16 %v6173, %v6169
    %v6206 = vpack.c.b16 %v6174, %v6170
    %v6207 = vpack.c.b16 %v6175, %v6171
    %v6208 = vpack.c.b16 %v6176, %v6172
    %6241 = vmatprep.subr.bf16.mxu0 %v6206
    %6242 = vmatpush1.bf16.msra.mxu0 %v6205
    %6243 = vmatprep.subr.bf16.mxu0 %v6202
    %6244 = vmatpush1.bf16.msra.mxu0 %v6201
    %6245 = vmatprep.subr.bf16.mxu0 %v6198
    %6246 = vmatpush1.bf16.msra.mxu0 %v6197
    %6247 = vmatprep.subr.bf16.mxu0 %v6194
    %6248 = vmatpush1.bf16.msra.mxu0 %v6193
    %6249 = vmatprep.subr.bf16.mxu0 %v6190
    %6250 = vmatpush1.bf16.msra.mxu0 %v6189
    %6251 = vmatprep.subr.bf16.mxu0 %v6186
    %6252 = vmatpush1.bf16.msra.mxu0 %v6185
    %6253 = vmatprep.subr.bf16.mxu0 %v6182
    %6254 = vmatpush1.bf16.msra.mxu0 %v6181
    %6255 = vmatprep.subr.bf16.mxu0 %v6178
    %6256 = vmatpush1.bf16.msra.mxu0 %v6177
    %6257 = vmatprep.subr.bf16.mxu0 0
    %6258 = vmatpush2.bf16.msra.mxu0 0
    %6259 = vmatprep.subr.bf16.mxu0 0
    %6260 = vmatpush2.bf16.msra.mxu0 0
    %6261 = vmatprep.subr.bf16.mxu0 0
    %6262 = vmatpush2.bf16.msra.mxu0 0
    %6263 = vmatprep.subr.bf16.mxu0 0
    %6264 = vmatpush2.bf16.msra.mxu0 0
    %6265 = vmatprep.subr.bf16.mxu0 0
    %6266 = vmatpush2.bf16.msra.mxu0 0
    %6267 = vmatprep.subr.bf16.mxu0 0
    %6268 = vmatpush2.bf16.msra.mxu0 0
    %6269 = vmatprep.subr.bf16.mxu0 0
    %6270 = vmatpush2.bf16.msra.mxu0 0
    %6271 = vmatprep.subr.bf16.mxu0 0
    %6272 = vmatpush2.bf16.msra.mxu0 0
    %6273 = vmatprep.mubr.bf16.mxu0 0
    %6274 = vmatmul.mubr.bf16.gmra.mxu0 %v6073
    %v6275 = vpop.f32.mrf.mxu0
    %v6276 = vadd.f32 %v6040, %v6275
    %v6277 = vpop.f32.mrf.mxu0
    %v6278 = vadd.f32 %v6044, %v6277
    %v6279 = vpop.f32.mrf.mxu0
    %v6280 = vadd.f32 %v6040, %v6279
    %v6281 = vpop.f32.mrf.mxu0
    %v6282 = vadd.f32 %v6044, %v6281
    %6283 = vmatprep.mubr.bf16.mxu0 0
    %6284 = vmatmul.mubr.bf16.gmra.mxu0 %v6074
    %v6285 = vpop.f32.mrf.mxu0
    %v6286 = vadd.f32 %v6040, %v6285
    %v6287 = vpop.f32.mrf.mxu0
    %v6288 = vadd.f32 %v6044, %v6287
    %v6289 = vpop.f32.mrf.mxu0
    %v6290 = vadd.f32 %v6040, %v6289
    %v6291 = vpop.f32.mrf.mxu0
    %v6292 = vadd.f32 %v6044, %v6291
    %6293 = vmatprep.mubr.bf16.mxu0 0
    %6294 = vmatmul.mubr.bf16.gmra.mxu0 %v6075
    %v6295 = vpop.f32.mrf.mxu0
    %v6296 = vadd.f32 %v6040, %v6295
    %v6297 = vpop.f32.mrf.mxu0
    %v6298 = vadd.f32 %v6044, %v6297
    %v6299 = vpop.f32.mrf.mxu0
    %v6300 = vadd.f32 %v6040, %v6299
    %v6301 = vpop.f32.mrf.mxu0
    %v6302 = vadd.f32 %v6044, %v6301
    %6303 = vmatprep.mubr.bf16.mxu0 0
    %6304 = vmatmul.mubr.bf16.gmra.mxu0 %v6076
    %v6305 = vpop.f32.mrf.mxu0
    %v6306 = vadd.f32 %v6040, %v6305
    %v6307 = vpop.f32.mrf.mxu0
    %v6308 = vadd.f32 %v6044, %v6307
    %v6309 = vpop.f32.mrf.mxu0
    %v6310 = vadd.f32 %v6040, %v6309
    %v6311 = vpop.f32.mrf.mxu0
    %v6312 = vadd.f32 %v6044, %v6311
    %6313 = vdwg.mxu0
    %6314 = vmatprep.subr.bf16.mxu0 %v6208
    %6315 = vmatpush1.bf16.msra.mxu0 %v6207
    %6316 = vmatprep.subr.bf16.mxu0 %v6204
    %6317 = vmatpush1.bf16.msra.mxu0 %v6203
    %6318 = vmatprep.subr.bf16.mxu0 %v6200
    %6319 = vmatpush1.bf16.msra.mxu0 %v6199
    %6320 = vmatprep.subr.bf16.mxu0 %v6196
    %6321 = vmatpush1.bf16.msra.mxu0 %v6195
    %6322 = vmatprep.subr.bf16.mxu0 %v6192
    %6323 = vmatpush1.bf16.msra.mxu0 %v6191
    %6324 = vmatprep.subr.bf16.mxu0 %v6188
    %6325 = vmatpush1.bf16.msra.mxu0 %v6187
    %6326 = vmatprep.subr.bf16.mxu0 %v6184
    %6327 = vmatpush1.bf16.msra.mxu0 %v6183
    %6328 = vmatprep.subr.bf16.mxu0 %v6180
    %6329 = vmatpush1.bf16.msra.mxu0 %v6179
    %6330 = vmatprep.subr.bf16.mxu0 0
    %6331 = vmatpush2.bf16.msra.mxu0 0
    %6332 = vmatprep.subr.bf16.mxu0 0
    %6333 = vmatpush2.bf16.msra.mxu0 0
    %6334 = vmatprep.subr.bf16.mxu0 0
    %6335 = vmatpush2.bf16.msra.mxu0 0
    %6336 = vmatprep.subr.bf16.mxu0 0
    %6337 = vmatpush2.bf16.msra.mxu0 0
    %6338 = vmatprep.subr.bf16.mxu0 0
    %6339 = vmatpush2.bf16.msra.mxu0 0
    %6340 = vmatprep.subr.bf16.mxu0 0
    %6341 = vmatpush2.bf16.msra.mxu0 0
    %6342 = vmatprep.subr.bf16.mxu0 0
    %6343 = vmatpush2.bf16.msra.mxu0 0
    %6344 = vmatprep.subr.bf16.mxu0 0
    %6345 = vmatpush2.bf16.msra.mxu0 0
    %6346 = vmatprep.mubr.bf16.mxu0 0
    %6347 = vmatmul.mubr.bf16.gmra.mxu0 %v6073
    %v6348 = vpop.f32.mrf.mxu0
    %v6349 = vadd.f32 %v6048, %v6348
    %v6350 = vpop.f32.mrf.mxu0
    %v6351 = vadd.f32 %v6052, %v6350
    %v6352 = vpop.f32.mrf.mxu0
    %v6353 = vadd.f32 %v6048, %v6352
    %v6354 = vpop.f32.mrf.mxu0
    %v6355 = vadd.f32 %v6052, %v6354
    %6356 = vmatprep.mubr.bf16.mxu0 0
    %6357 = vmatmul.mubr.bf16.gmra.mxu0 %v6074
    %v6358 = vpop.f32.mrf.mxu0
    %v6359 = vadd.f32 %v6048, %v6358
    %v6360 = vpop.f32.mrf.mxu0
    %v6361 = vadd.f32 %v6052, %v6360
    %v6362 = vpop.f32.mrf.mxu0
    %v6363 = vadd.f32 %v6048, %v6362
    %v6364 = vpop.f32.mrf.mxu0
    %v6365 = vadd.f32 %v6052, %v6364
    %6366 = vmatprep.mubr.bf16.mxu0 0
    %6367 = vmatmul.mubr.bf16.gmra.mxu0 %v6075
    %v6368 = vpop.f32.mrf.mxu0
    %v6369 = vadd.f32 %v6048, %v6368
    %v6370 = vpop.f32.mrf.mxu0
    %v6371 = vadd.f32 %v6052, %v6370
    %v6372 = vpop.f32.mrf.mxu0
    %v6373 = vadd.f32 %v6048, %v6372
    %v6374 = vpop.f32.mrf.mxu0
    %v6375 = vadd.f32 %v6052, %v6374
    %6376 = vmatprep.mubr.bf16.mxu0 0
    %6377 = vmatmul.mubr.bf16.gmra.mxu0 %v6076
    %v6378 = vpop.f32.mrf.mxu0
    %v6379 = vadd.f32 %v6048, %v6378
    %v6380 = vpop.f32.mrf.mxu0
    %v6381 = vadd.f32 %v6052, %v6380
    %v6382 = vpop.f32.mrf.mxu0
    %v6383 = vadd.f32 %v6048, %v6382
    %v6384 = vpop.f32.mrf.mxu0
    %v6385 = vadd.f32 %v6052, %v6384
    %6386 = vdwg.mxu0
    %6387 = vst [vmem:[#allocation2] sm:$0xff] %v6276
    %6388 = vst [vmem:[#allocation2 + $0x8] sm:$0xff] %v6278
    %6389 = vst [vmem:[#allocation2 + $0x10] sm:$0xff] %v6349
    %6390 = vst [vmem:[#allocation2 + $0x18] sm:$0xff] %v6351
    %6391 = vst [vmem:[#allocation2 + $0x20] sm:$0xff] %v6280
    %6392 = vst [vmem:[#allocation2 + $0x28] sm:$0xff] %v6282
    %6393 = vst [vmem:[#allocation2 + $0x30] sm:$0xff] %v6353
    %6394 = vst [vmem:[#allocation2 + $0x38] sm:$0xff] %v6355
    %6395 = vst [vmem:[#allocation2 + $0x40] sm:$0xff] %v6286
    %6396 = vst [vmem:[#allocation2 + $0x48] sm:$0xff] %v6288
    %6397 = vst [vmem:[#allocation2 + $0x50] sm:$0xff] %v6359
    %6398 = vst [vmem:[#allocation2 + $0x58] sm:$0xff] %v6361
    %6399 = vst [vmem:[#allocation2 + $0x60] sm:$0xff] %v6290
    %6400 = vst [vmem:[#allocation2 + $0x68] sm:$0xff] %v6292
    %6401 = vst [vmem:[#allocation2 + $0x70] sm:$0xff] %v6363
    %6402 = vst [vmem:[#allocation2 + $0x78] sm:$0xff] %v6365
    %6403 = vst [vmem:[#allocation2 + $0x80] sm:$0xff] %v6296
    %6404 = vst [vmem:[#allocation2 + $0x88] sm:$0xff] %v6298
    %6405 = vst [vmem:[#allocation2 + $0x90] sm:$0xff] %v6369
    %6406 = vst [vmem:[#allocation2 + $0x98] sm:$0xff] %v6371
    %6407 = vst [vmem:[#allocation2 + $0xa0] sm:$0xff] %v6300
    %6408 = vst [vmem:[#allocation2 + $0xa8] sm:$0xff] %v6302
    %6409 = vst [vmem:[#allocation2 + $0xb0] sm:$0xff] %v6373
    %6410 = vst [vmem:[#allocation2 + $0xb8] sm:$0xff] %v6375
    %6411 = vst [vmem:[#allocation2 + $0xc0] sm:$0xff] %v6306
    %6412 = vst [vmem:[#allocation2 + $0xc8] sm:$0xff] %v6308
    %6413 = vst [vmem:[#allocation2 + $0xd0] sm:$0xff] %v6379
    %6414 = vst [vmem:[#allocation2 + $0xd8] sm:$0xff] %v6381
    %6415 = vst [vmem:[#allocation2 + $0xe0] sm:$0xff] %v6310
    %6416 = vst [vmem:[#allocation2 + $0xe8] sm:$0xff] %v6312
    %6417 = vst [vmem:[#allocation2 + $0xf0] sm:$0xff] %v6383
    %6418 = vst [vmem:[#allocation2 + $0xf8] sm:$0xff] %v6385
    %v6419 = vld [vmem:[%s604] sm:$0xff]
    %v6420 = vld [vmem:[%s604 + $0x8] sm:$0xff]
    %v6421 = vld [vmem:[%s604 + $0x10] sm:$0xff]
    %v6422 = vld [vmem:[%s604 + $0x18] sm:$0xff]
    %s6423 = scalar_lea.vmem [#allocation5], 256
    %v6424 = vld [vmem:[%s6423] sm:$0xff]
    %v6425 = vld [vmem:[%s6423 + $0x8] sm:$0xff]
    %v6426 = vld [vmem:[%s6423 + $0x10] sm:$0xff]
    %v6427 = vld [vmem:[%s6423 + $0x18] sm:$0xff]
    %v6428 = vld [vmem:[%s6423 + $0x20] sm:$0xff]
    %v6429 = vld [vmem:[%s6423 + $0x28] sm:$0xff]
    %v6430 = vld [vmem:[%s6423 + $0x30] sm:$0xff]
    %v6431 = vld [vmem:[%s6423 + $0x38] sm:$0xff]
    %v6432 = vld [vmem:[%s6423 + $0x40] sm:$0xff]
    %v6433 = vld [vmem:[%s6423 + $0x48] sm:$0xff]
    %v6434 = vld [vmem:[%s6423 + $0x50] sm:$0xff]
    %v6435 = vld [vmem:[%s6423 + $0x58] sm:$0xff]
    %v6436 = vld [vmem:[%s6423 + $0x60] sm:$0xff]
    %v6437 = vld [vmem:[%s6423 + $0x68] sm:$0xff]
    %v6438 = vld [vmem:[%s6423 + $0x70] sm:$0xff]
    %v6439 = vld [vmem:[%s6423 + $0x78] sm:$0xff]
    %v6440 = vld [vmem:[%s6423 + $0x80] sm:$0xff]
    %v6441 = vld [vmem:[%s6423 + $0x88] sm:$0xff]
    %v6442 = vld [vmem:[%s6423 + $0x90] sm:$0xff]
    %v6443 = vld [vmem:[%s6423 + $0x98] sm:$0xff]
    %v6444 = vld [vmem:[%s6423 + $0xa0] sm:$0xff]
    %v6445 = vld [vmem:[%s6423 + $0xa8] sm:$0xff]
    %v6446 = vld [vmem:[%s6423 + $0xb0] sm:$0xff]
    %v6447 = vld [vmem:[%s6423 + $0xb8] sm:$0xff]
    %v6448 = vld [vmem:[%s6423 + $0xc0] sm:$0xff]
    %v6449 = vld [vmem:[%s6423 + $0xc8] sm:$0xff]
    %v6450 = vld [vmem:[%s6423 + $0xd0] sm:$0xff]
    %v6451 = vld [vmem:[%s6423 + $0xd8] sm:$0xff]
    %v6452 = vld [vmem:[%s6423 + $0xe0] sm:$0xff]
    %v6453 = vld [vmem:[%s6423 + $0xe8] sm:$0xff]
    %v6454 = vld [vmem:[%s6423 + $0xf0] sm:$0xff]
    %v6455 = vld [vmem:[%s6423 + $0xf8] sm:$0xff]
    %v6488 = vunpack.c.l.b16 %v6424
    %v6489 = vunpack.c.h.b16 %v6424
    %v6490 = vunpack.c.l.b16 %v6425
    %v6491 = vunpack.c.h.b16 %v6425
    %v6492 = vunpack.c.l.b16 %v6426
    %v6493 = vunpack.c.h.b16 %v6426
    %v6494 = vunpack.c.l.b16 %v6427
    %v6495 = vunpack.c.h.b16 %v6427
    %v6496 = vunpack.c.l.b16 %v6428
    %v6497 = vunpack.c.h.b16 %v6428
    %v6498 = vunpack.c.l.b16 %v6429
    %v6499 = vunpack.c.h.b16 %v6429
    %v6500 = vunpack.c.l.b16 %v6430
    %v6501 = vunpack.c.h.b16 %v6430
    %v6502 = vunpack.c.l.b16 %v6431
    %v6503 = vunpack.c.h.b16 %v6431
    %v6504 = vunpack.c.l.b16 %v6432
    %v6505 = vunpack.c.h.b16 %v6432
    %v6506 = vunpack.c.l.b16 %v6433
    %v6507 = vunpack.c.h.b16 %v6433
    %v6508 = vunpack.c.l.b16 %v6434
    %v6509 = vunpack.c.h.b16 %v6434
    %v6510 = vunpack.c.l.b16 %v6435
    %v6511 = vunpack.c.h.b16 %v6435
    %v6512 = vunpack.c.l.b16 %v6436
    %v6513 = vunpack.c.h.b16 %v6436
    %v6514 = vunpack.c.l.b16 %v6437
    %v6515 = vunpack.c.h.b16 %v6437
    %v6516 = vunpack.c.l.b16 %v6438
    %v6517 = vunpack.c.h.b16 %v6438
    %v6518 = vunpack.c.l.b16 %v6439
    %v6519 = vunpack.c.h.b16 %v6439
    %v6520 = vunpack.c.l.b16 %v6440
    %v6521 = vunpack.c.h.b16 %v6440
    %v6522 = vunpack.c.l.b16 %v6441
    %v6523 = vunpack.c.h.b16 %v6441
    %v6524 = vunpack.c.l.b16 %v6442
    %v6525 = vunpack.c.h.b16 %v6442
    %v6526 = vunpack.c.l.b16 %v6443
    %v6527 = vunpack.c.h.b16 %v6443
    %v6528 = vunpack.c.l.b16 %v6444
    %v6529 = vunpack.c.h.b16 %v6444
    %v6530 = vunpack.c.l.b16 %v6445
    %v6531 = vunpack.c.h.b16 %v6445
    %v6532 = vunpack.c.l.b16 %v6446
    %v6533 = vunpack.c.h.b16 %v6446
    %v6534 = vunpack.c.l.b16 %v6447
    %v6535 = vunpack.c.h.b16 %v6447
    %v6536 = vunpack.c.l.b16 %v6448
    %v6537 = vunpack.c.h.b16 %v6448
    %v6538 = vunpack.c.l.b16 %v6449
    %v6539 = vunpack.c.h.b16 %v6449
    %v6540 = vunpack.c.l.b16 %v6450
    %v6541 = vunpack.c.h.b16 %v6450
    %v6542 = vunpack.c.l.b16 %v6451
    %v6543 = vunpack.c.h.b16 %v6451
    %v6544 = vunpack.c.l.b16 %v6452
    %v6545 = vunpack.c.h.b16 %v6452
    %v6546 = vunpack.c.l.b16 %v6453
    %v6547 = vunpack.c.h.b16 %v6453
    %v6548 = vunpack.c.l.b16 %v6454
    %v6549 = vunpack.c.h.b16 %v6454
    %v6550 = vunpack.c.l.b16 %v6455
    %v6551 = vunpack.c.h.b16 %v6455
    %v6552 = vpack.c.b16 %v6492, %v6488
    %v6553 = vpack.c.b16 %v6493, %v6489
    %v6554 = vpack.c.b16 %v6494, %v6490
    %v6555 = vpack.c.b16 %v6495, %v6491
    %v6556 = vpack.c.b16 %v6500, %v6496
    %v6557 = vpack.c.b16 %v6501, %v6497
    %v6558 = vpack.c.b16 %v6502, %v6498
    %v6559 = vpack.c.b16 %v6503, %v6499
    %v6560 = vpack.c.b16 %v6508, %v6504
    %v6561 = vpack.c.b16 %v6509, %v6505
    %v6562 = vpack.c.b16 %v6510, %v6506
    %v6563 = vpack.c.b16 %v6511, %v6507
    %v6564 = vpack.c.b16 %v6516, %v6512
    %v6565 = vpack.c.b16 %v6517, %v6513
    %v6566 = vpack.c.b16 %v6518, %v6514
    %v6567 = vpack.c.b16 %v6519, %v6515
    %v6568 = vpack.c.b16 %v6524, %v6520
    %v6569 = vpack.c.b16 %v6525, %v6521
    %v6570 = vpack.c.b16 %v6526, %v6522
    %v6571 = vpack.c.b16 %v6527, %v6523
    %v6572 = vpack.c.b16 %v6532, %v6528
    %v6573 = vpack.c.b16 %v6533, %v6529
    %v6574 = vpack.c.b16 %v6534, %v6530
    %v6575 = vpack.c.b16 %v6535, %v6531
    %v6576 = vpack.c.b16 %v6540, %v6536
    %v6577 = vpack.c.b16 %v6541, %v6537
    %v6578 = vpack.c.b16 %v6542, %v6538
    %v6579 = vpack.c.b16 %v6543, %v6539
    %v6580 = vpack.c.b16 %v6548, %v6544
    %v6581 = vpack.c.b16 %v6549, %v6545
    %v6582 = vpack.c.b16 %v6550, %v6546
    %v6583 = vpack.c.b16 %v6551, %v6547
    %6616 = vmatprep.subr.bf16.mxu0 %v6581
    %6617 = vmatpush1.bf16.msra.mxu0 %v6580
    %6618 = vmatprep.subr.bf16.mxu0 %v6577
    %6619 = vmatpush1.bf16.msra.mxu0 %v6576
    %6620 = vmatprep.subr.bf16.mxu0 %v6573
    %6621 = vmatpush1.bf16.msra.mxu0 %v6572
    %6622 = vmatprep.subr.bf16.mxu0 %v6569
    %6623 = vmatpush1.bf16.msra.mxu0 %v6568
    %6624 = vmatprep.subr.bf16.mxu0 %v6565
    %6625 = vmatpush1.bf16.msra.mxu0 %v6564
    %6626 = vmatprep.subr.bf16.mxu0 %v6561
    %6627 = vmatpush1.bf16.msra.mxu0 %v6560
    %6628 = vmatprep.subr.bf16.mxu0 %v6557
    %6629 = vmatpush1.bf16.msra.mxu0 %v6556
    %6630 = vmatprep.subr.bf16.mxu0 %v6553
    %6631 = vmatpush1.bf16.msra.mxu0 %v6552
    %6632 = vmatprep.subr.bf16.mxu0 0
    %6633 = vmatpush2.bf16.msra.mxu0 0
    %6634 = vmatprep.subr.bf16.mxu0 0
    %6635 = vmatpush2.bf16.msra.mxu0 0
    %6636 = vmatprep.subr.bf16.mxu0 0
    %6637 = vmatpush2.bf16.msra.mxu0 0
    %6638 = vmatprep.subr.bf16.mxu0 0
    %6639 = vmatpush2.bf16.msra.mxu0 0
    %6640 = vmatprep.subr.bf16.mxu0 0
    %6641 = vmatpush2.bf16.msra.mxu0 0
    %6642 = vmatprep.subr.bf16.mxu0 0
    %6643 = vmatpush2.bf16.msra.mxu0 0
    %6644 = vmatprep.subr.bf16.mxu0 0
    %6645 = vmatpush2.bf16.msra.mxu0 0
    %6646 = vmatprep.subr.bf16.mxu0 0
    %6647 = vmatpush2.bf16.msra.mxu0 0
    %6648 = vmatprep.mubr.bf16.mxu0 0
    %6649 = vmatmul.mubr.bf16.gmra.mxu0 0
    %v6650 = vpop.f32.mrf.mxu0
    %v6651 = vadd.f32 0.0, %v6650
    %v6652 = vpop.f32.mrf.mxu0
    %v6653 = vadd.f32 0.0, %v6652
    %v6654 = vpop.f32.mrf.mxu0
    %v6655 = vpop.f32.mrf.mxu0
    %6656 = vdwg.mxu0
    %6657 = vmatprep.subr.bf16.mxu0 %v6583
    %6658 = vmatpush1.bf16.msra.mxu0 %v6582
    %6659 = vmatprep.subr.bf16.mxu0 %v6579
    %6660 = vmatpush1.bf16.msra.mxu0 %v6578
    %6661 = vmatprep.subr.bf16.mxu0 %v6575
    %6662 = vmatpush1.bf16.msra.mxu0 %v6574
    %6663 = vmatprep.subr.bf16.mxu0 %v6571
    %6664 = vmatpush1.bf16.msra.mxu0 %v6570
    %6665 = vmatprep.subr.bf16.mxu0 %v6567
    %6666 = vmatpush1.bf16.msra.mxu0 %v6566
    %6667 = vmatprep.subr.bf16.mxu0 %v6563
    %6668 = vmatpush1.bf16.msra.mxu0 %v6562
    %6669 = vmatprep.subr.bf16.mxu0 %v6559
    %6670 = vmatpush1.bf16.msra.mxu0 %v6558
    %6671 = vmatprep.subr.bf16.mxu0 %v6555
    %6672 = vmatpush1.bf16.msra.mxu0 %v6554
    %6673 = vmatprep.subr.bf16.mxu0 0
    %6674 = vmatpush2.bf16.msra.mxu0 0
    %6675 = vmatprep.subr.bf16.mxu0 0
    %6676 = vmatpush2.bf16.msra.mxu0 0
    %6677 = vmatprep.subr.bf16.mxu0 0
    %6678 = vmatpush2.bf16.msra.mxu0 0
    %6679 = vmatprep.subr.bf16.mxu0 0
    %6680 = vmatpush2.bf16.msra.mxu0 0
    %6681 = vmatprep.subr.bf16.mxu0 0
    %6682 = vmatpush2.bf16.msra.mxu0 0
    %6683 = vmatprep.subr.bf16.mxu0 0
    %6684 = vmatpush2.bf16.msra.mxu0 0
    %6685 = vmatprep.subr.bf16.mxu0 0
    %6686 = vmatpush2.bf16.msra.mxu0 0
    %6687 = vmatprep.subr.bf16.mxu0 0
    %6688 = vmatpush2.bf16.msra.mxu0 0
    %6689 = vmatprep.mubr.bf16.mxu0 0
    %6690 = vmatmul.mubr.bf16.gmra.mxu0 0
    %v6691 = vpop.f32.mrf.mxu0
    %v6692 = vadd.f32 0.0, %v6691
    %v6693 = vpop.f32.mrf.mxu0
    %v6694 = vadd.f32 0.0, %v6693
    %v6695 = vpop.f32.mrf.mxu0
    %v6696 = vpop.f32.mrf.mxu0
    %6697 = vdwg.mxu0
    %v6698 = vadd.f32 %v6419, %v6651
    %v6699 = vadd.f32 %v6420, %v6653
    %v6700 = vadd.f32 %v6421, %v6692
    %v6701 = vadd.f32 %v6422, %v6694
    %v6702 = vxor.u32 %v6698, 2147483648
    %v6703 = vmul.f32 %v6702, 1.442695
    %v6704 = vpow.pop %v6703
    %v6705 = vadd.f32 %v6704, 1.0
    %v6706 = vrcp.pop %v6705
    %v6707 = vmul.f32 1.0, %v6706
    %v6708 = vxor.u32 %v6699, 2147483648
    %v6709 = vmul.f32 %v6708, 1.442695
    %v6710 = vpow.pop %v6709
    %v6711 = vadd.f32 %v6710, 1.0
    %v6712 = vrcp.pop %v6711
    %v6713 = vmul.f32 1.0, %v6712
    %v6714 = vtanh.pop %v6700
    %v6715 = vxor.u32 %v6701, 2147483648
    %v6716 = vmul.f32 %v6715, 1.442695
    %v6717 = vpow.pop %v6716
    %v6718 = vadd.f32 %v6717, 1.0
    %v6719 = vrcp.pop %v6718
    %v6720 = vmul.f32 1.0, %v6719
    %v6721 = vmul.f32 %v6713, 0.0
    %v6722 = vmul.f32 %v6707, %v6714
    %v6723 = vadd.f32 %v6721, %v6722
    %v6724 = vtanh.pop %v6723
    %v6725 = vmul.f32 %v6720, %v6724
    %v6726 = vpack.c.bf16 %v6725, %v6725
    %v6727 = vld [vmem:[%s915] sm:$0xff]
    %v6728 = vld [vmem:[%s915 + $0x8] sm:$0xff]
    %v6729 = vld [vmem:[%s915 + $0x10] sm:$0xff]
    %v6730 = vld [vmem:[%s915 + $0x18] sm:$0xff]
    %6731 = vmatprep.subr.bf16.mxu0 %v6581
    %6732 = vmatpush1.bf16.msra.mxu0 %v6580
    %6733 = vmatprep.subr.bf16.mxu0 %v6577
    %6734 = vmatpush1.bf16.msra.mxu0 %v6576
    %6735 = vmatprep.subr.bf16.mxu0 %v6573
    %6736 = vmatpush1.bf16.msra.mxu0 %v6572
    %6737 = vmatprep.subr.bf16.mxu0 %v6569
    %6738 = vmatpush1.bf16.msra.mxu0 %v6568
    %6739 = vmatprep.subr.bf16.mxu0 %v6565
    %6740 = vmatpush1.bf16.msra.mxu0 %v6564
    %6741 = vmatprep.subr.bf16.mxu0 %v6561
    %6742 = vmatpush1.bf16.msra.mxu0 %v6560
    %6743 = vmatprep.subr.bf16.mxu0 %v6557
    %6744 = vmatpush1.bf16.msra.mxu0 %v6556
    %6745 = vmatprep.subr.bf16.mxu0 %v6553
    %6746 = vmatpush1.bf16.msra.mxu0 %v6552
    %6747 = vmatprep.subr.bf16.mxu0 0
    %6748 = vmatpush2.bf16.msra.mxu0 0
    %6749 = vmatprep.subr.bf16.mxu0 0
    %6750 = vmatpush2.bf16.msra.mxu0 0
    %6751 = vmatprep.subr.bf16.mxu0 0
    %6752 = vmatpush2.bf16.msra.mxu0 0
    %6753 = vmatprep.subr.bf16.mxu0 0
    %6754 = vmatpush2.bf16.msra.mxu0 0
    %6755 = vmatprep.subr.bf16.mxu0 0
    %6756 = vmatpush2.bf16.msra.mxu0 0
    %6757 = vmatprep.subr.bf16.mxu0 0
    %6758 = vmatpush2.bf16.msra.mxu0 0
    %6759 = vmatprep.subr.bf16.mxu0 0
    %6760 = vmatpush2.bf16.msra.mxu0 0
    %6761 = vmatprep.subr.bf16.mxu0 0
    %6762 = vmatpush2.bf16.msra.mxu0 0
    %6763 = vmatprep.mubr.bf16.mxu0 0
    %6764 = vmatmul.mubr.bf16.gmra.mxu0 %v6726
    %v6765 = vpop.f32.mrf.mxu0
    %v6766 = vadd.f32 0.0, %v6765
    %v6767 = vpop.f32.mrf.mxu0
    %v6768 = vadd.f32 0.0, %v6767
    %v6769 = vpop.f32.mrf.mxu0
    %v6770 = vpop.f32.mrf.mxu0
    %6771 = vdwg.mxu0
    %6772 = vmatprep.subr.bf16.mxu0 %v6583
    %6773 = vmatpush1.bf16.msra.mxu0 %v6582
    %6774 = vmatprep.subr.bf16.mxu0 %v6579
    %6775 = vmatpush1.bf16.msra.mxu0 %v6578
    %6776 = vmatprep.subr.bf16.mxu0 %v6575
    %6777 = vmatpush1.bf16.msra.mxu0 %v6574
    %6778 = vmatprep.subr.bf16.mxu0 %v6571
    %6779 = vmatpush1.bf16.msra.mxu0 %v6570
    %6780 = vmatprep.subr.bf16.mxu0 %v6567
    %6781 = vmatpush1.bf16.msra.mxu0 %v6566
    %6782 = vmatprep.subr.bf16.mxu0 %v6563
    %6783 = vmatpush1.bf16.msra.mxu0 %v6562
    %6784 = vmatprep.subr.bf16.mxu0 %v6559
    %6785 = vmatpush1.bf16.msra.mxu0 %v6558
    %6786 = vmatprep.subr.bf16.mxu0 %v6555
    %6787 = vmatpush1.bf16.msra.mxu0 %v6554
    %6788 = vmatprep.subr.bf16.mxu0 0
    %6789 = vmatpush2.bf16.msra.mxu0 0
    %6790 = vmatprep.subr.bf16.mxu0 0
    %6791 = vmatpush2.bf16.msra.mxu0 0
    %6792 = vmatprep.subr.bf16.mxu0 0
    %6793 = vmatpush2.bf16.msra.mxu0 0
    %6794 = vmatprep.subr.bf16.mxu0 0
    %6795 = vmatpush2.bf16.msra.mxu0 0
    %6796 = vmatprep.subr.bf16.mxu0 0
    %6797 = vmatpush2.bf16.msra.mxu0 0
    %6798 = vmatprep.subr.bf16.mxu0 0
    %6799 = vmatpush2.bf16.msra.mxu0 0
    %6800 = vmatprep.subr.bf16.mxu0 0
    %6801 = vmatpush2.bf16.msra.mxu0 0
    %6802 = vmatprep.subr.bf16.mxu0 0
    %6803 = vmatpush2.bf16.msra.mxu0 0
    %6804 = vmatprep.mubr.bf16.mxu0 0
    %6805 = vmatmul.mubr.bf16.gmra.mxu0 %v6726
    %v6806 = vpop.f32.mrf.mxu0
    %v6807 = vadd.f32 0.0, %v6806
    %v6808 = vpop.f32.mrf.mxu0
    %v6809 = vadd.f32 0.0, %v6808
    %v6810 = vpop.f32.mrf.mxu0
    %v6811 = vpop.f32.mrf.mxu0
    %6812 = vdwg.mxu0
    %v6813 = vadd.f32 %v6727, %v6766
    %v6814 = vadd.f32 %v6728, %v6768
    %v6815 = vadd.f32 %v6729, %v6807
    %v6816 = vadd.f32 %v6730, %v6809
    %v6817 = vxor.u32 %v6813, 2147483648
    %v6818 = vmul.f32 %v6817, 1.442695
    %v6819 = vpow.pop %v6818
    %v6820 = vadd.f32 %v6819, 1.0
    %v6821 = vrcp.pop %v6820
    %v6822 = vmul.f32 1.0, %v6821
    %v6823 = vxor.u32 %v6814, 2147483648
    %v6824 = vmul.f32 %v6823, 1.442695
    %v6825 = vpow.pop %v6824
    %v6826 = vadd.f32 %v6825, 1.0
    %v6827 = vrcp.pop %v6826
    %v6828 = vmul.f32 1.0, %v6827
    %v6829 = vtanh.pop %v6815
    %v6830 = vxor.u32 %v6816, 2147483648
    %v6831 = vmul.f32 %v6830, 1.442695
    %v6832 = vpow.pop %v6831
    %v6833 = vadd.f32 %v6832, 1.0
    %v6834 = vrcp.pop %v6833
    %v6835 = vmul.f32 1.0, %v6834
    %v6836 = vmul.f32 %v6828, %v6723
    %v6837 = vmul.f32 %v6822, %v6829
    %v6838 = vadd.f32 %v6836, %v6837
    %v6839 = vtanh.pop %v6838
    %v6840 = vmul.f32 %v6835, %v6839
    %v6841 = vpack.c.bf16 %v6840, %v6840
    %v6842 = vld [vmem:[%s1227] sm:$0xff]
    %v6843 = vld [vmem:[%s1227 + $0x8] sm:$0xff]
    %v6844 = vld [vmem:[%s1227 + $0x10] sm:$0xff]
    %v6845 = vld [vmem:[%s1227 + $0x18] sm:$0xff]
    %6846 = vmatprep.subr.bf16.mxu0 %v6581
    %6847 = vmatpush1.bf16.msra.mxu0 %v6580
    %6848 = vmatprep.subr.bf16.mxu0 %v6577
    %6849 = vmatpush1.bf16.msra.mxu0 %v6576
    %6850 = vmatprep.subr.bf16.mxu0 %v6573
    %6851 = vmatpush1.bf16.msra.mxu0 %v6572
    %6852 = vmatprep.subr.bf16.mxu0 %v6569
    %6853 = vmatpush1.bf16.msra.mxu0 %v6568
    %6854 = vmatprep.subr.bf16.mxu0 %v6565
    %6855 = vmatpush1.bf16.msra.mxu0 %v6564
    %6856 = vmatprep.subr.bf16.mxu0 %v6561
    %6857 = vmatpush1.bf16.msra.mxu0 %v6560
    %6858 = vmatprep.subr.bf16.mxu0 %v6557
    %6859 = vmatpush1.bf16.msra.mxu0 %v6556
    %6860 = vmatprep.subr.bf16.mxu0 %v6553
    %6861 = vmatpush1.bf16.msra.mxu0 %v6552
    %6862 = vmatprep.subr.bf16.mxu0 0
    %6863 = vmatpush2.bf16.msra.mxu0 0
    %6864 = vmatprep.subr.bf16.mxu0 0
    %6865 = vmatpush2.bf16.msra.mxu0 0
    %6866 = vmatprep.subr.bf16.mxu0 0
    %6867 = vmatpush2.bf16.msra.mxu0 0
    %6868 = vmatprep.subr.bf16.mxu0 0
    %6869 = vmatpush2.bf16.msra.mxu0 0
    %6870 = vmatprep.subr.bf16.mxu0 0
    %6871 = vmatpush2.bf16.msra.mxu0 0
    %6872 = vmatprep.subr.bf16.mxu0 0
    %6873 = vmatpush2.bf16.msra.mxu0 0
    %6874 = vmatprep.subr.bf16.mxu0 0
    %6875 = vmatpush2.bf16.msra.mxu0 0
    %6876 = vmatprep.subr.bf16.mxu0 0
    %6877 = vmatpush2.bf16.msra.mxu0 0
    %6878 = vmatprep.mubr.bf16.mxu0 0
    %6879 = vmatmul.mubr.bf16.gmra.mxu0 %v6841
    %v6880 = vpop.f32.mrf.mxu0
    %v6881 = vadd.f32 0.0, %v6880
    %v6882 = vpop.f32.mrf.mxu0
    %v6883 = vadd.f32 0.0, %v6882
    %v6884 = vpop.f32.mrf.mxu0
    %v6885 = vpop.f32.mrf.mxu0
    %6886 = vdwg.mxu0
    %6887 = vmatprep.subr.bf16.mxu0 %v6583
    %6888 = vmatpush1.bf16.msra.mxu0 %v6582
    %6889 = vmatprep.subr.bf16.mxu0 %v6579
    %6890 = vmatpush1.bf16.msra.mxu0 %v6578
    %6891 = vmatprep.subr.bf16.mxu0 %v6575
    %6892 = vmatpush1.bf16.msra.mxu0 %v6574
    %6893 = vmatprep.subr.bf16.mxu0 %v6571
    %6894 = vmatpush1.bf16.msra.mxu0 %v6570
    %6895 = vmatprep.subr.bf16.mxu0 %v6567
    %6896 = vmatpush1.bf16.msra.mxu0 %v6566
    %6897 = vmatprep.subr.bf16.mxu0 %v6563
    %6898 = vmatpush1.bf16.msra.mxu0 %v6562
    %6899 = vmatprep.subr.bf16.mxu0 %v6559
    %6900 = vmatpush1.bf16.msra.mxu0 %v6558
    %6901 = vmatprep.subr.bf16.mxu0 %v6555
    %6902 = vmatpush1.bf16.msra.mxu0 %v6554
    %6903 = vmatprep.subr.bf16.mxu0 0
    %6904 = vmatpush2.bf16.msra.mxu0 0
    %6905 = vmatprep.subr.bf16.mxu0 0
    %6906 = vmatpush2.bf16.msra.mxu0 0
    %6907 = vmatprep.subr.bf16.mxu0 0
    %6908 = vmatpush2.bf16.msra.mxu0 0
    %6909 = vmatprep.subr.bf16.mxu0 0
    %6910 = vmatpush2.bf16.msra.mxu0 0
    %6911 = vmatprep.subr.bf16.mxu0 0
    %6912 = vmatpush2.bf16.msra.mxu0 0
    %6913 = vmatprep.subr.bf16.mxu0 0
    %6914 = vmatpush2.bf16.msra.mxu0 0
    %6915 = vmatprep.subr.bf16.mxu0 0
    %6916 = vmatpush2.bf16.msra.mxu0 0
    %6917 = vmatprep.subr.bf16.mxu0 0
    %6918 = vmatpush2.bf16.msra.mxu0 0
    %6919 = vmatprep.mubr.bf16.mxu0 0
    %6920 = vmatmul.mubr.bf16.gmra.mxu0 %v6841
    %v6921 = vpop.f32.mrf.mxu0
    %v6922 = vadd.f32 0.0, %v6921
    %v6923 = vpop.f32.mrf.mxu0
    %v6924 = vadd.f32 0.0, %v6923
    %v6925 = vpop.f32.mrf.mxu0
    %v6926 = vpop.f32.mrf.mxu0
    %6927 = vdwg.mxu0
    %v6928 = vadd.f32 %v6842, %v6881
    %v6929 = vadd.f32 %v6843, %v6883
    %v6930 = vadd.f32 %v6844, %v6922
    %v6931 = vadd.f32 %v6845, %v6924
    %v6932 = vxor.u32 %v6928, 2147483648
    %v6933 = vmul.f32 %v6932, 1.442695
    %v6934 = vpow.pop %v6933
    %v6935 = vadd.f32 %v6934, 1.0
    %v6936 = vrcp.pop %v6935
    %v6937 = vmul.f32 1.0, %v6936
    %v6938 = vxor.u32 %v6929, 2147483648
    %v6939 = vmul.f32 %v6938, 1.442695
    %v6940 = vpow.pop %v6939
    %v6941 = vadd.f32 %v6940, 1.0
    %v6942 = vrcp.pop %v6941
    %v6943 = vmul.f32 1.0, %v6942
    %v6944 = vtanh.pop %v6930
    %v6945 = vxor.u32 %v6931, 2147483648
    %v6946 = vmul.f32 %v6945, 1.442695
    %v6947 = vpow.pop %v6946
    %v6948 = vadd.f32 %v6947, 1.0
    %v6949 = vrcp.pop %v6948
    %v6950 = vmul.f32 1.0, %v6949
    %v6951 = vmul.f32 %v6943, %v6838
    %v6952 = vmul.f32 %v6937, %v6944
    %v6953 = vadd.f32 %v6951, %v6952
    %v6954 = vtanh.pop %v6953
    %v6955 = vmul.f32 %v6950, %v6954
    %v6956 = vpack.c.bf16 %v6955, %v6955
    %v6957 = vld [vmem:[%s1539] sm:$0xff]
    %v6958 = vld [vmem:[%s1539 + $0x8] sm:$0xff]
    %v6959 = vld [vmem:[%s1539 + $0x10] sm:$0xff]
    %v6960 = vld [vmem:[%s1539 + $0x18] sm:$0xff]
    %6961 = vmatprep.subr.bf16.mxu0 %v6581
    %6962 = vmatpush1.bf16.msra.mxu0 %v6580
    %6963 = vmatprep.subr.bf16.mxu0 %v6577
    %6964 = vmatpush1.bf16.msra.mxu0 %v6576
    %6965 = vmatprep.subr.bf16.mxu0 %v6573
    %6966 = vmatpush1.bf16.msra.mxu0 %v6572
    %6967 = vmatprep.subr.bf16.mxu0 %v6569
    %6968 = vmatpush1.bf16.msra.mxu0 %v6568
    %6969 = vmatprep.subr.bf16.mxu0 %v6565
    %6970 = vmatpush1.bf16.msra.mxu0 %v6564
    %6971 = vmatprep.subr.bf16.mxu0 %v6561
    %6972 = vmatpush1.bf16.msra.mxu0 %v6560
    %6973 = vmatprep.subr.bf16.mxu0 %v6557
    %6974 = vmatpush1.bf16.msra.mxu0 %v6556
    %6975 = vmatprep.subr.bf16.mxu0 %v6553
    %6976 = vmatpush1.bf16.msra.mxu0 %v6552
    %6977 = vmatprep.subr.bf16.mxu0 0
    %6978 = vmatpush2.bf16.msra.mxu0 0
    %6979 = vmatprep.subr.bf16.mxu0 0
    %6980 = vmatpush2.bf16.msra.mxu0 0
    %6981 = vmatprep.subr.bf16.mxu0 0
    %6982 = vmatpush2.bf16.msra.mxu0 0
    %6983 = vmatprep.subr.bf16.mxu0 0
    %6984 = vmatpush2.bf16.msra.mxu0 0
    %6985 = vmatprep.subr.bf16.mxu0 0
    %6986 = vmatpush2.bf16.msra.mxu0 0
    %6987 = vmatprep.subr.bf16.mxu0 0
    %6988 = vmatpush2.bf16.msra.mxu0 0
    %6989 = vmatprep.subr.bf16.mxu0 0
    %6990 = vmatpush2.bf16.msra.mxu0 0
    %6991 = vmatprep.subr.bf16.mxu0 0
    %6992 = vmatpush2.bf16.msra.mxu0 0
    %6993 = vmatprep.mubr.bf16.mxu0 0
    %6994 = vmatmul.mubr.bf16.gmra.mxu0 %v6956
    %v6995 = vpop.f32.mrf.mxu0
    %v6996 = vadd.f32 0.0, %v6995
    %v6997 = vpop.f32.mrf.mxu0
    %v6998 = vadd.f32 0.0, %v6997
    %v6999 = vpop.f32.mrf.mxu0
    %v7000 = vpop.f32.mrf.mxu0
    %7001 = vdwg.mxu0
    %7002 = vmatprep.subr.bf16.mxu0 %v6583
    %7003 = vmatpush1.bf16.msra.mxu0 %v6582
    %7004 = vmatprep.subr.bf16.mxu0 %v6579
    %7005 = vmatpush1.bf16.msra.mxu0 %v6578
    %7006 = vmatprep.subr.bf16.mxu0 %v6575
    %7007 = vmatpush1.bf16.msra.mxu0 %v6574
    %7008 = vmatprep.subr.bf16.mxu0 %v6571
    %7009 = vmatpush1.bf16.msra.mxu0 %v6570
    %7010 = vmatprep.subr.bf16.mxu0 %v6567
    %7011 = vmatpush1.bf16.msra.mxu0 %v6566
    %7012 = vmatprep.subr.bf16.mxu0 %v6563
    %7013 = vmatpush1.bf16.msra.mxu0 %v6562
    %7014 = vmatprep.subr.bf16.mxu0 %v6559
    %7015 = vmatpush1.bf16.msra.mxu0 %v6558
    %7016 = vmatprep.subr.bf16.mxu0 %v6555
    %7017 = vmatpush1.bf16.msra.mxu0 %v6554
    %7018 = vmatprep.subr.bf16.mxu0 0
    %7019 = vmatpush2.bf16.msra.mxu0 0
    %7020 = vmatprep.subr.bf16.mxu0 0
    %7021 = vmatpush2.bf16.msra.mxu0 0
    %7022 = vmatprep.subr.bf16.mxu0 0
    %7023 = vmatpush2.bf16.msra.mxu0 0
    %7024 = vmatprep.subr.bf16.mxu0 0
    %7025 = vmatpush2.bf16.msra.mxu0 0
    %7026 = vmatprep.subr.bf16.mxu0 0
    %7027 = vmatpush2.bf16.msra.mxu0 0
    %7028 = vmatprep.subr.bf16.mxu0 0
    %7029 = vmatpush2.bf16.msra.mxu0 0
    %7030 = vmatprep.subr.bf16.mxu0 0
    %7031 = vmatpush2.bf16.msra.mxu0 0
    %7032 = vmatprep.subr.bf16.mxu0 0
    %7033 = vmatpush2.bf16.msra.mxu0 0
    %7034 = vmatprep.mubr.bf16.mxu0 0
    %7035 = vmatmul.mubr.bf16.gmra.mxu0 %v6956
    %v7036 = vpop.f32.mrf.mxu0
    %v7037 = vadd.f32 0.0, %v7036
    %v7038 = vpop.f32.mrf.mxu0
    %v7039 = vadd.f32 0.0, %v7038
    %v7040 = vpop.f32.mrf.mxu0
    %v7041 = vpop.f32.mrf.mxu0
    %7042 = vdwg.mxu0
    %v7043 = vadd.f32 %v6957, %v6996
    %v7044 = vadd.f32 %v6958, %v6998
    %v7045 = vadd.f32 %v6959, %v7037
    %v7046 = vadd.f32 %v6960, %v7039
    %v7047 = vxor.u32 %v7043, 2147483648
    %v7048 = vmul.f32 %v7047, 1.442695
    %v7049 = vpow.pop %v7048
    %v7050 = vadd.f32 %v7049, 1.0
    %v7051 = vrcp.pop %v7050
    %v7052 = vmul.f32 1.0, %v7051
    %v7053 = vxor.u32 %v7044, 2147483648
    %v7054 = vmul.f32 %v7053, 1.442695
    %v7055 = vpow.pop %v7054
    %v7056 = vadd.f32 %v7055, 1.0
    %v7057 = vrcp.pop %v7056
    %v7058 = vmul.f32 1.0, %v7057
    %v7059 = vtanh.pop %v7045
    %v7060 = vxor.u32 %v7046, 2147483648
    %v7061 = vmul.f32 %v7060, 1.442695
    %v7062 = vpow.pop %v7061
    %v7063 = vadd.f32 %v7062, 1.0
    %v7064 = vrcp.pop %v7063
    %v7065 = vmul.f32 1.0, %v7064
    %v7066 = vmul.f32 %v7058, %v6953
    %v7067 = vmul.f32 %v7052, %v7059
    %v7068 = vadd.f32 %v7066, %v7067
    %v7069 = vtanh.pop %v7068
    %v7070 = vmul.f32 %v7065, %v7069
    %v7071 = vpack.c.bf16 %v7070, %v7070
    %v7072 = vld [vmem:[%s1851] sm:$0xff]
    %v7073 = vld [vmem:[%s1851 + $0x8] sm:$0xff]
    %v7074 = vld [vmem:[%s1851 + $0x10] sm:$0xff]
    %v7075 = vld [vmem:[%s1851 + $0x18] sm:$0xff]
    %7076 = vmatprep.subr.bf16.mxu0 %v6581
    %7077 = vmatpush1.bf16.msra.mxu0 %v6580
    %7078 = vmatprep.subr.bf16.mxu0 %v6577
    %7079 = vmatpush1.bf16.msra.mxu0 %v6576
    %7080 = vmatprep.subr.bf16.mxu0 %v6573
    %7081 = vmatpush1.bf16.msra.mxu0 %v6572
    %7082 = vmatprep.subr.bf16.mxu0 %v6569
    %7083 = vmatpush1.bf16.msra.mxu0 %v6568
    %7084 = vmatprep.subr.bf16.mxu0 %v6565
    %7085 = vmatpush1.bf16.msra.mxu0 %v6564
    %7086 = vmatprep.subr.bf16.mxu0 %v6561
    %7087 = vmatpush1.bf16.msra.mxu0 %v6560
    %7088 = vmatprep.subr.bf16.mxu0 %v6557
    %7089 = vmatpush1.bf16.msra.mxu0 %v6556
    %7090 = vmatprep.subr.bf16.mxu0 %v6553
    %7091 = vmatpush1.bf16.msra.mxu0 %v6552
    %7092 = vmatprep.subr.bf16.mxu0 0
    %7093 = vmatpush2.bf16.msra.mxu0 0
    %7094 = vmatprep.subr.bf16.mxu0 0
    %7095 = vmatpush2.bf16.msra.mxu0 0
    %7096 = vmatprep.subr.bf16.mxu0 0
    %7097 = vmatpush2.bf16.msra.mxu0 0
    %7098 = vmatprep.subr.bf16.mxu0 0
    %7099 = vmatpush2.bf16.msra.mxu0 0
    %7100 = vmatprep.subr.bf16.mxu0 0
    %7101 = vmatpush2.bf16.msra.mxu0 0
    %7102 = vmatprep.subr.bf16.mxu0 0
    %7103 = vmatpush2.bf16.msra.mxu0 0
    %7104 = vmatprep.subr.bf16.mxu0 0
    %7105 = vmatpush2.bf16.msra.mxu0 0
    %7106 = vmatprep.subr.bf16.mxu0 0
    %7107 = vmatpush2.bf16.msra.mxu0 0
    %7108 = vmatprep.mubr.bf16.mxu0 0
    %7109 = vmatmul.mubr.bf16.gmra.mxu0 %v7071
    %v7110 = vpop.f32.mrf.mxu0
    %v7111 = vadd.f32 0.0, %v7110
    %v7112 = vpop.f32.mrf.mxu0
    %v7113 = vadd.f32 0.0, %v7112
    %v7114 = vpop.f32.mrf.mxu0
    %v7115 = vpop.f32.mrf.mxu0
    %7116 = vdwg.mxu0
    %7117 = vmatprep.subr.bf16.mxu0 %v6583
    %7118 = vmatpush1.bf16.msra.mxu0 %v6582
    %7119 = vmatprep.subr.bf16.mxu0 %v6579
    %7120 = vmatpush1.bf16.msra.mxu0 %v6578
    %7121 = vmatprep.subr.bf16.mxu0 %v6575
    %7122 = vmatpush1.bf16.msra.mxu0 %v6574
    %7123 = vmatprep.subr.bf16.mxu0 %v6571
    %7124 = vmatpush1.bf16.msra.mxu0 %v6570
    %7125 = vmatprep.subr.bf16.mxu0 %v6567
    %7126 = vmatpush1.bf16.msra.mxu0 %v6566
    %7127 = vmatprep.subr.bf16.mxu0 %v6563
    %7128 = vmatpush1.bf16.msra.mxu0 %v6562
    %7129 = vmatprep.subr.bf16.mxu0 %v6559
    %7130 = vmatpush1.bf16.msra.mxu0 %v6558
    %7131 = vmatprep.subr.bf16.mxu0 %v6555
    %7132 = vmatpush1.bf16.msra.mxu0 %v6554
    %7133 = vmatprep.subr.bf16.mxu0 0
    %7134 = vmatpush2.bf16.msra.mxu0 0
    %7135 = vmatprep.subr.bf16.mxu0 0
    %7136 = vmatpush2.bf16.msra.mxu0 0
    %7137 = vmatprep.subr.bf16.mxu0 0
    %7138 = vmatpush2.bf16.msra.mxu0 0
    %7139 = vmatprep.subr.bf16.mxu0 0
    %7140 = vmatpush2.bf16.msra.mxu0 0
    %7141 = vmatprep.subr.bf16.mxu0 0
    %7142 = vmatpush2.bf16.msra.mxu0 0
    %7143 = vmatprep.subr.bf16.mxu0 0
    %7144 = vmatpush2.bf16.msra.mxu0 0
    %7145 = vmatprep.subr.bf16.mxu0 0
    %7146 = vmatpush2.bf16.msra.mxu0 0
    %7147 = vmatprep.subr.bf16.mxu0 0
    %7148 = vmatpush2.bf16.msra.mxu0 0
    %7149 = vmatprep.mubr.bf16.mxu0 0
    %7150 = vmatmul.mubr.bf16.gmra.mxu0 %v7071
    %v7151 = vpop.f32.mrf.mxu0
    %v7152 = vadd.f32 0.0, %v7151
    %v7153 = vpop.f32.mrf.mxu0
    %v7154 = vadd.f32 0.0, %v7153
    %v7155 = vpop.f32.mrf.mxu0
    %v7156 = vpop.f32.mrf.mxu0
    %7157 = vdwg.mxu0
    %v7158 = vadd.f32 %v7072, %v7111
    %v7159 = vadd.f32 %v7073, %v7113
    %v7160 = vadd.f32 %v7074, %v7152
    %v7161 = vadd.f32 %v7075, %v7154
    %v7162 = vxor.u32 %v7158, 2147483648
    %v7163 = vmul.f32 %v7162, 1.442695
    %v7164 = vpow.pop %v7163
    %v7165 = vadd.f32 %v7164, 1.0
    %v7166 = vrcp.pop %v7165
    %v7167 = vmul.f32 1.0, %v7166
    %v7168 = vxor.u32 %v7159, 2147483648
    %v7169 = vmul.f32 %v7168, 1.442695
    %v7170 = vpow.pop %v7169
    %v7171 = vadd.f32 %v7170, 1.0
    %v7172 = vrcp.pop %v7171
    %v7173 = vmul.f32 1.0, %v7172
    %v7174 = vtanh.pop %v7160
    %v7175 = vxor.u32 %v7161, 2147483648
    %v7176 = vmul.f32 %v7175, 1.442695
    %v7177 = vpow.pop %v7176
    %v7178 = vadd.f32 %v7177, 1.0
    %v7179 = vrcp.pop %v7178
    %v7180 = vmul.f32 1.0, %v7179
    %v7181 = vmul.f32 %v7173, %v7068
    %v7182 = vmul.f32 %v7167, %v7174
    %v7183 = vadd.f32 %v7181, %v7182
    %v7184 = vtanh.pop %v7183
    %v7185 = vmul.f32 %v7180, %v7184
    %v7186 = vpack.c.bf16 %v7185, %v7185
    %v7187 = vld [vmem:[%s2163] sm:$0xff]
    %v7188 = vld [vmem:[%s2163 + $0x8] sm:$0xff]
    %v7189 = vld [vmem:[%s2163 + $0x10] sm:$0xff]
    %v7190 = vld [vmem:[%s2163 + $0x18] sm:$0xff]
    %7191 = vmatprep.subr.bf16.mxu0 %v6581
    %7192 = vmatpush1.bf16.msra.mxu0 %v6580
    %7193 = vmatprep.subr.bf16.mxu0 %v6577
    %7194 = vmatpush1.bf16.msra.mxu0 %v6576
    %7195 = vmatprep.subr.bf16.mxu0 %v6573
    %7196 = vmatpush1.bf16.msra.mxu0 %v6572
    %7197 = vmatprep.subr.bf16.mxu0 %v6569
    %7198 = vmatpush1.bf16.msra.mxu0 %v6568
    %7199 = vmatprep.subr.bf16.mxu0 %v6565
    %7200 = vmatpush1.bf16.msra.mxu0 %v6564
    %7201 = vmatprep.subr.bf16.mxu0 %v6561
    %7202 = vmatpush1.bf16.msra.mxu0 %v6560
    %7203 = vmatprep.subr.bf16.mxu0 %v6557
    %7204 = vmatpush1.bf16.msra.mxu0 %v6556
    %7205 = vmatprep.subr.bf16.mxu0 %v6553
    %7206 = vmatpush1.bf16.msra.mxu0 %v6552
    %7207 = vmatprep.subr.bf16.mxu0 0
    %7208 = vmatpush2.bf16.msra.mxu0 0
    %7209 = vmatprep.subr.bf16.mxu0 0
    %7210 = vmatpush2.bf16.msra.mxu0 0
    %7211 = vmatprep.subr.bf16.mxu0 0
    %7212 = vmatpush2.bf16.msra.mxu0 0
    %7213 = vmatprep.subr.bf16.mxu0 0
    %7214 = vmatpush2.bf16.msra.mxu0 0
    %7215 = vmatprep.subr.bf16.mxu0 0
    %7216 = vmatpush2.bf16.msra.mxu0 0
    %7217 = vmatprep.subr.bf16.mxu0 0
    %7218 = vmatpush2.bf16.msra.mxu0 0
    %7219 = vmatprep.subr.bf16.mxu0 0
    %7220 = vmatpush2.bf16.msra.mxu0 0
    %7221 = vmatprep.subr.bf16.mxu0 0
    %7222 = vmatpush2.bf16.msra.mxu0 0
    %7223 = vmatprep.mubr.bf16.mxu0 0
    %7224 = vmatmul.mubr.bf16.gmra.mxu0 %v7186
    %v7225 = vpop.f32.mrf.mxu0
    %v7226 = vadd.f32 0.0, %v7225
    %v7227 = vpop.f32.mrf.mxu0
    %v7228 = vadd.f32 0.0, %v7227
    %v7229 = vpop.f32.mrf.mxu0
    %v7230 = vpop.f32.mrf.mxu0
    %7231 = vdwg.mxu0
    %7232 = vmatprep.subr.bf16.mxu0 %v6583
    %7233 = vmatpush1.bf16.msra.mxu0 %v6582
    %7234 = vmatprep.subr.bf16.mxu0 %v6579
    %7235 = vmatpush1.bf16.msra.mxu0 %v6578
    %7236 = vmatprep.subr.bf16.mxu0 %v6575
    %7237 = vmatpush1.bf16.msra.mxu0 %v6574
    %7238 = vmatprep.subr.bf16.mxu0 %v6571
    %7239 = vmatpush1.bf16.msra.mxu0 %v6570
    %7240 = vmatprep.subr.bf16.mxu0 %v6567
    %7241 = vmatpush1.bf16.msra.mxu0 %v6566
    %7242 = vmatprep.subr.bf16.mxu0 %v6563
    %7243 = vmatpush1.bf16.msra.mxu0 %v6562
    %7244 = vmatprep.subr.bf16.mxu0 %v6559
    %7245 = vmatpush1.bf16.msra.mxu0 %v6558
    %7246 = vmatprep.subr.bf16.mxu0 %v6555
    %7247 = vmatpush1.bf16.msra.mxu0 %v6554
    %7248 = vmatprep.subr.bf16.mxu0 0
    %7249 = vmatpush2.bf16.msra.mxu0 0
    %7250 = vmatprep.subr.bf16.mxu0 0
    %7251 = vmatpush2.bf16.msra.mxu0 0
    %7252 = vmatprep.subr.bf16.mxu0 0
    %7253 = vmatpush2.bf16.msra.mxu0 0
    %7254 = vmatprep.subr.bf16.mxu0 0
    %7255 = vmatpush2.bf16.msra.mxu0 0
    %7256 = vmatprep.subr.bf16.mxu0 0
    %7257 = vmatpush2.bf16.msra.mxu0 0
    %7258 = vmatprep.subr.bf16.mxu0 0
    %7259 = vmatpush2.bf16.msra.mxu0 0
    %7260 = vmatprep.subr.bf16.mxu0 0
    %7261 = vmatpush2.bf16.msra.mxu0 0
    %7262 = vmatprep.subr.bf16.mxu0 0
    %7263 = vmatpush2.bf16.msra.mxu0 0
    %7264 = vmatprep.mubr.bf16.mxu0 0
    %7265 = vmatmul.mubr.bf16.gmra.mxu0 %v7186
    %v7266 = vpop.f32.mrf.mxu0
    %v7267 = vadd.f32 0.0, %v7266
    %v7268 = vpop.f32.mrf.mxu0
    %v7269 = vadd.f32 0.0, %v7268
    %v7270 = vpop.f32.mrf.mxu0
    %v7271 = vpop.f32.mrf.mxu0
    %7272 = vdwg.mxu0
    %v7273 = vadd.f32 %v7187, %v7226
    %v7274 = vadd.f32 %v7188, %v7228
    %v7275 = vadd.f32 %v7189, %v7267
    %v7276 = vadd.f32 %v7190, %v7269
    %v7277 = vxor.u32 %v7273, 2147483648
    %v7278 = vmul.f32 %v7277, 1.442695
    %v7279 = vpow.pop %v7278
    %v7280 = vadd.f32 %v7279, 1.0
    %v7281 = vrcp.pop %v7280
    %v7282 = vmul.f32 1.0, %v7281
    %v7283 = vxor.u32 %v7274, 2147483648
    %v7284 = vmul.f32 %v7283, 1.442695
    %v7285 = vpow.pop %v7284
    %v7286 = vadd.f32 %v7285, 1.0
    %v7287 = vrcp.pop %v7286
    %v7288 = vmul.f32 1.0, %v7287
    %v7289 = vtanh.pop %v7275
    %v7290 = vxor.u32 %v7276, 2147483648
    %v7291 = vmul.f32 %v7290, 1.442695
    %v7292 = vpow.pop %v7291
    %v7293 = vadd.f32 %v7292, 1.0
    %v7294 = vrcp.pop %v7293
    %v7295 = vmul.f32 1.0, %v7294
    %v7296 = vmul.f32 %v7288, %v7183
    %v7297 = vmul.f32 %v7282, %v7289
    %v7298 = vadd.f32 %v7296, %v7297
    %v7299 = vtanh.pop %v7298
    %v7300 = vmul.f32 %v7295, %v7299
    %v7301 = vpack.c.bf16 %v7300, %v7300
    %v7302 = vld [vmem:[%s2475] sm:$0xff]
    %v7303 = vld [vmem:[%s2475 + $0x8] sm:$0xff]
    %v7304 = vld [vmem:[%s2475 + $0x10] sm:$0xff]
    %v7305 = vld [vmem:[%s2475 + $0x18] sm:$0xff]
    %7306 = vmatprep.subr.bf16.mxu0 %v6581
    %7307 = vmatpush1.bf16.msra.mxu0 %v6580
    %7308 = vmatprep.subr.bf16.mxu0 %v6577
    %7309 = vmatpush1.bf16.msra.mxu0 %v6576
    %7310 = vmatprep.subr.bf16.mxu0 %v6573
    %7311 = vmatpush1.bf16.msra.mxu0 %v6572
    %7312 = vmatprep.subr.bf16.mxu0 %v6569
    %7313 = vmatpush1.bf16.msra.mxu0 %v6568
    %7314 = vmatprep.subr.bf16.mxu0 %v6565
    %7315 = vmatpush1.bf16.msra.mxu0 %v6564
    %7316 = vmatprep.subr.bf16.mxu0 %v6561
    %7317 = vmatpush1.bf16.msra.mxu0 %v6560
    %7318 = vmatprep.subr.bf16.mxu0 %v6557
    %7319 = vmatpush1.bf16.msra.mxu0 %v6556
    %7320 = vmatprep.subr.bf16.mxu0 %v6553
    %7321 = vmatpush1.bf16.msra.mxu0 %v6552
    %7322 = vmatprep.subr.bf16.mxu0 0
    %7323 = vmatpush2.bf16.msra.mxu0 0
    %7324 = vmatprep.subr.bf16.mxu0 0
    %7325 = vmatpush2.bf16.msra.mxu0 0
    %7326 = vmatprep.subr.bf16.mxu0 0
    %7327 = vmatpush2.bf16.msra.mxu0 0
    %7328 = vmatprep.subr.bf16.mxu0 0
    %7329 = vmatpush2.bf16.msra.mxu0 0
    %7330 = vmatprep.subr.bf16.mxu0 0
    %7331 = vmatpush2.bf16.msra.mxu0 0
    %7332 = vmatprep.subr.bf16.mxu0 0
    %7333 = vmatpush2.bf16.msra.mxu0 0
    %7334 = vmatprep.subr.bf16.mxu0 0
    %7335 = vmatpush2.bf16.msra.mxu0 0
    %7336 = vmatprep.subr.bf16.mxu0 0
    %7337 = vmatpush2.bf16.msra.mxu0 0
    %7338 = vmatprep.mubr.bf16.mxu0 0
    %7339 = vmatmul.mubr.bf16.gmra.mxu0 %v7301
    %v7340 = vpop.f32.mrf.mxu0
    %v7341 = vadd.f32 0.0, %v7340
    %v7342 = vpop.f32.mrf.mxu0
    %v7343 = vadd.f32 0.0, %v7342
    %v7344 = vpop.f32.mrf.mxu0
    %v7345 = vpop.f32.mrf.mxu0
    %7346 = vdwg.mxu0
    %7347 = vmatprep.subr.bf16.mxu0 %v6583
    %7348 = vmatpush1.bf16.msra.mxu0 %v6582
    %7349 = vmatprep.subr.bf16.mxu0 %v6579
    %7350 = vmatpush1.bf16.msra.mxu0 %v6578
    %7351 = vmatprep.subr.bf16.mxu0 %v6575
    %7352 = vmatpush1.bf16.msra.mxu0 %v6574
    %7353 = vmatprep.subr.bf16.mxu0 %v6571
    %7354 = vmatpush1.bf16.msra.mxu0 %v6570
    %7355 = vmatprep.subr.bf16.mxu0 %v6567
    %7356 = vmatpush1.bf16.msra.mxu0 %v6566
    %7357 = vmatprep.subr.bf16.mxu0 %v6563
    %7358 = vmatpush1.bf16.msra.mxu0 %v6562
    %7359 = vmatprep.subr.bf16.mxu0 %v6559
    %7360 = vmatpush1.bf16.msra.mxu0 %v6558
    %7361 = vmatprep.subr.bf16.mxu0 %v6555
    %7362 = vmatpush1.bf16.msra.mxu0 %v6554
    %7363 = vmatprep.subr.bf16.mxu0 0
    %7364 = vmatpush2.bf16.msra.mxu0 0
    %7365 = vmatprep.subr.bf16.mxu0 0
    %7366 = vmatpush2.bf16.msra.mxu0 0
    %7367 = vmatprep.subr.bf16.mxu0 0
    %7368 = vmatpush2.bf16.msra.mxu0 0
    %7369 = vmatprep.subr.bf16.mxu0 0
    %7370 = vmatpush2.bf16.msra.mxu0 0
    %7371 = vmatprep.subr.bf16.mxu0 0
    %7372 = vmatpush2.bf16.msra.mxu0 0
    %7373 = vmatprep.subr.bf16.mxu0 0
    %7374 = vmatpush2.bf16.msra.mxu0 0
    %7375 = vmatprep.subr.bf16.mxu0 0
    %7376 = vmatpush2.bf16.msra.mxu0 0
    %7377 = vmatprep.subr.bf16.mxu0 0
    %7378 = vmatpush2.bf16.msra.mxu0 0
    %7379 = vmatprep.mubr.bf16.mxu0 0
    %7380 = vmatmul.mubr.bf16.gmra.mxu0 %v7301
    %v7381 = vpop.f32.mrf.mxu0
    %v7382 = vadd.f32 0.0, %v7381
    %v7383 = vpop.f32.mrf.mxu0
    %v7384 = vadd.f32 0.0, %v7383
    %v7385 = vpop.f32.mrf.mxu0
    %v7386 = vpop.f32.mrf.mxu0
    %7387 = vdwg.mxu0
    %v7388 = vadd.f32 %v7302, %v7341
    %v7389 = vadd.f32 %v7303, %v7343
    %v7390 = vadd.f32 %v7304, %v7382
    %v7391 = vadd.f32 %v7305, %v7384
    %v7392 = vxor.u32 %v7388, 2147483648
    %v7393 = vmul.f32 %v7392, 1.442695
    %v7394 = vpow.pop %v7393
    %v7395 = vadd.f32 %v7394, 1.0
    %v7396 = vrcp.pop %v7395
    %v7397 = vmul.f32 1.0, %v7396
    %v7398 = vxor.u32 %v7389, 2147483648
    %v7399 = vmul.f32 %v7398, 1.442695
    %v7400 = vpow.pop %v7399
    %v7401 = vadd.f32 %v7400, 1.0
    %v7402 = vrcp.pop %v7401
    %v7403 = vmul.f32 1.0, %v7402
    %v7404 = vtanh.pop %v7390
    %v7405 = vxor.u32 %v7391, 2147483648
    %v7406 = vmul.f32 %v7405, 1.442695
    %v7407 = vpow.pop %v7406
    %v7408 = vadd.f32 %v7407, 1.0
    %v7409 = vrcp.pop %v7408
    %v7410 = vmul.f32 1.0, %v7409
    %v7411 = vmul.f32 %v7403, %v7298
    %v7412 = vmul.f32 %v7397, %v7404
    %v7413 = vadd.f32 %v7411, %v7412
    %v7414 = vtanh.pop %v7413
    %v7415 = vmul.f32 %v7410, %v7414
    %v7416 = vpack.c.bf16 %v7415, %v7415
    %v7417 = vld [vmem:[%s2787] sm:$0xff]
    %v7418 = vld [vmem:[%s2787 + $0x8] sm:$0xff]
    %v7419 = vld [vmem:[%s2787 + $0x10] sm:$0xff]
    %v7420 = vld [vmem:[%s2787 + $0x18] sm:$0xff]
    %7421 = vmatprep.subr.bf16.mxu0 %v6581
    %7422 = vmatpush1.bf16.msra.mxu0 %v6580
    %7423 = vmatprep.subr.bf16.mxu0 %v6577
    %7424 = vmatpush1.bf16.msra.mxu0 %v6576
    %7425 = vmatprep.subr.bf16.mxu0 %v6573
    %7426 = vmatpush1.bf16.msra.mxu0 %v6572
    %7427 = vmatprep.subr.bf16.mxu0 %v6569
    %7428 = vmatpush1.bf16.msra.mxu0 %v6568
    %7429 = vmatprep.subr.bf16.mxu0 %v6565
    %7430 = vmatpush1.bf16.msra.mxu0 %v6564
    %7431 = vmatprep.subr.bf16.mxu0 %v6561
    %7432 = vmatpush1.bf16.msra.mxu0 %v6560
    %7433 = vmatprep.subr.bf16.mxu0 %v6557
    %7434 = vmatpush1.bf16.msra.mxu0 %v6556
    %7435 = vmatprep.subr.bf16.mxu0 %v6553
    %7436 = vmatpush1.bf16.msra.mxu0 %v6552
    %7437 = vmatprep.subr.bf16.mxu0 0
    %7438 = vmatpush2.bf16.msra.mxu0 0
    %7439 = vmatprep.subr.bf16.mxu0 0
    %7440 = vmatpush2.bf16.msra.mxu0 0
    %7441 = vmatprep.subr.bf16.mxu0 0
    %7442 = vmatpush2.bf16.msra.mxu0 0
    %7443 = vmatprep.subr.bf16.mxu0 0
    %7444 = vmatpush2.bf16.msra.mxu0 0
    %7445 = vmatprep.subr.bf16.mxu0 0
    %7446 = vmatpush2.bf16.msra.mxu0 0
    %7447 = vmatprep.subr.bf16.mxu0 0
    %7448 = vmatpush2.bf16.msra.mxu0 0
    %7449 = vmatprep.subr.bf16.mxu0 0
    %7450 = vmatpush2.bf16.msra.mxu0 0
    %7451 = vmatprep.subr.bf16.mxu0 0
    %7452 = vmatpush2.bf16.msra.mxu0 0
    %7453 = vmatprep.mubr.bf16.mxu0 0
    %7454 = vmatmul.mubr.bf16.gmra.mxu0 %v7416
    %v7455 = vpop.f32.mrf.mxu0
    %v7456 = vadd.f32 0.0, %v7455
    %v7457 = vpop.f32.mrf.mxu0
    %v7458 = vadd.f32 0.0, %v7457
    %v7459 = vpop.f32.mrf.mxu0
    %v7460 = vpop.f32.mrf.mxu0
    %7461 = vdwg.mxu0
    %7462 = vmatprep.subr.bf16.mxu0 %v6583
    %7463 = vmatpush1.bf16.msra.mxu0 %v6582
    %7464 = vmatprep.subr.bf16.mxu0 %v6579
    %7465 = vmatpush1.bf16.msra.mxu0 %v6578
    %7466 = vmatprep.subr.bf16.mxu0 %v6575
    %7467 = vmatpush1.bf16.msra.mxu0 %v6574
    %7468 = vmatprep.subr.bf16.mxu0 %v6571
    %7469 = vmatpush1.bf16.msra.mxu0 %v6570
    %7470 = vmatprep.subr.bf16.mxu0 %v6567
    %7471 = vmatpush1.bf16.msra.mxu0 %v6566
    %7472 = vmatprep.subr.bf16.mxu0 %v6563
    %7473 = vmatpush1.bf16.msra.mxu0 %v6562
    %7474 = vmatprep.subr.bf16.mxu0 %v6559
    %7475 = vmatpush1.bf16.msra.mxu0 %v6558
    %7476 = vmatprep.subr.bf16.mxu0 %v6555
    %7477 = vmatpush1.bf16.msra.mxu0 %v6554
    %7478 = vmatprep.subr.bf16.mxu0 0
    %7479 = vmatpush2.bf16.msra.mxu0 0
    %7480 = vmatprep.subr.bf16.mxu0 0
    %7481 = vmatpush2.bf16.msra.mxu0 0
    %7482 = vmatprep.subr.bf16.mxu0 0
    %7483 = vmatpush2.bf16.msra.mxu0 0
    %7484 = vmatprep.subr.bf16.mxu0 0
    %7485 = vmatpush2.bf16.msra.mxu0 0
    %7486 = vmatprep.subr.bf16.mxu0 0
    %7487 = vmatpush2.bf16.msra.mxu0 0
    %7488 = vmatprep.subr.bf16.mxu0 0
    %7489 = vmatpush2.bf16.msra.mxu0 0
    %7490 = vmatprep.subr.bf16.mxu0 0
    %7491 = vmatpush2.bf16.msra.mxu0 0
    %7492 = vmatprep.subr.bf16.mxu0 0
    %7493 = vmatpush2.bf16.msra.mxu0 0
    %7494 = vmatprep.mubr.bf16.mxu0 0
    %7495 = vmatmul.mubr.bf16.gmra.mxu0 %v7416
    %v7496 = vpop.f32.mrf.mxu0
    %v7497 = vadd.f32 0.0, %v7496
    %v7498 = vpop.f32.mrf.mxu0
    %v7499 = vadd.f32 0.0, %v7498
    %v7500 = vpop.f32.mrf.mxu0
    %v7501 = vpop.f32.mrf.mxu0
    %7502 = vdwg.mxu0
    %v7503 = vadd.f32 %v7417, %v7456
    %v7504 = vadd.f32 %v7418, %v7458
    %v7505 = vadd.f32 %v7419, %v7497
    %v7506 = vadd.f32 %v7420, %v7499
    %v7507 = vxor.u32 %v7503, 2147483648
    %v7508 = vmul.f32 %v7507, 1.442695
    %v7509 = vpow.pop %v7508
    %v7510 = vadd.f32 %v7509, 1.0
    %v7511 = vrcp.pop %v7510
    %v7512 = vmul.f32 1.0, %v7511
    %v7513 = vxor.u32 %v7504, 2147483648
    %v7514 = vmul.f32 %v7513, 1.442695
    %v7515 = vpow.pop %v7514
    %v7516 = vadd.f32 %v7515, 1.0
    %v7517 = vrcp.pop %v7516
    %v7518 = vmul.f32 1.0, %v7517
    %v7519 = vtanh.pop %v7505
    %v7520 = vxor.u32 %v7506, 2147483648
    %v7521 = vmul.f32 %v7520, 1.442695
    %v7522 = vpow.pop %v7521
    %v7523 = vadd.f32 %v7522, 1.0
    %v7524 = vrcp.pop %v7523
    %v7525 = vmul.f32 1.0, %v7524
    %v7526 = vmul.f32 %v7518, %v7413
    %v7527 = vmul.f32 %v7512, %v7519
    %v7528 = vadd.f32 %v7526, %v7527
    %v7529 = vtanh.pop %v7528
    %v7530 = vmul.f32 %v7525, %v7529
    %v7531 = vpack.c.bf16 %v7530, %v7530
    %s7532 = smul.u32 4, 3
    %s7533 = smul.u32 %s7532, 16
    %s7534 = smul.u32 %s7533, 1
    %s7535 = sshll.u32 %s7534, 4
    %7536 = dma.done %s80, %s7535
    %s7537 = smul.u32 4, 16
    %s7538 = smul.u32 %s7537, 2
    %s7539 = sshll.u32 %s7538, 4
    %7540 = dma.done %s92, %s7539
    %s7541 = smul.u32 %s3097, 32
    %s7542 = smul.u32 %s7541, 2
    %s7543 = sshll.u32 %s7542, 4
    %7544 = dma.done %s166, %s7543
    %v7545 = vld [vmem:[#allocation6] sm:$0xf]
    %v7546 = vld [vmem:[#allocation6 + $0x4] sm:$0xf]
    %v7547 = vld [vmem:[#allocation6 + $0x8] sm:$0xf]
    %v7548 = vld [vmem:[#allocation6 + $0xc] sm:$0xf]
    %v7549 = vld [vmem:[#allocation6 + $0x10] sm:$0xf]
    %v7550 = vld [vmem:[#allocation6 + $0x14] sm:$0xf]
    %v7551 = vld [vmem:[#allocation6 + $0x18] sm:$0xf]
    %v7552 = vld [vmem:[#allocation6 + $0x1c] sm:$0xf]
    %v7553 = vld [vmem:[#allocation6 + $0x20] sm:$0xf]
    %v7554 = vld [vmem:[#allocation6 + $0x24] sm:$0xf]
    %v7555 = vld [vmem:[#allocation6 + $0x28] sm:$0xf]
    %v7556 = vld [vmem:[#allocation6 + $0x2c] sm:$0xf]
    %v7557 = vld [vmem:[#allocation6 + $0x30] sm:$0xf]
    %v7558 = vld [vmem:[#allocation6 + $0x34] sm:$0xf]
    %v7559 = vld [vmem:[#allocation6 + $0x38] sm:$0xf]
    %v7560 = vld [vmem:[#allocation6 + $0x3c] sm:$0xf]
    %v7561 = vld [vmem:[%s4] sm:$0x1]
    %v7562 = vlaneseq
    %v7563 = vshrl.u32 %v7562, 7
    %v7564 = vsub.s32 0, %v7563
    %v7565 = vrot.slane %v7561, %v7564
    %v7582 = vunpack.c.l.b16 %v7545
    %v7583 = vunpack.c.l.b16 %v7546
    %v7584 = vunpack.c.l.b16 %v7547
    %v7585 = vunpack.c.l.b16 %v7548
    %v7586 = vunpack.c.l.b16 %v7549
    %v7587 = vunpack.c.l.b16 %v7550
    %v7588 = vunpack.c.l.b16 %v7551
    %v7589 = vunpack.c.l.b16 %v7552
    %v7590 = vunpack.c.l.b16 %v7553
    %v7591 = vunpack.c.l.b16 %v7554
    %v7592 = vunpack.c.l.b16 %v7555
    %v7593 = vunpack.c.l.b16 %v7556
    %v7594 = vunpack.c.l.b16 %v7557
    %v7595 = vunpack.c.l.b16 %v7558
    %v7596 = vunpack.c.l.b16 %v7559
    %v7597 = vunpack.c.l.b16 %v7560
    %v7598 = vpack.c.b16 %v7583, %v7582
    %v7599 = vpack.c.b16 %v7585, %v7584
    %v7600 = vpack.c.b16 %v7587, %v7586
    %v7601 = vpack.c.b16 %v7589, %v7588
    %v7602 = vpack.c.b16 %v7591, %v7590
    %v7603 = vpack.c.b16 %v7593, %v7592
    %v7604 = vpack.c.b16 %v7595, %v7594
    %v7605 = vpack.c.b16 %v7597, %v7596
    %7614 = vmatprep.subr.bf16.mxu0 0
    %7615 = vmatpush1.bf16.msra.mxu0 %v7605
    %7616 = vmatprep.subr.bf16.mxu0 0
    %7617 = vmatpush1.bf16.msra.mxu0 %v7604
    %7618 = vmatprep.subr.bf16.mxu0 0
    %7619 = vmatpush1.bf16.msra.mxu0 %v7603
    %7620 = vmatprep.subr.bf16.mxu0 0
    %7621 = vmatpush1.bf16.msra.mxu0 %v7602
    %7622 = vmatprep.subr.bf16.mxu0 0
    %7623 = vmatpush1.bf16.msra.mxu0 %v7601
    %7624 = vmatprep.subr.bf16.mxu0 0
    %7625 = vmatpush1.bf16.msra.mxu0 %v7600
    %7626 = vmatprep.subr.bf16.mxu0 0
    %7627 = vmatpush1.bf16.msra.mxu0 %v7599
    %7628 = vmatprep.subr.bf16.mxu0 0
    %7629 = vmatpush1.bf16.msra.mxu0 %v7598
    %7630 = vmatprep.subr.bf16.mxu0 0
    %7631 = vmatpush2.bf16.msra.mxu0 0
    %7632 = vmatprep.subr.bf16.mxu0 0
    %7633 = vmatpush2.bf16.msra.mxu0 0
    %7634 = vmatprep.subr.bf16.mxu0 0
    %7635 = vmatpush2.bf16.msra.mxu0 0
    %7636 = vmatprep.subr.bf16.mxu0 0
    %7637 = vmatpush2.bf16.msra.mxu0 0
    %7638 = vmatprep.subr.bf16.mxu0 0
    %7639 = vmatpush2.bf16.msra.mxu0 0
    %7640 = vmatprep.subr.bf16.mxu0 0
    %7641 = vmatpush2.bf16.msra.mxu0 0
    %7642 = vmatprep.subr.bf16.mxu0 0
    %7643 = vmatpush2.bf16.msra.mxu0 0
    %7644 = vmatprep.subr.bf16.mxu0 0
    %7645 = vmatpush2.bf16.msra.mxu0 0
    %7646 = vmatprep.mubr.bf16.mxu0 0
    %7647 = vmatmul.mubr.bf16.gmra.mxu0 %v7531
    %v7648 = vpop.f32.mrf.mxu0
    %v7649 = vadd.f32 %v7565, %v7648
    %v7650 = vpop.f32.mrf.mxu0
    %v7651 = vpop.f32.mrf.mxu0
    %v7652 = vpop.f32.mrf.mxu0
    %7653 = vdwg.mxu0
    %v7654 = vmax.f32 %v7649, 0.0
    %v7655 = vpack.c.bf16 %v7654, %v7654
    %s7656 = scalar_lea.vmem [#allocation6], 64
    %v7657 = vld [vmem:[%s7656] sm:$0xf]
    %v7658 = vld [vmem:[%s7656 + $0x4] sm:$0xf]
    %v7659 = vld [vmem:[%s7656 + $0x8] sm:$0xf]
    %v7660 = vld [vmem:[%s7656 + $0xc] sm:$0xf]
    %v7661 = vld [vmem:[%s7656 + $0x10] sm:$0xf]
    %v7662 = vld [vmem:[%s7656 + $0x14] sm:$0xf]
    %v7663 = vld [vmem:[%s7656 + $0x18] sm:$0xf]
    %v7664 = vld [vmem:[%s7656 + $0x1c] sm:$0xf]
    %v7665 = vld [vmem:[%s7656 + $0x20] sm:$0xf]
    %v7666 = vld [vmem:[%s7656 + $0x24] sm:$0xf]
    %v7667 = vld [vmem:[%s7656 + $0x28] sm:$0xf]
    %v7668 = vld [vmem:[%s7656 + $0x2c] sm:$0xf]
    %v7669 = vld [vmem:[%s7656 + $0x30] sm:$0xf]
    %v7670 = vld [vmem:[%s7656 + $0x34] sm:$0xf]
    %v7671 = vld [vmem:[%s7656 + $0x38] sm:$0xf]
    %v7672 = vld [vmem:[%s7656 + $0x3c] sm:$0xf]
    %v7673 = vld [vmem:[%s4 + $0x1] sm:$0x1]
    %v7674 = vlaneseq
    %v7675 = vshrl.u32 %v7674, 7
    %v7676 = vsub.s32 0, %v7675
    %v7677 = vrot.slane %v7673, %v7676
    %v7694 = vunpack.c.l.b16 %v7657
    %v7695 = vunpack.c.l.b16 %v7658
    %v7696 = vunpack.c.l.b16 %v7659
    %v7697 = vunpack.c.l.b16 %v7660
    %v7698 = vunpack.c.l.b16 %v7661
    %v7699 = vunpack.c.l.b16 %v7662
    %v7700 = vunpack.c.l.b16 %v7663
    %v7701 = vunpack.c.l.b16 %v7664
    %v7702 = vunpack.c.l.b16 %v7665
    %v7703 = vunpack.c.l.b16 %v7666
    %v7704 = vunpack.c.l.b16 %v7667
    %v7705 = vunpack.c.l.b16 %v7668
    %v7706 = vunpack.c.l.b16 %v7669
    %v7707 = vunpack.c.l.b16 %v7670
    %v7708 = vunpack.c.l.b16 %v7671
    %v7709 = vunpack.c.l.b16 %v7672
    %v7710 = vpack.c.b16 %v7695, %v7694
    %v7711 = vpack.c.b16 %v7697, %v7696
    %v7712 = vpack.c.b16 %v7699, %v7698
    %v7713 = vpack.c.b16 %v7701, %v7700
    %v7714 = vpack.c.b16 %v7703, %v7702
    %v7715 = vpack.c.b16 %v7705, %v7704
    %v7716 = vpack.c.b16 %v7707, %v7706
    %v7717 = vpack.c.b16 %v7709, %v7708
    %7726 = vmatprep.subr.bf16.mxu0 0
    %7727 = vmatpush1.bf16.msra.mxu0 %v7717
    %7728 = vmatprep.subr.bf16.mxu0 0
    %7729 = vmatpush1.bf16.msra.mxu0 %v7716
    %7730 = vmatprep.subr.bf16.mxu0 0
    %7731 = vmatpush1.bf16.msra.mxu0 %v7715
    %7732 = vmatprep.subr.bf16.mxu0 0
    %7733 = vmatpush1.bf16.msra.mxu0 %v7714
    %7734 = vmatprep.subr.bf16.mxu0 0
    %7735 = vmatpush1.bf16.msra.mxu0 %v7713
    %7736 = vmatprep.subr.bf16.mxu0 0
    %7737 = vmatpush1.bf16.msra.mxu0 %v7712
    %7738 = vmatprep.subr.bf16.mxu0 0
    %7739 = vmatpush1.bf16.msra.mxu0 %v7711
    %7740 = vmatprep.subr.bf16.mxu0 0
    %7741 = vmatpush1.bf16.msra.mxu0 %v7710
    %7742 = vmatprep.subr.bf16.mxu0 0
    %7743 = vmatpush2.bf16.msra.mxu0 0
    %7744 = vmatprep.subr.bf16.mxu0 0
    %7745 = vmatpush2.bf16.msra.mxu0 0
    %7746 = vmatprep.subr.bf16.mxu0 0
    %7747 = vmatpush2.bf16.msra.mxu0 0
    %7748 = vmatprep.subr.bf16.mxu0 0
    %7749 = vmatpush2.bf16.msra.mxu0 0
    %7750 = vmatprep.subr.bf16.mxu0 0
    %7751 = vmatpush2.bf16.msra.mxu0 0
    %7752 = vmatprep.subr.bf16.mxu0 0
    %7753 = vmatpush2.bf16.msra.mxu0 0
    %7754 = vmatprep.subr.bf16.mxu0 0
    %7755 = vmatpush2.bf16.msra.mxu0 0
    %7756 = vmatprep.subr.bf16.mxu0 0
    %7757 = vmatpush2.bf16.msra.mxu0 0
    %7758 = vmatprep.mubr.bf16.mxu0 0
    %7759 = vmatmul.mubr.bf16.gmra.mxu0 %v7655
    %v7760 = vpop.f32.mrf.mxu0
    %v7761 = vadd.f32 %v7677, %v7760
    %v7762 = vpop.f32.mrf.mxu0
    %v7763 = vpop.f32.mrf.mxu0
    %v7764 = vpop.f32.mrf.mxu0
    %7765 = vdwg.mxu0
    %v7766 = vmax.f32 %v7761, 0.0
    %v7767 = vpack.c.bf16 %v7766, %v7766
    %s7768 = scalar_lea.vmem [#allocation6], 128
    %v7769 = vld [vmem:[%s7768] sm:$0xf]
    %v7770 = vld [vmem:[%s7768 + $0x4] sm:$0xf]
    %v7771 = vld [vmem:[%s7768 + $0x8] sm:$0xf]
    %v7772 = vld [vmem:[%s7768 + $0xc] sm:$0xf]
    %v7773 = vld [vmem:[%s7768 + $0x10] sm:$0xf]
    %v7774 = vld [vmem:[%s7768 + $0x14] sm:$0xf]
    %v7775 = vld [vmem:[%s7768 + $0x18] sm:$0xf]
    %v7776 = vld [vmem:[%s7768 + $0x1c] sm:$0xf]
    %v7777 = vld [vmem:[%s7768 + $0x20] sm:$0xf]
    %v7778 = vld [vmem:[%s7768 + $0x24] sm:$0xf]
    %v7779 = vld [vmem:[%s7768 + $0x28] sm:$0xf]
    %v7780 = vld [vmem:[%s7768 + $0x2c] sm:$0xf]
    %v7781 = vld [vmem:[%s7768 + $0x30] sm:$0xf]
    %v7782 = vld [vmem:[%s7768 + $0x34] sm:$0xf]
    %v7783 = vld [vmem:[%s7768 + $0x38] sm:$0xf]
    %v7784 = vld [vmem:[%s7768 + $0x3c] sm:$0xf]
    %v7785 = vld [vmem:[%s4 + $0x2] sm:$0x1]
    %v7786 = vlaneseq
    %v7787 = vshrl.u32 %v7786, 7
    %v7788 = vsub.s32 0, %v7787
    %v7789 = vrot.slane %v7785, %v7788
    %v7806 = vunpack.c.l.b16 %v7769
    %v7807 = vunpack.c.l.b16 %v7770
    %v7808 = vunpack.c.l.b16 %v7771
    %v7809 = vunpack.c.l.b16 %v7772
    %v7810 = vunpack.c.l.b16 %v7773
    %v7811 = vunpack.c.l.b16 %v7774
    %v7812 = vunpack.c.l.b16 %v7775
    %v7813 = vunpack.c.l.b16 %v7776
    %v7814 = vunpack.c.l.b16 %v7777
    %v7815 = vunpack.c.l.b16 %v7778
    %v7816 = vunpack.c.l.b16 %v7779
    %v7817 = vunpack.c.l.b16 %v7780
    %v7818 = vunpack.c.l.b16 %v7781
    %v7819 = vunpack.c.l.b16 %v7782
    %v7820 = vunpack.c.l.b16 %v7783
    %v7821 = vunpack.c.l.b16 %v7784
    %v7822 = vpack.c.b16 %v7807, %v7806
    %v7823 = vpack.c.b16 %v7809, %v7808
    %v7824 = vpack.c.b16 %v7811, %v7810
    %v7825 = vpack.c.b16 %v7813, %v7812
    %v7826 = vpack.c.b16 %v7815, %v7814
    %v7827 = vpack.c.b16 %v7817, %v7816
    %v7828 = vpack.c.b16 %v7819, %v7818
    %v7829 = vpack.c.b16 %v7821, %v7820
    %7838 = vmatprep.subr.bf16.mxu0 0
    %7839 = vmatpush1.bf16.msra.mxu0 %v7829
    %7840 = vmatprep.subr.bf16.mxu0 0
    %7841 = vmatpush1.bf16.msra.mxu0 %v7828
    %7842 = vmatprep.subr.bf16.mxu0 0
    %7843 = vmatpush1.bf16.msra.mxu0 %v7827
    %7844 = vmatprep.subr.bf16.mxu0 0
    %7845 = vmatpush1.bf16.msra.mxu0 %v7826
    %7846 = vmatprep.subr.bf16.mxu0 0
    %7847 = vmatpush1.bf16.msra.mxu0 %v7825
    %7848 = vmatprep.subr.bf16.mxu0 0
    %7849 = vmatpush1.bf16.msra.mxu0 %v7824
    %7850 = vmatprep.subr.bf16.mxu0 0
    %7851 = vmatpush1.bf16.msra.mxu0 %v7823
    %7852 = vmatprep.subr.bf16.mxu0 0
    %7853 = vmatpush1.bf16.msra.mxu0 %v7822
    %7854 = vmatprep.subr.bf16.mxu0 0
    %7855 = vmatpush2.bf16.msra.mxu0 0
    %7856 = vmatprep.subr.bf16.mxu0 0
    %7857 = vmatpush2.bf16.msra.mxu0 0
    %7858 = vmatprep.subr.bf16.mxu0 0
    %7859 = vmatpush2.bf16.msra.mxu0 0
    %7860 = vmatprep.subr.bf16.mxu0 0
    %7861 = vmatpush2.bf16.msra.mxu0 0
    %7862 = vmatprep.subr.bf16.mxu0 0
    %7863 = vmatpush2.bf16.msra.mxu0 0
    %7864 = vmatprep.subr.bf16.mxu0 0
    %7865 = vmatpush2.bf16.msra.mxu0 0
    %7866 = vmatprep.subr.bf16.mxu0 0
    %7867 = vmatpush2.bf16.msra.mxu0 0
    %7868 = vmatprep.subr.bf16.mxu0 0
    %7869 = vmatpush2.bf16.msra.mxu0 0
    %7870 = vmatprep.mubr.bf16.mxu0 0
    %7871 = vmatmul.mubr.bf16.gmra.mxu0 %v7767
    %v7872 = vpop.f32.mrf.mxu0
    %v7873 = vadd.f32 %v7789, %v7872
    %v7874 = vpop.f32.mrf.mxu0
    %v7875 = vpop.f32.mrf.mxu0
    %v7876 = vpop.f32.mrf.mxu0
    %7877 = vdwg.mxu0
    %v7878 = vpack.c.bf16 %v7873, %v7873
    %v7879 = vld [vmem:[#allocation7] sm:$0xff]
    %v7880 = vld [vmem:[#allocation7 + $0x8] sm:$0xff]
    %v7881 = vld [vmem:[#allocation7 + $0x10] sm:$0xff]
    %v7882 = vld [vmem:[#allocation7 + $0x18] sm:$0xff]
    %v7883 = vld [vmem:[#allocation7 + $0x20] sm:$0xff]
    %v7884 = vld [vmem:[#allocation7 + $0x28] sm:$0xff]
    %v7885 = vld [vmem:[#allocation7 + $0x30] sm:$0xff]
    %v7886 = vld [vmem:[#allocation7 + $0x38] sm:$0xff]
    %v7887 = vld [vmem:[#allocation7 + $0x40] sm:$0xff]
    %v7888 = vld [vmem:[#allocation7 + $0x48] sm:$0xff]
    %v7889 = vld [vmem:[#allocation7 + $0x50] sm:$0xff]
    %v7890 = vld [vmem:[#allocation7 + $0x58] sm:$0xff]
    %v7891 = vld [vmem:[#allocation7 + $0x60] sm:$0xff]
    %v7892 = vld [vmem:[#allocation7 + $0x68] sm:$0xff]
    %v7893 = vld [vmem:[#allocation7 + $0x70] sm:$0xff]
    %v7894 = vld [vmem:[#allocation7 + $0x78] sm:$0xff]
    %v7895 = vld [vmem:[%s5] ss:$4 sm:$0x3]
    %v7897 = vlaneseq
    %v7898 = vshrl.u32 %v7897, 7
    %v7899 = vsub.s32 0, %v7898
    %v7900 = vrot.slane %v7895, %v7899
    %v7901 = vlaneseq
    %v7902 = vshrl.u32 %v7901, 7
    %v7903 = vsub.s32 1, %v7902
    %v7904 = vrot.slane %v7895, %v7903
    %v7923 = vunpack.c.l.b16 %v7879
    %v7924 = vunpack.c.h.b16 %v7879
    %v7925 = vunpack.c.l.b16 %v7880
    %v7926 = vunpack.c.h.b16 %v7880
    %v7927 = vunpack.c.l.b16 %v7881
    %v7928 = vunpack.c.h.b16 %v7881
    %v7929 = vunpack.c.l.b16 %v7882
    %v7930 = vunpack.c.h.b16 %v7882
    %v7931 = vunpack.c.l.b16 %v7883
    %v7932 = vunpack.c.h.b16 %v7883
    %v7933 = vunpack.c.l.b16 %v7884
    %v7934 = vunpack.c.h.b16 %v7884
    %v7935 = vunpack.c.l.b16 %v7885
    %v7936 = vunpack.c.h.b16 %v7885
    %v7937 = vunpack.c.l.b16 %v7886
    %v7938 = vunpack.c.h.b16 %v7886
    %v7939 = vunpack.c.l.b16 %v7887
    %v7940 = vunpack.c.h.b16 %v7887
    %v7941 = vunpack.c.l.b16 %v7888
    %v7942 = vunpack.c.h.b16 %v7888
    %v7943 = vunpack.c.l.b16 %v7889
    %v7944 = vunpack.c.h.b16 %v7889
    %v7945 = vunpack.c.l.b16 %v7890
    %v7946 = vunpack.c.h.b16 %v7890
    %v7947 = vunpack.c.l.b16 %v7891
    %v7948 = vunpack.c.h.b16 %v7891
    %v7949 = vunpack.c.l.b16 %v7892
    %v7950 = vunpack.c.h.b16 %v7892
    %v7951 = vunpack.c.l.b16 %v7893
    %v7952 = vunpack.c.h.b16 %v7893
    %v7953 = vunpack.c.l.b16 %v7894
    %v7954 = vunpack.c.h.b16 %v7894
    %v7955 = vpack.c.b16 %v7925, %v7923
    %v7956 = vpack.c.b16 %v7926, %v7924
    %v7957 = vpack.c.b16 %v7929, %v7927
    %v7958 = vpack.c.b16 %v7930, %v7928
    %v7959 = vpack.c.b16 %v7933, %v7931
    %v7960 = vpack.c.b16 %v7934, %v7932
    %v7961 = vpack.c.b16 %v7937, %v7935
    %v7962 = vpack.c.b16 %v7938, %v7936
    %v7963 = vpack.c.b16 %v7941, %v7939
    %v7964 = vpack.c.b16 %v7942, %v7940
    %v7965 = vpack.c.b16 %v7945, %v7943
    %v7966 = vpack.c.b16 %v7946, %v7944
    %v7967 = vpack.c.b16 %v7949, %v7947
    %v7968 = vpack.c.b16 %v7950, %v7948
    %v7969 = vpack.c.b16 %v7953, %v7951
    %v7970 = vpack.c.b16 %v7954, %v7952
    %7987 = vmatprep.subr.bf16.mxu0 %v7970
    %7988 = vmatpush1.bf16.msra.mxu0 %v7969
    %7989 = vmatprep.subr.bf16.mxu0 %v7968
    %7990 = vmatpush1.bf16.msra.mxu0 %v7967
    %7991 = vmatprep.subr.bf16.mxu0 %v7966
    %7992 = vmatpush1.bf16.msra.mxu0 %v7965
    %7993 = vmatprep.subr.bf16.mxu0 %v7964
    %7994 = vmatpush1.bf16.msra.mxu0 %v7963
    %7995 = vmatprep.subr.bf16.mxu0 %v7962
    %7996 = vmatpush1.bf16.msra.mxu0 %v7961
    %7997 = vmatprep.subr.bf16.mxu0 %v7960
    %7998 = vmatpush1.bf16.msra.mxu0 %v7959
    %7999 = vmatprep.subr.bf16.mxu0 %v7958
    %8000 = vmatpush1.bf16.msra.mxu0 %v7957
    %8001 = vmatprep.subr.bf16.mxu0 %v7956
    %8002 = vmatpush1.bf16.msra.mxu0 %v7955
    %8003 = vmatprep.subr.bf16.mxu0 0
    %8004 = vmatpush2.bf16.msra.mxu0 0
    %8005 = vmatprep.subr.bf16.mxu0 0
    %8006 = vmatpush2.bf16.msra.mxu0 0
    %8007 = vmatprep.subr.bf16.mxu0 0
    %8008 = vmatpush2.bf16.msra.mxu0 0
    %8009 = vmatprep.subr.bf16.mxu0 0
    %8010 = vmatpush2.bf16.msra.mxu0 0
    %8011 = vmatprep.subr.bf16.mxu0 0
    %8012 = vmatpush2.bf16.msra.mxu0 0
    %8013 = vmatprep.subr.bf16.mxu0 0
    %8014 = vmatpush2.bf16.msra.mxu0 0
    %8015 = vmatprep.subr.bf16.mxu0 0
    %8016 = vmatpush2.bf16.msra.mxu0 0
    %8017 = vmatprep.subr.bf16.mxu0 0
    %8018 = vmatpush2.bf16.msra.mxu0 0
    %8019 = vmatprep.mubr.bf16.mxu0 0
    %8020 = vmatmul.mubr.bf16.gmra.mxu0 %v7878
    %v8021 = vpop.f32.mrf.mxu0
    %v8022 = vadd.f32 %v7900, %v8021
    %v8023 = vpop.f32.mrf.mxu0
    %v8024 = vadd.f32 %v7904, %v8023
    %v8025 = vpop.f32.mrf.mxu0
    %v8026 = vpop.f32.mrf.mxu0
    %8027 = vdwg.mxu0
    %v8028 = vmax.f32 %v8022, 0.0
    %v8029 = vmax.f32 %v8024, 0.0
    %v8030 = vpack.c.bf16 %v8028, %v8028
    %v8031 = vpack.c.bf16 %v8029, %v8029
    %v8032 = vld [vmem:[#allocation8] sm:$0xff]
    %v8033 = vld [vmem:[#allocation8 + $0x8] sm:$0xff]
    %v8034 = vld [vmem:[#allocation8 + $0x10] sm:$0xff]
    %v8035 = vld [vmem:[#allocation8 + $0x18] sm:$0xff]
    %v8036 = vld [vmem:[#allocation8 + $0x20] sm:$0xff]
    %v8037 = vld [vmem:[#allocation8 + $0x28] sm:$0xff]
    %v8038 = vld [vmem:[#allocation8 + $0x30] sm:$0xff]
    %v8039 = vld [vmem:[#allocation8 + $0x38] sm:$0xff]
    %v8040 = vld [vmem:[#allocation8 + $0x40] sm:$0xff]
    %v8041 = vld [vmem:[#allocation8 + $0x48] sm:$0xff]
    %v8042 = vld [vmem:[#allocation8 + $0x50] sm:$0xff]
    %v8043 = vld [vmem:[#allocation8 + $0x58] sm:$0xff]
    %v8044 = vld [vmem:[#allocation8 + $0x60] sm:$0xff]
    %v8045 = vld [vmem:[#allocation8 + $0x68] sm:$0xff]
    %v8046 = vld [vmem:[#allocation8 + $0x70] sm:$0xff]
    %v8047 = vld [vmem:[#allocation8 + $0x78] sm:$0xff]
    %v8048 = vld [vmem:[#allocation8 + $0x80] sm:$0xff]
    %v8049 = vld [vmem:[#allocation8 + $0x88] sm:$0xff]
    %v8050 = vld [vmem:[#allocation8 + $0x90] sm:$0xff]
    %v8051 = vld [vmem:[#allocation8 + $0x98] sm:$0xff]
    %v8052 = vld [vmem:[#allocation8 + $0xa0] sm:$0xff]
    %v8053 = vld [vmem:[#allocation8 + $0xa8] sm:$0xff]
    %v8054 = vld [vmem:[#allocation8 + $0xb0] sm:$0xff]
    %v8055 = vld [vmem:[#allocation8 + $0xb8] sm:$0xff]
    %v8056 = vld [vmem:[#allocation8 + $0xc0] sm:$0xff]
    %v8057 = vld [vmem:[#allocation8 + $0xc8] sm:$0xff]
    %v8058 = vld [vmem:[#allocation8 + $0xd0] sm:$0xff]
    %v8059 = vld [vmem:[#allocation8 + $0xd8] sm:$0xff]
    %v8060 = vld [vmem:[#allocation8 + $0xe0] sm:$0xff]
    %v8061 = vld [vmem:[#allocation8 + $0xe8] sm:$0xff]
    %v8062 = vld [vmem:[#allocation8 + $0xf0] sm:$0xff]
    %v8063 = vld [vmem:[#allocation8 + $0xf8] sm:$0xff]
    %s8064 = scalar_lea.vmem %s5, 1
    %v8065 = vld [vmem:[%s8064] ss:$4 sm:$0x3]
    %v8067 = vlaneseq
    %v8068 = vshrl.u32 %v8067, 7
    %v8069 = vsub.s32 0, %v8068
    %v8070 = vrot.slane %v8065, %v8069
    %v8071 = vlaneseq
    %v8072 = vshrl.u32 %v8071, 7
    %v8073 = vsub.s32 1, %v8072
    %v8074 = vrot.slane %v8065, %v8073
    %v8109 = vunpack.c.l.b16 %v8032
    %v8110 = vunpack.c.h.b16 %v8032
    %v8111 = vunpack.c.l.b16 %v8033
    %v8112 = vunpack.c.h.b16 %v8033
    %v8113 = vunpack.c.l.b16 %v8034
    %v8114 = vunpack.c.h.b16 %v8034
    %v8115 = vunpack.c.l.b16 %v8035
    %v8116 = vunpack.c.h.b16 %v8035
    %v8117 = vunpack.c.l.b16 %v8036
    %v8118 = vunpack.c.h.b16 %v8036
    %v8119 = vunpack.c.l.b16 %v8037
    %v8120 = vunpack.c.h.b16 %v8037
    %v8121 = vunpack.c.l.b16 %v8038
    %v8122 = vunpack.c.h.b16 %v8038
    %v8123 = vunpack.c.l.b16 %v8039
    %v8124 = vunpack.c.h.b16 %v8039
    %v8125 = vunpack.c.l.b16 %v8040
    %v8126 = vunpack.c.h.b16 %v8040
    %v8127 = vunpack.c.l.b16 %v8041
    %v8128 = vunpack.c.h.b16 %v8041
    %v8129 = vunpack.c.l.b16 %v8042
    %v8130 = vunpack.c.h.b16 %v8042
    %v8131 = vunpack.c.l.b16 %v8043
    %v8132 = vunpack.c.h.b16 %v8043
    %v8133 = vunpack.c.l.b16 %v8044
    %v8134 = vunpack.c.h.b16 %v8044
    %v8135 = vunpack.c.l.b16 %v8045
    %v8136 = vunpack.c.h.b16 %v8045
    %v8137 = vunpack.c.l.b16 %v8046
    %v8138 = vunpack.c.h.b16 %v8046
    %v8139 = vunpack.c.l.b16 %v8047
    %v8140 = vunpack.c.h.b16 %v8047
    %v8141 = vunpack.c.l.b16 %v8048
    %v8142 = vunpack.c.h.b16 %v8048
    %v8143 = vunpack.c.l.b16 %v8049
    %v8144 = vunpack.c.h.b16 %v8049
    %v8145 = vunpack.c.l.b16 %v8050
    %v8146 = vunpack.c.h.b16 %v8050
    %v8147 = vunpack.c.l.b16 %v8051
    %v8148 = vunpack.c.h.b16 %v8051
    %v8149 = vunpack.c.l.b16 %v8052
    %v8150 = vunpack.c.h.b16 %v8052
    %v8151 = vunpack.c.l.b16 %v8053
    %v8152 = vunpack.c.h.b16 %v8053
    %v8153 = vunpack.c.l.b16 %v8054
    %v8154 = vunpack.c.h.b16 %v8054
    %v8155 = vunpack.c.l.b16 %v8055
    %v8156 = vunpack.c.h.b16 %v8055
    %v8157 = vunpack.c.l.b16 %v8056
    %v8158 = vunpack.c.h.b16 %v8056
    %v8159 = vunpack.c.l.b16 %v8057
    %v8160 = vunpack.c.h.b16 %v8057
    %v8161 = vunpack.c.l.b16 %v8058
    %v8162 = vunpack.c.h.b16 %v8058
    %v8163 = vunpack.c.l.b16 %v8059
    %v8164 = vunpack.c.h.b16 %v8059
    %v8165 = vunpack.c.l.b16 %v8060
    %v8166 = vunpack.c.h.b16 %v8060
    %v8167 = vunpack.c.l.b16 %v8061
    %v8168 = vunpack.c.h.b16 %v8061
    %v8169 = vunpack.c.l.b16 %v8062
    %v8170 = vunpack.c.h.b16 %v8062
    %v8171 = vunpack.c.l.b16 %v8063
    %v8172 = vunpack.c.h.b16 %v8063
    %v8173 = vpack.c.b16 %v8111, %v8109
    %v8174 = vpack.c.b16 %v8112, %v8110
    %v8175 = vpack.c.b16 %v8115, %v8113
    %v8176 = vpack.c.b16 %v8116, %v8114
    %v8177 = vpack.c.b16 %v8119, %v8117
    %v8178 = vpack.c.b16 %v8120, %v8118
    %v8179 = vpack.c.b16 %v8123, %v8121
    %v8180 = vpack.c.b16 %v8124, %v8122
    %v8181 = vpack.c.b16 %v8127, %v8125
    %v8182 = vpack.c.b16 %v8128, %v8126
    %v8183 = vpack.c.b16 %v8131, %v8129
    %v8184 = vpack.c.b16 %v8132, %v8130
    %v8185 = vpack.c.b16 %v8135, %v8133
    %v8186 = vpack.c.b16 %v8136, %v8134
    %v8187 = vpack.c.b16 %v8139, %v8137
    %v8188 = vpack.c.b16 %v8140, %v8138
    %v8189 = vpack.c.b16 %v8143, %v8141
    %v8190 = vpack.c.b16 %v8144, %v8142
    %v8191 = vpack.c.b16 %v8147, %v8145
    %v8192 = vpack.c.b16 %v8148, %v8146
    %v8193 = vpack.c.b16 %v8151, %v8149
    %v8194 = vpack.c.b16 %v8152, %v8150
    %v8195 = vpack.c.b16 %v8155, %v8153
    %v8196 = vpack.c.b16 %v8156, %v8154
    %v8197 = vpack.c.b16 %v8159, %v8157
    %v8198 = vpack.c.b16 %v8160, %v8158
    %v8199 = vpack.c.b16 %v8163, %v8161
    %v8200 = vpack.c.b16 %v8164, %v8162
    %v8201 = vpack.c.b16 %v8167, %v8165
    %v8202 = vpack.c.b16 %v8168, %v8166
    %v8203 = vpack.c.b16 %v8171, %v8169
    %v8204 = vpack.c.b16 %v8172, %v8170
    %8237 = vmatprep.subr.bf16.mxu0 %v8188
    %8238 = vmatpush1.bf16.msra.mxu0 %v8187
    %8239 = vmatprep.subr.bf16.mxu0 %v8186
    %8240 = vmatpush1.bf16.msra.mxu0 %v8185
    %8241 = vmatprep.subr.bf16.mxu0 %v8184
    %8242 = vmatpush1.bf16.msra.mxu0 %v8183
    %8243 = vmatprep.subr.bf16.mxu0 %v8182
    %8244 = vmatpush1.bf16.msra.mxu0 %v8181
    %8245 = vmatprep.subr.bf16.mxu0 %v8180
    %8246 = vmatpush1.bf16.msra.mxu0 %v8179
    %8247 = vmatprep.subr.bf16.mxu0 %v8178
    %8248 = vmatpush1.bf16.msra.mxu0 %v8177
    %8249 = vmatprep.subr.bf16.mxu0 %v8176
    %8250 = vmatpush1.bf16.msra.mxu0 %v8175
    %8251 = vmatprep.subr.bf16.mxu0 %v8174
    %8252 = vmatpush1.bf16.msra.mxu0 %v8173
    %8253 = vmatprep.subr.bf16.mxu0 %v8204
    %8254 = vmatpush2.bf16.msra.mxu0 %v8203
    %8255 = vmatprep.subr.bf16.mxu0 %v8202
    %8256 = vmatpush2.bf16.msra.mxu0 %v8201
    %8257 = vmatprep.subr.bf16.mxu0 %v8200
    %8258 = vmatpush2.bf16.msra.mxu0 %v8199
    %8259 = vmatprep.subr.bf16.mxu0 %v8198
    %8260 = vmatpush2.bf16.msra.mxu0 %v8197
    %8261 = vmatprep.subr.bf16.mxu0 %v8196
    %8262 = vmatpush2.bf16.msra.mxu0 %v8195
    %8263 = vmatprep.subr.bf16.mxu0 %v8194
    %8264 = vmatpush2.bf16.msra.mxu0 %v8193
    %8265 = vmatprep.subr.bf16.mxu0 %v8192
    %8266 = vmatpush2.bf16.msra.mxu0 %v8191
    %8267 = vmatprep.subr.bf16.mxu0 %v8190
    %8268 = vmatpush2.bf16.msra.mxu0 %v8189
    %8269 = vmatprep.mubr.bf16.mxu0 %v8031
    %8270 = vmatmul.mubr.bf16.gmra.mxu0 %v8030
    %v8271 = vpop.f32.mrf.mxu0
    %v8272 = vadd.f32 %v8070, %v8271
    %v8273 = vpop.f32.mrf.mxu0
    %v8274 = vadd.f32 %v8074, %v8273
    %v8275 = vpop.f32.mrf.mxu0
    %v8276 = vpop.f32.mrf.mxu0
    %8277 = vdwg.mxu0
    %v8278 = vmax.f32 %v8272, 0.0
    %v8279 = vmax.f32 %v8274, 0.0
    %v8280 = vpack.c.bf16 %v8278, %v8278
    %v8281 = vpack.c.bf16 %v8279, %v8279
    %s8282 = scalar_lea.vmem [#allocation8], 256
    %v8283 = vld [vmem:[%s8282] sm:$0xff]
    %v8284 = vld [vmem:[%s8282 + $0x8] sm:$0xff]
    %v8285 = vld [vmem:[%s8282 + $0x10] sm:$0xff]
    %v8286 = vld [vmem:[%s8282 + $0x18] sm:$0xff]
    %v8287 = vld [vmem:[%s8282 + $0x20] sm:$0xff]
    %v8288 = vld [vmem:[%s8282 + $0x28] sm:$0xff]
    %v8289 = vld [vmem:[%s8282 + $0x30] sm:$0xff]
    %v8290 = vld [vmem:[%s8282 + $0x38] sm:$0xff]
    %v8291 = vld [vmem:[%s8282 + $0x40] sm:$0xff]
    %v8292 = vld [vmem:[%s8282 + $0x48] sm:$0xff]
    %v8293 = vld [vmem:[%s8282 + $0x50] sm:$0xff]
    %v8294 = vld [vmem:[%s8282 + $0x58] sm:$0xff]
    %v8295 = vld [vmem:[%s8282 + $0x60] sm:$0xff]
    %v8296 = vld [vmem:[%s8282 + $0x68] sm:$0xff]
    %v8297 = vld [vmem:[%s8282 + $0x70] sm:$0xff]
    %v8298 = vld [vmem:[%s8282 + $0x78] sm:$0xff]
    %v8299 = vld [vmem:[%s8282 + $0x80] sm:$0xff]
    %v8300 = vld [vmem:[%s8282 + $0x88] sm:$0xff]
    %v8301 = vld [vmem:[%s8282 + $0x90] sm:$0xff]
    %v8302 = vld [vmem:[%s8282 + $0x98] sm:$0xff]
    %v8303 = vld [vmem:[%s8282 + $0xa0] sm:$0xff]
    %v8304 = vld [vmem:[%s8282 + $0xa8] sm:$0xff]
    %v8305 = vld [vmem:[%s8282 + $0xb0] sm:$0xff]
    %v8306 = vld [vmem:[%s8282 + $0xb8] sm:$0xff]
    %v8307 = vld [vmem:[%s8282 + $0xc0] sm:$0xff]
    %v8308 = vld [vmem:[%s8282 + $0xc8] sm:$0xff]
    %v8309 = vld [vmem:[%s8282 + $0xd0] sm:$0xff]
    %v8310 = vld [vmem:[%s8282 + $0xd8] sm:$0xff]
    %v8311 = vld [vmem:[%s8282 + $0xe0] sm:$0xff]
    %v8312 = vld [vmem:[%s8282 + $0xe8] sm:$0xff]
    %v8313 = vld [vmem:[%s8282 + $0xf0] sm:$0xff]
    %v8314 = vld [vmem:[%s8282 + $0xf8] sm:$0xff]
    %s8315 = scalar_lea.vmem %s5, 2
    %v8316 = vld [vmem:[%s8315] ss:$4 sm:$0x3]
    %v8318 = vlaneseq
    %v8319 = vshrl.u32 %v8318, 7
    %v8320 = vsub.s32 0, %v8319
    %v8321 = vrot.slane %v8316, %v8320
    %v8322 = vlaneseq
    %v8323 = vshrl.u32 %v8322, 7
    %v8324 = vsub.s32 1, %v8323
    %v8325 = vrot.slane %v8316, %v8324
    %v8360 = vunpack.c.l.b16 %v8283
    %v8361 = vunpack.c.h.b16 %v8283
    %v8362 = vunpack.c.l.b16 %v8284
    %v8363 = vunpack.c.h.b16 %v8284
    %v8364 = vunpack.c.l.b16 %v8285
    %v8365 = vunpack.c.h.b16 %v8285
    %v8366 = vunpack.c.l.b16 %v8286
    %v8367 = vunpack.c.h.b16 %v8286
    %v8368 = vunpack.c.l.b16 %v8287
    %v8369 = vunpack.c.h.b16 %v8287
    %v8370 = vunpack.c.l.b16 %v8288
    %v8371 = vunpack.c.h.b16 %v8288
    %v8372 = vunpack.c.l.b16 %v8289
    %v8373 = vunpack.c.h.b16 %v8289
    %v8374 = vunpack.c.l.b16 %v8290
    %v8375 = vunpack.c.h.b16 %v8290
    %v8376 = vunpack.c.l.b16 %v8291
    %v8377 = vunpack.c.h.b16 %v8291
    %v8378 = vunpack.c.l.b16 %v8292
    %v8379 = vunpack.c.h.b16 %v8292
    %v8380 = vunpack.c.l.b16 %v8293
    %v8381 = vunpack.c.h.b16 %v8293
    %v8382 = vunpack.c.l.b16 %v8294
    %v8383 = vunpack.c.h.b16 %v8294
    %v8384 = vunpack.c.l.b16 %v8295
    %v8385 = vunpack.c.h.b16 %v8295
    %v8386 = vunpack.c.l.b16 %v8296
    %v8387 = vunpack.c.h.b16 %v8296
    %v8388 = vunpack.c.l.b16 %v8297
    %v8389 = vunpack.c.h.b16 %v8297
    %v8390 = vunpack.c.l.b16 %v8298
    %v8391 = vunpack.c.h.b16 %v8298
    %v8392 = vunpack.c.l.b16 %v8299
    %v8393 = vunpack.c.h.b16 %v8299
    %v8394 = vunpack.c.l.b16 %v8300
    %v8395 = vunpack.c.h.b16 %v8300
    %v8396 = vunpack.c.l.b16 %v8301
    %v8397 = vunpack.c.h.b16 %v8301
    %v8398 = vunpack.c.l.b16 %v8302
    %v8399 = vunpack.c.h.b16 %v8302
    %v8400 = vunpack.c.l.b16 %v8303
    %v8401 = vunpack.c.h.b16 %v8303
    %v8402 = vunpack.c.l.b16 %v8304
    %v8403 = vunpack.c.h.b16 %v8304
    %v8404 = vunpack.c.l.b16 %v8305
    %v8405 = vunpack.c.h.b16 %v8305
    %v8406 = vunpack.c.l.b16 %v8306
    %v8407 = vunpack.c.h.b16 %v8306
    %v8408 = vunpack.c.l.b16 %v8307
    %v8409 = vunpack.c.h.b16 %v8307
    %v8410 = vunpack.c.l.b16 %v8308
    %v8411 = vunpack.c.h.b16 %v8308
    %v8412 = vunpack.c.l.b16 %v8309
    %v8413 = vunpack.c.h.b16 %v8309
    %v8414 = vunpack.c.l.b16 %v8310
    %v8415 = vunpack.c.h.b16 %v8310
    %v8416 = vunpack.c.l.b16 %v8311
    %v8417 = vunpack.c.h.b16 %v8311
    %v8418 = vunpack.c.l.b16 %v8312
    %v8419 = vunpack.c.h.b16 %v8312
    %v8420 = vunpack.c.l.b16 %v8313
    %v8421 = vunpack.c.h.b16 %v8313
    %v8422 = vunpack.c.l.b16 %v8314
    %v8423 = vunpack.c.h.b16 %v8314
    %v8424 = vpack.c.b16 %v8362, %v8360
    %v8425 = vpack.c.b16 %v8363, %v8361
    %v8426 = vpack.c.b16 %v8366, %v8364
    %v8427 = vpack.c.b16 %v8367, %v8365
    %v8428 = vpack.c.b16 %v8370, %v8368
    %v8429 = vpack.c.b16 %v8371, %v8369
    %v8430 = vpack.c.b16 %v8374, %v8372
    %v8431 = vpack.c.b16 %v8375, %v8373
    %v8432 = vpack.c.b16 %v8378, %v8376
    %v8433 = vpack.c.b16 %v8379, %v8377
    %v8434 = vpack.c.b16 %v8382, %v8380
    %v8435 = vpack.c.b16 %v8383, %v8381
    %v8436 = vpack.c.b16 %v8386, %v8384
    %v8437 = vpack.c.b16 %v8387, %v8385
    %v8438 = vpack.c.b16 %v8390, %v8388
    %v8439 = vpack.c.b16 %v8391, %v8389
    %v8440 = vpack.c.b16 %v8394, %v8392
    %v8441 = vpack.c.b16 %v8395, %v8393
    %v8442 = vpack.c.b16 %v8398, %v8396
    %v8443 = vpack.c.b16 %v8399, %v8397
    %v8444 = vpack.c.b16 %v8402, %v8400
    %v8445 = vpack.c.b16 %v8403, %v8401
    %v8446 = vpack.c.b16 %v8406, %v8404
    %v8447 = vpack.c.b16 %v8407, %v8405
    %v8448 = vpack.c.b16 %v8410, %v8408
    %v8449 = vpack.c.b16 %v8411, %v8409
    %v8450 = vpack.c.b16 %v8414, %v8412
    %v8451 = vpack.c.b16 %v8415, %v8413
    %v8452 = vpack.c.b16 %v8418, %v8416
    %v8453 = vpack.c.b16 %v8419, %v8417
    %v8454 = vpack.c.b16 %v8422, %v8420
    %v8455 = vpack.c.b16 %v8423, %v8421
    %8488 = vmatprep.subr.bf16.mxu0 %v8439
    %8489 = vmatpush1.bf16.msra.mxu0 %v8438
    %8490 = vmatprep.subr.bf16.mxu0 %v8437
    %8491 = vmatpush1.bf16.msra.mxu0 %v8436
    %8492 = vmatprep.subr.bf16.mxu0 %v8435
    %8493 = vmatpush1.bf16.msra.mxu0 %v8434
    %8494 = vmatprep.subr.bf16.mxu0 %v8433
    %8495 = vmatpush1.bf16.msra.mxu0 %v8432
    %8496 = vmatprep.subr.bf16.mxu0 %v8431
    %8497 = vmatpush1.bf16.msra.mxu0 %v8430
    %8498 = vmatprep.subr.bf16.mxu0 %v8429
    %8499 = vmatpush1.bf16.msra.mxu0 %v8428
    %8500 = vmatprep.subr.bf16.mxu0 %v8427
    %8501 = vmatpush1.bf16.msra.mxu0 %v8426
    %8502 = vmatprep.subr.bf16.mxu0 %v8425
    %8503 = vmatpush1.bf16.msra.mxu0 %v8424
    %8504 = vmatprep.subr.bf16.mxu0 %v8455
    %8505 = vmatpush2.bf16.msra.mxu0 %v8454
    %8506 = vmatprep.subr.bf16.mxu0 %v8453
    %8507 = vmatpush2.bf16.msra.mxu0 %v8452
    %8508 = vmatprep.subr.bf16.mxu0 %v8451
    %8509 = vmatpush2.bf16.msra.mxu0 %v8450
    %8510 = vmatprep.subr.bf16.mxu0 %v8449
    %8511 = vmatpush2.bf16.msra.mxu0 %v8448
    %8512 = vmatprep.subr.bf16.mxu0 %v8447
    %8513 = vmatpush2.bf16.msra.mxu0 %v8446
    %8514 = vmatprep.subr.bf16.mxu0 %v8445
    %8515 = vmatpush2.bf16.msra.mxu0 %v8444
    %8516 = vmatprep.subr.bf16.mxu0 %v8443
    %8517 = vmatpush2.bf16.msra.mxu0 %v8442
    %8518 = vmatprep.subr.bf16.mxu0 %v8441
    %8519 = vmatpush2.bf16.msra.mxu0 %v8440
    %8520 = vmatprep.mubr.bf16.mxu0 %v8281
    %8521 = vmatmul.mubr.bf16.gmra.mxu0 %v8280
    %v8522 = vpop.f32.mrf.mxu0
    %v8523 = vadd.f32 %v8321, %v8522
    %v8524 = vpop.f32.mrf.mxu0
    %v8525 = vadd.f32 %v8325, %v8524
    %v8526 = vpop.f32.mrf.mxu0
    %v8527 = vpop.f32.mrf.mxu0
    %8528 = vdwg.mxu0
    %v8529 = vunpack.c.l.bf16 %v7531
    %8530 = vst [vmem:[%s11] sm:$0xff] %v8529
    %8531 = vst [vmem:[%s11 + $0x8] sm:$0xff] %v7873
    %8532 = vst [vmem:[%s11 + $0x10] sm:$0xff] %v8523
    %8533 = vst [vmem:[%s11 + $0x18] sm:$0xff] %v8525
    // Predicated region
    $region84: #{hipot_forward.1} parent=1 // pred_check
      _
    $region85: #{hipot_forward.1} parent=1 // pred_check_branch
      %8535 = sbr.rel (0) target = $region87
    $region86: #{hipot_forward.1} parent=1 // pred_region
      _
    $region87: #{hipot_forward.1} parent=1 // pred_fallthru
      _
    // Predicated region
    $region88: #{hipot_forward.1} parent=1 // pred_check
      _
    $region89: #{hipot_forward.1} parent=1 // pred_check_branch
      %8537 = sbr.rel (0) target = $region91
    $region90: #{hipot_forward.1} parent=1 // pred_region
      _
    $region91: #{hipot_forward.1} parent=1 // pred_fallthru
      _
    %8538 = vsyncpa [#allocation11], 1
    %8539 = vsyncpa [#allocation13], 1
  %8540 = vsyncmov [#allocation9]
  %s8541 = vpop.sfrf %8540
  %p8542 = scmp.eq.s32.totalorder %s8541, 0
  %p8543 = pneg %p8542
  %8545 = shalt.err (%p8543)
  %s8546 = scalar_lea.sflag [#allocation9], 1
  %8547 = vsyncmov %s8546
  %s8548 = vpop.sfrf %8547
  %p8549 = scmp.eq.s32.totalorder %s8548, 0
  %p8550 = pneg %p8549
  %8552 = shalt.err (%p8550)
  %s8553 = scalar_lea.sflag [#allocation9], 2
  %8554 = vsyncmov %s8553
  %s8555 = vpop.sfrf %8554
  %p8556 = scmp.eq.s32.totalorder %s8555, 0
  %p8557 = pneg %p8556
  %8559 = shalt.err (%p8557)
  %s8560 = scalar_lea.sflag [#allocation9], 3
  %8561 = vsyncmov %s8560
  %s8562 = vpop.sfrf %8561
  %p8563 = scmp.eq.s32.totalorder %s8562, 0
  %p8564 = pneg %p8563
  %8566 = shalt.err (%p8564)
  %s8567 = scalar_lea.sflag [#allocation9], 4
  %8568 = vsyncmov %s8567
  %s8569 = vpop.sfrf %8568
  %p8570 = scmp.eq.s32.totalorder %s8569, 0
  %p8571 = pneg %p8570
  %8573 = shalt.err (%p8571)

</llo_original>
